<compile_context>
chip_gen: v7x
topology: tpu7x:2x2x1
jax: 0.10.0
libtpu: 0.0.40
codegen_flags: <defaults>
</compile_context>

<pallas_src>
import math

import jax
import jax.numpy as jnp
from jax.experimental import pallas as pl
from jax.experimental.pallas import tpu as pltpu

EPS = 1e-5
SIGMA = 0.1        # fixed std of the policy Normal, as in the PyTorch code
ACTION_DIM = 4
IMG = 61           # (61-5)//2+1 = 29 ; (29-5)//2+1 = 13  -> 32*13*13 = 5408
FEAT = 32 * 13 * 13


# ----------------------------------------------------------------------------
# Pallas kernels
# ----------------------------------------------------------------------------
def conv_gemm_bn_kernel(p_ref, w_ref, scale_ref, bias_ref, o_ref):
    """Channels-first conv-as-GEMM fused with eval-mode BatchNorm.

    out[Cout, M] = (W[Cout, K] @ patches[K, M]) * scale[Cout, 1] + bias[Cout, 1]

    Channels live on sublanes and (batch*spatial) on lanes, so stores are
    lane-dense and the BN scale/shift is a per-sublane broadcast.
    """
    acc = jnp.dot(w_ref[...], p_ref[...], preferred_element_type=jnp.float32)
    o_ref[...] = acc * scale_ref[...] + bias_ref[...]


def heads_kernel(xa_ref, xc_ref, act_ref,
                 w1a_ref, b1a_ref, w2a_ref, b2a_ref,
                 w1c_ref, b1c_ref, w2c_ref, b2c_ref,
                 lp_ref, ent_ref, v_ref):
    """Fused actor + critic heads.

    actor : x -> Linear(5408,128) -> tanh -> Linear(128,A) = mu
            log_prob / entropy of Normal(mu, SIGMA) at `action`
    critic: x -> Linear(5408,128) -> tanh -> Linear(128,1) = value
    FC1 weights are bf16 (they dominate DMA bytes); accumulation is f32.
    """
    ha = jnp.tanh(
        jnp.dot(xa_ref[...].astype(jnp.bfloat16), w1a_ref[...],
                preferred_element_type=jnp.float32) + b1a_ref[...])
    mu = jnp.dot(ha, w2a_ref[...],
                 preferred_element_type=jnp.float32) + b2a_ref[...]

    inv_two_var = jnp.float32(1.0 / (2.0 * SIGMA * SIGMA))
    log_norm = jnp.float32(math.log(SIGMA) + 0.5 * math.log(2.0 * math.pi))
    diff = act_ref[...] - mu
    lp_ref[...] = -(diff * diff) * inv_two_var - log_norm
    ent_ref[...] = jnp.full_like(
        mu, 0.5 + 0.5 * math.log(2.0 * math.pi) + math.log(SIGMA))

    hc = jnp.tanh(
        jnp.dot(xc_ref[...].astype(jnp.bfloat16), w1c_ref[...],
                preferred_element_type=jnp.float32) + b1c_ref[...])
    v_ref[...] = jnp.dot(hc, w2c_ref[...],
                         preferred_element_type=jnp.float32) + b2c_ref[...]


# ----------------------------------------------------------------------------
# pallas_call wrappers (single grid step, full-array blocks)
# ----------------------------------------------------------------------------
def _fs(shape):
    n = len(shape)
    return pl.BlockSpec(shape, lambda *_: (0,) * n)


def conv_gemm_bn(patches_t, w_t, scale, bias):
    """patches_t: (K, M), w_t: (Cout, K), scale/bias: (Cout, 1) -> (Cout, M)."""
    K, M = patches_t.shape
    Cout = w_t.shape[0]
    cost = pl.CostEstimate(
        flops=2 * Cout * K * M,
        transcendentals=0,
        bytes_accessed=4 * (K * M + Cout * K + 2 * Cout + Cout * M))
    return pl.pallas_call(
        conv_gemm_bn_kernel,
        out_shape=jax.ShapeDtypeStruct((Cout, M), jnp.float32),
        grid=(1,),
        in_specs=[_fs((K, M)), _fs((Cout, K)), _fs((Cout, 1)), _fs((Cout, 1))],
        out_specs=_fs((Cout, M)),
        compiler_params=pltpu.CompilerParams(
            dimension_semantics=("arbitrary",)),
        cost_estimate=cost,
    )(patches_t, w_t, scale, bias)


def fused_heads(xa, xc, action, w1a, b1a, w2a, b2a, w1c, b1c, w2c, b2c):
    B, F = xa.shape
    H = w1a.shape[1]
    A = w2a.shape[1]
    cost = pl.CostEstimate(
        flops=2 * (2 * B * F * H) + 2 * B * H * (A + 1),
        transcendentals=2 * B * H,
        bytes_accessed=2 * (2 * F * H) + 4 * (2 * B * F + 2 * H + 3 * B * A + B))
    return pl.pallas_call(
        heads_kernel,
        out_shape=(jax.ShapeDtypeStruct((B, A), jnp.float32),
                   jax.ShapeDtypeStruct((B, A), jnp.float32),
                   jax.ShapeDtypeStruct((B, 1), jnp.float32)),
        grid=(1,),
        in_specs=[_fs((B, F)), _fs((B, F)), _fs((B, A)),
                  _fs((F, H)), _fs((1, H)), _fs((H, A)), _fs((1, A)),
                  _fs((F, H)), _fs((1, H)), _fs((H, 1)), _fs((1, 1))],
        out_specs=(_fs((B, A)), _fs((B, A)), _fs((B, 1))),
        compiler_params=pltpu.CompilerParams(
            dimension_semantics=("arbitrary",)),
        cost_estimate=cost,
    )(xa, xc, action, w1a, b1a, w2a, b2a, w1c, b1c, w2c, b2c)


# ----------------------------------------------------------------------------
# Glue (im2col, layout plumbing) — plain JAX, cheap and shared
# ----------------------------------------------------------------------------
def im2col_cfirst(x_cf, k, s):
    """x_cf: (C, B, H, W) -> patches^T (C*k*k, B*Ho*Wo).

    Row order (c, di, dj) matches the row-major flatten of a PyTorch
    (O, I, kH, kW) conv weight; column order is (b, i, j).  Built without any
    transpose of the patch tensor.
    """
    C, B, H, W = x_cf.shape
    Ho = (H - k) // s + 1
    Wo = (W - k) // s + 1
    slices = []
    for di in range(k):
        for dj in range(k):
            slices.append(x_cf[:, :, di:di + s * (Ho - 1) + 1:s,
                               dj:dj + s * (Wo - 1) + 1:s])
    p = jnp.stack(slices, axis=1)                       # (C, k*k, B, Ho, Wo)
    return p.reshape(C * k * k, B * Ho * Wo), Ho, Wo


@jax.jit
def evaluate(fp, state_nchw, action):
    B = state_nchw.shape[0]
    # (B, 3, H, W) -> (3, B, H, W): channel-first so im2col needs no transpose
    x_cf = jnp.transpose(state_nchw, (1, 0, 2, 3))

    # conv1, shared by actor & critic: one im2col, one GEMM, 32 output chans.
    p1, ho1, wo1 = im2col_cfirst(x_cf, 5, 2)                  # (75, B*29*29)
    y1 = conv_gemm_bn(p1, fp["w1_t"], fp["s1"], fp["b1"])     # (32, B*29*29)

    # conv2 for both towers in one GEMM via a block-diagonal (64, 800) weight.
    y1r = y1.reshape(32, B, ho1, wo1)
    p2, ho2, wo2 = im2col_cfirst(y1r, 5, 2)                   # (800, B*13*13)
    y2 = conv_gemm_bn(p2, fp["w2_t"], fp["s2"], fp["b2"])     # (64, B*13*13)

    # (tower, c, b, s) -> (tower, b, c, s): matches PyTorch's NCHW view(B,-1).
    s2 = ho2 * wo2
    xflat = jnp.transpose(y2.reshape(2, 32, B, s2), (0, 2, 1, 3))
    xflat = xflat.reshape(2, B, 32 * s2)                      # (2, B, 5408)

    return fused_heads(
        xflat[0], xflat[1], action,
        fp["a_fc1_w"], fp["a_fc1_b"], fp["a_fc2_w"], fp["a_fc2_b"],
        fp["c_fc1_w"], fp["c_fc1_b"], fp["c_fc2_w"], fp["c_fc2_b"])


# ----------------------------------------------------------------------------
# One-time parameter folding (BN fold, GEMM-shaped weights, bf16 FC1)
# ----------------------------------------------------------------------------
def fold_params(p):
    f = {}
    # --- shared conv1: actor = out chans 0..15, critic = out chans 16..31 ---
    w1 = jnp.concatenate([p["a_conv1_w"].reshape(16, 75),
                          p["c_conv1_w"].reshape(16, 75)], axis=0)   # (32, 75)
    s1 = jnp.concatenate([p["a_bn1_g"] / jnp.sqrt(p["a_bn1_v"] + EPS),
                          p["c_bn1_g"] / jnp.sqrt(p["c_bn1_v"] + EPS)])
    cb1 = jnp.concatenate([p["a_conv1_b"], p["c_conv1_b"]])
    m1 = jnp.concatenate([p["a_bn1_m"], p["c_bn1_m"]])
    beta1 = jnp.concatenate([p["a_bn1_b"], p["c_bn1_b"]])
    f["w1_t"] = w1
    f["s1"] = s1[:, None]
    f["b1"] = (beta1 + s1 * (cb1 - m1))[:, None]

    # --- conv2: both towers as one block-diagonal GEMM weight (64, 800) ---
    w2a = p["a_conv2_w"].reshape(32, 400)
    w2c = p["c_conv2_w"].reshape(32, 400)
    zeros = jnp.zeros((32, 400), jnp.float32)
    f["w2_t"] = jnp.concatenate(
        [jnp.concatenate([w2a, zeros], axis=1),
         jnp.concatenate([zeros, w2c], axis=1)], axis=0)
    s2a = p["a_bn2_g"] / jnp.sqrt(p["a_bn2_v"] + EPS)
    s2c = p["c_bn2_g"] / jnp.sqrt(p["c_bn2_v"] + EPS)
    f["s2"] = jnp.concatenate([s2a, s2c])[:, None]
    f["b2"] = jnp.concatenate(
        [p["a_bn2_b"] + s2a * (p["a_conv2_b"] - p["a_bn2_m"]),
         p["c_bn2_b"] + s2c * (p["c_conv2_b"] - p["c_bn2_m"])])[:, None]

    # --- FC heads: FC1 weights in bf16 (dominant DMA bytes), rest f32 ---
    for t in ("a", "c"):
        f[f"{t}_fc1_w"] = p[f"{t}_fc1_w"].astype(jnp.bfloat16)
        f[f"{t}_fc1_b"] = p[f"{t}_fc1_b"]
        f[f"{t}_fc2_w"] = p[f"{t}_fc2_w"]
        f[f"{t}_fc2_b"] = p[f"{t}_fc2_b"]
    return f


# ----------------------------------------------------------------------------
# Deterministic parameter initialization (synthetic, not a checkpoint)
# ----------------------------------------------------------------------------
def init_params(key, action_dim):
    ks = iter(jax.random.split(key, 64))

    def nrm(shape, scale=0.05):
        return scale * jax.random.normal(next(ks), shape, dtype=jnp.float32)

    def pos(shape):
        return 0.5 + jax.random.uniform(next(ks), shape, dtype=jnp.float32)

    p = {}
    for prefix in ("a", "c"):
        p[f"{prefix}_conv1_w"] = nrm((16, 3, 5, 5))
        p[f"{prefix}_conv1_b"] = nrm((16,))
        p[f"{prefix}_bn1_g"] = pos((16,))
        p[f"{prefix}_bn1_b"] = nrm((16,))
        p[f"{prefix}_bn1_m"] = nrm((16,))
        p[f"{prefix}_bn1_v"] = pos((16,))
        p[f"{prefix}_conv2_w"] = nrm((32, 16, 5, 5))
        p[f"{prefix}_conv2_b"] = nrm((32,))
        p[f"{prefix}_bn2_g"] = pos((32,))
        p[f"{prefix}_bn2_b"] = nrm((32,))
        p[f"{prefix}_bn2_m"] = nrm((32,))
        p[f"{prefix}_bn2_v"] = pos((32,))
    # FC weights stored as (in, out); biases as (1, out) for lane-major bcast
    p["a_fc1_w"] = nrm((FEAT, 128), 0.01)
    p["a_fc1_b"] = nrm((1, 128))
    p["a_fc2_w"] = nrm((128, action_dim), 0.01)
    p["a_fc2_b"] = nrm((1, action_dim))
    p["c_fc1_w"] = nrm((FEAT, 128), 0.01)
    p["c_fc1_b"] = nrm((1, 128))
    p["c_fc2_w"] = nrm((128, 1), 0.01)
    p["c_fc2_b"] = nrm((1, 1))
    return p


if __name__ == "__main__":
    key = jax.random.PRNGKey(0)
    k_param, k_state, k_action = jax.random.split(key, 3)

    params = init_params(k_param, ACTION_DIM)
    folded = fold_params(params)

    state = jax.random.normal(k_state, (2, 3, IMG, IMG), dtype=jnp.float32)
    action = jax.random.normal(k_action, (2, ACTION_DIM), dtype=jnp.float32)

    logprob, entropy, value = evaluate(folded, state, action)
    jax.block_until_ready((logprob, entropy, value))

    assert logprob.shape == (2, ACTION_DIM)
    assert entropy.shape == (2, ACTION_DIM)
    assert value.shape == (2, 1)
    assert bool(jnp.isfinite(logprob).all()) and bool(jnp.isfinite(value).all())
    print("KERNEL_OK")
</pallas_src>

<mosaic_0001>
module attributes {stable_mosaic.version = 11 : i64} {
  func.func @conv_gemm_bn_kernel(%arg0: i32, %arg1: memref<75x1682xf32, #tpu.memory_space<vmem>>, %arg2: memref<32x75xf32, #tpu.memory_space<vmem>>, %arg3: memref<32x1xf32, #tpu.memory_space<vmem>>, %arg4: memref<32x1xf32, #tpu.memory_space<vmem>>, %arg5: memref<32x1682xf32, #tpu.memory_space<vmem>>) attributes {dimension_semantics = [#tpu.dimension_semantics<arbitrary>], iteration_bounds = array<i64: 1>, scalar_prefetch = 0 : i64, scratch_operands = 0 : i64, tpu.core_type = #tpu.core_type<tc>, window_params = [{pipeline_mode = #tpu.pipeline_mode<synchronous>, transform_indices = @transform_0, window_bounds = array<i64: 75, 1682>}, {pipeline_mode = #tpu.pipeline_mode<synchronous>, transform_indices = @transform_1, window_bounds = array<i64: 32, 75>}, {pipeline_mode = #tpu.pipeline_mode<synchronous>, transform_indices = @transform_2, window_bounds = array<i64: 32, 1>}, {pipeline_mode = #tpu.pipeline_mode<synchronous>, transform_indices = @transform_3, window_bounds = array<i64: 32, 1>}, {pipeline_mode = #tpu.pipeline_mode<synchronous>, transform_indices = @transform_4, window_bounds = array<i64: 32, 1682>}]} {
    %c0 = arith.constant 0 : index
    %c0_0 = arith.constant 0 : index
    %0 = vector.load %arg2[%c0, %c0_0] : memref<32x75xf32, #tpu.memory_space<vmem>>, vector<32x75xf32>
    %c0_1 = arith.constant 0 : index
    %c0_2 = arith.constant 0 : index
    %1 = vector.load %arg1[%c0_1, %c0_2] : memref<75x1682xf32, #tpu.memory_space<vmem>>, vector<75x1682xf32>
    %cst = arith.constant dense<0.000000e+00> : vector<32x1682xf32>
    %2 = tpu.matmul %0, %1, %cst {dimension_numbers = #tpu.dot_dimension_numbers<[1], [0], [0], [1], [0, 0, 1, 1], [], []>} : vector<32x75xf32>, vector<75x1682xf32>, vector<32x1682xf32> -> vector<32x1682xf32>
    %c0_3 = arith.constant 0 : index
    %c0_4 = arith.constant 0 : index
    %3 = vector.load %arg3[%c0_3, %c0_4] : memref<32x1xf32, #tpu.memory_space<vmem>>, vector<32x1xf32>
    %4 = vector.broadcast %3 : vector<32x1xf32> to vector<32x1682xf32>
    %5 = arith.mulf %2, %4 : vector<32x1682xf32>
    %c0_5 = arith.constant 0 : index
    %c0_6 = arith.constant 0 : index
    %6 = vector.load %arg4[%c0_5, %c0_6] : memref<32x1xf32, #tpu.memory_space<vmem>>, vector<32x1xf32>
    %7 = vector.broadcast %6 : vector<32x1xf32> to vector<32x1682xf32>
    %8 = arith.addf %5, %7 : vector<32x1682xf32>
    %c0_7 = arith.constant 0 : index
    %c0_8 = arith.constant 0 : index
    %9 = vector.load %arg5[%c0_7, %c0_8] : memref<32x1682xf32, #tpu.memory_space<vmem>>, vector<32x1682xf32>
    tpu.vector_store %arg5[%c0_7, %c0_8], %8 {strides = array<i32>} : memref<32x1682xf32, #tpu.memory_space<vmem>>, vector<32x1682xf32>,
    return
  }
  func.func @transform_0(%arg0: i32) -> (i32, i32) {
    %c0_i32 = arith.constant 0 : i32
    %c0_i32_0 = arith.constant 0 : i32
    %c0_i32_1 = arith.constant 0 : i32
    return %c0_i32, %c0_i32_0 : i32, i32
  }
  func.func @transform_1(%arg0: i32) -> (i32, i32) {
    %c0_i32 = arith.constant 0 : i32
    %c0_i32_0 = arith.constant 0 : i32
    %c0_i32_1 = arith.constant 0 : i32
    return %c0_i32, %c0_i32_0 : i32, i32
  }
  func.func @transform_2(%arg0: i32) -> (i32, i32) {
    %c0_i32 = arith.constant 0 : i32
    %c0_i32_0 = arith.constant 0 : i32
    %c0_i32_1 = arith.constant 0 : i32
    return %c0_i32, %c0_i32_0 : i32, i32
  }
  func.func @transform_3(%arg0: i32) -> (i32, i32) {
    %c0_i32 = arith.constant 0 : i32
    %c0_i32_0 = arith.constant 0 : i32
    %c0_i32_1 = arith.constant 0 : i32
    return %c0_i32, %c0_i32_0 : i32, i32
  }
  func.func @transform_4(%arg0: i32) -> (i32, i32) {
    %c0_i32 = arith.constant 0 : i32
    %c0_i32_0 = arith.constant 0 : i32
    %c0_i32_1 = arith.constant 0 : i32
    return %c0_i32, %c0_i32_0 : i32, i32
  }
}

module attributes {stable_mosaic.version = 11 : i64} {
  func.func @conv_gemm_bn_kernel(%arg0: i32, %arg1: memref<800x338xf32, #tpu.memory_space<vmem>>, %arg2: memref<64x800xf32, #tpu.memory_space<vmem>>, %arg3: memref<64x1xf32, #tpu.memory_space<vmem>>, %arg4: memref<64x1xf32, #tpu.memory_space<vmem>>, %arg5: memref<64x338xf32, #tpu.memory_space<vmem>>) attributes {dimension_semantics = [#tpu.dimension_semantics<arbitrary>], iteration_bounds = array<i64: 1>, scalar_prefetch = 0 : i64, scratch_operands = 0 : i64, tpu.core_type = #tpu.core_type<tc>, window_params = [{pipeline_mode = #tpu.pipeline_mode<synchronous>, transform_indices = @transform_0, window_bounds = array<i64: 800, 338>}, {pipeline_mode = #tpu.pipeline_mode<synchronous>, transform_indices = @transform_1, window_bounds = array<i64: 64, 800>}, {pipeline_mode = #tpu.pipeline_mode<synchronous>, transform_indices = @transform_2, window_bounds = array<i64: 64, 1>}, {pipeline_mode = #tpu.pipeline_mode<synchronous>, transform_indices = @transform_3, window_bounds = array<i64: 64, 1>}, {pipeline_mode = #tpu.pipeline_mode<synchronous>, transform_indices = @transform_4, window_bounds = array<i64: 64, 338>}]} {
    %c0 = arith.constant 0 : index
    %c0_0 = arith.constant 0 : index
    %0 = vector.load %arg2[%c0, %c0_0] : memref<64x800xf32, #tpu.memory_space<vmem>>, vector<64x800xf32>
    %c0_1 = arith.constant 0 : index
    %c0_2 = arith.constant 0 : index
    %1 = vector.load %arg1[%c0_1, %c0_2] : memref<800x338xf32, #tpu.memory_space<vmem>>, vector<800x338xf32>
    %cst = arith.constant dense<0.000000e+00> : vector<64x338xf32>
    %2 = tpu.matmul %0, %1, %cst {dimension_numbers = #tpu.dot_dimension_numbers<[1], [0], [0], [1], [0, 0, 1, 1], [], []>} : vector<64x800xf32>, vector<800x338xf32>, vector<64x338xf32> -> vector<64x338xf32>
    %c0_3 = arith.constant 0 : index
    %c0_4 = arith.constant 0 : index
    %3 = vector.load %arg3[%c0_3, %c0_4] : memref<64x1xf32, #tpu.memory_space<vmem>>, vector<64x1xf32>
    %4 = vector.broadcast %3 : vector<64x1xf32> to vector<64x338xf32>
    %5 = arith.mulf %2, %4 : vector<64x338xf32>
    %c0_5 = arith.constant 0 : index
    %c0_6 = arith.constant 0 : index
    %6 = vector.load %arg4[%c0_5, %c0_6] : memref<64x1xf32, #tpu.memory_space<vmem>>, vector<64x1xf32>
    %7 = vector.broadcast %6 : vector<64x1xf32> to vector<64x338xf32>
    %8 = arith.addf %5, %7 : vector<64x338xf32>
    %c0_7 = arith.constant 0 : index
    %c0_8 = arith.constant 0 : index
    %9 = vector.load %arg5[%c0_7, %c0_8] : memref<64x338xf32, #tpu.memory_space<vmem>>, vector<64x338xf32>
    tpu.vector_store %arg5[%c0_7, %c0_8], %8 {strides = array<i32>} : memref<64x338xf32, #tpu.memory_space<vmem>>, vector<64x338xf32>,
    return
  }
  func.func @transform_0(%arg0: i32) -> (i32, i32) {
    %c0_i32 = arith.constant 0 : i32
    %c0_i32_0 = arith.constant 0 : i32
    %c0_i32_1 = arith.constant 0 : i32
    return %c0_i32, %c0_i32_0 : i32, i32
  }
  func.func @transform_1(%arg0: i32) -> (i32, i32) {
    %c0_i32 = arith.constant 0 : i32
    %c0_i32_0 = arith.constant 0 : i32
    %c0_i32_1 = arith.constant 0 : i32
    return %c0_i32, %c0_i32_0 : i32, i32
  }
  func.func @transform_2(%arg0: i32) -> (i32, i32) {
    %c0_i32 = arith.constant 0 : i32
    %c0_i32_0 = arith.constant 0 : i32
    %c0_i32_1 = arith.constant 0 : i32
    return %c0_i32, %c0_i32_0 : i32, i32
  }
  func.func @transform_3(%arg0: i32) -> (i32, i32) {
    %c0_i32 = arith.constant 0 : i32
    %c0_i32_0 = arith.constant 0 : i32
    %c0_i32_1 = arith.constant 0 : i32
    return %c0_i32, %c0_i32_0 : i32, i32
  }
  func.func @transform_4(%arg0: i32) -> (i32, i32) {
    %c0_i32 = arith.constant 0 : i32
    %c0_i32_0 = arith.constant 0 : i32
    %c0_i32_1 = arith.constant 0 : i32
    return %c0_i32, %c0_i32_0 : i32, i32
  }
}

module attributes {stable_mosaic.version = 11 : i64} {
  func.func @heads_kernel(%arg0: i32, %arg1: memref<2x5408xf32, #tpu.memory_space<vmem>>, %arg2: memref<2x5408xf32, #tpu.memory_space<vmem>>, %arg3: memref<2x4xf32, #tpu.memory_space<vmem>>, %arg4: memref<5408x128xbf16, #tpu.memory_space<vmem>>, %arg5: memref<1x128xf32, #tpu.memory_space<vmem>>, %arg6: memref<128x4xf32, #tpu.memory_space<vmem>>, %arg7: memref<1x4xf32, #tpu.memory_space<vmem>>, %arg8: memref<5408x128xbf16, #tpu.memory_space<vmem>>, %arg9: memref<1x128xf32, #tpu.memory_space<vmem>>, %arg10: memref<128x1xf32, #tpu.memory_space<vmem>>, %arg11: memref<1x1xf32, #tpu.memory_space<vmem>>, %arg12: memref<2x4xf32, #tpu.memory_space<vmem>>, %arg13: memref<2x4xf32, #tpu.memory_space<vmem>>, %arg14: memref<2x1xf32, #tpu.memory_space<vmem>>) attributes {dimension_semantics = [#tpu.dimension_semantics<arbitrary>], iteration_bounds = array<i64: 1>, scalar_prefetch = 0 : i64, scratch_operands = 0 : i64, tpu.core_type = #tpu.core_type<tc>, window_params = [{pipeline_mode = #tpu.pipeline_mode<synchronous>, transform_indices = @transform_0, window_bounds = array<i64: 2, 5408>}, {pipeline_mode = #tpu.pipeline_mode<synchronous>, transform_indices = @transform_1, window_bounds = array<i64: 2, 5408>}, {pipeline_mode = #tpu.pipeline_mode<synchronous>, transform_indices = @transform_2, window_bounds = array<i64: 2, 4>}, {pipeline_mode = #tpu.pipeline_mode<synchronous>, transform_indices = @transform_3, window_bounds = array<i64: 5408, 128>}, {pipeline_mode = #tpu.pipeline_mode<synchronous>, transform_indices = @transform_4, window_bounds = array<i64: 1, 128>}, {pipeline_mode = #tpu.pipeline_mode<synchronous>, transform_indices = @transform_5, window_bounds = array<i64: 128, 4>}, {pipeline_mode = #tpu.pipeline_mode<synchronous>, transform_indices = @transform_6, window_bounds = array<i64: 1, 4>}, {pipeline_mode = #tpu.pipeline_mode<synchronous>, transform_indices = @transform_7, window_bounds = array<i64: 5408, 128>}, {pipeline_mode = #tpu.pipeline_mode<synchronous>, transform_indices = @transform_8, window_bounds = array<i64: 1, 128>}, {pipeline_mode = #tpu.pipeline_mode<synchronous>, transform_indices = @transform_9, window_bounds = array<i64: 128, 1>}, {pipeline_mode = #tpu.pipeline_mode<synchronous>, transform_indices = @transform_10, window_bounds = array<i64: 1, 1>}, {pipeline_mode = #tpu.pipeline_mode<synchronous>, transform_indices = @transform_11, window_bounds = array<i64: 2, 4>}, {pipeline_mode = #tpu.pipeline_mode<synchronous>, transform_indices = @transform_12, window_bounds = array<i64: 2, 4>}, {pipeline_mode = #tpu.pipeline_mode<synchronous>, transform_indices = @transform_13, window_bounds = array<i64: 2, 1>}]} {
    %c0 = arith.constant 0 : index
    %c0_0 = arith.constant 0 : index
    %0 = vector.load %arg1[%c0, %c0_0] : memref<2x5408xf32, #tpu.memory_space<vmem>>, vector<2x5408xf32>
    %1 = arith.truncf %0 : vector<2x5408xf32> to vector<2x5408xbf16>
    %c0_1 = arith.constant 0 : index
    %c0_2 = arith.constant 0 : index
    %2 = vector.load %arg4[%c0_1, %c0_2] : memref<5408x128xbf16, #tpu.memory_space<vmem>>, vector<5408x128xbf16>
    %cst = arith.constant dense<0.000000e+00> : vector<2x128xf32>
    %3 = tpu.matmul %1, %2, %cst {dimension_numbers = #tpu.dot_dimension_numbers<[1], [0], [0], [1], [0, 0, 1, 1], [], []>} : vector<2x5408xbf16>, vector<5408x128xbf16>, vector<2x128xf32> -> vector<2x128xf32>
    %c0_3 = arith.constant 0 : index
    %c0_4 = arith.constant 0 : index
    %4 = vector.load %arg5[%c0_3, %c0_4] : memref<1x128xf32, #tpu.memory_space<vmem>>, vector<1x128xf32>
    %5 = vector.broadcast %4 : vector<1x128xf32> to vector<2x128xf32>
    %6 = arith.addf %3, %5 : vector<2x128xf32>
    %7 = math.tanh %6 : vector<2x128xf32>
    %c0_5 = arith.constant 0 : index
    %c0_6 = arith.constant 0 : index
    %8 = vector.load %arg6[%c0_5, %c0_6] : memref<128x4xf32, #tpu.memory_space<vmem>>, vector<128x4xf32>
    %cst_7 = arith.constant dense<0.000000e+00> : vector<2x4xf32>
    %9 = tpu.matmul %7, %8, %cst_7 {dimension_numbers = #tpu.dot_dimension_numbers<[1], [0], [0], [1], [0, 0, 1, 1], [], []>} : vector<2x128xf32>, vector<128x4xf32>, vector<2x4xf32> -> vector<2x4xf32>
    %c0_8 = arith.constant 0 : index
    %c0_9 = arith.constant 0 : index
    %10 = vector.load %arg7[%c0_8, %c0_9] : memref<1x4xf32, #tpu.memory_space<vmem>>, vector<1x4xf32>
    %11 = vector.broadcast %10 : vector<1x4xf32> to vector<2x4xf32>
    %12 = arith.addf %9, %11 : vector<2x4xf32>
    %c0_10 = arith.constant 0 : index
    %c0_11 = arith.constant 0 : index
    %13 = vector.load %arg3[%c0_10, %c0_11] : memref<2x4xf32, #tpu.memory_space<vmem>>, vector<2x4xf32>
    %14 = arith.subf %13, %12 : vector<2x4xf32>
    %15 = arith.mulf %14, %14 : vector<2x4xf32>
    %cst_12 = arith.constant 0.000000e+00 : f32
    %16 = vector.broadcast %cst_12 : f32 to vector<2x4xf32>
    %17 = arith.subf %16, %15 : vector<2x4xf32>
    %cst_13 = arith.constant 5.000000e+01 : f32
    %18 = vector.broadcast %cst_13 : f32 to vector<2x4xf32>
    %19 = arith.mulf %17, %18 : vector<2x4xf32>
    %cst_14 = arith.constant -1.38364661 : f32
    %20 = vector.broadcast %cst_14 : f32 to vector<2x4xf32>
    %21 = arith.subf %19, %20 : vector<2x4xf32>
    %c0_15 = arith.constant 0 : index
    %c0_16 = arith.constant 0 : index
    %22 = vector.load %arg12[%c0_15, %c0_16] : memref<2x4xf32, #tpu.memory_space<vmem>>, vector<2x4xf32>
    tpu.vector_store %arg12[%c0_15, %c0_16], %21 {strides = array<i32>} : memref<2x4xf32, #tpu.memory_space<vmem>>, vector<2x4xf32>,
    %cst_17 = arith.constant -0.883646547 : f32
    %23 = vector.broadcast %cst_17 : f32 to vector<2x4xf32>
    %c0_18 = arith.constant 0 : index
    %c0_19 = arith.constant 0 : index
    %24 = vector.load %arg13[%c0_18, %c0_19] : memref<2x4xf32, #tpu.memory_space<vmem>>, vector<2x4xf32>
    tpu.vector_store %arg13[%c0_18, %c0_19], %23 {strides = array<i32>} : memref<2x4xf32, #tpu.memory_space<vmem>>, vector<2x4xf32>,
    %c0_20 = arith.constant 0 : index
    %c0_21 = arith.constant 0 : index
    %25 = vector.load %arg2[%c0_20, %c0_21] : memref<2x5408xf32, #tpu.memory_space<vmem>>, vector<2x5408xf32>
    %26 = arith.truncf %25 : vector<2x5408xf32> to vector<2x5408xbf16>
    %c0_22 = arith.constant 0 : index
    %c0_23 = arith.constant 0 : index
    %27 = vector.load %arg8[%c0_22, %c0_23] : memref<5408x128xbf16, #tpu.memory_space<vmem>>, vector<5408x128xbf16>
    %cst_24 = arith.constant dense<0.000000e+00> : vector<2x128xf32>
    %28 = tpu.matmul %26, %27, %cst_24 {dimension_numbers = #tpu.dot_dimension_numbers<[1], [0], [0], [1], [0, 0, 1, 1], [], []>} : vector<2x5408xbf16>, vector<5408x128xbf16>, vector<2x128xf32> -> vector<2x128xf32>
    %c0_25 = arith.constant 0 : index
    %c0_26 = arith.constant 0 : index
    %29 = vector.load %arg9[%c0_25, %c0_26] : memref<1x128xf32, #tpu.memory_space<vmem>>, vector<1x128xf32>
    %30 = vector.broadcast %29 : vector<1x128xf32> to vector<2x128xf32>
    %31 = arith.addf %28, %30 : vector<2x128xf32>
    %32 = math.tanh %31 : vector<2x128xf32>
    %c0_27 = arith.constant 0 : index
    %c0_28 = arith.constant 0 : index
    %33 = vector.load %arg10[%c0_27, %c0_28] : memref<128x1xf32, #tpu.memory_space<vmem>>, vector<128x1xf32>
    %cst_29 = arith.constant dense<0.000000e+00> : vector<2x1xf32>
    %34 = tpu.matmul %32, %33, %cst_29 {dimension_numbers = #tpu.dot_dimension_numbers<[1], [0], [0], [1], [0, 0, 1, 1], [], []>} : vector<2x128xf32>, vector<128x1xf32>, vector<2x1xf32> -> vector<2x1xf32>
    %c0_30 = arith.constant 0 : index
    %c0_31 = arith.constant 0 : index
    %35 = vector.load %arg11[%c0_30, %c0_31] : memref<1x1xf32, #tpu.memory_space<vmem>>, vector<1x1xf32>
    %36 = vector.broadcast %35 : vector<1x1xf32> to vector<2x1xf32>
    %37 = arith.addf %34, %36 : vector<2x1xf32>
    %c0_32 = arith.constant 0 : index
    %c0_33 = arith.constant 0 : index
    %38 = vector.load %arg14[%c0_32, %c0_33] : memref<2x1xf32, #tpu.memory_space<vmem>>, vector<2x1xf32>
    tpu.vector_store %arg14[%c0_32, %c0_33], %37 {strides = array<i32>} : memref<2x1xf32, #tpu.memory_space<vmem>>, vector<2x1xf32>,
    return
  }
  func.func @transform_0(%arg0: i32) -> (i32, i32) {
    %c0_i32 = arith.constant 0 : i32
    %c0_i32_0 = arith.constant 0 : i32
    %c0_i32_1 = arith.constant 0 : i32
    return %c0_i32, %c0_i32_0 : i32, i32
  }
  func.func @transform_1(%arg0: i32) -> (i32, i32) {
    %c0_i32 = arith.constant 0 : i32
    %c0_i32_0 = arith.constant 0 : i32
    %c0_i32_1 = arith.constant 0 : i32
    return %c0_i32, %c0_i32_0 : i32, i32
  }
  func.func @transform_2(%arg0: i32) -> (i32, i32) {
    %c0_i32 = arith.constant 0 : i32
    %c0_i32_0 = arith.constant 0 : i32
    %c0_i32_1 = arith.constant 0 : i32
    return %c0_i32, %c0_i32_0 : i32, i32
  }
  func.func @transform_3(%arg0: i32) -> (i32, i32) {
    %c0_i32 = arith.constant 0 : i32
    %c0_i32_0 = arith.constant 0 : i32
    %c0_i32_1 = arith.constant 0 : i32
    return %c0_i32, %c0_i32_0 : i32, i32
  }
  func.func @transform_4(%arg0: i32) -> (i32, i32) {
    %c0_i32 = arith.constant 0 : i32
    %c0_i32_0 = arith.constant 0 : i32
    %c0_i32_1 = arith.constant 0 : i32
    return %c0_i32, %c0_i32_0 : i32, i32
  }
  func.func @transform_5(%arg0: i32) -> (i32, i32) {
    %c0_i32 = arith.constant 0 : i32
    %c0_i32_0 = arith.constant 0 : i32
    %c0_i32_1 = arith.constant 0 : i32
    return %c0_i32, %c0_i32_0 : i32, i32
  }
  func.func @transform_6(%arg0: i32) -> (i32, i32) {
    %c0_i32 = arith.constant 0 : i32
    %c0_i32_0 = arith.constant 0 : i32
    %c0_i32_1 = arith.constant 0 : i32
    return %c0_i32, %c0_i32_0 : i32, i32
  }
  func.func @transform_7(%arg0: i32) -> (i32, i32) {
    %c0_i32 = arith.constant 0 : i32
    %c0_i32_0 = arith.constant 0 : i32
    %c0_i32_1 = arith.constant 0 : i32
    return %c0_i32, %c0_i32_0 : i32, i32
  }
  func.func @transform_8(%arg0: i32) -> (i32, i32) {
    %c0_i32 = arith.constant 0 : i32
    %c0_i32_0 = arith.constant 0 : i32
    %c0_i32_1 = arith.constant 0 : i32
    return %c0_i32, %c0_i32_0 : i32, i32
  }
  func.func @transform_9(%arg0: i32) -> (i32, i32) {
    %c0_i32 = arith.constant 0 : i32
    %c0_i32_0 = arith.constant 0 : i32
    %c0_i32_1 = arith.constant 0 : i32
    return %c0_i32, %c0_i32_0 : i32, i32
  }
  func.func @transform_10(%arg0: i32) -> (i32, i32) {
    %c0_i32 = arith.constant 0 : i32
    %c0_i32_0 = arith.constant 0 : i32
    %c0_i32_1 = arith.constant 0 : i32
    return %c0_i32, %c0_i32_0 : i32, i32
  }
  func.func @transform_11(%arg0: i32) -> (i32, i32) {
    %c0_i32 = arith.constant 0 : i32
    %c0_i32_0 = arith.constant 0 : i32
    %c0_i32_1 = arith.constant 0 : i32
    return %c0_i32, %c0_i32_0 : i32, i32
  }
  func.func @transform_12(%arg0: i32) -> (i32, i32) {
    %c0_i32 = arith.constant 0 : i32
    %c0_i32_0 = arith.constant 0 : i32
    %c0_i32_1 = arith.constant 0 : i32
    return %c0_i32, %c0_i32_0 : i32, i32
  }
  func.func @transform_13(%arg0: i32) -> (i32, i32) {
    %c0_i32 = arith.constant 0 : i32
    %c0_i32_0 = arith.constant 0 : i32
    %c0_i32_1 = arith.constant 0 : i32
    return %c0_i32, %c0_i32_0 : i32, i32
  }
}

</mosaic_0001>

<llo_original>
// kernel: evaluate.3
$region0: #{evaluate.3}
  #allocation0 [shape = 'u32[]', space=smem, size = 0x4, offset = 0x4, fixed_abs, tag = 'smem constant byte address 0x4 - core index']
  #allocation1 [shape = 'u32[144,128]{1,0:T(1,128)}', space=vmem, size = 0x12000, scoped, tag = 'internal scratch']
  %s0 = inlined_call_operand.vmem [shape: f32[75,1682], index: 0, kind: input, shape index: {}]
  %s1 = inlined_call_operand.vmem [shape: f32[32,75], index: 1, kind: input, shape index: {}]
  %s2 = inlined_call_operand.vmem [shape: f32[32,1], index: 2, kind: input, shape index: {}]
  %s3 = inlined_call_operand.vmem [shape: f32[32,1], index: 3, kind: input, shape index: {}]
  %s4 = inlined_call_operand.vmem [shape: f32[32,1682], index: 4, kind: output, shape index: {}]
  %s5 = sld [smem:[#allocation0]]
  $region26: #{evaluate.3} parent=0
    _
  %s7 = ssub.s32 1, %s5
  %s8 = scalar_select 0, %s7, %s5
  // Predicated region
  $region2: #{evaluate.3} parent=0 // pred_check
    _
  $region3: #{evaluate.3} parent=0 // pred_check_branch
    %10 = sbr.rel (0) target = $region5
  $region4: #{evaluate.3} parent=0 // pred_region
    _
  $region5: #{evaluate.3} parent=0 // pred_fallthru
    _
  // Predicated region
  $region6: #{evaluate.3} parent=0 // pred_check
    _
  $region7: #{evaluate.3} parent=0 // pred_check_branch
    %12 = sbr.rel (0) target = $region9
  $region8: #{evaluate.3} parent=0 // pred_region
    _
  $region9: #{evaluate.3} parent=0 // pred_fallthru
    _
  // Predicated region
  $region10: #{evaluate.3} parent=0 // pred_check
    _
  $region11: #{evaluate.3} parent=0 // pred_check_branch
    %14 = sbr.rel (0) target = $region13
  $region12: #{evaluate.3} parent=0 // pred_region
    _
  $region13: #{evaluate.3} parent=0 // pred_fallthru
    _
  // Predicated region
  $region14: #{evaluate.3} parent=0 // pred_check
    _
  $region15: #{evaluate.3} parent=0 // pred_check_branch
    %16 = sbr.rel (0) target = $region17
  $region16: #{evaluate.3} parent=0 // pred_region
    _
  $region17: #{evaluate.3} parent=0 // pred_fallthru
    _
  %v17 = vld [vmem:[%s1] sm:$0xff]
  %v18 = vld [vmem:[%s1 + $0x8] sm:$0xff]
  %v19 = vld [vmem:[%s1 + $0x10] sm:$0xff]
  %v20 = vld [vmem:[%s1 + $0x18] sm:$0xff]
  %v21 = vld [vmem:[%s0] sm:$0xff]
  %v22 = vld [vmem:[%s0 + $0x8] sm:$0xff]
  %v23 = vld [vmem:[%s0 + $0x10] sm:$0xff]
  %v24 = vld [vmem:[%s0 + $0x18] sm:$0xff]
  %v25 = vld [vmem:[%s0 + $0x20] sm:$0xff]
  %v26 = vld [vmem:[%s0 + $0x28] sm:$0xff]
  %v27 = vld [vmem:[%s0 + $0x30] sm:$0xff]
  %v28 = vld [vmem:[%s0 + $0x38] sm:$0xff]
  %v29 = vld [vmem:[%s0 + $0x40] sm:$0xff]
  %v30 = vld [vmem:[%s0 + $0x48] sm:$0xff]
  %v31 = vld [vmem:[%s0 + $0x50] sm:$0xff]
  %v32 = vld [vmem:[%s0 + $0x58] sm:$0xff]
  %v33 = vld [vmem:[%s0 + $0x60] sm:$0xff]
  %v34 = vld [vmem:[%s0 + $0x68] sm:$0xff]
  %v35 = vld [vmem:[%s0 + $0x70] sm:$0xff]
  %v36 = vld [vmem:[%s0 + $0x78] sm:$0xff]
  %v37 = vld [vmem:[%s0 + $0x80] sm:$0xff]
  %v38 = vld [vmem:[%s0 + $0x88] sm:$0xff]
  %v39 = vld [vmem:[%s0 + $0x90] sm:$0xff]
  %v40 = vld [vmem:[%s0 + $0x98] sm:$0xff]
  %v41 = vld [vmem:[%s0 + $0xa0] sm:$0xff]
  %v42 = vld [vmem:[%s0 + $0xa8] sm:$0xff]
  %v43 = vld [vmem:[%s0 + $0xb0] sm:$0xff]
  %v44 = vld [vmem:[%s0 + $0xb8] sm:$0xff]
  %v45 = vld [vmem:[%s0 + $0xc0] sm:$0xff]
  %v46 = vld [vmem:[%s0 + $0xc8] sm:$0xff]
  %v47 = vld [vmem:[%s0 + $0xd0] sm:$0xff]
  %v48 = vld [vmem:[%s0 + $0xd8] sm:$0xff]
  %v49 = vld [vmem:[%s0 + $0xe0] sm:$0xff]
  %v50 = vld [vmem:[%s0 + $0xe8] sm:$0xff]
  %v51 = vld [vmem:[%s0 + $0xf0] sm:$0xff]
  %v52 = vld [vmem:[%s0 + $0xf8] sm:$0xff]
  %v53 = vld [vmem:[%s0 + $0x100] sm:$0xff]
  %v54 = vld [vmem:[%s0 + $0x108] sm:$0xff]
  %v55 = vld [vmem:[%s0 + $0x110] sm:$0xff]
  %v56 = vld [vmem:[%s0 + $0x118] sm:$0xff]
  %v57 = vld [vmem:[%s0 + $0x120] sm:$0xff]
  %v58 = vld [vmem:[%s0 + $0x128] sm:$0xff]
  %v59 = vld [vmem:[%s0 + $0x130] sm:$0xff]
  %v60 = vld [vmem:[%s0 + $0x138] sm:$0xff]
  %v61 = vld [vmem:[%s0 + $0x140] sm:$0xff]
  %v62 = vld [vmem:[%s0 + $0x148] sm:$0xff]
  %v63 = vld [vmem:[%s0 + $0x150] sm:$0xff]
  %v64 = vld [vmem:[%s0 + $0x158] sm:$0xff]
  %v65 = vld [vmem:[%s0 + $0x160] sm:$0xff]
  %v66 = vld [vmem:[%s0 + $0x168] sm:$0xff]
  %v67 = vld [vmem:[%s0 + $0x170] sm:$0xff]
  %v68 = vld [vmem:[%s0 + $0x178] sm:$0xff]
  %v69 = vld [vmem:[%s0 + $0x180] sm:$0xff]
  %v70 = vld [vmem:[%s0 + $0x188] sm:$0xff]
  %v71 = vld [vmem:[%s0 + $0x190] sm:$0xff]
  %v72 = vld [vmem:[%s0 + $0x198] sm:$0xff]
  %v73 = vld [vmem:[%s0 + $0x1a0] sm:$0xff]
  %v74 = vld [vmem:[%s0 + $0x1a8] sm:$0xff]
  %v75 = vld [vmem:[%s0 + $0x1b0] sm:$0xff]
  %v76 = vld [vmem:[%s0 + $0x1b8] sm:$0xff]
  %v77 = vld [vmem:[%s0 + $0x1c0] sm:$0xff]
  %v78 = vld [vmem:[%s0 + $0x1c8] sm:$0xff]
  %v79 = vld [vmem:[%s0 + $0x1d0] sm:$0xff]
  %v80 = vld [vmem:[%s0 + $0x1d8] sm:$0xff]
  %v81 = vld [vmem:[%s0 + $0x1e0] sm:$0xff]
  %v82 = vld [vmem:[%s0 + $0x1e8] sm:$0xff]
  %v83 = vld [vmem:[%s0 + $0x1f0] sm:$0xff]
  %v84 = vld [vmem:[%s0 + $0x1f8] sm:$0xff]
  %v85 = vld [vmem:[%s0 + $0x200] sm:$0xff]
  %v86 = vld [vmem:[%s0 + $0x208] sm:$0xff]
  %v87 = vld [vmem:[%s0 + $0x210] sm:$0xff]
  %v88 = vld [vmem:[%s0 + $0x218] sm:$0xff]
  %v89 = vld [vmem:[%s0 + $0x220] sm:$0xff]
  %v90 = vld [vmem:[%s0 + $0x228] sm:$0xff]
  %v91 = vld [vmem:[%s0 + $0x230] sm:$0xff]
  %v92 = vld [vmem:[%s0 + $0x238] sm:$0xff]
  %v93 = vld [vmem:[%s0 + $0x240] sm:$0xff]
  %v94 = vld [vmem:[%s0 + $0x248] sm:$0xff]
  %v95 = vld [vmem:[%s0 + $0x250] sm:$0xff]
  %v96 = vld [vmem:[%s0 + $0x258] sm:$0xff]
  %v97 = vld [vmem:[%s0 + $0x260] sm:$0xff]
  %v98 = vld [vmem:[%s0 + $0x268] sm:$0xff]
  %v99 = vld [vmem:[%s0 + $0x270] sm:$0xff]
  %v100 = vld [vmem:[%s0 + $0x278] sm:$0xff]
  %v101 = vld [vmem:[%s0 + $0x280] sm:$0xff]
  %v102 = vld [vmem:[%s0 + $0x288] sm:$0xff]
  %v103 = vld [vmem:[%s0 + $0x290] sm:$0xff]
  %v104 = vld [vmem:[%s0 + $0x298] sm:$0xff]
  %v105 = vld [vmem:[%s0 + $0x2a0] sm:$0xff]
  %v106 = vld [vmem:[%s0 + $0x2a8] sm:$0xff]
  %v107 = vld [vmem:[%s0 + $0x2b0] sm:$0xff]
  %v108 = vld [vmem:[%s0 + $0x2b8] sm:$0xff]
  %v109 = vld [vmem:[%s0 + $0x2c0] sm:$0xff]
  %v110 = vld [vmem:[%s0 + $0x2c8] sm:$0xff]
  %v111 = vld [vmem:[%s0 + $0x2d0] sm:$0xff]
  %v112 = vld [vmem:[%s0 + $0x2d8] sm:$0xff]
  %v113 = vld [vmem:[%s0 + $0x2e0] sm:$0xff]
  %v114 = vld [vmem:[%s0 + $0x2e8] sm:$0xff]
  %v115 = vld [vmem:[%s0 + $0x2f0] sm:$0xff]
  %v116 = vld [vmem:[%s0 + $0x2f8] sm:$0xff]
  %v117 = vld [vmem:[%s0 + $0x300] sm:$0xff]
  %v118 = vld [vmem:[%s0 + $0x308] sm:$0xff]
  %v119 = vld [vmem:[%s0 + $0x310] sm:$0xff]
  %v120 = vld [vmem:[%s0 + $0x318] sm:$0xff]
  %v121 = vld [vmem:[%s0 + $0x320] sm:$0xff]
  %v122 = vld [vmem:[%s0 + $0x328] sm:$0xff]
  %v123 = vld [vmem:[%s0 + $0x330] sm:$0xff]
  %v124 = vld [vmem:[%s0 + $0x338] sm:$0xff]
  %v125 = vld [vmem:[%s0 + $0x340] sm:$0xff]
  %v126 = vld [vmem:[%s0 + $0x348] sm:$0xff]
  %v127 = vld [vmem:[%s0 + $0x350] sm:$0xff]
  %v128 = vld [vmem:[%s0 + $0x358] sm:$0xff]
  %v129 = vld [vmem:[%s0 + $0x360] sm:$0xff]
  %v130 = vld [vmem:[%s0 + $0x368] sm:$0xff]
  %v131 = vld [vmem:[%s0 + $0x370] sm:$0xff]
  %v132 = vld [vmem:[%s0 + $0x378] sm:$0xff]
  %v133 = vld [vmem:[%s0 + $0x380] sm:$0xff]
  %v134 = vld [vmem:[%s0 + $0x388] sm:$0xff]
  %v135 = vld [vmem:[%s0 + $0x390] sm:$0xff]
  %v136 = vld [vmem:[%s0 + $0x398] sm:$0xff]
  %v137 = vld [vmem:[%s0 + $0x3a0] sm:$0xff]
  %v138 = vld [vmem:[%s0 + $0x3a8] sm:$0xff]
  %v139 = vld [vmem:[%s0 + $0x3b0] sm:$0xff]
  %v140 = vld [vmem:[%s0 + $0x3b8] sm:$0xff]
  %v141 = vld [vmem:[%s0 + $0x3c0] sm:$0xff]
  %v142 = vld [vmem:[%s0 + $0x3c8] sm:$0xff]
  %v143 = vld [vmem:[%s0 + $0x3d0] sm:$0xff]
  %v144 = vld [vmem:[%s0 + $0x3d8] sm:$0xff]
  %v145 = vld [vmem:[%s0 + $0x3e0] sm:$0xff]
  %v146 = vld [vmem:[%s0 + $0x3e8] sm:$0xff]
  %v147 = vld [vmem:[%s0 + $0x3f0] sm:$0x7]
  %v148 = vld [vmem:[%s0 + $0x3f8] sm:$0x7]
  %v149 = vld [vmem:[%s0 + $0x400] sm:$0x7]
  %v150 = vld [vmem:[%s0 + $0x408] sm:$0x7]
  %v151 = vld [vmem:[%s0 + $0x410] sm:$0x7]
  %v152 = vld [vmem:[%s0 + $0x418] sm:$0x7]
  %v153 = vld [vmem:[%s0 + $0x420] sm:$0x7]
  %v154 = vld [vmem:[%s0 + $0x428] sm:$0x7]
  %v155 = vld [vmem:[%s0 + $0x430] sm:$0x7]
  %v156 = vld [vmem:[%s0 + $0x438] sm:$0x7]
  %v157 = vld [vmem:[%s0 + $0x440] sm:$0x7]
  %v158 = vld [vmem:[%s0 + $0x448] sm:$0x7]
  %v159 = vld [vmem:[%s0 + $0x450] sm:$0x7]
  %v160 = vld [vmem:[%s0 + $0x458] sm:$0x7]
  %vm161 = vcmask 613376
  %v163 = vsel %vm161, %v17, 0
  %v166 = vsel %vm161, %v18, 0
  %v169 = vsel %vm161, %v19, 0
  %v172 = vsel %vm161, %v20, 0
  %vm174 = vcmask 1042432
  %v176 = vsel %vm174, %v147, 0
  %v179 = vsel %vm174, %v148, 0
  %v182 = vsel %vm174, %v149, 0
  %v185 = vsel %vm174, %v150, 0
  %v188 = vsel %vm174, %v151, 0
  %v191 = vsel %vm174, %v152, 0
  %v194 = vsel %vm174, %v153, 0
  %v197 = vsel %vm174, %v154, 0
  %v200 = vsel %vm174, %v155, 0
  %v203 = vsel %vm174, %v156, 0
  %v206 = vsel %vm174, %v157, 0
  %v209 = vsel %vm174, %v158, 0
  %v212 = vsel %vm174, %v159, 0
  %v215 = vsel %vm174, %v160, 0
  %217 = vmatprep.subr.mxu0 %v22
  %218 = vmatpush1.msra.mxu0 %v21
  %219 = vmatprep.subr.mxu0 %v36
  %220 = vmatpush1.msra.mxu0 %v35
  %221 = vmatprep.subr.mxu0 %v50
  %222 = vmatpush1.msra.mxu0 %v49
  %223 = vmatprep.subr.mxu0 %v64
  %224 = vmatpush1.msra.mxu0 %v63
  %225 = vmatprep.subr.mxu0 %v78
  %226 = vmatpush1.msra.mxu0 %v77
  %227 = vmatprep.subr.mxu0 %v92
  %228 = vmatpush1.msra.mxu0 %v91
  %229 = vmatprep.subr.mxu0 %v106
  %230 = vmatpush1.msra.mxu0 %v105
  %231 = vmatprep.subr.mxu0 %v120
  %232 = vmatpush1.msra.mxu0 %v119
  %233 = vmatprep.subr.mxu0 %v134
  %234 = vmatpush1.msra.mxu0 %v133
  %235 = vmatprep.subr.mxu0 %v179
  %236 = vmatpush1.msra.mxu0 %v176
  %237 = vmatprep.subr.mxu0 0.0
  %238 = vmatpush1.msra.mxu0 0.0
  %239 = vmatprep.subr.mxu0 0.0
  %240 = vmatpush1.msra.mxu0 0.0
  %241 = vmatprep.subr.mxu0 0.0
  %242 = vmatpush1.msra.mxu0 0.0
  %243 = vmatprep.subr.mxu0 0.0
  %244 = vmatpush1.msra.mxu0 0.0
  %245 = vmatprep.subr.mxu0 0.0
  %246 = vmatpush1.msra.mxu0 0.0
  %247 = vmatprep.subr.mxu0 0.0
  %248 = vmatpush1.msra.mxu0 0.0
  %249 = vmatprep.subr.mxu0 0.0
  %250 = vmatpush1.msra.mxu0 0.0
  %251 = vmatprep.subr.mxu0 0.0
  %252 = vmatpush1.msra.mxu0 0.0
  %253 = vmatprep.subr.mxu0 0.0
  %254 = vmatpush1.msra.mxu0 0.0
  %255 = vmatprep.subr.mxu0 0.0
  %256 = vmatpush1.msra.mxu0 0.0
  %257 = vmatprep.subr.mxu0 0.0
  %258 = vmatpush1.msra.mxu0 0.0
  %259 = vmatprep.subr.mxu0 0.0
  %260 = vmatpush1.msra.mxu0 0.0
  %261 = vmatprep.subr.mxu0 0.0
  %262 = vmatpush1.msra.mxu0 0.0
  %263 = vmatprep.subr.mxu0 0.0
  %264 = vmatpush1.msra.mxu0 0.0
  %265 = vmatprep.subr.mxu0 0.0
  %266 = vmatpush1.msra.mxu0 0.0
  %267 = vmatprep.subr.mxu0 0.0
  %268 = vmatpush1.msra.mxu0 0.0
  %269 = vmatprep.subr.mxu0 0.0
  %270 = vmatpush1.msra.mxu0 0.0
  %271 = vmatprep.subr.mxu0 0.0
  %272 = vmatpush1.msra.mxu0 0.0
  %273 = vmatprep.subr.mxu0 0.0
  %274 = vmatpush1.msra.mxu0 0.0
  %275 = vmatprep.subr.mxu0 0.0
  %276 = vmatpush1.msra.mxu0 0.0
  %277 = vmatprep.subr.mxu0 0.0
  %278 = vmatpush1.msra.mxu0 0.0
  %279 = vmatprep.subr.mxu0 0.0
  %280 = vmatpush1.msra.mxu0 0.0
  %281 = vmatprep.mubr.f32.mxu0 0.0
  %282 = vmatmul.mubr.f32.gmra.mrb[0].mxu0 %v163
  %v283 = vpop.f32.mrb[0].mxu0
  %v284 = vadd.f32 0.0, %v283
  %v285 = vpop.f32.mrb[0].mxu0
  %v286 = vadd.f32 0.0, %v285
  %287 = vmatprep.mubr.f32.mxu0 0.0
  %288 = vmatmul.mubr.f32.gmra.mrb[0].mxu0 %v166
  %v289 = vpop.f32.mrb[0].mxu0
  %v290 = vadd.f32 0.0, %v289
  %v291 = vpop.f32.mrb[0].mxu0
  %v292 = vadd.f32 0.0, %v291
  %293 = vmatprep.mubr.f32.mxu0 0.0
  %294 = vmatmul.mubr.f32.gmra.mrb[0].mxu0 %v169
  %v295 = vpop.f32.mrb[0].mxu0
  %v296 = vadd.f32 0.0, %v295
  %v297 = vpop.f32.mrb[0].mxu0
  %v298 = vadd.f32 0.0, %v297
  %299 = vmatprep.mubr.f32.mxu0 0.0
  %300 = vmatmul.mubr.f32.gmra.mrb[0].mxu0 %v172
  %v301 = vpop.f32.mrb[0].mxu0
  %v302 = vadd.f32 0.0, %v301
  %v303 = vpop.f32.mrb[0].mxu0
  %v304 = vadd.f32 0.0, %v303
  %305 = vdwg.mxu0
  %306 = vmatprep.subr.mxu0 %v24
  %307 = vmatpush1.msra.mxu0 %v23
  %308 = vmatprep.subr.mxu0 %v38
  %309 = vmatpush1.msra.mxu0 %v37
  %310 = vmatprep.subr.mxu0 %v52
  %311 = vmatpush1.msra.mxu0 %v51
  %312 = vmatprep.subr.mxu0 %v66
  %313 = vmatpush1.msra.mxu0 %v65
  %314 = vmatprep.subr.mxu0 %v80
  %315 = vmatpush1.msra.mxu0 %v79
  %316 = vmatprep.subr.mxu0 %v94
  %317 = vmatpush1.msra.mxu0 %v93
  %318 = vmatprep.subr.mxu0 %v108
  %319 = vmatpush1.msra.mxu0 %v107
  %320 = vmatprep.subr.mxu0 %v122
  %321 = vmatpush1.msra.mxu0 %v121
  %322 = vmatprep.subr.mxu0 %v136
  %323 = vmatpush1.msra.mxu0 %v135
  %324 = vmatprep.subr.mxu0 %v185
  %325 = vmatpush1.msra.mxu0 %v182
  %326 = vmatprep.subr.mxu0 0.0
  %327 = vmatpush1.msra.mxu0 0.0
  %328 = vmatprep.subr.mxu0 0.0
  %329 = vmatpush1.msra.mxu0 0.0
  %330 = vmatprep.subr.mxu0 0.0
  %331 = vmatpush1.msra.mxu0 0.0
  %332 = vmatprep.subr.mxu0 0.0
  %333 = vmatpush1.msra.mxu0 0.0
  %334 = vmatprep.subr.mxu0 0.0
  %335 = vmatpush1.msra.mxu0 0.0
  %336 = vmatprep.subr.mxu0 0.0
  %337 = vmatpush1.msra.mxu0 0.0
  %338 = vmatprep.subr.mxu0 0.0
  %339 = vmatpush1.msra.mxu0 0.0
  %340 = vmatprep.subr.mxu0 0.0
  %341 = vmatpush1.msra.mxu0 0.0
  %342 = vmatprep.subr.mxu0 0.0
  %343 = vmatpush1.msra.mxu0 0.0
  %344 = vmatprep.subr.mxu0 0.0
  %345 = vmatpush1.msra.mxu0 0.0
  %346 = vmatprep.subr.mxu0 0.0
  %347 = vmatpush1.msra.mxu0 0.0
  %348 = vmatprep.subr.mxu0 0.0
  %349 = vmatpush1.msra.mxu0 0.0
  %350 = vmatprep.subr.mxu0 0.0
  %351 = vmatpush1.msra.mxu0 0.0
  %352 = vmatprep.subr.mxu0 0.0
  %353 = vmatpush1.msra.mxu0 0.0
  %354 = vmatprep.subr.mxu0 0.0
  %355 = vmatpush1.msra.mxu0 0.0
  %356 = vmatprep.subr.mxu0 0.0
  %357 = vmatpush1.msra.mxu0 0.0
  %358 = vmatprep.subr.mxu0 0.0
  %359 = vmatpush1.msra.mxu0 0.0
  %360 = vmatprep.subr.mxu0 0.0
  %361 = vmatpush1.msra.mxu0 0.0
  %362 = vmatprep.subr.mxu0 0.0
  %363 = vmatpush1.msra.mxu0 0.0
  %364 = vmatprep.subr.mxu0 0.0
  %365 = vmatpush1.msra.mxu0 0.0
  %366 = vmatprep.subr.mxu0 0.0
  %367 = vmatpush1.msra.mxu0 0.0
  %368 = vmatprep.subr.mxu0 0.0
  %369 = vmatpush1.msra.mxu0 0.0
  %370 = vmatprep.mubr.f32.mxu0 0.0
  %371 = vmatmul.mubr.f32.gmra.mrb[0].mxu0 %v163
  %v372 = vpop.f32.mrb[0].mxu0
  %v373 = vadd.f32 0.0, %v372
  %v374 = vpop.f32.mrb[0].mxu0
  %v375 = vadd.f32 0.0, %v374
  %376 = vmatprep.mubr.f32.mxu0 0.0
  %377 = vmatmul.mubr.f32.gmra.mrb[0].mxu0 %v166
  %v378 = vpop.f32.mrb[0].mxu0
  %v379 = vadd.f32 0.0, %v378
  %v380 = vpop.f32.mrb[0].mxu0
  %v381 = vadd.f32 0.0, %v380
  %382 = vmatprep.mubr.f32.mxu0 0.0
  %383 = vmatmul.mubr.f32.gmra.mrb[0].mxu0 %v169
  %v384 = vpop.f32.mrb[0].mxu0
  %v385 = vadd.f32 0.0, %v384
  %v386 = vpop.f32.mrb[0].mxu0
  %v387 = vadd.f32 0.0, %v386
  %388 = vmatprep.mubr.f32.mxu0 0.0
  %389 = vmatmul.mubr.f32.gmra.mrb[0].mxu0 %v172
  %v390 = vpop.f32.mrb[0].mxu0
  %v391 = vadd.f32 0.0, %v390
  %v392 = vpop.f32.mrb[0].mxu0
  %v393 = vadd.f32 0.0, %v392
  %394 = vdwg.mxu0
  %395 = vmatprep.subr.mxu0 %v26
  %396 = vmatpush1.msra.mxu0 %v25
  %397 = vmatprep.subr.mxu0 %v40
  %398 = vmatpush1.msra.mxu0 %v39
  %399 = vmatprep.subr.mxu0 %v54
  %400 = vmatpush1.msra.mxu0 %v53
  %401 = vmatprep.subr.mxu0 %v68
  %402 = vmatpush1.msra.mxu0 %v67
  %403 = vmatprep.subr.mxu0 %v82
  %404 = vmatpush1.msra.mxu0 %v81
  %405 = vmatprep.subr.mxu0 %v96
  %406 = vmatpush1.msra.mxu0 %v95
  %407 = vmatprep.subr.mxu0 %v110
  %408 = vmatpush1.msra.mxu0 %v109
  %409 = vmatprep.subr.mxu0 %v124
  %410 = vmatpush1.msra.mxu0 %v123
  %411 = vmatprep.subr.mxu0 %v138
  %412 = vmatpush1.msra.mxu0 %v137
  %413 = vmatprep.subr.mxu0 %v191
  %414 = vmatpush1.msra.mxu0 %v188
  %415 = vmatprep.subr.mxu0 0.0
  %416 = vmatpush1.msra.mxu0 0.0
  %417 = vmatprep.subr.mxu0 0.0
  %418 = vmatpush1.msra.mxu0 0.0
  %419 = vmatprep.subr.mxu0 0.0
  %420 = vmatpush1.msra.mxu0 0.0
  %421 = vmatprep.subr.mxu0 0.0
  %422 = vmatpush1.msra.mxu0 0.0
  %423 = vmatprep.subr.mxu0 0.0
  %424 = vmatpush1.msra.mxu0 0.0
  %425 = vmatprep.subr.mxu0 0.0
  %426 = vmatpush1.msra.mxu0 0.0
  %427 = vmatprep.subr.mxu0 0.0
  %428 = vmatpush1.msra.mxu0 0.0
  %429 = vmatprep.subr.mxu0 0.0
  %430 = vmatpush1.msra.mxu0 0.0
  %431 = vmatprep.subr.mxu0 0.0
  %432 = vmatpush1.msra.mxu0 0.0
  %433 = vmatprep.subr.mxu0 0.0
  %434 = vmatpush1.msra.mxu0 0.0
  %435 = vmatprep.subr.mxu0 0.0
  %436 = vmatpush1.msra.mxu0 0.0
  %437 = vmatprep.subr.mxu0 0.0
  %438 = vmatpush1.msra.mxu0 0.0
  %439 = vmatprep.subr.mxu0 0.0
  %440 = vmatpush1.msra.mxu0 0.0
  %441 = vmatprep.subr.mxu0 0.0
  %442 = vmatpush1.msra.mxu0 0.0
  %443 = vmatprep.subr.mxu0 0.0
  %444 = vmatpush1.msra.mxu0 0.0
  %445 = vmatprep.subr.mxu0 0.0
  %446 = vmatpush1.msra.mxu0 0.0
  %447 = vmatprep.subr.mxu0 0.0
  %448 = vmatpush1.msra.mxu0 0.0
  %449 = vmatprep.subr.mxu0 0.0
  %450 = vmatpush1.msra.mxu0 0.0
  %451 = vmatprep.subr.mxu0 0.0
  %452 = vmatpush1.msra.mxu0 0.0
  %453 = vmatprep.subr.mxu0 0.0
  %454 = vmatpush1.msra.mxu0 0.0
  %455 = vmatprep.subr.mxu0 0.0
  %456 = vmatpush1.msra.mxu0 0.0
  %457 = vmatprep.subr.mxu0 0.0
  %458 = vmatpush1.msra.mxu0 0.0
  %459 = vmatprep.mubr.f32.mxu0 0.0
  %460 = vmatmul.mubr.f32.gmra.mrb[0].mxu0 %v163
  %v461 = vpop.f32.mrb[0].mxu0
  %v462 = vadd.f32 0.0, %v461
  %v463 = vpop.f32.mrb[0].mxu0
  %v464 = vadd.f32 0.0, %v463
  %465 = vmatprep.mubr.f32.mxu0 0.0
  %466 = vmatmul.mubr.f32.gmra.mrb[0].mxu0 %v166
  %v467 = vpop.f32.mrb[0].mxu0
  %v468 = vadd.f32 0.0, %v467
  %v469 = vpop.f32.mrb[0].mxu0
  %v470 = vadd.f32 0.0, %v469
  %471 = vmatprep.mubr.f32.mxu0 0.0
  %472 = vmatmul.mubr.f32.gmra.mrb[0].mxu0 %v169
  %v473 = vpop.f32.mrb[0].mxu0
  %v474 = vadd.f32 0.0, %v473
  %v475 = vpop.f32.mrb[0].mxu0
  %v476 = vadd.f32 0.0, %v475
  %477 = vmatprep.mubr.f32.mxu0 0.0
  %478 = vmatmul.mubr.f32.gmra.mrb[0].mxu0 %v172
  %v479 = vpop.f32.mrb[0].mxu0
  %v480 = vadd.f32 0.0, %v479
  %v481 = vpop.f32.mrb[0].mxu0
  %v482 = vadd.f32 0.0, %v481
  %483 = vdwg.mxu0
  %484 = vmatprep.subr.mxu0 %v28
  %485 = vmatpush1.msra.mxu0 %v27
  %486 = vmatprep.subr.mxu0 %v42
  %487 = vmatpush1.msra.mxu0 %v41
  %488 = vmatprep.subr.mxu0 %v56
  %489 = vmatpush1.msra.mxu0 %v55
  %490 = vmatprep.subr.mxu0 %v70
  %491 = vmatpush1.msra.mxu0 %v69
  %492 = vmatprep.subr.mxu0 %v84
  %493 = vmatpush1.msra.mxu0 %v83
  %494 = vmatprep.subr.mxu0 %v98
  %495 = vmatpush1.msra.mxu0 %v97
  %496 = vmatprep.subr.mxu0 %v112
  %497 = vmatpush1.msra.mxu0 %v111
  %498 = vmatprep.subr.mxu0 %v126
  %499 = vmatpush1.msra.mxu0 %v125
  %500 = vmatprep.subr.mxu0 %v140
  %501 = vmatpush1.msra.mxu0 %v139
  %502 = vmatprep.subr.mxu0 %v197
  %503 = vmatpush1.msra.mxu0 %v194
  %504 = vmatprep.subr.mxu0 0.0
  %505 = vmatpush1.msra.mxu0 0.0
  %506 = vmatprep.subr.mxu0 0.0
  %507 = vmatpush1.msra.mxu0 0.0
  %508 = vmatprep.subr.mxu0 0.0
  %509 = vmatpush1.msra.mxu0 0.0
  %510 = vmatprep.subr.mxu0 0.0
  %511 = vmatpush1.msra.mxu0 0.0
  %512 = vmatprep.subr.mxu0 0.0
  %513 = vmatpush1.msra.mxu0 0.0
  %514 = vmatprep.subr.mxu0 0.0
  %515 = vmatpush1.msra.mxu0 0.0
  %516 = vmatprep.subr.mxu0 0.0
  %517 = vmatpush1.msra.mxu0 0.0
  %518 = vmatprep.subr.mxu0 0.0
  %519 = vmatpush1.msra.mxu0 0.0
  %520 = vmatprep.subr.mxu0 0.0
  %521 = vmatpush1.msra.mxu0 0.0
  %522 = vmatprep.subr.mxu0 0.0
  %523 = vmatpush1.msra.mxu0 0.0
  %524 = vmatprep.subr.mxu0 0.0
  %525 = vmatpush1.msra.mxu0 0.0
  %526 = vmatprep.subr.mxu0 0.0
  %527 = vmatpush1.msra.mxu0 0.0
  %528 = vmatprep.subr.mxu0 0.0
  %529 = vmatpush1.msra.mxu0 0.0
  %530 = vmatprep.subr.mxu0 0.0
  %531 = vmatpush1.msra.mxu0 0.0
  %532 = vmatprep.subr.mxu0 0.0
  %533 = vmatpush1.msra.mxu0 0.0
  %534 = vmatprep.subr.mxu0 0.0
  %535 = vmatpush1.msra.mxu0 0.0
  %536 = vmatprep.subr.mxu0 0.0
  %537 = vmatpush1.msra.mxu0 0.0
  %538 = vmatprep.subr.mxu0 0.0
  %539 = vmatpush1.msra.mxu0 0.0
  %540 = vmatprep.subr.mxu0 0.0
  %541 = vmatpush1.msra.mxu0 0.0
  %542 = vmatprep.subr.mxu0 0.0
  %543 = vmatpush1.msra.mxu0 0.0
  %544 = vmatprep.subr.mxu0 0.0
  %545 = vmatpush1.msra.mxu0 0.0
  %546 = vmatprep.subr.mxu0 0.0
  %547 = vmatpush1.msra.mxu0 0.0
  %548 = vmatprep.mubr.f32.mxu0 0.0
  %549 = vmatmul.mubr.f32.gmra.mrb[0].mxu0 %v163
  %v550 = vpop.f32.mrb[0].mxu0
  %v551 = vadd.f32 0.0, %v550
  %v552 = vpop.f32.mrb[0].mxu0
  %v553 = vadd.f32 0.0, %v552
  %554 = vmatprep.mubr.f32.mxu0 0.0
  %555 = vmatmul.mubr.f32.gmra.mrb[0].mxu0 %v166
  %v556 = vpop.f32.mrb[0].mxu0
  %v557 = vadd.f32 0.0, %v556
  %v558 = vpop.f32.mrb[0].mxu0
  %v559 = vadd.f32 0.0, %v558
  %560 = vmatprep.mubr.f32.mxu0 0.0
  %561 = vmatmul.mubr.f32.gmra.mrb[0].mxu0 %v169
  %v562 = vpop.f32.mrb[0].mxu0
  %v563 = vadd.f32 0.0, %v562
  %v564 = vpop.f32.mrb[0].mxu0
  %v565 = vadd.f32 0.0, %v564
  %566 = vmatprep.mubr.f32.mxu0 0.0
  %567 = vmatmul.mubr.f32.gmra.mrb[0].mxu0 %v172
  %v568 = vpop.f32.mrb[0].mxu0
  %v569 = vadd.f32 0.0, %v568
  %v570 = vpop.f32.mrb[0].mxu0
  %v571 = vadd.f32 0.0, %v570
  %572 = vdwg.mxu0
  %573 = vmatprep.subr.mxu0 %v30
  %574 = vmatpush1.msra.mxu0 %v29
  %575 = vmatprep.subr.mxu0 %v44
  %576 = vmatpush1.msra.mxu0 %v43
  %577 = vmatprep.subr.mxu0 %v58
  %578 = vmatpush1.msra.mxu0 %v57
  %579 = vmatprep.subr.mxu0 %v72
  %580 = vmatpush1.msra.mxu0 %v71
  %581 = vmatprep.subr.mxu0 %v86
  %582 = vmatpush1.msra.mxu0 %v85
  %583 = vmatprep.subr.mxu0 %v100
  %584 = vmatpush1.msra.mxu0 %v99
  %585 = vmatprep.subr.mxu0 %v114
  %586 = vmatpush1.msra.mxu0 %v113
  %587 = vmatprep.subr.mxu0 %v128
  %588 = vmatpush1.msra.mxu0 %v127
  %589 = vmatprep.subr.mxu0 %v142
  %590 = vmatpush1.msra.mxu0 %v141
  %591 = vmatprep.subr.mxu0 %v203
  %592 = vmatpush1.msra.mxu0 %v200
  %593 = vmatprep.subr.mxu0 0.0
  %594 = vmatpush1.msra.mxu0 0.0
  %595 = vmatprep.subr.mxu0 0.0
  %596 = vmatpush1.msra.mxu0 0.0
  %597 = vmatprep.subr.mxu0 0.0
  %598 = vmatpush1.msra.mxu0 0.0
  %599 = vmatprep.subr.mxu0 0.0
  %600 = vmatpush1.msra.mxu0 0.0
  %601 = vmatprep.subr.mxu0 0.0
  %602 = vmatpush1.msra.mxu0 0.0
  %603 = vmatprep.subr.mxu0 0.0
  %604 = vmatpush1.msra.mxu0 0.0
  %605 = vmatprep.subr.mxu0 0.0
  %606 = vmatpush1.msra.mxu0 0.0
  %607 = vmatprep.subr.mxu0 0.0
  %608 = vmatpush1.msra.mxu0 0.0
  %609 = vmatprep.subr.mxu0 0.0
  %610 = vmatpush1.msra.mxu0 0.0
  %611 = vmatprep.subr.mxu0 0.0
  %612 = vmatpush1.msra.mxu0 0.0
  %613 = vmatprep.subr.mxu0 0.0
  %614 = vmatpush1.msra.mxu0 0.0
  %615 = vmatprep.subr.mxu0 0.0
  %616 = vmatpush1.msra.mxu0 0.0
  %617 = vmatprep.subr.mxu0 0.0
  %618 = vmatpush1.msra.mxu0 0.0
  %619 = vmatprep.subr.mxu0 0.0
  %620 = vmatpush1.msra.mxu0 0.0
  %621 = vmatprep.subr.mxu0 0.0
  %622 = vmatpush1.msra.mxu0 0.0
  %623 = vmatprep.subr.mxu0 0.0
  %624 = vmatpush1.msra.mxu0 0.0
  %625 = vmatprep.subr.mxu0 0.0
  %626 = vmatpush1.msra.mxu0 0.0
  %627 = vmatprep.subr.mxu0 0.0
  %628 = vmatpush1.msra.mxu0 0.0
  %629 = vmatprep.subr.mxu0 0.0
  %630 = vmatpush1.msra.mxu0 0.0
  %631 = vmatprep.subr.mxu0 0.0
  %632 = vmatpush1.msra.mxu0 0.0
  %633 = vmatprep.subr.mxu0 0.0
  %634 = vmatpush1.msra.mxu0 0.0
  %635 = vmatprep.subr.mxu0 0.0
  %636 = vmatpush1.msra.mxu0 0.0
  %637 = vmatprep.mubr.f32.mxu0 0.0
  %638 = vmatmul.mubr.f32.gmra.mrb[0].mxu0 %v163
  %v639 = vpop.f32.mrb[0].mxu0
  %v640 = vadd.f32 0.0, %v639
  %v641 = vpop.f32.mrb[0].mxu0
  %v642 = vadd.f32 0.0, %v641
  %643 = vmatprep.mubr.f32.mxu0 0.0
  %644 = vmatmul.mubr.f32.gmra.mrb[0].mxu0 %v166
  %v645 = vpop.f32.mrb[0].mxu0
  %v646 = vadd.f32 0.0, %v645
  %v647 = vpop.f32.mrb[0].mxu0
  %v648 = vadd.f32 0.0, %v647
  %649 = vmatprep.mubr.f32.mxu0 0.0
  %650 = vmatmul.mubr.f32.gmra.mrb[0].mxu0 %v169
  %v651 = vpop.f32.mrb[0].mxu0
  %v652 = vadd.f32 0.0, %v651
  %v653 = vpop.f32.mrb[0].mxu0
  %v654 = vadd.f32 0.0, %v653
  %655 = vmatprep.mubr.f32.mxu0 0.0
  %656 = vmatmul.mubr.f32.gmra.mrb[0].mxu0 %v172
  %v657 = vpop.f32.mrb[0].mxu0
  %v658 = vadd.f32 0.0, %v657
  %v659 = vpop.f32.mrb[0].mxu0
  %v660 = vadd.f32 0.0, %v659
  %661 = vdwg.mxu0
  %662 = vmatprep.subr.mxu0 %v32
  %663 = vmatpush1.msra.mxu0 %v31
  %664 = vmatprep.subr.mxu0 %v46
  %665 = vmatpush1.msra.mxu0 %v45
  %666 = vmatprep.subr.mxu0 %v60
  %667 = vmatpush1.msra.mxu0 %v59
  %668 = vmatprep.subr.mxu0 %v74
  %669 = vmatpush1.msra.mxu0 %v73
  %670 = vmatprep.subr.mxu0 %v88
  %671 = vmatpush1.msra.mxu0 %v87
  %672 = vmatprep.subr.mxu0 %v102
  %673 = vmatpush1.msra.mxu0 %v101
  %674 = vmatprep.subr.mxu0 %v116
  %675 = vmatpush1.msra.mxu0 %v115
  %676 = vmatprep.subr.mxu0 %v130
  %677 = vmatpush1.msra.mxu0 %v129
  %678 = vmatprep.subr.mxu0 %v144
  %679 = vmatpush1.msra.mxu0 %v143
  %680 = vmatprep.subr.mxu0 %v209
  %681 = vmatpush1.msra.mxu0 %v206
  %682 = vmatprep.subr.mxu0 0.0
  %683 = vmatpush1.msra.mxu0 0.0
  %684 = vmatprep.subr.mxu0 0.0
  %685 = vmatpush1.msra.mxu0 0.0
  %686 = vmatprep.subr.mxu0 0.0
  %687 = vmatpush1.msra.mxu0 0.0
  %688 = vmatprep.subr.mxu0 0.0
  %689 = vmatpush1.msra.mxu0 0.0
  %690 = vmatprep.subr.mxu0 0.0
  %691 = vmatpush1.msra.mxu0 0.0
  %692 = vmatprep.subr.mxu0 0.0
  %693 = vmatpush1.msra.mxu0 0.0
  %694 = vmatprep.subr.mxu0 0.0
  %695 = vmatpush1.msra.mxu0 0.0
  %696 = vmatprep.subr.mxu0 0.0
  %697 = vmatpush1.msra.mxu0 0.0
  %698 = vmatprep.subr.mxu0 0.0
  %699 = vmatpush1.msra.mxu0 0.0
  %700 = vmatprep.subr.mxu0 0.0
  %701 = vmatpush1.msra.mxu0 0.0
  %702 = vmatprep.subr.mxu0 0.0
  %703 = vmatpush1.msra.mxu0 0.0
  %704 = vmatprep.subr.mxu0 0.0
  %705 = vmatpush1.msra.mxu0 0.0
  %706 = vmatprep.subr.mxu0 0.0
  %707 = vmatpush1.msra.mxu0 0.0
  %708 = vmatprep.subr.mxu0 0.0
  %709 = vmatpush1.msra.mxu0 0.0
  %710 = vmatprep.subr.mxu0 0.0
  %711 = vmatpush1.msra.mxu0 0.0
  %712 = vmatprep.subr.mxu0 0.0
  %713 = vmatpush1.msra.mxu0 0.0
  %714 = vmatprep.subr.mxu0 0.0
  %715 = vmatpush1.msra.mxu0 0.0
  %716 = vmatprep.subr.mxu0 0.0
  %717 = vmatpush1.msra.mxu0 0.0
  %718 = vmatprep.subr.mxu0 0.0
  %719 = vmatpush1.msra.mxu0 0.0
  %720 = vmatprep.subr.mxu0 0.0
  %721 = vmatpush1.msra.mxu0 0.0
  %722 = vmatprep.subr.mxu0 0.0
  %723 = vmatpush1.msra.mxu0 0.0
  %724 = vmatprep.subr.mxu0 0.0
  %725 = vmatpush1.msra.mxu0 0.0
  %726 = vmatprep.mubr.f32.mxu0 0.0
  %727 = vmatmul.mubr.f32.gmra.mrb[0].mxu0 %v163
  %v728 = vpop.f32.mrb[0].mxu0
  %v729 = vadd.f32 0.0, %v728
  %v730 = vpop.f32.mrb[0].mxu0
  %v731 = vadd.f32 0.0, %v730
  %732 = vmatprep.mubr.f32.mxu0 0.0
  %733 = vmatmul.mubr.f32.gmra.mrb[0].mxu0 %v166
  %v734 = vpop.f32.mrb[0].mxu0
  %v735 = vadd.f32 0.0, %v734
  %v736 = vpop.f32.mrb[0].mxu0
  %v737 = vadd.f32 0.0, %v736
  %738 = vmatprep.mubr.f32.mxu0 0.0
  %739 = vmatmul.mubr.f32.gmra.mrb[0].mxu0 %v169
  %v740 = vpop.f32.mrb[0].mxu0
  %v741 = vadd.f32 0.0, %v740
  %v742 = vpop.f32.mrb[0].mxu0
  %v743 = vadd.f32 0.0, %v742
  %744 = vmatprep.mubr.f32.mxu0 0.0
  %745 = vmatmul.mubr.f32.gmra.mrb[0].mxu0 %v172
  %v746 = vpop.f32.mrb[0].mxu0
  %v747 = vadd.f32 0.0, %v746
  %v748 = vpop.f32.mrb[0].mxu0
  %v749 = vadd.f32 0.0, %v748
  %750 = vdwg.mxu0
  %751 = vmatprep.subr.mxu0 %v34
  %752 = vmatpush1.msra.mxu0 %v33
  %753 = vmatprep.subr.mxu0 %v48
  %754 = vmatpush1.msra.mxu0 %v47
  %755 = vmatprep.subr.mxu0 %v62
  %756 = vmatpush1.msra.mxu0 %v61
  %757 = vmatprep.subr.mxu0 %v76
  %758 = vmatpush1.msra.mxu0 %v75
  %759 = vmatprep.subr.mxu0 %v90
  %760 = vmatpush1.msra.mxu0 %v89
  %761 = vmatprep.subr.mxu0 %v104
  %762 = vmatpush1.msra.mxu0 %v103
  %763 = vmatprep.subr.mxu0 %v118
  %764 = vmatpush1.msra.mxu0 %v117
  %765 = vmatprep.subr.mxu0 %v132
  %766 = vmatpush1.msra.mxu0 %v131
  %767 = vmatprep.subr.mxu0 %v146
  %768 = vmatpush1.msra.mxu0 %v145
  %769 = vmatprep.subr.mxu0 %v215
  %770 = vmatpush1.msra.mxu0 %v212
  %771 = vmatprep.subr.mxu0 0.0
  %772 = vmatpush1.msra.mxu0 0.0
  %773 = vmatprep.subr.mxu0 0.0
  %774 = vmatpush1.msra.mxu0 0.0
  %775 = vmatprep.subr.mxu0 0.0
  %776 = vmatpush1.msra.mxu0 0.0
  %777 = vmatprep.subr.mxu0 0.0
  %778 = vmatpush1.msra.mxu0 0.0
  %779 = vmatprep.subr.mxu0 0.0
  %780 = vmatpush1.msra.mxu0 0.0
  %781 = vmatprep.subr.mxu0 0.0
  %782 = vmatpush1.msra.mxu0 0.0
  %783 = vmatprep.subr.mxu0 0.0
  %784 = vmatpush1.msra.mxu0 0.0
  %785 = vmatprep.subr.mxu0 0.0
  %786 = vmatpush1.msra.mxu0 0.0
  %787 = vmatprep.subr.mxu0 0.0
  %788 = vmatpush1.msra.mxu0 0.0
  %789 = vmatprep.subr.mxu0 0.0
  %790 = vmatpush1.msra.mxu0 0.0
  %791 = vmatprep.subr.mxu0 0.0
  %792 = vmatpush1.msra.mxu0 0.0
  %793 = vmatprep.subr.mxu0 0.0
  %794 = vmatpush1.msra.mxu0 0.0
  %795 = vmatprep.subr.mxu0 0.0
  %796 = vmatpush1.msra.mxu0 0.0
  %797 = vmatprep.subr.mxu0 0.0
  %798 = vmatpush1.msra.mxu0 0.0
  %799 = vmatprep.subr.mxu0 0.0
  %800 = vmatpush1.msra.mxu0 0.0
  %801 = vmatprep.subr.mxu0 0.0
  %802 = vmatpush1.msra.mxu0 0.0
  %803 = vmatprep.subr.mxu0 0.0
  %804 = vmatpush1.msra.mxu0 0.0
  %805 = vmatprep.subr.mxu0 0.0
  %806 = vmatpush1.msra.mxu0 0.0
  %807 = vmatprep.subr.mxu0 0.0
  %808 = vmatpush1.msra.mxu0 0.0
  %809 = vmatprep.subr.mxu0 0.0
  %810 = vmatpush1.msra.mxu0 0.0
  %811 = vmatprep.subr.mxu0 0.0
  %812 = vmatpush1.msra.mxu0 0.0
  %813 = vmatprep.subr.mxu0 0.0
  %814 = vmatpush1.msra.mxu0 0.0
  %815 = vmatprep.mubr.f32.mxu0 0.0
  %816 = vmatmul.mubr.f32.gmra.mrb[0].mxu0 %v163
  %v817 = vpop.f32.mrb[0].mxu0
  %v818 = vadd.f32 0.0, %v817
  %v819 = vpop.f32.mrb[0].mxu0
  %v820 = vadd.f32 0.0, %v819
  %821 = vmatprep.mubr.f32.mxu0 0.0
  %822 = vmatmul.mubr.f32.gmra.mrb[0].mxu0 %v166
  %v823 = vpop.f32.mrb[0].mxu0
  %v824 = vadd.f32 0.0, %v823
  %v825 = vpop.f32.mrb[0].mxu0
  %v826 = vadd.f32 0.0, %v825
  %827 = vmatprep.mubr.f32.mxu0 0.0
  %828 = vmatmul.mubr.f32.gmra.mrb[0].mxu0 %v169
  %v829 = vpop.f32.mrb[0].mxu0
  %v830 = vadd.f32 0.0, %v829
  %v831 = vpop.f32.mrb[0].mxu0
  %v832 = vadd.f32 0.0, %v831
  %833 = vmatprep.mubr.f32.mxu0 0.0
  %834 = vmatmul.mubr.f32.gmra.mrb[0].mxu0 %v172
  %v835 = vpop.f32.mrb[0].mxu0
  %v836 = vadd.f32 0.0, %v835
  %v837 = vpop.f32.mrb[0].mxu0
  %v838 = vadd.f32 0.0, %v837
  %839 = vdwg.mxu0
  %v840 = vld [vmem:[%s2] sm:$0xff]
  %v841 = vld [vmem:[%s2 + $0x8] sm:$0xff]
  %v842 = vld [vmem:[%s2 + $0x10] sm:$0xff]
  %v843 = vld [vmem:[%s2 + $0x18] sm:$0xff]
  %845 = vset.pattern.permute.xlu0 0
  %846 = vperm.xlu0 %845, %v840
  %v847 = vpop.permute.xlu0 %846
  %850 = vset.pattern.permute.xlu0 0
  %851 = vperm.xlu0 %850, %v841
  %v852 = vpop.permute.xlu0 %851
  %855 = vset.pattern.permute.xlu0 0
  %856 = vperm.xlu0 %855, %v842
  %v857 = vpop.permute.xlu0 %856
  %860 = vset.pattern.permute.xlu0 0
  %861 = vperm.xlu0 %860, %v843
  %v862 = vpop.permute.xlu0 %861
  %v864 = vmul.f32 %v284, %v847
  %v865 = vmul.f32 %v286, %v847
  %v866 = vmul.f32 %v373, %v847
  %v867 = vmul.f32 %v375, %v847
  %v868 = vmul.f32 %v462, %v847
  %v869 = vmul.f32 %v464, %v847
  %v870 = vmul.f32 %v551, %v847
  %v871 = vmul.f32 %v553, %v847
  %v872 = vmul.f32 %v640, %v847
  %v873 = vmul.f32 %v642, %v847
  %v874 = vmul.f32 %v729, %v847
  %v875 = vmul.f32 %v731, %v847
  %v876 = vmul.f32 %v818, %v847
  %v877 = vmul.f32 %v820, %v847
  %v878 = vmul.f32 %v290, %v852
  %v879 = vmul.f32 %v292, %v852
  %v880 = vmul.f32 %v379, %v852
  %v881 = vmul.f32 %v381, %v852
  %v882 = vmul.f32 %v468, %v852
  %v883 = vmul.f32 %v470, %v852
  %v884 = vmul.f32 %v557, %v852
  %v885 = vmul.f32 %v559, %v852
  %v886 = vmul.f32 %v646, %v852
  %v887 = vmul.f32 %v648, %v852
  %v888 = vmul.f32 %v735, %v852
  %v889 = vmul.f32 %v737, %v852
  %v890 = vmul.f32 %v824, %v852
  %v891 = vmul.f32 %v826, %v852
  %v892 = vmul.f32 %v296, %v857
  %v893 = vmul.f32 %v298, %v857
  %v894 = vmul.f32 %v385, %v857
  %v895 = vmul.f32 %v387, %v857
  %v896 = vmul.f32 %v474, %v857
  %v897 = vmul.f32 %v476, %v857
  %v898 = vmul.f32 %v563, %v857
  %v899 = vmul.f32 %v565, %v857
  %v900 = vmul.f32 %v652, %v857
  %v901 = vmul.f32 %v654, %v857
  %v902 = vmul.f32 %v741, %v857
  %v903 = vmul.f32 %v743, %v857
  %v904 = vmul.f32 %v830, %v857
  %v905 = vmul.f32 %v832, %v857
  %v906 = vmul.f32 %v302, %v862
  %v907 = vmul.f32 %v304, %v862
  %v908 = vmul.f32 %v391, %v862
  %v909 = vmul.f32 %v393, %v862
  %v910 = vmul.f32 %v480, %v862
  %v911 = vmul.f32 %v482, %v862
  %v912 = vmul.f32 %v569, %v862
  %v913 = vmul.f32 %v571, %v862
  %v914 = vmul.f32 %v658, %v862
  %v915 = vmul.f32 %v660, %v862
  %v916 = vmul.f32 %v747, %v862
  %v917 = vmul.f32 %v749, %v862
  %v918 = vmul.f32 %v836, %v862
  %v919 = vmul.f32 %v838, %v862
  %v920 = vld [vmem:[%s3] sm:$0xff]
  %v921 = vld [vmem:[%s3 + $0x8] sm:$0xff]
  %v922 = vld [vmem:[%s3 + $0x10] sm:$0xff]
  %v923 = vld [vmem:[%s3 + $0x18] sm:$0xff]
  %925 = vset.pattern.permute.xlu0 0
  %926 = vperm.xlu0 %925, %v920
  %v927 = vpop.permute.xlu0 %926
  %930 = vset.pattern.permute.xlu0 0
  %931 = vperm.xlu0 %930, %v921
  %v932 = vpop.permute.xlu0 %931
  %935 = vset.pattern.permute.xlu0 0
  %936 = vperm.xlu0 %935, %v922
  %v937 = vpop.permute.xlu0 %936
  %940 = vset.pattern.permute.xlu0 0
  %941 = vperm.xlu0 %940, %v923
  %v942 = vpop.permute.xlu0 %941
  %v944 = vadd.f32 %v864, %v927
  %v945 = vadd.f32 %v865, %v927
  %v946 = vadd.f32 %v866, %v927
  %v947 = vadd.f32 %v867, %v927
  %v948 = vadd.f32 %v868, %v927
  %v949 = vadd.f32 %v869, %v927
  %v950 = vadd.f32 %v870, %v927
  %v951 = vadd.f32 %v871, %v927
  %v952 = vadd.f32 %v872, %v927
  %v953 = vadd.f32 %v873, %v927
  %v954 = vadd.f32 %v874, %v927
  %v955 = vadd.f32 %v875, %v927
  %v956 = vadd.f32 %v876, %v927
  %v957 = vadd.f32 %v877, %v927
  %v958 = vadd.f32 %v878, %v932
  %v959 = vadd.f32 %v879, %v932
  %v960 = vadd.f32 %v880, %v932
  %v961 = vadd.f32 %v881, %v932
  %v962 = vadd.f32 %v882, %v932
  %v963 = vadd.f32 %v883, %v932
  %v964 = vadd.f32 %v884, %v932
  %v965 = vadd.f32 %v885, %v932
  %v966 = vadd.f32 %v886, %v932
  %v967 = vadd.f32 %v887, %v932
  %v968 = vadd.f32 %v888, %v932
  %v969 = vadd.f32 %v889, %v932
  %v970 = vadd.f32 %v890, %v932
  %v971 = vadd.f32 %v891, %v932
  %v972 = vadd.f32 %v892, %v937
  %v973 = vadd.f32 %v893, %v937
  %v974 = vadd.f32 %v894, %v937
  %v975 = vadd.f32 %v895, %v937
  %v976 = vadd.f32 %v896, %v937
  %v977 = vadd.f32 %v897, %v937
  %v978 = vadd.f32 %v898, %v937
  %v979 = vadd.f32 %v899, %v937
  %v980 = vadd.f32 %v900, %v937
  %v981 = vadd.f32 %v901, %v937
  %v982 = vadd.f32 %v902, %v937
  %v983 = vadd.f32 %v903, %v937
  %v984 = vadd.f32 %v904, %v937
  %v985 = vadd.f32 %v905, %v937
  %v986 = vadd.f32 %v906, %v942
  %v987 = vadd.f32 %v907, %v942
  %v988 = vadd.f32 %v908, %v942
  %v989 = vadd.f32 %v909, %v942
  %v990 = vadd.f32 %v910, %v942
  %v991 = vadd.f32 %v911, %v942
  %v992 = vadd.f32 %v912, %v942
  %v993 = vadd.f32 %v913, %v942
  %v994 = vadd.f32 %v914, %v942
  %v995 = vadd.f32 %v915, %v942
  %v996 = vadd.f32 %v916, %v942
  %v997 = vadd.f32 %v917, %v942
  %v998 = vadd.f32 %v918, %v942
  %v999 = vadd.f32 %v919, %v942
  %1000 = vst [vmem:[%s4] sm:$0xff] %v944
  %1001 = vst [vmem:[%s4 + $0x8] sm:$0xff] %v945
  %1002 = vst [vmem:[%s4 + $0x10] sm:$0xff] %v946
  %1003 = vst [vmem:[%s4 + $0x18] sm:$0xff] %v947
  %1004 = vst [vmem:[%s4 + $0x20] sm:$0xff] %v948
  %1005 = vst [vmem:[%s4 + $0x28] sm:$0xff] %v949
  %1006 = vst [vmem:[%s4 + $0x30] sm:$0xff] %v950
  %1007 = vst [vmem:[%s4 + $0x38] sm:$0xff] %v951
  %1008 = vst [vmem:[%s4 + $0x40] sm:$0xff] %v952
  %1009 = vst [vmem:[%s4 + $0x48] sm:$0xff] %v953
  %1010 = vst [vmem:[%s4 + $0x50] sm:$0xff] %v954
  %1011 = vst [vmem:[%s4 + $0x58] sm:$0xff] %v955
  %1012 = vst [vmem:[%s4 + $0x60] sm:$0xff] %v956
  %vm1013 = vcmask 146432
  %1014 = vst.msk [vmem:[%s4 + $0x68] sm:$0xff] %vm1013, %v957
  %1015 = vst [vmem:[%s4 + $0x70] sm:$0xff] %v958
  %1016 = vst [vmem:[%s4 + $0x78] sm:$0xff] %v959
  %1017 = vst [vmem:[%s4 + $0x80] sm:$0xff] %v960
  %1018 = vst [vmem:[%s4 + $0x88] sm:$0xff] %v961
  %1019 = vst [vmem:[%s4 + $0x90] sm:$0xff] %v962
  %1020 = vst [vmem:[%s4 + $0x98] sm:$0xff] %v963
  %1021 = vst [vmem:[%s4 + $0xa0] sm:$0xff] %v964
  %1022 = vst [vmem:[%s4 + $0xa8] sm:$0xff] %v965
  %1023 = vst [vmem:[%s4 + $0xb0] sm:$0xff] %v966
  %1024 = vst [vmem:[%s4 + $0xb8] sm:$0xff] %v967
  %1025 = vst [vmem:[%s4 + $0xc0] sm:$0xff] %v968
  %1026 = vst [vmem:[%s4 + $0xc8] sm:$0xff] %v969
  %1027 = vst [vmem:[%s4 + $0xd0] sm:$0xff] %v970
  %1028 = vst.msk [vmem:[%s4 + $0xd8] sm:$0xff] %vm1013, %v971
  %1029 = vst [vmem:[%s4 + $0xe0] sm:$0xff] %v972
  %1030 = vst [vmem:[%s4 + $0xe8] sm:$0xff] %v973
  %1031 = vst [vmem:[%s4 + $0xf0] sm:$0xff] %v974
  %1032 = vst [vmem:[%s4 + $0xf8] sm:$0xff] %v975
  %1033 = vst [vmem:[%s4 + $0x100] sm:$0xff] %v976
  %1034 = vst [vmem:[%s4 + $0x108] sm:$0xff] %v977
  %1035 = vst [vmem:[%s4 + $0x110] sm:$0xff] %v978
  %1036 = vst [vmem:[%s4 + $0x118] sm:$0xff] %v979
  %1037 = vst [vmem:[%s4 + $0x120] sm:$0xff] %v980
  %1038 = vst [vmem:[%s4 + $0x128] sm:$0xff] %v981
  %1039 = vst [vmem:[%s4 + $0x130] sm:$0xff] %v982
  %1040 = vst [vmem:[%s4 + $0x138] sm:$0xff] %v983
  %1041 = vst [vmem:[%s4 + $0x140] sm:$0xff] %v984
  %1042 = vst.msk [vmem:[%s4 + $0x148] sm:$0xff] %vm1013, %v985
  %1043 = vst [vmem:[%s4 + $0x150] sm:$0xff] %v986
  %1044 = vst [vmem:[%s4 + $0x158] sm:$0xff] %v987
  %1045 = vst [vmem:[%s4 + $0x160] sm:$0xff] %v988
  %1046 = vst [vmem:[%s4 + $0x168] sm:$0xff] %v989
  %1047 = vst [vmem:[%s4 + $0x170] sm:$0xff] %v990
  %1048 = vst [vmem:[%s4 + $0x178] sm:$0xff] %v991
  %1049 = vst [vmem:[%s4 + $0x180] sm:$0xff] %v992
  %1050 = vst [vmem:[%s4 + $0x188] sm:$0xff] %v993
  %1051 = vst [vmem:[%s4 + $0x190] sm:$0xff] %v994
  %1052 = vst [vmem:[%s4 + $0x198] sm:$0xff] %v995
  %1053 = vst [vmem:[%s4 + $0x1a0] sm:$0xff] %v996
  %1054 = vst [vmem:[%s4 + $0x1a8] sm:$0xff] %v997
  %1055 = vst [vmem:[%s4 + $0x1b0] sm:$0xff] %v998
  %1056 = vst.msk [vmem:[%s4 + $0x1b8] sm:$0xff] %vm1013, %v999
  // Predicated region
  $region18: #{evaluate.3} parent=0 // pred_check
    _
  $region19: #{evaluate.3} parent=0 // pred_check_branch
    %1058 = sbr.rel (0) target = $region21
  $region20: #{evaluate.3} parent=0 // pred_region
    _
  $region21: #{evaluate.3} parent=0 // pred_fallthru
    _
  // Predicated region
  $region22: #{evaluate.3} parent=0 // pred_check
    _
  $region23: #{evaluate.3} parent=0 // pred_check_branch
    %1060 = sbr.rel (0) target = $region25
  $region24: #{evaluate.3} parent=0 // pred_region
    _
  $region25: #{evaluate.3} parent=0 // pred_fallthru
    _

// kernel: evaluate.4
$region0: #{evaluate.4}
  #allocation0 [shape = 'u32[]', space=smem, size = 0x4, offset = 0x4, fixed_abs, tag = 'smem constant byte address 0x4 - core index']
  #allocation1 [shape = 'u32[144,128]{1,0:T(1,128)}', space=vmem, size = 0x12000, scoped, tag = 'internal scratch']
  %s0 = inlined_call_operand.vmem [shape: f32[800,338], index: 0, kind: input, shape index: {}]
  %s1 = inlined_call_operand.vmem [shape: f32[64,800], index: 1, kind: input, shape index: {}]
  %s2 = inlined_call_operand.vmem [shape: f32[64,1], index: 2, kind: input, shape index: {}]
  %s3 = inlined_call_operand.vmem [shape: f32[64,1], index: 3, kind: input, shape index: {}]
  %s4 = inlined_call_operand.vmem [shape: f32[64,338], index: 4, kind: output, shape index: {}]
  %s5 = sld [smem:[#allocation0]]
  $region26: #{evaluate.4} parent=0
    _
  %s7 = ssub.s32 1, %s5
  %s8 = scalar_select 0, %s7, %s5
  // Predicated region
  $region2: #{evaluate.4} parent=0 // pred_check
    _
  $region3: #{evaluate.4} parent=0 // pred_check_branch
    %10 = sbr.rel (0) target = $region5
  $region4: #{evaluate.4} parent=0 // pred_region
    _
  $region5: #{evaluate.4} parent=0 // pred_fallthru
    _
  // Predicated region
  $region6: #{evaluate.4} parent=0 // pred_check
    _
  $region7: #{evaluate.4} parent=0 // pred_check_branch
    %12 = sbr.rel (0) target = $region9
  $region8: #{evaluate.4} parent=0 // pred_region
    _
  $region9: #{evaluate.4} parent=0 // pred_fallthru
    _
  // Predicated region
  $region10: #{evaluate.4} parent=0 // pred_check
    _
  $region11: #{evaluate.4} parent=0 // pred_check_branch
    %14 = sbr.rel (0) target = $region13
  $region12: #{evaluate.4} parent=0 // pred_region
    _
  $region13: #{evaluate.4} parent=0 // pred_fallthru
    _
  // Predicated region
  $region14: #{evaluate.4} parent=0 // pred_check
    _
  $region15: #{evaluate.4} parent=0 // pred_check_branch
    %16 = sbr.rel (0) target = $region17
  $region16: #{evaluate.4} parent=0 // pred_region
    _
  $region17: #{evaluate.4} parent=0 // pred_fallthru
    _
  %v17 = vld [vmem:[%s1] sm:$0xff]
  %v18 = vld [vmem:[%s1 + $0x8] sm:$0xff]
  %v19 = vld [vmem:[%s1 + $0x10] sm:$0xff]
  %v20 = vld [vmem:[%s1 + $0x18] sm:$0xff]
  %v21 = vld [vmem:[%s1 + $0x20] sm:$0xff]
  %v22 = vld [vmem:[%s1 + $0x28] sm:$0xff]
  %v23 = vld [vmem:[%s1 + $0x30] sm:$0xff]
  %v24 = vld [vmem:[%s1 + $0x38] sm:$0xff]
  %v25 = vld [vmem:[%s1 + $0x40] sm:$0xff]
  %v26 = vld [vmem:[%s1 + $0x48] sm:$0xff]
  %v27 = vld [vmem:[%s1 + $0x50] sm:$0xff]
  %v28 = vld [vmem:[%s1 + $0x58] sm:$0xff]
  %v29 = vld [vmem:[%s1 + $0x60] sm:$0xff]
  %v30 = vld [vmem:[%s1 + $0x68] sm:$0xff]
  %v31 = vld [vmem:[%s1 + $0x70] sm:$0xff]
  %v32 = vld [vmem:[%s1 + $0x78] sm:$0xff]
  %v33 = vld [vmem:[%s1 + $0x80] sm:$0xff]
  %v34 = vld [vmem:[%s1 + $0x88] sm:$0xff]
  %v35 = vld [vmem:[%s1 + $0x90] sm:$0xff]
  %v36 = vld [vmem:[%s1 + $0x98] sm:$0xff]
  %v37 = vld [vmem:[%s1 + $0xa0] sm:$0xff]
  %v38 = vld [vmem:[%s1 + $0xa8] sm:$0xff]
  %v39 = vld [vmem:[%s1 + $0xb0] sm:$0xff]
  %v40 = vld [vmem:[%s1 + $0xb8] sm:$0xff]
  %v41 = vld [vmem:[%s1 + $0xc0] sm:$0xff]
  %v42 = vld [vmem:[%s1 + $0xc8] sm:$0xff]
  %v43 = vld [vmem:[%s1 + $0xd0] sm:$0xff]
  %v44 = vld [vmem:[%s1 + $0xd8] sm:$0xff]
  %v45 = vld [vmem:[%s1 + $0xe0] sm:$0xff]
  %v46 = vld [vmem:[%s1 + $0xe8] sm:$0xff]
  %v47 = vld [vmem:[%s1 + $0xf0] sm:$0xff]
  %v48 = vld [vmem:[%s1 + $0xf8] sm:$0xff]
  %v49 = vld [vmem:[%s1 + $0x100] sm:$0xff]
  %v50 = vld [vmem:[%s1 + $0x108] sm:$0xff]
  %v51 = vld [vmem:[%s1 + $0x110] sm:$0xff]
  %v52 = vld [vmem:[%s1 + $0x118] sm:$0xff]
  %v53 = vld [vmem:[%s1 + $0x120] sm:$0xff]
  %v54 = vld [vmem:[%s1 + $0x128] sm:$0xff]
  %v55 = vld [vmem:[%s1 + $0x130] sm:$0xff]
  %v56 = vld [vmem:[%s1 + $0x138] sm:$0xff]
  %v57 = vld [vmem:[%s1 + $0x140] sm:$0xff]
  %v58 = vld [vmem:[%s1 + $0x148] sm:$0xff]
  %v59 = vld [vmem:[%s1 + $0x150] sm:$0xff]
  %v60 = vld [vmem:[%s1 + $0x158] sm:$0xff]
  %v61 = vld [vmem:[%s1 + $0x160] sm:$0xff]
  %v62 = vld [vmem:[%s1 + $0x168] sm:$0xff]
  %v63 = vld [vmem:[%s1 + $0x170] sm:$0xff]
  %v64 = vld [vmem:[%s1 + $0x178] sm:$0xff]
  %v65 = vld [vmem:[%s1 + $0x180] sm:$0xff]
  %v66 = vld [vmem:[%s1 + $0x188] sm:$0xff]
  %v67 = vld [vmem:[%s1 + $0x190] sm:$0xff]
  %v68 = vld [vmem:[%s1 + $0x198] sm:$0xff]
  %v69 = vld [vmem:[%s1 + $0x1a0] sm:$0xff]
  %v70 = vld [vmem:[%s1 + $0x1a8] sm:$0xff]
  %v71 = vld [vmem:[%s1 + $0x1b0] sm:$0xff]
  %v72 = vld [vmem:[%s1 + $0x1b8] sm:$0xff]
  %v73 = vld [vmem:[%s0] sm:$0xff]
  %v74 = vld [vmem:[%s0 + $0x8] sm:$0xff]
  %v75 = vld [vmem:[%s0 + $0x10] sm:$0xff]
  %v76 = vld [vmem:[%s0 + $0x18] sm:$0xff]
  %v77 = vld [vmem:[%s0 + $0x20] sm:$0xff]
  %v78 = vld [vmem:[%s0 + $0x28] sm:$0xff]
  %v79 = vld [vmem:[%s0 + $0x30] sm:$0xff]
  %v80 = vld [vmem:[%s0 + $0x38] sm:$0xff]
  %v81 = vld [vmem:[%s0 + $0x40] sm:$0xff]
  %v82 = vld [vmem:[%s0 + $0x48] sm:$0xff]
  %v83 = vld [vmem:[%s0 + $0x50] sm:$0xff]
  %v84 = vld [vmem:[%s0 + $0x58] sm:$0xff]
  %v85 = vld [vmem:[%s0 + $0x60] sm:$0xff]
  %v86 = vld [vmem:[%s0 + $0x68] sm:$0xff]
  %v87 = vld [vmem:[%s0 + $0x70] sm:$0xff]
  %v88 = vld [vmem:[%s0 + $0x78] sm:$0xff]
  %v89 = vld [vmem:[%s0 + $0x80] sm:$0xff]
  %v90 = vld [vmem:[%s0 + $0x88] sm:$0xff]
  %v91 = vld [vmem:[%s0 + $0x90] sm:$0xff]
  %v92 = vld [vmem:[%s0 + $0x98] sm:$0xff]
  %v93 = vld [vmem:[%s0 + $0xa0] sm:$0xff]
  %v94 = vld [vmem:[%s0 + $0xa8] sm:$0xff]
  %v95 = vld [vmem:[%s0 + $0xb0] sm:$0xff]
  %v96 = vld [vmem:[%s0 + $0xb8] sm:$0xff]
  %v97 = vld [vmem:[%s0 + $0xc0] sm:$0xff]
  %v98 = vld [vmem:[%s0 + $0xc8] sm:$0xff]
  %v99 = vld [vmem:[%s0 + $0xd0] sm:$0xff]
  %v100 = vld [vmem:[%s0 + $0xd8] sm:$0xff]
  %v101 = vld [vmem:[%s0 + $0xe0] sm:$0xff]
  %v102 = vld [vmem:[%s0 + $0xe8] sm:$0xff]
  %v103 = vld [vmem:[%s0 + $0xf0] sm:$0xff]
  %v104 = vld [vmem:[%s0 + $0xf8] sm:$0xff]
  %v105 = vld [vmem:[%s0 + $0x100] sm:$0xff]
  %v106 = vld [vmem:[%s0 + $0x108] sm:$0xff]
  %v107 = vld [vmem:[%s0 + $0x110] sm:$0xff]
  %v108 = vld [vmem:[%s0 + $0x118] sm:$0xff]
  %v109 = vld [vmem:[%s0 + $0x120] sm:$0xff]
  %v110 = vld [vmem:[%s0 + $0x128] sm:$0xff]
  %v111 = vld [vmem:[%s0 + $0x130] sm:$0xff]
  %v112 = vld [vmem:[%s0 + $0x138] sm:$0xff]
  %v113 = vld [vmem:[%s0 + $0x140] sm:$0xff]
  %v114 = vld [vmem:[%s0 + $0x148] sm:$0xff]
  %v115 = vld [vmem:[%s0 + $0x150] sm:$0xff]
  %v116 = vld [vmem:[%s0 + $0x158] sm:$0xff]
  %v117 = vld [vmem:[%s0 + $0x160] sm:$0xff]
  %v118 = vld [vmem:[%s0 + $0x168] sm:$0xff]
  %v119 = vld [vmem:[%s0 + $0x170] sm:$0xff]
  %v120 = vld [vmem:[%s0 + $0x178] sm:$0xff]
  %v121 = vld [vmem:[%s0 + $0x180] sm:$0xff]
  %v122 = vld [vmem:[%s0 + $0x188] sm:$0xff]
  %v123 = vld [vmem:[%s0 + $0x190] sm:$0xff]
  %v124 = vld [vmem:[%s0 + $0x198] sm:$0xff]
  %v125 = vld [vmem:[%s0 + $0x1a0] sm:$0xff]
  %v126 = vld [vmem:[%s0 + $0x1a8] sm:$0xff]
  %v127 = vld [vmem:[%s0 + $0x1b0] sm:$0xff]
  %v128 = vld [vmem:[%s0 + $0x1b8] sm:$0xff]
  %v129 = vld [vmem:[%s0 + $0x1c0] sm:$0xff]
  %v130 = vld [vmem:[%s0 + $0x1c8] sm:$0xff]
  %v131 = vld [vmem:[%s0 + $0x1d0] sm:$0xff]
  %v132 = vld [vmem:[%s0 + $0x1d8] sm:$0xff]
  %v133 = vld [vmem:[%s0 + $0x1e0] sm:$0xff]
  %v134 = vld [vmem:[%s0 + $0x1e8] sm:$0xff]
  %v135 = vld [vmem:[%s0 + $0x1f0] sm:$0xff]
  %v136 = vld [vmem:[%s0 + $0x1f8] sm:$0xff]
  %v137 = vld [vmem:[%s0 + $0x200] sm:$0xff]
  %v138 = vld [vmem:[%s0 + $0x208] sm:$0xff]
  %v139 = vld [vmem:[%s0 + $0x210] sm:$0xff]
  %v140 = vld [vmem:[%s0 + $0x218] sm:$0xff]
  %v141 = vld [vmem:[%s0 + $0x220] sm:$0xff]
  %v142 = vld [vmem:[%s0 + $0x228] sm:$0xff]
  %v143 = vld [vmem:[%s0 + $0x230] sm:$0xff]
  %v144 = vld [vmem:[%s0 + $0x238] sm:$0xff]
  %v145 = vld [vmem:[%s0 + $0x240] sm:$0xff]
  %v146 = vld [vmem:[%s0 + $0x248] sm:$0xff]
  %v147 = vld [vmem:[%s0 + $0x250] sm:$0xff]
  %v148 = vld [vmem:[%s0 + $0x258] sm:$0xff]
  %v149 = vld [vmem:[%s0 + $0x260] sm:$0xff]
  %v150 = vld [vmem:[%s0 + $0x268] sm:$0xff]
  %v151 = vld [vmem:[%s0 + $0x270] sm:$0xff]
  %v152 = vld [vmem:[%s0 + $0x278] sm:$0xff]
  %v153 = vld [vmem:[%s0 + $0x280] sm:$0xff]
  %v154 = vld [vmem:[%s0 + $0x288] sm:$0xff]
  %v155 = vld [vmem:[%s0 + $0x290] sm:$0xff]
  %v156 = vld [vmem:[%s0 + $0x298] sm:$0xff]
  %v157 = vld [vmem:[%s0 + $0x2a0] sm:$0xff]
  %v158 = vld [vmem:[%s0 + $0x2a8] sm:$0xff]
  %v159 = vld [vmem:[%s0 + $0x2b0] sm:$0xff]
  %v160 = vld [vmem:[%s0 + $0x2b8] sm:$0xff]
  %v161 = vld [vmem:[%s0 + $0x2c0] sm:$0xff]
  %v162 = vld [vmem:[%s0 + $0x2c8] sm:$0xff]
  %v163 = vld [vmem:[%s0 + $0x2d0] sm:$0xff]
  %v164 = vld [vmem:[%s0 + $0x2d8] sm:$0xff]
  %v165 = vld [vmem:[%s0 + $0x2e0] sm:$0xff]
  %v166 = vld [vmem:[%s0 + $0x2e8] sm:$0xff]
  %v167 = vld [vmem:[%s0 + $0x2f0] sm:$0xff]
  %v168 = vld [vmem:[%s0 + $0x2f8] sm:$0xff]
  %v169 = vld [vmem:[%s0 + $0x300] sm:$0xff]
  %v170 = vld [vmem:[%s0 + $0x308] sm:$0xff]
  %v171 = vld [vmem:[%s0 + $0x310] sm:$0xff]
  %v172 = vld [vmem:[%s0 + $0x318] sm:$0xff]
  %v173 = vld [vmem:[%s0 + $0x320] sm:$0xff]
  %v174 = vld [vmem:[%s0 + $0x328] sm:$0xff]
  %v175 = vld [vmem:[%s0 + $0x330] sm:$0xff]
  %v176 = vld [vmem:[%s0 + $0x338] sm:$0xff]
  %v177 = vld [vmem:[%s0 + $0x340] sm:$0xff]
  %v178 = vld [vmem:[%s0 + $0x348] sm:$0xff]
  %v179 = vld [vmem:[%s0 + $0x350] sm:$0xff]
  %v180 = vld [vmem:[%s0 + $0x358] sm:$0xff]
  %v181 = vld [vmem:[%s0 + $0x360] sm:$0xff]
  %v182 = vld [vmem:[%s0 + $0x368] sm:$0xff]
  %v183 = vld [vmem:[%s0 + $0x370] sm:$0xff]
  %v184 = vld [vmem:[%s0 + $0x378] sm:$0xff]
  %v185 = vld [vmem:[%s0 + $0x380] sm:$0xff]
  %v186 = vld [vmem:[%s0 + $0x388] sm:$0xff]
  %v187 = vld [vmem:[%s0 + $0x390] sm:$0xff]
  %v188 = vld [vmem:[%s0 + $0x398] sm:$0xff]
  %v189 = vld [vmem:[%s0 + $0x3a0] sm:$0xff]
  %v190 = vld [vmem:[%s0 + $0x3a8] sm:$0xff]
  %v191 = vld [vmem:[%s0 + $0x3b0] sm:$0xff]
  %v192 = vld [vmem:[%s0 + $0x3b8] sm:$0xff]
  %v193 = vld [vmem:[%s0 + $0x3c0] sm:$0xff]
  %v194 = vld [vmem:[%s0 + $0x3c8] sm:$0xff]
  %v195 = vld [vmem:[%s0 + $0x3d0] sm:$0xff]
  %v196 = vld [vmem:[%s0 + $0x3d8] sm:$0xff]
  %v197 = vld [vmem:[%s0 + $0x3e0] sm:$0xff]
  %v198 = vld [vmem:[%s0 + $0x3e8] sm:$0xff]
  %v199 = vld [vmem:[%s0 + $0x3f0] sm:$0xff]
  %v200 = vld [vmem:[%s0 + $0x3f8] sm:$0xff]
  %v201 = vld [vmem:[%s0 + $0x400] sm:$0xff]
  %v202 = vld [vmem:[%s0 + $0x408] sm:$0xff]
  %v203 = vld [vmem:[%s0 + $0x410] sm:$0xff]
  %v204 = vld [vmem:[%s0 + $0x418] sm:$0xff]
  %v205 = vld [vmem:[%s0 + $0x420] sm:$0xff]
  %v206 = vld [vmem:[%s0 + $0x428] sm:$0xff]
  %v207 = vld [vmem:[%s0 + $0x430] sm:$0xff]
  %v208 = vld [vmem:[%s0 + $0x438] sm:$0xff]
  %v209 = vld [vmem:[%s0 + $0x440] sm:$0xff]
  %v210 = vld [vmem:[%s0 + $0x448] sm:$0xff]
  %v211 = vld [vmem:[%s0 + $0x450] sm:$0xff]
  %v212 = vld [vmem:[%s0 + $0x458] sm:$0xff]
  %v213 = vld [vmem:[%s0 + $0x460] sm:$0xff]
  %v214 = vld [vmem:[%s0 + $0x468] sm:$0xff]
  %v215 = vld [vmem:[%s0 + $0x470] sm:$0xff]
  %v216 = vld [vmem:[%s0 + $0x478] sm:$0xff]
  %v217 = vld [vmem:[%s0 + $0x480] sm:$0xff]
  %v218 = vld [vmem:[%s0 + $0x488] sm:$0xff]
  %v219 = vld [vmem:[%s0 + $0x490] sm:$0xff]
  %v220 = vld [vmem:[%s0 + $0x498] sm:$0xff]
  %v221 = vld [vmem:[%s0 + $0x4a0] sm:$0xff]
  %v222 = vld [vmem:[%s0 + $0x4a8] sm:$0xff]
  %v223 = vld [vmem:[%s0 + $0x4b0] sm:$0xff]
  %v224 = vld [vmem:[%s0 + $0x4b8] sm:$0xff]
  %v225 = vld [vmem:[%s0 + $0x4c0] sm:$0xff]
  %v226 = vld [vmem:[%s0 + $0x4c8] sm:$0xff]
  %v227 = vld [vmem:[%s0 + $0x4d0] sm:$0xff]
  %v228 = vld [vmem:[%s0 + $0x4d8] sm:$0xff]
  %v229 = vld [vmem:[%s0 + $0x4e0] sm:$0xff]
  %v230 = vld [vmem:[%s0 + $0x4e8] sm:$0xff]
  %v231 = vld [vmem:[%s0 + $0x4f0] sm:$0xff]
  %v232 = vld [vmem:[%s0 + $0x4f8] sm:$0xff]
  %v233 = vld [vmem:[%s0 + $0x500] sm:$0xff]
  %v234 = vld [vmem:[%s0 + $0x508] sm:$0xff]
  %v235 = vld [vmem:[%s0 + $0x510] sm:$0xff]
  %v236 = vld [vmem:[%s0 + $0x518] sm:$0xff]
  %v237 = vld [vmem:[%s0 + $0x520] sm:$0xff]
  %v238 = vld [vmem:[%s0 + $0x528] sm:$0xff]
  %v239 = vld [vmem:[%s0 + $0x530] sm:$0xff]
  %v240 = vld [vmem:[%s0 + $0x538] sm:$0xff]
  %v241 = vld [vmem:[%s0 + $0x540] sm:$0xff]
  %v242 = vld [vmem:[%s0 + $0x548] sm:$0xff]
  %v243 = vld [vmem:[%s0 + $0x550] sm:$0xff]
  %v244 = vld [vmem:[%s0 + $0x558] sm:$0xff]
  %v245 = vld [vmem:[%s0 + $0x560] sm:$0xff]
  %v246 = vld [vmem:[%s0 + $0x568] sm:$0xff]
  %v247 = vld [vmem:[%s0 + $0x570] sm:$0xff]
  %v248 = vld [vmem:[%s0 + $0x578] sm:$0xff]
  %v249 = vld [vmem:[%s0 + $0x580] sm:$0xff]
  %v250 = vld [vmem:[%s0 + $0x588] sm:$0xff]
  %v251 = vld [vmem:[%s0 + $0x590] sm:$0xff]
  %v252 = vld [vmem:[%s0 + $0x598] sm:$0xff]
  %v253 = vld [vmem:[%s0 + $0x5a0] sm:$0xff]
  %v254 = vld [vmem:[%s0 + $0x5a8] sm:$0xff]
  %v255 = vld [vmem:[%s0 + $0x5b0] sm:$0xff]
  %v256 = vld [vmem:[%s0 + $0x5b8] sm:$0xff]
  %v257 = vld [vmem:[%s0 + $0x5c0] sm:$0xff]
  %v258 = vld [vmem:[%s0 + $0x5c8] sm:$0xff]
  %v259 = vld [vmem:[%s0 + $0x5d0] sm:$0xff]
  %v260 = vld [vmem:[%s0 + $0x5d8] sm:$0xff]
  %v261 = vld [vmem:[%s0 + $0x5e0] sm:$0xff]
  %v262 = vld [vmem:[%s0 + $0x5e8] sm:$0xff]
  %v263 = vld [vmem:[%s0 + $0x5f0] sm:$0xff]
  %v264 = vld [vmem:[%s0 + $0x5f8] sm:$0xff]
  %v265 = vld [vmem:[%s0 + $0x600] sm:$0xff]
  %v266 = vld [vmem:[%s0 + $0x608] sm:$0xff]
  %v267 = vld [vmem:[%s0 + $0x610] sm:$0xff]
  %v268 = vld [vmem:[%s0 + $0x618] sm:$0xff]
  %v269 = vld [vmem:[%s0 + $0x620] sm:$0xff]
  %v270 = vld [vmem:[%s0 + $0x628] sm:$0xff]
  %v271 = vld [vmem:[%s0 + $0x630] sm:$0xff]
  %v272 = vld [vmem:[%s0 + $0x638] sm:$0xff]
  %v273 = vld [vmem:[%s0 + $0x640] sm:$0xff]
  %v274 = vld [vmem:[%s0 + $0x648] sm:$0xff]
  %v275 = vld [vmem:[%s0 + $0x650] sm:$0xff]
  %v276 = vld [vmem:[%s0 + $0x658] sm:$0xff]
  %v277 = vld [vmem:[%s0 + $0x660] sm:$0xff]
  %v278 = vld [vmem:[%s0 + $0x668] sm:$0xff]
  %v279 = vld [vmem:[%s0 + $0x670] sm:$0xff]
  %v280 = vld [vmem:[%s0 + $0x678] sm:$0xff]
  %v281 = vld [vmem:[%s0 + $0x680] sm:$0xff]
  %v282 = vld [vmem:[%s0 + $0x688] sm:$0xff]
  %v283 = vld [vmem:[%s0 + $0x690] sm:$0xff]
  %v284 = vld [vmem:[%s0 + $0x698] sm:$0xff]
  %v285 = vld [vmem:[%s0 + $0x6a0] sm:$0xff]
  %v286 = vld [vmem:[%s0 + $0x6a8] sm:$0xff]
  %v287 = vld [vmem:[%s0 + $0x6b0] sm:$0xff]
  %v288 = vld [vmem:[%s0 + $0x6b8] sm:$0xff]
  %v289 = vld [vmem:[%s0 + $0x6c0] sm:$0xff]
  %v290 = vld [vmem:[%s0 + $0x6c8] sm:$0xff]
  %v291 = vld [vmem:[%s0 + $0x6d0] sm:$0xff]
  %v292 = vld [vmem:[%s0 + $0x6d8] sm:$0xff]
  %v293 = vld [vmem:[%s0 + $0x6e0] sm:$0xff]
  %v294 = vld [vmem:[%s0 + $0x6e8] sm:$0xff]
  %v295 = vld [vmem:[%s0 + $0x6f0] sm:$0xff]
  %v296 = vld [vmem:[%s0 + $0x6f8] sm:$0xff]
  %v297 = vld [vmem:[%s0 + $0x700] sm:$0xff]
  %v298 = vld [vmem:[%s0 + $0x708] sm:$0xff]
  %v299 = vld [vmem:[%s0 + $0x710] sm:$0xff]
  %v300 = vld [vmem:[%s0 + $0x718] sm:$0xff]
  %v301 = vld [vmem:[%s0 + $0x720] sm:$0xff]
  %v302 = vld [vmem:[%s0 + $0x728] sm:$0xff]
  %v303 = vld [vmem:[%s0 + $0x730] sm:$0xff]
  %v304 = vld [vmem:[%s0 + $0x738] sm:$0xff]
  %v305 = vld [vmem:[%s0 + $0x740] sm:$0xff]
  %v306 = vld [vmem:[%s0 + $0x748] sm:$0xff]
  %v307 = vld [vmem:[%s0 + $0x750] sm:$0xff]
  %v308 = vld [vmem:[%s0 + $0x758] sm:$0xff]
  %v309 = vld [vmem:[%s0 + $0x760] sm:$0xff]
  %v310 = vld [vmem:[%s0 + $0x768] sm:$0xff]
  %v311 = vld [vmem:[%s0 + $0x770] sm:$0xff]
  %v312 = vld [vmem:[%s0 + $0x778] sm:$0xff]
  %v313 = vld [vmem:[%s0 + $0x780] sm:$0xff]
  %v314 = vld [vmem:[%s0 + $0x788] sm:$0xff]
  %v315 = vld [vmem:[%s0 + $0x790] sm:$0xff]
  %v316 = vld [vmem:[%s0 + $0x798] sm:$0xff]
  %v317 = vld [vmem:[%s0 + $0x7a0] sm:$0xff]
  %v318 = vld [vmem:[%s0 + $0x7a8] sm:$0xff]
  %v319 = vld [vmem:[%s0 + $0x7b0] sm:$0xff]
  %v320 = vld [vmem:[%s0 + $0x7b8] sm:$0xff]
  %v321 = vld [vmem:[%s0 + $0x7c0] sm:$0xff]
  %v322 = vld [vmem:[%s0 + $0x7c8] sm:$0xff]
  %v323 = vld [vmem:[%s0 + $0x7d0] sm:$0xff]
  %v324 = vld [vmem:[%s0 + $0x7d8] sm:$0xff]
  %v325 = vld [vmem:[%s0 + $0x7e0] sm:$0xff]
  %v326 = vld [vmem:[%s0 + $0x7e8] sm:$0xff]
  %v327 = vld [vmem:[%s0 + $0x7f0] sm:$0xff]
  %v328 = vld [vmem:[%s0 + $0x7f8] sm:$0xff]
  %v329 = vld [vmem:[%s0 + $0x800] sm:$0xff]
  %v330 = vld [vmem:[%s0 + $0x808] sm:$0xff]
  %v331 = vld [vmem:[%s0 + $0x810] sm:$0xff]
  %v332 = vld [vmem:[%s0 + $0x818] sm:$0xff]
  %v333 = vld [vmem:[%s0 + $0x820] sm:$0xff]
  %v334 = vld [vmem:[%s0 + $0x828] sm:$0xff]
  %v335 = vld [vmem:[%s0 + $0x830] sm:$0xff]
  %v336 = vld [vmem:[%s0 + $0x838] sm:$0xff]
  %v337 = vld [vmem:[%s0 + $0x840] sm:$0xff]
  %v338 = vld [vmem:[%s0 + $0x848] sm:$0xff]
  %v339 = vld [vmem:[%s0 + $0x850] sm:$0xff]
  %v340 = vld [vmem:[%s0 + $0x858] sm:$0xff]
  %v341 = vld [vmem:[%s0 + $0x860] sm:$0xff]
  %v342 = vld [vmem:[%s0 + $0x868] sm:$0xff]
  %v343 = vld [vmem:[%s0 + $0x870] sm:$0xff]
  %v344 = vld [vmem:[%s0 + $0x878] sm:$0xff]
  %v345 = vld [vmem:[%s0 + $0x880] sm:$0xff]
  %v346 = vld [vmem:[%s0 + $0x888] sm:$0xff]
  %v347 = vld [vmem:[%s0 + $0x890] sm:$0xff]
  %v348 = vld [vmem:[%s0 + $0x898] sm:$0xff]
  %v349 = vld [vmem:[%s0 + $0x8a0] sm:$0xff]
  %v350 = vld [vmem:[%s0 + $0x8a8] sm:$0xff]
  %v351 = vld [vmem:[%s0 + $0x8b0] sm:$0xff]
  %v352 = vld [vmem:[%s0 + $0x8b8] sm:$0xff]
  %v353 = vld [vmem:[%s0 + $0x8c0] sm:$0xff]
  %v354 = vld [vmem:[%s0 + $0x8c8] sm:$0xff]
  %v355 = vld [vmem:[%s0 + $0x8d0] sm:$0xff]
  %v356 = vld [vmem:[%s0 + $0x8d8] sm:$0xff]
  %v357 = vld [vmem:[%s0 + $0x8e0] sm:$0xff]
  %v358 = vld [vmem:[%s0 + $0x8e8] sm:$0xff]
  %v359 = vld [vmem:[%s0 + $0x8f0] sm:$0xff]
  %v360 = vld [vmem:[%s0 + $0x8f8] sm:$0xff]
  %v361 = vld [vmem:[%s0 + $0x900] sm:$0xff]
  %v362 = vld [vmem:[%s0 + $0x908] sm:$0xff]
  %v363 = vld [vmem:[%s0 + $0x910] sm:$0xff]
  %v364 = vld [vmem:[%s0 + $0x918] sm:$0xff]
  %v365 = vld [vmem:[%s0 + $0x920] sm:$0xff]
  %v366 = vld [vmem:[%s0 + $0x928] sm:$0xff]
  %v367 = vld [vmem:[%s0 + $0x930] sm:$0xff]
  %v368 = vld [vmem:[%s0 + $0x938] sm:$0xff]
  %v369 = vld [vmem:[%s0 + $0x940] sm:$0xff]
  %v370 = vld [vmem:[%s0 + $0x948] sm:$0xff]
  %v371 = vld [vmem:[%s0 + $0x950] sm:$0xff]
  %v372 = vld [vmem:[%s0 + $0x958] sm:$0xff]
  %vm373 = vcmask 261120
  %v375 = vsel %vm373, %v23, 0
  %v378 = vsel %vm373, %v30, 0
  %v381 = vsel %vm373, %v37, 0
  %v384 = vsel %vm373, %v44, 0
  %v387 = vsel %vm373, %v51, 0
  %v390 = vsel %vm373, %v58, 0
  %v393 = vsel %vm373, %v65, 0
  %v396 = vsel %vm373, %v72, 0
  %398 = vmatprep.subr.mxu0 %v74
  %399 = vmatpush1.msra.mxu0 %v73
  %400 = vmatprep.subr.mxu0 %v77
  %401 = vmatpush1.msra.mxu0 %v76
  %402 = vmatprep.subr.mxu0 %v80
  %403 = vmatpush1.msra.mxu0 %v79
  %404 = vmatprep.subr.mxu0 %v83
  %405 = vmatpush1.msra.mxu0 %v82
  %406 = vmatprep.subr.mxu0 %v86
  %407 = vmatpush1.msra.mxu0 %v85
  %408 = vmatprep.subr.mxu0 %v89
  %409 = vmatpush1.msra.mxu0 %v88
  %410 = vmatprep.subr.mxu0 %v92
  %411 = vmatpush1.msra.mxu0 %v91
  %412 = vmatprep.subr.mxu0 %v95
  %413 = vmatpush1.msra.mxu0 %v94
  %414 = vmatprep.subr.mxu0 %v98
  %415 = vmatpush1.msra.mxu0 %v97
  %416 = vmatprep.subr.mxu0 %v101
  %417 = vmatpush1.msra.mxu0 %v100
  %418 = vmatprep.subr.mxu0 %v104
  %419 = vmatpush1.msra.mxu0 %v103
  %420 = vmatprep.subr.mxu0 %v107
  %421 = vmatpush1.msra.mxu0 %v106
  %422 = vmatprep.subr.mxu0 %v110
  %423 = vmatpush1.msra.mxu0 %v109
  %424 = vmatprep.subr.mxu0 %v113
  %425 = vmatpush1.msra.mxu0 %v112
  %426 = vmatprep.subr.mxu0 %v116
  %427 = vmatpush1.msra.mxu0 %v115
  %428 = vmatprep.subr.mxu0 %v119
  %429 = vmatpush1.msra.mxu0 %v118
  %430 = vmatprep.subr.mxu0 %v122
  %431 = vmatpush1.msra.mxu0 %v121
  %432 = vmatprep.subr.mxu0 %v125
  %433 = vmatpush1.msra.mxu0 %v124
  %434 = vmatprep.subr.mxu0 %v128
  %435 = vmatpush1.msra.mxu0 %v127
  %436 = vmatprep.subr.mxu0 %v131
  %437 = vmatpush1.msra.mxu0 %v130
  %438 = vmatprep.subr.mxu0 %v134
  %439 = vmatpush1.msra.mxu0 %v133
  %440 = vmatprep.subr.mxu0 %v137
  %441 = vmatpush1.msra.mxu0 %v136
  %442 = vmatprep.subr.mxu0 %v140
  %443 = vmatpush1.msra.mxu0 %v139
  %444 = vmatprep.subr.mxu0 %v143
  %445 = vmatpush1.msra.mxu0 %v142
  %446 = vmatprep.subr.mxu0 %v146
  %447 = vmatpush1.msra.mxu0 %v145
  %448 = vmatprep.subr.mxu0 %v149
  %449 = vmatpush1.msra.mxu0 %v148
  %450 = vmatprep.subr.mxu0 %v152
  %451 = vmatpush1.msra.mxu0 %v151
  %452 = vmatprep.subr.mxu0 %v155
  %453 = vmatpush1.msra.mxu0 %v154
  %454 = vmatprep.subr.mxu0 %v158
  %455 = vmatpush1.msra.mxu0 %v157
  %456 = vmatprep.subr.mxu0 %v161
  %457 = vmatpush1.msra.mxu0 %v160
  %458 = vmatprep.subr.mxu0 %v164
  %459 = vmatpush1.msra.mxu0 %v163
  %460 = vmatprep.subr.mxu0 %v167
  %461 = vmatpush1.msra.mxu0 %v166
  %462 = vmatprep.mubr.f32.mxu0 %v18
  %463 = vmatmul.mubr.f32.gmra.mrb[0].mxu0 %v17
  %v464 = vpop.f32.mrb[0].mxu0
  %v465 = vadd.f32 0.0, %v464
  %v466 = vpop.f32.mrb[0].mxu0
  %v467 = vadd.f32 0.0, %v466
  %468 = vmatprep.mubr.f32.mxu0 %v25
  %469 = vmatmul.mubr.f32.gmra.mrb[0].mxu0 %v24
  %v470 = vpop.f32.mrb[0].mxu0
  %v471 = vadd.f32 0.0, %v470
  %v472 = vpop.f32.mrb[0].mxu0
  %v473 = vadd.f32 0.0, %v472
  %474 = vmatprep.mubr.f32.mxu0 %v32
  %475 = vmatmul.mubr.f32.gmra.mrb[0].mxu0 %v31
  %v476 = vpop.f32.mrb[0].mxu0
  %v477 = vadd.f32 0.0, %v476
  %v478 = vpop.f32.mrb[0].mxu0
  %v479 = vadd.f32 0.0, %v478
  %480 = vmatprep.mubr.f32.mxu0 %v39
  %481 = vmatmul.mubr.f32.gmra.mrb[0].mxu0 %v38
  %v482 = vpop.f32.mrb[0].mxu0
  %v483 = vadd.f32 0.0, %v482
  %v484 = vpop.f32.mrb[0].mxu0
  %v485 = vadd.f32 0.0, %v484
  %486 = vmatprep.mubr.f32.mxu0 %v46
  %487 = vmatmul.mubr.f32.gmra.mrb[0].mxu0 %v45
  %v488 = vpop.f32.mrb[0].mxu0
  %v489 = vadd.f32 0.0, %v488
  %v490 = vpop.f32.mrb[0].mxu0
  %v491 = vadd.f32 0.0, %v490
  %492 = vmatprep.mubr.f32.mxu0 %v53
  %493 = vmatmul.mubr.f32.gmra.mrb[0].mxu0 %v52
  %v494 = vpop.f32.mrb[0].mxu0
  %v495 = vadd.f32 0.0, %v494
  %v496 = vpop.f32.mrb[0].mxu0
  %v497 = vadd.f32 0.0, %v496
  %498 = vmatprep.mubr.f32.mxu0 %v60
  %499 = vmatmul.mubr.f32.gmra.mrb[0].mxu0 %v59
  %v500 = vpop.f32.mrb[0].mxu0
  %v501 = vadd.f32 0.0, %v500
  %v502 = vpop.f32.mrb[0].mxu0
  %v503 = vadd.f32 0.0, %v502
  %504 = vmatprep.mubr.f32.mxu0 %v67
  %505 = vmatmul.mubr.f32.gmra.mrb[0].mxu0 %v66
  %v506 = vpop.f32.mrb[0].mxu0
  %v507 = vadd.f32 0.0, %v506
  %v508 = vpop.f32.mrb[0].mxu0
  %v509 = vadd.f32 0.0, %v508
  %510 = vdwg.mxu0
  %511 = vmatprep.subr.mxu0 %v170
  %512 = vmatpush1.msra.mxu0 %v169
  %513 = vmatprep.subr.mxu0 %v173
  %514 = vmatpush1.msra.mxu0 %v172
  %515 = vmatprep.subr.mxu0 %v176
  %516 = vmatpush1.msra.mxu0 %v175
  %517 = vmatprep.subr.mxu0 %v179
  %518 = vmatpush1.msra.mxu0 %v178
  %519 = vmatprep.subr.mxu0 %v182
  %520 = vmatpush1.msra.mxu0 %v181
  %521 = vmatprep.subr.mxu0 %v185
  %522 = vmatpush1.msra.mxu0 %v184
  %523 = vmatprep.subr.mxu0 %v188
  %524 = vmatpush1.msra.mxu0 %v187
  %525 = vmatprep.subr.mxu0 %v191
  %526 = vmatpush1.msra.mxu0 %v190
  %527 = vmatprep.subr.mxu0 %v194
  %528 = vmatpush1.msra.mxu0 %v193
  %529 = vmatprep.subr.mxu0 %v197
  %530 = vmatpush1.msra.mxu0 %v196
  %531 = vmatprep.subr.mxu0 %v200
  %532 = vmatpush1.msra.mxu0 %v199
  %533 = vmatprep.subr.mxu0 %v203
  %534 = vmatpush1.msra.mxu0 %v202
  %535 = vmatprep.subr.mxu0 %v206
  %536 = vmatpush1.msra.mxu0 %v205
  %537 = vmatprep.subr.mxu0 %v209
  %538 = vmatpush1.msra.mxu0 %v208
  %539 = vmatprep.subr.mxu0 %v212
  %540 = vmatpush1.msra.mxu0 %v211
  %541 = vmatprep.subr.mxu0 %v215
  %542 = vmatpush1.msra.mxu0 %v214
  %543 = vmatprep.subr.mxu0 %v218
  %544 = vmatpush1.msra.mxu0 %v217
  %545 = vmatprep.subr.mxu0 %v221
  %546 = vmatpush1.msra.mxu0 %v220
  %547 = vmatprep.subr.mxu0 %v224
  %548 = vmatpush1.msra.mxu0 %v223
  %549 = vmatprep.subr.mxu0 %v227
  %550 = vmatpush1.msra.mxu0 %v226
  %551 = vmatprep.subr.mxu0 %v230
  %552 = vmatpush1.msra.mxu0 %v229
  %553 = vmatprep.subr.mxu0 %v233
  %554 = vmatpush1.msra.mxu0 %v232
  %555 = vmatprep.subr.mxu0 %v236
  %556 = vmatpush1.msra.mxu0 %v235
  %557 = vmatprep.subr.mxu0 %v239
  %558 = vmatpush1.msra.mxu0 %v238
  %559 = vmatprep.subr.mxu0 %v242
  %560 = vmatpush1.msra.mxu0 %v241
  %561 = vmatprep.subr.mxu0 %v245
  %562 = vmatpush1.msra.mxu0 %v244
  %563 = vmatprep.subr.mxu0 %v248
  %564 = vmatpush1.msra.mxu0 %v247
  %565 = vmatprep.subr.mxu0 %v251
  %566 = vmatpush1.msra.mxu0 %v250
  %567 = vmatprep.subr.mxu0 %v254
  %568 = vmatpush1.msra.mxu0 %v253
  %569 = vmatprep.subr.mxu0 %v257
  %570 = vmatpush1.msra.mxu0 %v256
  %571 = vmatprep.subr.mxu0 %v260
  %572 = vmatpush1.msra.mxu0 %v259
  %573 = vmatprep.subr.mxu0 %v263
  %574 = vmatpush1.msra.mxu0 %v262
  %575 = vmatprep.mubr.f32.mxu0 %v20
  %576 = vmatmul.mubr.f32.gmra.mrb[0].mxu0 %v19
  %v577 = vpop.f32.mrb[0].mxu0
  %v578 = vadd.f32 %v465, %v577
  %v579 = vpop.f32.mrb[0].mxu0
  %v580 = vadd.f32 %v467, %v579
  %581 = vmatprep.mubr.f32.mxu0 %v27
  %582 = vmatmul.mubr.f32.gmra.mrb[0].mxu0 %v26
  %v583 = vpop.f32.mrb[0].mxu0
  %v584 = vadd.f32 %v471, %v583
  %v585 = vpop.f32.mrb[0].mxu0
  %v586 = vadd.f32 %v473, %v585
  %587 = vmatprep.mubr.f32.mxu0 %v34
  %588 = vmatmul.mubr.f32.gmra.mrb[0].mxu0 %v33
  %v589 = vpop.f32.mrb[0].mxu0
  %v590 = vadd.f32 %v477, %v589
  %v591 = vpop.f32.mrb[0].mxu0
  %v592 = vadd.f32 %v479, %v591
  %593 = vmatprep.mubr.f32.mxu0 %v41
  %594 = vmatmul.mubr.f32.gmra.mrb[0].mxu0 %v40
  %v595 = vpop.f32.mrb[0].mxu0
  %v596 = vadd.f32 %v483, %v595
  %v597 = vpop.f32.mrb[0].mxu0
  %v598 = vadd.f32 %v485, %v597
  %599 = vmatprep.mubr.f32.mxu0 %v48
  %600 = vmatmul.mubr.f32.gmra.mrb[0].mxu0 %v47
  %v601 = vpop.f32.mrb[0].mxu0
  %v602 = vadd.f32 %v489, %v601
  %v603 = vpop.f32.mrb[0].mxu0
  %v604 = vadd.f32 %v491, %v603
  %605 = vmatprep.mubr.f32.mxu0 %v55
  %606 = vmatmul.mubr.f32.gmra.mrb[0].mxu0 %v54
  %v607 = vpop.f32.mrb[0].mxu0
  %v608 = vadd.f32 %v495, %v607
  %v609 = vpop.f32.mrb[0].mxu0
  %v610 = vadd.f32 %v497, %v609
  %611 = vmatprep.mubr.f32.mxu0 %v62
  %612 = vmatmul.mubr.f32.gmra.mrb[0].mxu0 %v61
  %v613 = vpop.f32.mrb[0].mxu0
  %v614 = vadd.f32 %v501, %v613
  %v615 = vpop.f32.mrb[0].mxu0
  %v616 = vadd.f32 %v503, %v615
  %617 = vmatprep.mubr.f32.mxu0 %v69
  %618 = vmatmul.mubr.f32.gmra.mrb[0].mxu0 %v68
  %v619 = vpop.f32.mrb[0].mxu0
  %v620 = vadd.f32 %v507, %v619
  %v621 = vpop.f32.mrb[0].mxu0
  %v622 = vadd.f32 %v509, %v621
  %623 = vdwg.mxu0
  %624 = vmatprep.subr.mxu0 %v266
  %625 = vmatpush1.msra.mxu0 %v265
  %626 = vmatprep.subr.mxu0 %v269
  %627 = vmatpush1.msra.mxu0 %v268
  %628 = vmatprep.subr.mxu0 %v272
  %629 = vmatpush1.msra.mxu0 %v271
  %630 = vmatprep.subr.mxu0 %v275
  %631 = vmatpush1.msra.mxu0 %v274
  %632 = vmatprep.subr.mxu0 %v278
  %633 = vmatpush1.msra.mxu0 %v277
  %634 = vmatprep.subr.mxu0 %v281
  %635 = vmatpush1.msra.mxu0 %v280
  %636 = vmatprep.subr.mxu0 %v284
  %637 = vmatpush1.msra.mxu0 %v283
  %638 = vmatprep.subr.mxu0 %v287
  %639 = vmatpush1.msra.mxu0 %v286
  %640 = vmatprep.subr.mxu0 %v290
  %641 = vmatpush1.msra.mxu0 %v289
  %642 = vmatprep.subr.mxu0 %v293
  %643 = vmatpush1.msra.mxu0 %v292
  %644 = vmatprep.subr.mxu0 %v296
  %645 = vmatpush1.msra.mxu0 %v295
  %646 = vmatprep.subr.mxu0 %v299
  %647 = vmatpush1.msra.mxu0 %v298
  %648 = vmatprep.subr.mxu0 %v302
  %649 = vmatpush1.msra.mxu0 %v301
  %650 = vmatprep.subr.mxu0 %v305
  %651 = vmatpush1.msra.mxu0 %v304
  %652 = vmatprep.subr.mxu0 %v308
  %653 = vmatpush1.msra.mxu0 %v307
  %654 = vmatprep.subr.mxu0 %v311
  %655 = vmatpush1.msra.mxu0 %v310
  %656 = vmatprep.subr.mxu0 %v314
  %657 = vmatpush1.msra.mxu0 %v313
  %658 = vmatprep.subr.mxu0 %v317
  %659 = vmatpush1.msra.mxu0 %v316
  %660 = vmatprep.subr.mxu0 %v320
  %661 = vmatpush1.msra.mxu0 %v319
  %662 = vmatprep.subr.mxu0 %v323
  %663 = vmatpush1.msra.mxu0 %v322
  %664 = vmatprep.subr.mxu0 %v326
  %665 = vmatpush1.msra.mxu0 %v325
  %666 = vmatprep.subr.mxu0 %v329
  %667 = vmatpush1.msra.mxu0 %v328
  %668 = vmatprep.subr.mxu0 %v332
  %669 = vmatpush1.msra.mxu0 %v331
  %670 = vmatprep.subr.mxu0 %v335
  %671 = vmatpush1.msra.mxu0 %v334
  %672 = vmatprep.subr.mxu0 %v338
  %673 = vmatpush1.msra.mxu0 %v337
  %674 = vmatprep.subr.mxu0 %v341
  %675 = vmatpush1.msra.mxu0 %v340
  %676 = vmatprep.subr.mxu0 %v344
  %677 = vmatpush1.msra.mxu0 %v343
  %678 = vmatprep.subr.mxu0 %v347
  %679 = vmatpush1.msra.mxu0 %v346
  %680 = vmatprep.subr.mxu0 %v350
  %681 = vmatpush1.msra.mxu0 %v349
  %682 = vmatprep.subr.mxu0 %v353
  %683 = vmatpush1.msra.mxu0 %v352
  %684 = vmatprep.subr.mxu0 %v356
  %685 = vmatpush1.msra.mxu0 %v355
  %686 = vmatprep.subr.mxu0 %v359
  %687 = vmatpush1.msra.mxu0 %v358
  %688 = vmatprep.mubr.f32.mxu0 %v22
  %689 = vmatmul.mubr.f32.gmra.mrb[0].mxu0 %v21
  %v690 = vpop.f32.mrb[0].mxu0
  %v691 = vadd.f32 %v578, %v690
  %v692 = vpop.f32.mrb[0].mxu0
  %v693 = vadd.f32 %v580, %v692
  %694 = vmatprep.mubr.f32.mxu0 %v29
  %695 = vmatmul.mubr.f32.gmra.mrb[0].mxu0 %v28
  %v696 = vpop.f32.mrb[0].mxu0
  %v697 = vadd.f32 %v584, %v696
  %v698 = vpop.f32.mrb[0].mxu0
  %v699 = vadd.f32 %v586, %v698
  %700 = vmatprep.mubr.f32.mxu0 %v36
  %701 = vmatmul.mubr.f32.gmra.mrb[0].mxu0 %v35
  %v702 = vpop.f32.mrb[0].mxu0
  %v703 = vadd.f32 %v590, %v702
  %v704 = vpop.f32.mrb[0].mxu0
  %v705 = vadd.f32 %v592, %v704
  %706 = vmatprep.mubr.f32.mxu0 %v43
  %707 = vmatmul.mubr.f32.gmra.mrb[0].mxu0 %v42
  %v708 = vpop.f32.mrb[0].mxu0
  %v709 = vadd.f32 %v596, %v708
  %v710 = vpop.f32.mrb[0].mxu0
  %v711 = vadd.f32 %v598, %v710
  %712 = vmatprep.mubr.f32.mxu0 %v50
  %713 = vmatmul.mubr.f32.gmra.mrb[0].mxu0 %v49
  %v714 = vpop.f32.mrb[0].mxu0
  %v715 = vadd.f32 %v602, %v714
  %v716 = vpop.f32.mrb[0].mxu0
  %v717 = vadd.f32 %v604, %v716
  %718 = vmatprep.mubr.f32.mxu0 %v57
  %719 = vmatmul.mubr.f32.gmra.mrb[0].mxu0 %v56
  %v720 = vpop.f32.mrb[0].mxu0
  %v721 = vadd.f32 %v608, %v720
  %v722 = vpop.f32.mrb[0].mxu0
  %v723 = vadd.f32 %v610, %v722
  %724 = vmatprep.mubr.f32.mxu0 %v64
  %725 = vmatmul.mubr.f32.gmra.mrb[0].mxu0 %v63
  %v726 = vpop.f32.mrb[0].mxu0
  %v727 = vadd.f32 %v614, %v726
  %v728 = vpop.f32.mrb[0].mxu0
  %v729 = vadd.f32 %v616, %v728
  %730 = vmatprep.mubr.f32.mxu0 %v71
  %731 = vmatmul.mubr.f32.gmra.mrb[0].mxu0 %v70
  %v732 = vpop.f32.mrb[0].mxu0
  %v733 = vadd.f32 %v620, %v732
  %v734 = vpop.f32.mrb[0].mxu0
  %v735 = vadd.f32 %v622, %v734
  %736 = vdwg.mxu0
  %737 = vmatprep.subr.mxu0 %v362
  %738 = vmatpush1.msra.mxu0 %v361
  %739 = vmatprep.subr.mxu0 %v365
  %740 = vmatpush1.msra.mxu0 %v364
  %741 = vmatprep.subr.mxu0 %v368
  %742 = vmatpush1.msra.mxu0 %v367
  %743 = vmatprep.subr.mxu0 %v371
  %744 = vmatpush1.msra.mxu0 %v370
  %745 = vmatprep.subr.mxu0 0.0
  %746 = vmatpush1.msra.mxu0 0.0
  %747 = vmatprep.subr.mxu0 0.0
  %748 = vmatpush1.msra.mxu0 0.0
  %749 = vmatprep.subr.mxu0 0.0
  %750 = vmatpush1.msra.mxu0 0.0
  %751 = vmatprep.subr.mxu0 0.0
  %752 = vmatpush1.msra.mxu0 0.0
  %753 = vmatprep.subr.mxu0 0.0
  %754 = vmatpush1.msra.mxu0 0.0
  %755 = vmatprep.subr.mxu0 0.0
  %756 = vmatpush1.msra.mxu0 0.0
  %757 = vmatprep.subr.mxu0 0.0
  %758 = vmatpush1.msra.mxu0 0.0
  %759 = vmatprep.subr.mxu0 0.0
  %760 = vmatpush1.msra.mxu0 0.0
  %761 = vmatprep.subr.mxu0 0.0
  %762 = vmatpush1.msra.mxu0 0.0
  %763 = vmatprep.subr.mxu0 0.0
  %764 = vmatpush1.msra.mxu0 0.0
  %765 = vmatprep.subr.mxu0 0.0
  %766 = vmatpush1.msra.mxu0 0.0
  %767 = vmatprep.subr.mxu0 0.0
  %768 = vmatpush1.msra.mxu0 0.0
  %769 = vmatprep.subr.mxu0 0.0
  %770 = vmatpush1.msra.mxu0 0.0
  %771 = vmatprep.subr.mxu0 0.0
  %772 = vmatpush1.msra.mxu0 0.0
  %773 = vmatprep.subr.mxu0 0.0
  %774 = vmatpush1.msra.mxu0 0.0
  %775 = vmatprep.subr.mxu0 0.0
  %776 = vmatpush1.msra.mxu0 0.0
  %777 = vmatprep.subr.mxu0 0.0
  %778 = vmatpush1.msra.mxu0 0.0
  %779 = vmatprep.subr.mxu0 0.0
  %780 = vmatpush1.msra.mxu0 0.0
  %781 = vmatprep.subr.mxu0 0.0
  %782 = vmatpush1.msra.mxu0 0.0
  %783 = vmatprep.subr.mxu0 0.0
  %784 = vmatpush1.msra.mxu0 0.0
  %785 = vmatprep.subr.mxu0 0.0
  %786 = vmatpush1.msra.mxu0 0.0
  %787 = vmatprep.subr.mxu0 0.0
  %788 = vmatpush1.msra.mxu0 0.0
  %789 = vmatprep.subr.mxu0 0.0
  %790 = vmatpush1.msra.mxu0 0.0
  %791 = vmatprep.subr.mxu0 0.0
  %792 = vmatpush1.msra.mxu0 0.0
  %793 = vmatprep.subr.mxu0 0.0
  %794 = vmatpush1.msra.mxu0 0.0
  %795 = vmatprep.subr.mxu0 0.0
  %796 = vmatpush1.msra.mxu0 0.0
  %797 = vmatprep.subr.mxu0 0.0
  %798 = vmatpush1.msra.mxu0 0.0
  %799 = vmatprep.subr.mxu0 0.0
  %800 = vmatpush1.msra.mxu0 0.0
  %801 = vmatprep.mubr.f32.mxu0 0.0
  %802 = vmatmul.mubr.f32.gmra.mrb[0].mxu0 %v375
  %v803 = vpop.f32.mrb[0].mxu0
  %v804 = vadd.f32 %v691, %v803
  %v805 = vpop.f32.mrb[0].mxu0
  %v806 = vadd.f32 %v693, %v805
  %807 = vmatprep.mubr.f32.mxu0 0.0
  %808 = vmatmul.mubr.f32.gmra.mrb[0].mxu0 %v378
  %v809 = vpop.f32.mrb[0].mxu0
  %v810 = vadd.f32 %v697, %v809
  %v811 = vpop.f32.mrb[0].mxu0
  %v812 = vadd.f32 %v699, %v811
  %813 = vmatprep.mubr.f32.mxu0 0.0
  %814 = vmatmul.mubr.f32.gmra.mrb[0].mxu0 %v381
  %v815 = vpop.f32.mrb[0].mxu0
  %v816 = vadd.f32 %v703, %v815
  %v817 = vpop.f32.mrb[0].mxu0
  %v818 = vadd.f32 %v705, %v817
  %819 = vmatprep.mubr.f32.mxu0 0.0
  %820 = vmatmul.mubr.f32.gmra.mrb[0].mxu0 %v384
  %v821 = vpop.f32.mrb[0].mxu0
  %v822 = vadd.f32 %v709, %v821
  %v823 = vpop.f32.mrb[0].mxu0
  %v824 = vadd.f32 %v711, %v823
  %825 = vmatprep.mubr.f32.mxu0 0.0
  %826 = vmatmul.mubr.f32.gmra.mrb[0].mxu0 %v387
  %v827 = vpop.f32.mrb[0].mxu0
  %v828 = vadd.f32 %v715, %v827
  %v829 = vpop.f32.mrb[0].mxu0
  %v830 = vadd.f32 %v717, %v829
  %831 = vmatprep.mubr.f32.mxu0 0.0
  %832 = vmatmul.mubr.f32.gmra.mrb[0].mxu0 %v390
  %v833 = vpop.f32.mrb[0].mxu0
  %v834 = vadd.f32 %v721, %v833
  %v835 = vpop.f32.mrb[0].mxu0
  %v836 = vadd.f32 %v723, %v835
  %837 = vmatprep.mubr.f32.mxu0 0.0
  %838 = vmatmul.mubr.f32.gmra.mrb[0].mxu0 %v393
  %v839 = vpop.f32.mrb[0].mxu0
  %v840 = vadd.f32 %v727, %v839
  %v841 = vpop.f32.mrb[0].mxu0
  %v842 = vadd.f32 %v729, %v841
  %843 = vmatprep.mubr.f32.mxu0 0.0
  %844 = vmatmul.mubr.f32.gmra.mrb[0].mxu0 %v396
  %v845 = vpop.f32.mrb[0].mxu0
  %v846 = vadd.f32 %v733, %v845
  %v847 = vpop.f32.mrb[0].mxu0
  %v848 = vadd.f32 %v735, %v847
  %849 = vdwg.mxu0
  %850 = vmatprep.subr.mxu0 0.0
  %851 = vmatpush1.msra.mxu0 %v75
  %852 = vmatprep.subr.mxu0 0.0
  %853 = vmatpush1.msra.mxu0 %v78
  %854 = vmatprep.subr.mxu0 0.0
  %855 = vmatpush1.msra.mxu0 %v81
  %856 = vmatprep.subr.mxu0 0.0
  %857 = vmatpush1.msra.mxu0 %v84
  %858 = vmatprep.subr.mxu0 0.0
  %859 = vmatpush1.msra.mxu0 %v87
  %860 = vmatprep.subr.mxu0 0.0
  %861 = vmatpush1.msra.mxu0 %v90
  %862 = vmatprep.subr.mxu0 0.0
  %863 = vmatpush1.msra.mxu0 %v93
  %864 = vmatprep.subr.mxu0 0.0
  %865 = vmatpush1.msra.mxu0 %v96
  %866 = vmatprep.subr.mxu0 0.0
  %867 = vmatpush1.msra.mxu0 %v99
  %868 = vmatprep.subr.mxu0 0.0
  %869 = vmatpush1.msra.mxu0 %v102
  %870 = vmatprep.subr.mxu0 0.0
  %871 = vmatpush1.msra.mxu0 %v105
  %872 = vmatprep.subr.mxu0 0.0
  %873 = vmatpush1.msra.mxu0 %v108
  %874 = vmatprep.subr.mxu0 0.0
  %875 = vmatpush1.msra.mxu0 %v111
  %876 = vmatprep.subr.mxu0 0.0
  %877 = vmatpush1.msra.mxu0 %v114
  %878 = vmatprep.subr.mxu0 0.0
  %879 = vmatpush1.msra.mxu0 %v117
  %880 = vmatprep.subr.mxu0 0.0
  %881 = vmatpush1.msra.mxu0 %v120
  %882 = vmatprep.subr.mxu0 0.0
  %883 = vmatpush1.msra.mxu0 %v123
  %884 = vmatprep.subr.mxu0 0.0
  %885 = vmatpush1.msra.mxu0 %v126
  %886 = vmatprep.subr.mxu0 0.0
  %887 = vmatpush1.msra.mxu0 %v129
  %888 = vmatprep.subr.mxu0 0.0
  %889 = vmatpush1.msra.mxu0 %v132
  %890 = vmatprep.subr.mxu0 0.0
  %891 = vmatpush1.msra.mxu0 %v135
  %892 = vmatprep.subr.mxu0 0.0
  %893 = vmatpush1.msra.mxu0 %v138
  %894 = vmatprep.subr.mxu0 0.0
  %895 = vmatpush1.msra.mxu0 %v141
  %896 = vmatprep.subr.mxu0 0.0
  %897 = vmatpush1.msra.mxu0 %v144
  %898 = vmatprep.subr.mxu0 0.0
  %899 = vmatpush1.msra.mxu0 %v147
  %900 = vmatprep.subr.mxu0 0.0
  %901 = vmatpush1.msra.mxu0 %v150
  %902 = vmatprep.subr.mxu0 0.0
  %903 = vmatpush1.msra.mxu0 %v153
  %904 = vmatprep.subr.mxu0 0.0
  %905 = vmatpush1.msra.mxu0 %v156
  %906 = vmatprep.subr.mxu0 0.0
  %907 = vmatpush1.msra.mxu0 %v159
  %908 = vmatprep.subr.mxu0 0.0
  %909 = vmatpush1.msra.mxu0 %v162
  %910 = vmatprep.subr.mxu0 0.0
  %911 = vmatpush1.msra.mxu0 %v165
  %912 = vmatprep.subr.mxu0 0.0
  %913 = vmatpush1.msra.mxu0 %v168
  %914 = vmatprep.mubr.f32.mxu0 %v18
  %915 = vmatmul.mubr.f32.gmra.mrb[0].mxu0 %v17
  %v916 = vpop.f32.mrb[0].mxu0
  %v917 = vadd.f32 0.0, %v916
  %v918 = vpop.f32.mrb[0].mxu0
  %919 = vmatprep.mubr.f32.mxu0 %v25
  %920 = vmatmul.mubr.f32.gmra.mrb[0].mxu0 %v24
  %v921 = vpop.f32.mrb[0].mxu0
  %v922 = vadd.f32 0.0, %v921
  %v923 = vpop.f32.mrb[0].mxu0
  %924 = vmatprep.mubr.f32.mxu0 %v32
  %925 = vmatmul.mubr.f32.gmra.mrb[0].mxu0 %v31
  %v926 = vpop.f32.mrb[0].mxu0
  %v927 = vadd.f32 0.0, %v926
  %v928 = vpop.f32.mrb[0].mxu0
  %929 = vmatprep.mubr.f32.mxu0 %v39
  %930 = vmatmul.mubr.f32.gmra.mrb[0].mxu0 %v38
  %v931 = vpop.f32.mrb[0].mxu0
  %v932 = vadd.f32 0.0, %v931
  %v933 = vpop.f32.mrb[0].mxu0
  %934 = vmatprep.mubr.f32.mxu0 %v46
  %935 = vmatmul.mubr.f32.gmra.mrb[0].mxu0 %v45
  %v936 = vpop.f32.mrb[0].mxu0
  %v937 = vadd.f32 0.0, %v936
  %v938 = vpop.f32.mrb[0].mxu0
  %939 = vmatprep.mubr.f32.mxu0 %v53
  %940 = vmatmul.mubr.f32.gmra.mrb[0].mxu0 %v52
  %v941 = vpop.f32.mrb[0].mxu0
  %v942 = vadd.f32 0.0, %v941
  %v943 = vpop.f32.mrb[0].mxu0
  %944 = vmatprep.mubr.f32.mxu0 %v60
  %945 = vmatmul.mubr.f32.gmra.mrb[0].mxu0 %v59
  %v946 = vpop.f32.mrb[0].mxu0
  %v947 = vadd.f32 0.0, %v946
  %v948 = vpop.f32.mrb[0].mxu0
  %949 = vmatprep.mubr.f32.mxu0 %v67
  %950 = vmatmul.mubr.f32.gmra.mrb[0].mxu0 %v66
  %v951 = vpop.f32.mrb[0].mxu0
  %v952 = vadd.f32 0.0, %v951
  %v953 = vpop.f32.mrb[0].mxu0
  %954 = vdwg.mxu0
  %955 = vmatprep.subr.mxu0 0.0
  %956 = vmatpush1.msra.mxu0 %v171
  %957 = vmatprep.subr.mxu0 0.0
  %958 = vmatpush1.msra.mxu0 %v174
  %959 = vmatprep.subr.mxu0 0.0
  %960 = vmatpush1.msra.mxu0 %v177
  %961 = vmatprep.subr.mxu0 0.0
  %962 = vmatpush1.msra.mxu0 %v180
  %963 = vmatprep.subr.mxu0 0.0
  %964 = vmatpush1.msra.mxu0 %v183
  %965 = vmatprep.subr.mxu0 0.0
  %966 = vmatpush1.msra.mxu0 %v186
  %967 = vmatprep.subr.mxu0 0.0
  %968 = vmatpush1.msra.mxu0 %v189
  %969 = vmatprep.subr.mxu0 0.0
  %970 = vmatpush1.msra.mxu0 %v192
  %971 = vmatprep.subr.mxu0 0.0
  %972 = vmatpush1.msra.mxu0 %v195
  %973 = vmatprep.subr.mxu0 0.0
  %974 = vmatpush1.msra.mxu0 %v198
  %975 = vmatprep.subr.mxu0 0.0
  %976 = vmatpush1.msra.mxu0 %v201
  %977 = vmatprep.subr.mxu0 0.0
  %978 = vmatpush1.msra.mxu0 %v204
  %979 = vmatprep.subr.mxu0 0.0
  %980 = vmatpush1.msra.mxu0 %v207
  %981 = vmatprep.subr.mxu0 0.0
  %982 = vmatpush1.msra.mxu0 %v210
  %983 = vmatprep.subr.mxu0 0.0
  %984 = vmatpush1.msra.mxu0 %v213
  %985 = vmatprep.subr.mxu0 0.0
  %986 = vmatpush1.msra.mxu0 %v216
  %987 = vmatprep.subr.mxu0 0.0
  %988 = vmatpush1.msra.mxu0 %v219
  %989 = vmatprep.subr.mxu0 0.0
  %990 = vmatpush1.msra.mxu0 %v222
  %991 = vmatprep.subr.mxu0 0.0
  %992 = vmatpush1.msra.mxu0 %v225
  %993 = vmatprep.subr.mxu0 0.0
  %994 = vmatpush1.msra.mxu0 %v228
  %995 = vmatprep.subr.mxu0 0.0
  %996 = vmatpush1.msra.mxu0 %v231
  %997 = vmatprep.subr.mxu0 0.0
  %998 = vmatpush1.msra.mxu0 %v234
  %999 = vmatprep.subr.mxu0 0.0
  %1000 = vmatpush1.msra.mxu0 %v237
  %1001 = vmatprep.subr.mxu0 0.0
  %1002 = vmatpush1.msra.mxu0 %v240
  %1003 = vmatprep.subr.mxu0 0.0
  %1004 = vmatpush1.msra.mxu0 %v243
  %1005 = vmatprep.subr.mxu0 0.0
  %1006 = vmatpush1.msra.mxu0 %v246
  %1007 = vmatprep.subr.mxu0 0.0
  %1008 = vmatpush1.msra.mxu0 %v249
  %1009 = vmatprep.subr.mxu0 0.0
  %1010 = vmatpush1.msra.mxu0 %v252
  %1011 = vmatprep.subr.mxu0 0.0
  %1012 = vmatpush1.msra.mxu0 %v255
  %1013 = vmatprep.subr.mxu0 0.0
  %1014 = vmatpush1.msra.mxu0 %v258
  %1015 = vmatprep.subr.mxu0 0.0
  %1016 = vmatpush1.msra.mxu0 %v261
  %1017 = vmatprep.subr.mxu0 0.0
  %1018 = vmatpush1.msra.mxu0 %v264
  %1019 = vmatprep.mubr.f32.mxu0 %v20
  %1020 = vmatmul.mubr.f32.gmra.mrb[0].mxu0 %v19
  %v1021 = vpop.f32.mrb[0].mxu0
  %v1022 = vadd.f32 %v917, %v1021
  %v1023 = vpop.f32.mrb[0].mxu0
  %1024 = vmatprep.mubr.f32.mxu0 %v27
  %1025 = vmatmul.mubr.f32.gmra.mrb[0].mxu0 %v26
  %v1026 = vpop.f32.mrb[0].mxu0
  %v1027 = vadd.f32 %v922, %v1026
  %v1028 = vpop.f32.mrb[0].mxu0
  %1029 = vmatprep.mubr.f32.mxu0 %v34
  %1030 = vmatmul.mubr.f32.gmra.mrb[0].mxu0 %v33
  %v1031 = vpop.f32.mrb[0].mxu0
  %v1032 = vadd.f32 %v927, %v1031
  %v1033 = vpop.f32.mrb[0].mxu0
  %1034 = vmatprep.mubr.f32.mxu0 %v41
  %1035 = vmatmul.mubr.f32.gmra.mrb[0].mxu0 %v40
  %v1036 = vpop.f32.mrb[0].mxu0
  %v1037 = vadd.f32 %v932, %v1036
  %v1038 = vpop.f32.mrb[0].mxu0
  %1039 = vmatprep.mubr.f32.mxu0 %v48
  %1040 = vmatmul.mubr.f32.gmra.mrb[0].mxu0 %v47
  %v1041 = vpop.f32.mrb[0].mxu0
  %v1042 = vadd.f32 %v937, %v1041
  %v1043 = vpop.f32.mrb[0].mxu0
  %1044 = vmatprep.mubr.f32.mxu0 %v55
  %1045 = vmatmul.mubr.f32.gmra.mrb[0].mxu0 %v54
  %v1046 = vpop.f32.mrb[0].mxu0
  %v1047 = vadd.f32 %v942, %v1046
  %v1048 = vpop.f32.mrb[0].mxu0
  %1049 = vmatprep.mubr.f32.mxu0 %v62
  %1050 = vmatmul.mubr.f32.gmra.mrb[0].mxu0 %v61
  %v1051 = vpop.f32.mrb[0].mxu0
  %v1052 = vadd.f32 %v947, %v1051
  %v1053 = vpop.f32.mrb[0].mxu0
  %1054 = vmatprep.mubr.f32.mxu0 %v69
  %1055 = vmatmul.mubr.f32.gmra.mrb[0].mxu0 %v68
  %v1056 = vpop.f32.mrb[0].mxu0
  %v1057 = vadd.f32 %v952, %v1056
  %v1058 = vpop.f32.mrb[0].mxu0
  %1059 = vdwg.mxu0
  %1060 = vmatprep.subr.mxu0 0.0
  %1061 = vmatpush1.msra.mxu0 %v267
  %1062 = vmatprep.subr.mxu0 0.0
  %1063 = vmatpush1.msra.mxu0 %v270
  %1064 = vmatprep.subr.mxu0 0.0
  %1065 = vmatpush1.msra.mxu0 %v273
  %1066 = vmatprep.subr.mxu0 0.0
  %1067 = vmatpush1.msra.mxu0 %v276
  %1068 = vmatprep.subr.mxu0 0.0
  %1069 = vmatpush1.msra.mxu0 %v279
  %1070 = vmatprep.subr.mxu0 0.0
  %1071 = vmatpush1.msra.mxu0 %v282
  %1072 = vmatprep.subr.mxu0 0.0
  %1073 = vmatpush1.msra.mxu0 %v285
  %1074 = vmatprep.subr.mxu0 0.0
  %1075 = vmatpush1.msra.mxu0 %v288
  %1076 = vmatprep.subr.mxu0 0.0
  %1077 = vmatpush1.msra.mxu0 %v291
  %1078 = vmatprep.subr.mxu0 0.0
  %1079 = vmatpush1.msra.mxu0 %v294
  %1080 = vmatprep.subr.mxu0 0.0
  %1081 = vmatpush1.msra.mxu0 %v297
  %1082 = vmatprep.subr.mxu0 0.0
  %1083 = vmatpush1.msra.mxu0 %v300
  %1084 = vmatprep.subr.mxu0 0.0
  %1085 = vmatpush1.msra.mxu0 %v303
  %1086 = vmatprep.subr.mxu0 0.0
  %1087 = vmatpush1.msra.mxu0 %v306
  %1088 = vmatprep.subr.mxu0 0.0
  %1089 = vmatpush1.msra.mxu0 %v309
  %1090 = vmatprep.subr.mxu0 0.0
  %1091 = vmatpush1.msra.mxu0 %v312
  %1092 = vmatprep.subr.mxu0 0.0
  %1093 = vmatpush1.msra.mxu0 %v315
  %1094 = vmatprep.subr.mxu0 0.0
  %1095 = vmatpush1.msra.mxu0 %v318
  %1096 = vmatprep.subr.mxu0 0.0
  %1097 = vmatpush1.msra.mxu0 %v321
  %1098 = vmatprep.subr.mxu0 0.0
  %1099 = vmatpush1.msra.mxu0 %v324
  %1100 = vmatprep.subr.mxu0 0.0
  %1101 = vmatpush1.msra.mxu0 %v327
  %1102 = vmatprep.subr.mxu0 0.0
  %1103 = vmatpush1.msra.mxu0 %v330
  %1104 = vmatprep.subr.mxu0 0.0
  %1105 = vmatpush1.msra.mxu0 %v333
  %1106 = vmatprep.subr.mxu0 0.0
  %1107 = vmatpush1.msra.mxu0 %v336
  %1108 = vmatprep.subr.mxu0 0.0
  %1109 = vmatpush1.msra.mxu0 %v339
  %1110 = vmatprep.subr.mxu0 0.0
  %1111 = vmatpush1.msra.mxu0 %v342
  %1112 = vmatprep.subr.mxu0 0.0
  %1113 = vmatpush1.msra.mxu0 %v345
  %1114 = vmatprep.subr.mxu0 0.0
  %1115 = vmatpush1.msra.mxu0 %v348
  %1116 = vmatprep.subr.mxu0 0.0
  %1117 = vmatpush1.msra.mxu0 %v351
  %1118 = vmatprep.subr.mxu0 0.0
  %1119 = vmatpush1.msra.mxu0 %v354
  %1120 = vmatprep.subr.mxu0 0.0
  %1121 = vmatpush1.msra.mxu0 %v357
  %1122 = vmatprep.subr.mxu0 0.0
  %1123 = vmatpush1.msra.mxu0 %v360
  %1124 = vmatprep.mubr.f32.mxu0 %v22
  %1125 = vmatmul.mubr.f32.gmra.mrb[0].mxu0 %v21
  %v1126 = vpop.f32.mrb[0].mxu0
  %v1127 = vadd.f32 %v1022, %v1126
  %v1128 = vpop.f32.mrb[0].mxu0
  %1129 = vmatprep.mubr.f32.mxu0 %v29
  %1130 = vmatmul.mubr.f32.gmra.mrb[0].mxu0 %v28
  %v1131 = vpop.f32.mrb[0].mxu0
  %v1132 = vadd.f32 %v1027, %v1131
  %v1133 = vpop.f32.mrb[0].mxu0
  %1134 = vmatprep.mubr.f32.mxu0 %v36
  %1135 = vmatmul.mubr.f32.gmra.mrb[0].mxu0 %v35
  %v1136 = vpop.f32.mrb[0].mxu0
  %v1137 = vadd.f32 %v1032, %v1136
  %v1138 = vpop.f32.mrb[0].mxu0
  %1139 = vmatprep.mubr.f32.mxu0 %v43
  %1140 = vmatmul.mubr.f32.gmra.mrb[0].mxu0 %v42
  %v1141 = vpop.f32.mrb[0].mxu0
  %v1142 = vadd.f32 %v1037, %v1141
  %v1143 = vpop.f32.mrb[0].mxu0
  %1144 = vmatprep.mubr.f32.mxu0 %v50
  %1145 = vmatmul.mubr.f32.gmra.mrb[0].mxu0 %v49
  %v1146 = vpop.f32.mrb[0].mxu0
  %v1147 = vadd.f32 %v1042, %v1146
  %v1148 = vpop.f32.mrb[0].mxu0
  %1149 = vmatprep.mubr.f32.mxu0 %v57
  %1150 = vmatmul.mubr.f32.gmra.mrb[0].mxu0 %v56
  %v1151 = vpop.f32.mrb[0].mxu0
  %v1152 = vadd.f32 %v1047, %v1151
  %v1153 = vpop.f32.mrb[0].mxu0
  %1154 = vmatprep.mubr.f32.mxu0 %v64
  %1155 = vmatmul.mubr.f32.gmra.mrb[0].mxu0 %v63
  %v1156 = vpop.f32.mrb[0].mxu0
  %v1157 = vadd.f32 %v1052, %v1156
  %v1158 = vpop.f32.mrb[0].mxu0
  %1159 = vmatprep.mubr.f32.mxu0 %v71
  %1160 = vmatmul.mubr.f32.gmra.mrb[0].mxu0 %v70
  %v1161 = vpop.f32.mrb[0].mxu0
  %v1162 = vadd.f32 %v1057, %v1161
  %v1163 = vpop.f32.mrb[0].mxu0
  %1164 = vdwg.mxu0
  %1165 = vmatprep.subr.mxu0 0.0
  %1166 = vmatpush1.msra.mxu0 %v363
  %1167 = vmatprep.subr.mxu0 0.0
  %1168 = vmatpush1.msra.mxu0 %v366
  %1169 = vmatprep.subr.mxu0 0.0
  %1170 = vmatpush1.msra.mxu0 %v369
  %1171 = vmatprep.subr.mxu0 0.0
  %1172 = vmatpush1.msra.mxu0 %v372
  %1173 = vmatprep.subr.mxu0 0.0
  %1174 = vmatpush1.msra.mxu0 0.0
  %1175 = vmatprep.subr.mxu0 0.0
  %1176 = vmatpush1.msra.mxu0 0.0
  %1177 = vmatprep.subr.mxu0 0.0
  %1178 = vmatpush1.msra.mxu0 0.0
  %1179 = vmatprep.subr.mxu0 0.0
  %1180 = vmatpush1.msra.mxu0 0.0
  %1181 = vmatprep.subr.mxu0 0.0
  %1182 = vmatpush1.msra.mxu0 0.0
  %1183 = vmatprep.subr.mxu0 0.0
  %1184 = vmatpush1.msra.mxu0 0.0
  %1185 = vmatprep.subr.mxu0 0.0
  %1186 = vmatpush1.msra.mxu0 0.0
  %1187 = vmatprep.subr.mxu0 0.0
  %1188 = vmatpush1.msra.mxu0 0.0
  %1189 = vmatprep.subr.mxu0 0.0
  %1190 = vmatpush1.msra.mxu0 0.0
  %1191 = vmatprep.subr.mxu0 0.0
  %1192 = vmatpush1.msra.mxu0 0.0
  %1193 = vmatprep.subr.mxu0 0.0
  %1194 = vmatpush1.msra.mxu0 0.0
  %1195 = vmatprep.subr.mxu0 0.0
  %1196 = vmatpush1.msra.mxu0 0.0
  %1197 = vmatprep.subr.mxu0 0.0
  %1198 = vmatpush1.msra.mxu0 0.0
  %1199 = vmatprep.subr.mxu0 0.0
  %1200 = vmatpush1.msra.mxu0 0.0
  %1201 = vmatprep.subr.mxu0 0.0
  %1202 = vmatpush1.msra.mxu0 0.0
  %1203 = vmatprep.subr.mxu0 0.0
  %1204 = vmatpush1.msra.mxu0 0.0
  %1205 = vmatprep.subr.mxu0 0.0
  %1206 = vmatpush1.msra.mxu0 0.0
  %1207 = vmatprep.subr.mxu0 0.0
  %1208 = vmatpush1.msra.mxu0 0.0
  %1209 = vmatprep.subr.mxu0 0.0
  %1210 = vmatpush1.msra.mxu0 0.0
  %1211 = vmatprep.subr.mxu0 0.0
  %1212 = vmatpush1.msra.mxu0 0.0
  %1213 = vmatprep.subr.mxu0 0.0
  %1214 = vmatpush1.msra.mxu0 0.0
  %1215 = vmatprep.subr.mxu0 0.0
  %1216 = vmatpush1.msra.mxu0 0.0
  %1217 = vmatprep.subr.mxu0 0.0
  %1218 = vmatpush1.msra.mxu0 0.0
  %1219 = vmatprep.subr.mxu0 0.0
  %1220 = vmatpush1.msra.mxu0 0.0
  %1221 = vmatprep.subr.mxu0 0.0
  %1222 = vmatpush1.msra.mxu0 0.0
  %1223 = vmatprep.subr.mxu0 0.0
  %1224 = vmatpush1.msra.mxu0 0.0
  %1225 = vmatprep.subr.mxu0 0.0
  %1226 = vmatpush1.msra.mxu0 0.0
  %1227 = vmatprep.subr.mxu0 0.0
  %1228 = vmatpush1.msra.mxu0 0.0
  %1229 = vmatprep.mubr.f32.mxu0 0.0
  %1230 = vmatmul.mubr.f32.gmra.mrb[0].mxu0 %v375
  %v1231 = vpop.f32.mrb[0].mxu0
  %v1232 = vadd.f32 %v1127, %v1231
  %v1233 = vpop.f32.mrb[0].mxu0
  %1234 = vmatprep.mubr.f32.mxu0 0.0
  %1235 = vmatmul.mubr.f32.gmra.mrb[0].mxu0 %v378
  %v1236 = vpop.f32.mrb[0].mxu0
  %v1237 = vadd.f32 %v1132, %v1236
  %v1238 = vpop.f32.mrb[0].mxu0
  %1239 = vmatprep.mubr.f32.mxu0 0.0
  %1240 = vmatmul.mubr.f32.gmra.mrb[0].mxu0 %v381
  %v1241 = vpop.f32.mrb[0].mxu0
  %v1242 = vadd.f32 %v1137, %v1241
  %v1243 = vpop.f32.mrb[0].mxu0
  %1244 = vmatprep.mubr.f32.mxu0 0.0
  %1245 = vmatmul.mubr.f32.gmra.mrb[0].mxu0 %v384
  %v1246 = vpop.f32.mrb[0].mxu0
  %v1247 = vadd.f32 %v1142, %v1246
  %v1248 = vpop.f32.mrb[0].mxu0
  %1249 = vmatprep.mubr.f32.mxu0 0.0
  %1250 = vmatmul.mubr.f32.gmra.mrb[0].mxu0 %v387
  %v1251 = vpop.f32.mrb[0].mxu0
  %v1252 = vadd.f32 %v1147, %v1251
  %v1253 = vpop.f32.mrb[0].mxu0
  %1254 = vmatprep.mubr.f32.mxu0 0.0
  %1255 = vmatmul.mubr.f32.gmra.mrb[0].mxu0 %v390
  %v1256 = vpop.f32.mrb[0].mxu0
  %v1257 = vadd.f32 %v1152, %v1256
  %v1258 = vpop.f32.mrb[0].mxu0
  %1259 = vmatprep.mubr.f32.mxu0 0.0
  %1260 = vmatmul.mubr.f32.gmra.mrb[0].mxu0 %v393
  %v1261 = vpop.f32.mrb[0].mxu0
  %v1262 = vadd.f32 %v1157, %v1261
  %v1263 = vpop.f32.mrb[0].mxu0
  %1264 = vmatprep.mubr.f32.mxu0 0.0
  %1265 = vmatmul.mubr.f32.gmra.mrb[0].mxu0 %v396
  %v1266 = vpop.f32.mrb[0].mxu0
  %v1267 = vadd.f32 %v1162, %v1266
  %v1268 = vpop.f32.mrb[0].mxu0
  %1269 = vdwg.mxu0
  %v1270 = vld [vmem:[%s2] sm:$0xff]
  %v1271 = vld [vmem:[%s2 + $0x8] sm:$0xff]
  %v1272 = vld [vmem:[%s2 + $0x10] sm:$0xff]
  %v1273 = vld [vmem:[%s2 + $0x18] sm:$0xff]
  %v1274 = vld [vmem:[%s2 + $0x20] sm:$0xff]
  %v1275 = vld [vmem:[%s2 + $0x28] sm:$0xff]
  %v1276 = vld [vmem:[%s2 + $0x30] sm:$0xff]
  %v1277 = vld [vmem:[%s2 + $0x38] sm:$0xff]
  %1279 = vset.pattern.permute.xlu0 0
  %1280 = vperm.xlu0 %1279, %v1270
  %v1281 = vpop.permute.xlu0 %1280
  %1284 = vset.pattern.permute.xlu0 0
  %1285 = vperm.xlu0 %1284, %v1271
  %v1286 = vpop.permute.xlu0 %1285
  %1289 = vset.pattern.permute.xlu0 0
  %1290 = vperm.xlu0 %1289, %v1272
  %v1291 = vpop.permute.xlu0 %1290
  %1294 = vset.pattern.permute.xlu0 0
  %1295 = vperm.xlu0 %1294, %v1273
  %v1296 = vpop.permute.xlu0 %1295
  %1299 = vset.pattern.permute.xlu0 0
  %1300 = vperm.xlu0 %1299, %v1274
  %v1301 = vpop.permute.xlu0 %1300
  %1304 = vset.pattern.permute.xlu0 0
  %1305 = vperm.xlu0 %1304, %v1275
  %v1306 = vpop.permute.xlu0 %1305
  %1309 = vset.pattern.permute.xlu0 0
  %1310 = vperm.xlu0 %1309, %v1276
  %v1311 = vpop.permute.xlu0 %1310
  %1314 = vset.pattern.permute.xlu0 0
  %1315 = vperm.xlu0 %1314, %v1277
  %v1316 = vpop.permute.xlu0 %1315
  %v1318 = vmul.f32 %v804, %v1281
  %v1319 = vmul.f32 %v806, %v1281
  %v1320 = vmul.f32 %v1232, %v1281
  %v1321 = vmul.f32 %v810, %v1286
  %v1322 = vmul.f32 %v812, %v1286
  %v1323 = vmul.f32 %v1237, %v1286
  %v1324 = vmul.f32 %v816, %v1291
  %v1325 = vmul.f32 %v818, %v1291
  %v1326 = vmul.f32 %v1242, %v1291
  %v1327 = vmul.f32 %v822, %v1296
  %v1328 = vmul.f32 %v824, %v1296
  %v1329 = vmul.f32 %v1247, %v1296
  %v1330 = vmul.f32 %v828, %v1301
  %v1331 = vmul.f32 %v830, %v1301
  %v1332 = vmul.f32 %v1252, %v1301
  %v1333 = vmul.f32 %v834, %v1306
  %v1334 = vmul.f32 %v836, %v1306
  %v1335 = vmul.f32 %v1257, %v1306
  %v1336 = vmul.f32 %v840, %v1311
  %v1337 = vmul.f32 %v842, %v1311
  %v1338 = vmul.f32 %v1262, %v1311
  %v1339 = vmul.f32 %v846, %v1316
  %v1340 = vmul.f32 %v848, %v1316
  %v1341 = vmul.f32 %v1267, %v1316
  %v1342 = vld [vmem:[%s3] sm:$0xff]
  %v1343 = vld [vmem:[%s3 + $0x8] sm:$0xff]
  %v1344 = vld [vmem:[%s3 + $0x10] sm:$0xff]
  %v1345 = vld [vmem:[%s3 + $0x18] sm:$0xff]
  %v1346 = vld [vmem:[%s3 + $0x20] sm:$0xff]
  %v1347 = vld [vmem:[%s3 + $0x28] sm:$0xff]
  %v1348 = vld [vmem:[%s3 + $0x30] sm:$0xff]
  %v1349 = vld [vmem:[%s3 + $0x38] sm:$0xff]
  %1351 = vset.pattern.permute.xlu0 0
  %1352 = vperm.xlu0 %1351, %v1342
  %v1353 = vpop.permute.xlu0 %1352
  %1356 = vset.pattern.permute.xlu0 0
  %1357 = vperm.xlu0 %1356, %v1343
  %v1358 = vpop.permute.xlu0 %1357
  %1361 = vset.pattern.permute.xlu0 0
  %1362 = vperm.xlu0 %1361, %v1344
  %v1363 = vpop.permute.xlu0 %1362
  %1366 = vset.pattern.permute.xlu0 0
  %1367 = vperm.xlu0 %1366, %v1345
  %v1368 = vpop.permute.xlu0 %1367
  %1371 = vset.pattern.permute.xlu0 0
  %1372 = vperm.xlu0 %1371, %v1346
  %v1373 = vpop.permute.xlu0 %1372
  %1376 = vset.pattern.permute.xlu0 0
  %1377 = vperm.xlu0 %1376, %v1347
  %v1378 = vpop.permute.xlu0 %1377
  %1381 = vset.pattern.permute.xlu0 0
  %1382 = vperm.xlu0 %1381, %v1348
  %v1383 = vpop.permute.xlu0 %1382
  %1386 = vset.pattern.permute.xlu0 0
  %1387 = vperm.xlu0 %1386, %v1349
  %v1388 = vpop.permute.xlu0 %1387
  %v1390 = vadd.f32 %v1318, %v1353
  %v1391 = vadd.f32 %v1319, %v1353
  %v1392 = vadd.f32 %v1320, %v1353
  %v1393 = vadd.f32 %v1321, %v1358
  %v1394 = vadd.f32 %v1322, %v1358
  %v1395 = vadd.f32 %v1323, %v1358
  %v1396 = vadd.f32 %v1324, %v1363
  %v1397 = vadd.f32 %v1325, %v1363
  %v1398 = vadd.f32 %v1326, %v1363
  %v1399 = vadd.f32 %v1327, %v1368
  %v1400 = vadd.f32 %v1328, %v1368
  %v1401 = vadd.f32 %v1329, %v1368
  %v1402 = vadd.f32 %v1330, %v1373
  %v1403 = vadd.f32 %v1331, %v1373
  %v1404 = vadd.f32 %v1332, %v1373
  %v1405 = vadd.f32 %v1333, %v1378
  %v1406 = vadd.f32 %v1334, %v1378
  %v1407 = vadd.f32 %v1335, %v1378
  %v1408 = vadd.f32 %v1336, %v1383
  %v1409 = vadd.f32 %v1337, %v1383
  %v1410 = vadd.f32 %v1338, %v1383
  %v1411 = vadd.f32 %v1339, %v1388
  %v1412 = vadd.f32 %v1340, %v1388
  %v1413 = vadd.f32 %v1341, %v1388
  %1414 = vst [vmem:[%s4] sm:$0xff] %v1390
  %1415 = vst [vmem:[%s4 + $0x8] sm:$0xff] %v1391
  %vm1416 = vcmask 670720
  %1417 = vst.msk [vmem:[%s4 + $0x10] sm:$0xff] %vm1416, %v1392
  %1418 = vst [vmem:[%s4 + $0x18] sm:$0xff] %v1393
  %1419 = vst [vmem:[%s4 + $0x20] sm:$0xff] %v1394
  %1420 = vst.msk [vmem:[%s4 + $0x28] sm:$0xff] %vm1416, %v1395
  %1421 = vst [vmem:[%s4 + $0x30] sm:$0xff] %v1396
  %1422 = vst [vmem:[%s4 + $0x38] sm:$0xff] %v1397
  %1423 = vst.msk [vmem:[%s4 + $0x40] sm:$0xff] %vm1416, %v1398
  %1424 = vst [vmem:[%s4 + $0x48] sm:$0xff] %v1399
  %1425 = vst [vmem:[%s4 + $0x50] sm:$0xff] %v1400
  %1426 = vst.msk [vmem:[%s4 + $0x58] sm:$0xff] %vm1416, %v1401
  %1427 = vst [vmem:[%s4 + $0x60] sm:$0xff] %v1402
  %1428 = vst [vmem:[%s4 + $0x68] sm:$0xff] %v1403
  %1429 = vst.msk [vmem:[%s4 + $0x70] sm:$0xff] %vm1416, %v1404
  %1430 = vst [vmem:[%s4 + $0x78] sm:$0xff] %v1405
  %1431 = vst [vmem:[%s4 + $0x80] sm:$0xff] %v1406
  %1432 = vst.msk [vmem:[%s4 + $0x88] sm:$0xff] %vm1416, %v1407
  %1433 = vst [vmem:[%s4 + $0x90] sm:$0xff] %v1408
  %1434 = vst [vmem:[%s4 + $0x98] sm:$0xff] %v1409
  %1435 = vst.msk [vmem:[%s4 + $0xa0] sm:$0xff] %vm1416, %v1410
  %1436 = vst [vmem:[%s4 + $0xa8] sm:$0xff] %v1411
  %1437 = vst [vmem:[%s4 + $0xb0] sm:$0xff] %v1412
  %1438 = vst.msk [vmem:[%s4 + $0xb8] sm:$0xff] %vm1416, %v1413
  // Predicated region
  $region18: #{evaluate.4} parent=0 // pred_check
    _
  $region19: #{evaluate.4} parent=0 // pred_check_branch
    %1440 = sbr.rel (0) target = $region21
  $region20: #{evaluate.4} parent=0 // pred_region
    _
  $region21: #{evaluate.4} parent=0 // pred_fallthru
    _
  // Predicated region
  $region22: #{evaluate.4} parent=0 // pred_check
    _
  $region23: #{evaluate.4} parent=0 // pred_check_branch
    %1442 = sbr.rel (0) target = $region25
  $region24: #{evaluate.4} parent=0 // pred_region
    _
  $region25: #{evaluate.4} parent=0 // pred_fallthru
    _

// kernel: squeeze.2
$region0: #{squeeze.2}
  %s0 = inlined_call_operand.vmem [shape: f32[1,2,32,169], index: 0, kind: input, shape index: {}]
  %s1 = inlined_call_operand.vmem [shape: f32[2,5408], index: 1, kind: output, shape index: {}]
  $region1: #{squeeze.2} parent=0
    #allocation0 [shape = 'u8[176128]{0}', space=vmem, size = 0x2b000, scoped, tag = 'scoped mem for output reshape']
    %s2 = scalar_lea.vmem %s0, 8
    %v3 = vld [vmem:[%s2] sm:$0x1]
    %s4 = scalar_lea.vmem %s0, 71
    %v5 = vld [vmem:[%s4] sm:$0x2]
    %vm6 = vcmask 1041409
    %v7 = vsel %vm6, %v5, %v3
    %vm8 = vcmask 334848
    %s9 = scalar_lea.vmem [#allocation0], 8
    %10 = vst.msk [vmem:[%s9] sm:$0x3] %vm8, %v7
    %v11 = vld [vmem:[%s0] sm:$0x1]
    %s12 = scalar_lea.vmem %s0, 63
    %v13 = vld [vmem:[%s12] sm:$0x2]
    %vm14 = vcmask 1041409
    %v15 = vsel %vm14, %v13, %v11
    %16 = vst [vmem:[#allocation0] sm:$0x3] %v15
    %s17 = scalar_lea.vmem %s0, 60
    %v18 = vld [vmem:[%s17] sm:$0x1]
    %s19 = scalar_lea.vmem %s0, 123
    %v20 = vld [vmem:[%s19] sm:$0x2]
    %vm21 = vcmask 1041409
    %v22 = vsel %vm21, %v20, %v18
    %s23 = scalar_lea.vmem %s0, 52
    %v24 = vld [vmem:[%s23] sm:$0x1]
    %s25 = scalar_lea.vmem %s0, 172
    %s26 = smov 6
    %v27 = vld [vmem:[%s25] ss:$-56 sm:%s26]
    %vm28 = vcmask 1042433
    %v29 = vsel %vm28, %v27, %v24
    %s30 = scalar_lea.vmem %s0, 121
    %v31 = vld [vmem:[%s30] sm:$0x8]
    %vm32 = vcmask 1043459
    %v33 = vsel %vm32, %v31, %v29
    %vm34 = vcmask 31744
    %v35 = vsel %vm34, %v33, %v22
    %36 = vrot.lane.b32.xlu0 %v35, 124
    %v37 = vpop.permute.xlu0 %36
    %vm38 = vcmask 302080
    %s39 = scalar_lea.vmem [#allocation0], 304
    %40 = vst.msk [vmem:[%s39] sm:$0x3] %vm38, %v37
    %vm41 = vcmask 1048544
    %s42 = scalar_lea.vmem [#allocation0], 288
    %43 = vst.msk [vmem:[%s42] sm:$0x3] %vm41, %v37
    %s44 = scalar_lea.vmem [#allocation0], 294
    %45 = vst.msk [vmem:[%s44] sm:$0xc] %vm41, %v37
    %s46 = scalar_lea.vmem %s0, 52
    %v47 = vld [vmem:[%s46] sm:$0x1]
    %s48 = scalar_lea.vmem %s0, 115
    %v49 = vld [vmem:[%s48] sm:$0x2]
    %vm50 = vcmask 1041409
    %v51 = vsel %vm50, %v49, %v47
    %52 = vrot.lane.b32.xlu0 %v51, 124
    %v53 = vpop.permute.xlu0 %52
    %vm54 = vcmask 1014784
    %s55 = scalar_lea.vmem [#allocation0], 296
    %56 = vst.msk [vmem:[%s55] sm:$0x3] %vm54, %v53
    %s57 = scalar_lea.vmem %s0, 11
    %v58 = vld [vmem:[%s57] sm:$0x1]
    %s59 = scalar_lea.vmem %s0, 74
    %v60 = vld [vmem:[%s59] sm:$0x2]
    %vm61 = vcmask 1041409
    %v62 = vsel %vm61, %v60, %v58
    %s63 = scalar_lea.vmem %s0, 11
    %v64 = vld [vmem:[%s63] sm:$0x1]
    %s65 = scalar_lea.vmem %s0, 147
    %s66 = smov 6
    %v67 = vld [vmem:[%s65] ss:$-72 sm:%s66]
    %vm68 = vcmask 1042433
    %v69 = vsel %vm68, %v67, %v64
    %s70 = scalar_lea.vmem %s0, 64
    %v71 = vld [vmem:[%s70] sm:$0x8]
    %vm72 = vcmask 1043459
    %v73 = vsel %vm72, %v71, %v69
    %vm74 = vcmask 39936
    %v75 = vsel %vm74, %v73, %v62
    %76 = vrot.lane.b32.xlu0 %v75, 123
    %v77 = vpop.permute.xlu0 %76
    %vm78 = vcmask 293888
    %s79 = scalar_lea.vmem [#allocation0], 40
    %80 = vst.msk [vmem:[%s79] sm:$0x3] %vm78, %v77
    %vm81 = vcmask 1048536
    %s82 = scalar_lea.vmem [#allocation0], 32
    %83 = vst.msk [vmem:[%s82] sm:$0x3] %vm81, %v77
    %s84 = scalar_lea.vmem [#allocation0], 22
    %85 = vst.msk [vmem:[%s84] sm:$0xc] %vm81, %v77
    %s86 = scalar_lea.vmem %s0, 3
    %v87 = vld [vmem:[%s86] sm:$0x1]
    %s88 = scalar_lea.vmem %s0, 66
    %v89 = vld [vmem:[%s88] sm:$0x2]
    %vm90 = vcmask 1041409
    %v91 = vsel %vm90, %v89, %v87
    %92 = vrot.lane.b32.xlu0 %v91, 123
    %v93 = vpop.permute.xlu0 %92
    %vm94 = vcmask 1006592
    %s95 = scalar_lea.vmem [#allocation0], 32
    %96 = vst.msk [vmem:[%s95] sm:$0x3] %vm94, %v93
    %s97 = scalar_lea.vmem %s0, 63
    %v98 = vld [vmem:[%s97] sm:$0x1]
    %s99 = scalar_lea.vmem %s0, 126
    %v100 = vld [vmem:[%s99] sm:$0x2]
    %vm101 = vcmask 1041409
    %v102 = vsel %vm101, %v100, %v98
    %s103 = scalar_lea.vmem %s0, 55
    %v104 = vld [vmem:[%s103] sm:$0x1]
    %s105 = scalar_lea.vmem %s0, 175
    %s106 = smov 6
    %v107 = vld [vmem:[%s105] ss:$-56 sm:%s106]
    %vm108 = vcmask 1042433
    %v109 = vsel %vm108, %v107, %v104
    %s110 = scalar_lea.vmem %s0, 124
    %v111 = vld [vmem:[%s110] sm:$0x8]
    %vm112 = vcmask 1043459
    %v113 = vsel %vm112, %v111, %v109
    %vm114 = vcmask 72704
    %v115 = vsel %vm114, %v113, %v102
    %116 = vrot.lane.b32.xlu0 %v115, 119
    %v117 = vpop.permute.xlu0 %116
    %vm118 = vcmask 261120
    %s119 = scalar_lea.vmem [#allocation0], 336
    %120 = vst.msk [vmem:[%s119] sm:$0x3] %vm118, %v117
    %vm121 = vcmask 1048504
    %s122 = scalar_lea.vmem [#allocation0], 320
    %123 = vst.msk [vmem:[%s122] sm:$0x3] %vm121, %v117
    %s124 = scalar_lea.vmem [#allocation0], 326
    %125 = vst.msk [vmem:[%s124] sm:$0xc] %vm121, %v117
    %s126 = scalar_lea.vmem %s0, 55
    %v127 = vld [vmem:[%s126] sm:$0x1]
    %s128 = scalar_lea.vmem %s0, 118
    %v129 = vld [vmem:[%s128] sm:$0x2]
    %vm130 = vcmask 1041409
    %v131 = vsel %vm130, %v129, %v127
    %132 = vrot.lane.b32.xlu0 %v131, 119
    %v133 = vpop.permute.xlu0 %132
    %vm134 = vcmask 973824
    %s135 = scalar_lea.vmem [#allocation0], 328
    %136 = vst.msk [vmem:[%s135] sm:$0x3] %vm134, %v133
    %s137 = scalar_lea.vmem %s0, 14
    %v138 = vld [vmem:[%s137] sm:$0x1]
    %s139 = scalar_lea.vmem %s0, 77
    %v140 = vld [vmem:[%s139] sm:$0x2]
    %vm141 = vcmask 1041409
    %v142 = vsel %vm141, %v140, %v138
    %s143 = scalar_lea.vmem %s0, 14
    %v144 = vld [vmem:[%s143] sm:$0x1]
    %s145 = scalar_lea.vmem %s0, 150
    %s146 = smov 6
    %v147 = vld [vmem:[%s145] ss:$-72 sm:%s146]
    %vm148 = vcmask 1042433
    %v149 = vsel %vm148, %v147, %v144
    %s150 = scalar_lea.vmem %s0, 67
    %v151 = vld [vmem:[%s150] sm:$0x8]
    %vm152 = vcmask 1043459
    %v153 = vsel %vm152, %v151, %v149
    %vm154 = vcmask 80896
    %v155 = vsel %vm154, %v153, %v142
    %156 = vrot.lane.b32.xlu0 %v155, 118
    %v157 = vpop.permute.xlu0 %156
    %vm158 = vcmask 252928
    %s159 = scalar_lea.vmem [#allocation0], 72
    %160 = vst.msk [vmem:[%s159] sm:$0x3] %vm158, %v157
    %vm161 = vcmask 1048496
    %s162 = scalar_lea.vmem [#allocation0], 64
    %163 = vst.msk [vmem:[%s162] sm:$0x3] %vm161, %v157
    %s164 = scalar_lea.vmem [#allocation0], 54
    %165 = vst.msk [vmem:[%s164] sm:$0xc] %vm161, %v157
    %s166 = scalar_lea.vmem %s0, 6
    %v167 = vld [vmem:[%s166] sm:$0x1]
    %s168 = scalar_lea.vmem %s0, 69
    %v169 = vld [vmem:[%s168] sm:$0x2]
    %vm170 = vcmask 1041409
    %v171 = vsel %vm170, %v169, %v167
    %172 = vrot.lane.b32.xlu0 %v171, 118
    %v173 = vpop.permute.xlu0 %172
    %vm174 = vcmask 965632
    %s175 = scalar_lea.vmem [#allocation0], 64
    %176 = vst.msk [vmem:[%s175] sm:$0x3] %vm174, %v173
    %s177 = scalar_lea.vmem %s0, 25
    %v178 = vld [vmem:[%s177] sm:$0x1]
    %s179 = scalar_lea.vmem %s0, 88
    %v180 = vld [vmem:[%s179] sm:$0x2]
    %vm181 = vcmask 1041409
    %v182 = vsel %vm181, %v180, %v178
    %s183 = scalar_lea.vmem %s0, 25
    %v184 = vld [vmem:[%s183] sm:$0x1]
    %s185 = scalar_lea.vmem %s0, 161
    %s186 = smov 6
    %v187 = vld [vmem:[%s185] ss:$-72 sm:%s186]
    %vm188 = vcmask 1042433
    %v189 = vsel %vm188, %v187, %v184
    %s190 = scalar_lea.vmem %s0, 78
    %v191 = vld [vmem:[%s190] sm:$0x8]
    %vm192 = vcmask 1043459
    %v193 = vsel %vm192, %v191, %v189
    %vm194 = vcmask 121856
    %v195 = vsel %vm194, %v193, %v182
    %196 = vrot.lane.b32.xlu0 %v195, 113
    %v197 = vpop.permute.xlu0 %196
    %vm198 = vcmask 211968
    %s199 = scalar_lea.vmem [#allocation0], 104
    %200 = vst.msk [vmem:[%s199] sm:$0x3] %vm198, %v197
    %vm201 = vcmask 1048456
    %s202 = scalar_lea.vmem [#allocation0], 96
    %203 = vst.msk [vmem:[%s202] sm:$0x3] %vm201, %v197
    %s204 = scalar_lea.vmem [#allocation0], 86
    %205 = vst.msk [vmem:[%s204] sm:$0xc] %vm201, %v197
    %s206 = scalar_lea.vmem %s0, 17
    %v207 = vld [vmem:[%s206] sm:$0x1]
    %s208 = scalar_lea.vmem %s0, 80
    %v209 = vld [vmem:[%s208] sm:$0x2]
    %vm210 = vcmask 1041409
    %v211 = vsel %vm210, %v209, %v207
    %212 = vrot.lane.b32.xlu0 %v211, 113
    %v213 = vpop.permute.xlu0 %212
    %vm214 = vcmask 924672
    %s215 = scalar_lea.vmem [#allocation0], 96
    %216 = vst.msk [vmem:[%s215] sm:$0x3] %vm214, %v213
    %s217 = scalar_lea.vmem %s0, 28
    %v218 = vld [vmem:[%s217] sm:$0x1]
    %s219 = scalar_lea.vmem %s0, 91
    %v220 = vld [vmem:[%s219] sm:$0x2]
    %vm221 = vcmask 1041409
    %v222 = vsel %vm221, %v220, %v218
    %s223 = scalar_lea.vmem %s0, 28
    %v224 = vld [vmem:[%s223] sm:$0x1]
    %s225 = scalar_lea.vmem %s0, 164
    %s226 = smov 6
    %v227 = vld [vmem:[%s225] ss:$-72 sm:%s226]
    %vm228 = vcmask 1042433
    %v229 = vsel %vm228, %v227, %v224
    %s230 = scalar_lea.vmem %s0, 81
    %v231 = vld [vmem:[%s230] sm:$0x8]
    %vm232 = vcmask 1043459
    %v233 = vsel %vm232, %v231, %v229
    %vm234 = vcmask 162816
    %v235 = vsel %vm234, %v233, %v222
    %236 = vrot.lane.b32.xlu0 %v235, 108
    %v237 = vpop.permute.xlu0 %236
    %vm238 = vcmask 171008
    %s239 = scalar_lea.vmem [#allocation0], 136
    %240 = vst.msk [vmem:[%s239] sm:$0x3] %vm238, %v237
    %vm241 = vcmask 1048416
    %s242 = scalar_lea.vmem [#allocation0], 128
    %243 = vst.msk [vmem:[%s242] sm:$0x3] %vm241, %v237
    %s244 = scalar_lea.vmem [#allocation0], 118
    %245 = vst.msk [vmem:[%s244] sm:$0xc] %vm241, %v237
    %s246 = scalar_lea.vmem %s0, 20
    %v247 = vld [vmem:[%s246] sm:$0x1]
    %s248 = scalar_lea.vmem %s0, 83
    %v249 = vld [vmem:[%s248] sm:$0x2]
    %vm250 = vcmask 1041409
    %v251 = vsel %vm250, %v249, %v247
    %252 = vrot.lane.b32.xlu0 %v251, 108
    %v253 = vpop.permute.xlu0 %252
    %vm254 = vcmask 883712
    %s255 = scalar_lea.vmem [#allocation0], 128
    %256 = vst.msk [vmem:[%s255] sm:$0x3] %vm254, %v253
    %s257 = scalar_lea.vmem %s0, 31
    %v258 = vld [vmem:[%s257] sm:$0x1]
    %s259 = scalar_lea.vmem %s0, 94
    %v260 = vld [vmem:[%s259] sm:$0x2]
    %vm261 = vcmask 1041409
    %v262 = vsel %vm261, %v260, %v258
    %s263 = scalar_lea.vmem %s0, 31
    %v264 = vld [vmem:[%s263] sm:$0x1]
    %s265 = scalar_lea.vmem %s0, 167
    %s266 = smov 6
    %v267 = vld [vmem:[%s265] ss:$-72 sm:%s266]
    %vm268 = vcmask 1042433
    %v269 = vsel %vm268, %v267, %v264
    %s270 = scalar_lea.vmem %s0, 84
    %v271 = vld [vmem:[%s270] sm:$0x8]
    %vm272 = vcmask 1043459
    %v273 = vsel %vm272, %v271, %v269
    %vm274 = vcmask 203776
    %v275 = vsel %vm274, %v273, %v262
    %276 = vrot.lane.b32.xlu0 %v275, 103
    %v277 = vpop.permute.xlu0 %276
    %vm278 = vcmask 130048
    %s279 = scalar_lea.vmem [#allocation0], 168
    %280 = vst.msk [vmem:[%s279] sm:$0x3] %vm278, %v277
    %vm281 = vcmask 1048376
    %s282 = scalar_lea.vmem [#allocation0], 160
    %283 = vst.msk [vmem:[%s282] sm:$0x3] %vm281, %v277
    %s284 = scalar_lea.vmem [#allocation0], 150
    %285 = vst.msk [vmem:[%s284] sm:$0xc] %vm281, %v277
    %s286 = scalar_lea.vmem %s0, 23
    %v287 = vld [vmem:[%s286] sm:$0x1]
    %s288 = scalar_lea.vmem %s0, 86
    %v289 = vld [vmem:[%s288] sm:$0x2]
    %vm290 = vcmask 1041409
    %v291 = vsel %vm290, %v289, %v287
    %292 = vrot.lane.b32.xlu0 %v291, 103
    %v293 = vpop.permute.xlu0 %292
    %vm294 = vcmask 842752
    %s295 = scalar_lea.vmem [#allocation0], 160
    %296 = vst.msk [vmem:[%s295] sm:$0x3] %vm294, %v293
    %s297 = scalar_lea.vmem %s0, 42
    %v298 = vld [vmem:[%s297] sm:$0x1]
    %s299 = scalar_lea.vmem %s0, 105
    %v300 = vld [vmem:[%s299] sm:$0x2]
    %vm301 = vcmask 1041409
    %v302 = vsel %vm301, %v300, %v298
    %s303 = scalar_lea.vmem %s0, 42
    %v304 = vld [vmem:[%s303] sm:$0x1]
    %s305 = scalar_lea.vmem %s0, 178
    %s306 = smov 6
    %v307 = vld [vmem:[%s305] ss:$-72 sm:%s306]
    %vm308 = vcmask 1042433
    %v309 = vsel %vm308, %v307, %v304
    %s310 = scalar_lea.vmem %s0, 95
    %v311 = vld [vmem:[%s310] sm:$0x8]
    %vm312 = vcmask 1043459
    %v313 = vsel %vm312, %v311, %v309
    %vm314 = vcmask 244736
    %v315 = vsel %vm314, %v313, %v302
    %316 = vrot.lane.b32.xlu0 %v315, 98
    %v317 = vpop.permute.xlu0 %316
    %vm318 = vcmask 89088
    %s319 = scalar_lea.vmem [#allocation0], 200
    %320 = vst.msk [vmem:[%s319] sm:$0x3] %vm318, %v317
    %vm321 = vcmask 1048336
    %s322 = scalar_lea.vmem [#allocation0], 192
    %323 = vst.msk [vmem:[%s322] sm:$0x3] %vm321, %v317
    %s324 = scalar_lea.vmem [#allocation0], 182
    %325 = vst.msk [vmem:[%s324] sm:$0xc] %vm321, %v317
    %s326 = scalar_lea.vmem %s0, 34
    %v327 = vld [vmem:[%s326] sm:$0x1]
    %s328 = scalar_lea.vmem %s0, 97
    %v329 = vld [vmem:[%s328] sm:$0x2]
    %vm330 = vcmask 1041409
    %v331 = vsel %vm330, %v329, %v327
    %332 = vrot.lane.b32.xlu0 %v331, 98
    %v333 = vpop.permute.xlu0 %332
    %vm334 = vcmask 801792
    %s335 = scalar_lea.vmem [#allocation0], 192
    %336 = vst.msk [vmem:[%s335] sm:$0x3] %vm334, %v333
    %s337 = scalar_lea.vmem %s0, 45
    %v338 = vld [vmem:[%s337] sm:$0x1]
    %s339 = scalar_lea.vmem %s0, 108
    %v340 = vld [vmem:[%s339] sm:$0x2]
    %vm341 = vcmask 1041409
    %v342 = vsel %vm341, %v340, %v338
    %s343 = scalar_lea.vmem %s0, 45
    %v344 = vld [vmem:[%s343] sm:$0x1]
    %s345 = scalar_lea.vmem %s0, 181
    %s346 = smov 6
    %v347 = vld [vmem:[%s345] ss:$-72 sm:%s346]
    %vm348 = vcmask 1042433
    %v349 = vsel %vm348, %v347, %v344
    %s350 = scalar_lea.vmem %s0, 98
    %v351 = vld [vmem:[%s350] sm:$0x8]
    %vm352 = vcmask 1043459
    %v353 = vsel %vm352, %v351, %v349
    %vm354 = vcmask 285696
    %v355 = vsel %vm354, %v353, %v342
    %356 = vrot.lane.b32.xlu0 %v355, 93
    %v357 = vpop.permute.xlu0 %356
    %vm358 = vcmask 48128
    %s359 = scalar_lea.vmem [#allocation0], 232
    %360 = vst.msk [vmem:[%s359] sm:$0x3] %vm358, %v357
    %vm361 = vcmask 1048296
    %s362 = scalar_lea.vmem [#allocation0], 224
    %363 = vst.msk [vmem:[%s362] sm:$0x3] %vm361, %v357
    %s364 = scalar_lea.vmem [#allocation0], 214
    %365 = vst.msk [vmem:[%s364] sm:$0xc] %vm361, %v357
    %s366 = scalar_lea.vmem %s0, 37
    %v367 = vld [vmem:[%s366] sm:$0x1]
    %s368 = scalar_lea.vmem %s0, 100
    %v369 = vld [vmem:[%s368] sm:$0x2]
    %vm370 = vcmask 1041409
    %v371 = vsel %vm370, %v369, %v367
    %372 = vrot.lane.b32.xlu0 %v371, 93
    %v373 = vpop.permute.xlu0 %372
    %vm374 = vcmask 760832
    %s375 = scalar_lea.vmem [#allocation0], 224
    %376 = vst.msk [vmem:[%s375] sm:$0x3] %vm374, %v373
    %s377 = scalar_lea.vmem %s0, 56
    %v378 = vld [vmem:[%s377] sm:$0x1]
    %s379 = scalar_lea.vmem %s0, 119
    %v380 = vld [vmem:[%s379] sm:$0x2]
    %vm381 = vcmask 1041409
    %v382 = vsel %vm381, %v380, %v378
    %s383 = scalar_lea.vmem %s0, 56
    %v384 = vld [vmem:[%s383] sm:$0x1]
    %s385 = scalar_lea.vmem %s0, 192
    %s386 = smov 6
    %v387 = vld [vmem:[%s385] ss:$-72 sm:%s386]
    %vm388 = vcmask 1042433
    %v389 = vsel %vm388, %v387, %v384
    %s390 = scalar_lea.vmem %s0, 109
    %v391 = vld [vmem:[%s390] sm:$0x8]
    %vm392 = vcmask 1043459
    %v393 = vsel %vm392, %v391, %v389
    %vm394 = vcmask 326656
    %v395 = vsel %vm394, %v393, %v382
    %396 = vrot.lane.b32.xlu0 %v395, 88
    %v397 = vpop.permute.xlu0 %396
    %vm398 = vcmask 7168
    %s399 = scalar_lea.vmem [#allocation0], 264
    %400 = vst.msk [vmem:[%s399] sm:$0x3] %vm398, %v397
    %vm401 = vcmask 1048256
    %s402 = scalar_lea.vmem [#allocation0], 256
    %403 = vst.msk [vmem:[%s402] sm:$0x3] %vm401, %v397
    %s404 = scalar_lea.vmem [#allocation0], 246
    %405 = vst.msk [vmem:[%s404] sm:$0xc] %vm401, %v397
    %s406 = scalar_lea.vmem %s0, 48
    %v407 = vld [vmem:[%s406] sm:$0x1]
    %s408 = scalar_lea.vmem %s0, 111
    %v409 = vld [vmem:[%s408] sm:$0x2]
    %vm410 = vcmask 1041409
    %v411 = vsel %vm410, %v409, %v407
    %412 = vrot.lane.b32.xlu0 %v411, 88
    %v413 = vpop.permute.xlu0 %412
    %vm414 = vcmask 719872
    %s415 = scalar_lea.vmem [#allocation0], 256
    %416 = vst.msk [vmem:[%s415] sm:$0x3] %vm414, %v413
    %s417 = scalar_lea.vmem %s0, 51
    %v418 = vld [vmem:[%s417] sm:$0x1]
    %s419 = scalar_lea.vmem %s0, 114
    %v420 = vld [vmem:[%s419] sm:$0x2]
    %vm421 = vcmask 1041409
    %v422 = vsel %vm421, %v420, %v418
    %s423 = scalar_lea.vmem %s0, 59
    %v424 = vld [vmem:[%s423] sm:$0x1]
    %s425 = scalar_lea.vmem %s0, 122
    %v426 = vld [vmem:[%s425] sm:$0x2]
    %vm427 = vcmask 1041409
    %v428 = vsel %vm427, %v426, %v424
    %vm429 = vcmask 367616
    %v430 = vsel %vm429, %v428, %v422
    %431 = vrot.lane.b32.xlu0 %v430, 83
    %v432 = vpop.permute.xlu0 %431
    %vm433 = vcmask 678912
    %s434 = scalar_lea.vmem [#allocation0], 288
    %435 = vst.msk [vmem:[%s434] sm:$0x3] %vm433, %v432
    %vm436 = vcmask 1015448
    %s437 = scalar_lea.vmem [#allocation0], 288
    %438 = vst.msk [vmem:[%s437] sm:$0x3] %vm436, %v432
    %s439 = scalar_lea.vmem %s0, 51
    %v440 = vld [vmem:[%s439] sm:$0x1]
    %s441 = scalar_lea.vmem %s0, 114
    %v442 = vld [vmem:[%s441] sm:$0x2]
    %vm443 = vcmask 1041409
    %v444 = vsel %vm443, %v442, %v440
    %445 = vrot.lane.b32.xlu0 %v444, 83
    %v446 = vpop.permute.xlu0 %445
    %vm447 = vcmask 1048216
    %s448 = scalar_lea.vmem [#allocation0], 280
    %449 = vst.msk [vmem:[%s448] sm:$0x3] %vm447, %v446
    %s450 = scalar_lea.vmem %s0, 2
    %v451 = vld [vmem:[%s450] sm:$0x1]
    %s452 = scalar_lea.vmem %s0, 65
    %v453 = vld [vmem:[%s452] sm:$0x2]
    %vm454 = vcmask 1041409
    %v455 = vsel %vm454, %v453, %v451
    %s456 = scalar_lea.vmem %s0, 10
    %v457 = vld [vmem:[%s456] sm:$0x1]
    %s458 = scalar_lea.vmem %s0, 73
    %v459 = vld [vmem:[%s458] sm:$0x2]
    %vm460 = vcmask 1041409
    %v461 = vsel %vm460, %v459, %v457
    %vm462 = vcmask 375808
    %v463 = vsel %vm462, %v461, %v455
    %464 = vrot.lane.b32.xlu0 %v463, 82
    %v465 = vpop.permute.xlu0 %464
    %vm466 = vcmask 670720
    %s467 = scalar_lea.vmem [#allocation0], 24
    %468 = vst.msk [vmem:[%s467] sm:$0x3] %vm466, %v465
    %vm469 = vcmask 1007248
    %s470 = scalar_lea.vmem [#allocation0], 24
    %471 = vst.msk [vmem:[%s470] sm:$0x3] %vm469, %v465
    %s472 = scalar_lea.vmem %s0, 2
    %v473 = vld [vmem:[%s472] sm:$0x1]
    %s474 = scalar_lea.vmem %s0, 65
    %v475 = vld [vmem:[%s474] sm:$0x2]
    %vm476 = vcmask 1041409
    %v477 = vsel %vm476, %v475, %v473
    %478 = vrot.lane.b32.xlu0 %v477, 82
    %v479 = vpop.permute.xlu0 %478
    %vm480 = vcmask 1048208
    %s481 = scalar_lea.vmem [#allocation0], 16
    %482 = vst.msk [vmem:[%s481] sm:$0x3] %vm480, %v479
    %s483 = scalar_lea.vmem %s0, 54
    %v484 = vld [vmem:[%s483] sm:$0x1]
    %s485 = scalar_lea.vmem %s0, 117
    %v486 = vld [vmem:[%s485] sm:$0x2]
    %vm487 = vcmask 1041409
    %v488 = vsel %vm487, %v486, %v484
    %s489 = scalar_lea.vmem %s0, 62
    %v490 = vld [vmem:[%s489] sm:$0x1]
    %s491 = scalar_lea.vmem %s0, 125
    %v492 = vld [vmem:[%s491] sm:$0x2]
    %vm493 = vcmask 1041409
    %v494 = vsel %vm493, %v492, %v490
    %vm495 = vcmask 408576
    %v496 = vsel %vm495, %v494, %v488
    %497 = vrot.lane.b32.xlu0 %v496, 78
    %v498 = vpop.permute.xlu0 %497
    %vm499 = vcmask 637952
    %s500 = scalar_lea.vmem [#allocation0], 320
    %501 = vst.msk [vmem:[%s500] sm:$0x3] %vm499, %v498
    %vm502 = vcmask 974448
    %s503 = scalar_lea.vmem [#allocation0], 320
    %504 = vst.msk [vmem:[%s503] sm:$0x3] %vm502, %v498
    %s505 = scalar_lea.vmem %s0, 54
    %v506 = vld [vmem:[%s505] sm:$0x1]
    %s507 = scalar_lea.vmem %s0, 117
    %v508 = vld [vmem:[%s507] sm:$0x2]
    %vm509 = vcmask 1041409
    %v510 = vsel %vm509, %v508, %v506
    %511 = vrot.lane.b32.xlu0 %v510, 78
    %v512 = vpop.permute.xlu0 %511
    %vm513 = vcmask 1048176
    %s514 = scalar_lea.vmem [#allocation0], 312
    %515 = vst.msk [vmem:[%s514] sm:$0x3] %vm513, %v512
    %s516 = scalar_lea.vmem %s0, 5
    %v517 = vld [vmem:[%s516] sm:$0x1]
    %s518 = scalar_lea.vmem %s0, 68
    %v519 = vld [vmem:[%s518] sm:$0x2]
    %vm520 = vcmask 1041409
    %v521 = vsel %vm520, %v519, %v517
    %s522 = scalar_lea.vmem %s0, 13
    %v523 = vld [vmem:[%s522] sm:$0x1]
    %s524 = scalar_lea.vmem %s0, 76
    %v525 = vld [vmem:[%s524] sm:$0x2]
    %vm526 = vcmask 1041409
    %v527 = vsel %vm526, %v525, %v523
    %vm528 = vcmask 416768
    %v529 = vsel %vm528, %v527, %v521
    %530 = vrot.lane.b32.xlu0 %v529, 77
    %v531 = vpop.permute.xlu0 %530
    %vm532 = vcmask 629760
    %s533 = scalar_lea.vmem [#allocation0], 56
    %534 = vst.msk [vmem:[%s533] sm:$0x3] %vm532, %v531
    %vm535 = vcmask 966248
    %s536 = scalar_lea.vmem [#allocation0], 56
    %537 = vst.msk [vmem:[%s536] sm:$0x3] %vm535, %v531
    %s538 = scalar_lea.vmem %s0, 5
    %v539 = vld [vmem:[%s538] sm:$0x1]
    %s540 = scalar_lea.vmem %s0, 68
    %v541 = vld [vmem:[%s540] sm:$0x2]
    %vm542 = vcmask 1041409
    %v543 = vsel %vm542, %v541, %v539
    %544 = vrot.lane.b32.xlu0 %v543, 77
    %v545 = vpop.permute.xlu0 %544
    %vm546 = vcmask 1048168
    %s547 = scalar_lea.vmem [#allocation0], 48
    %548 = vst.msk [vmem:[%s547] sm:$0x3] %vm546, %v545
    %s549 = scalar_lea.vmem %s0, 16
    %v550 = vld [vmem:[%s549] sm:$0x1]
    %s551 = scalar_lea.vmem %s0, 79
    %v552 = vld [vmem:[%s551] sm:$0x2]
    %vm553 = vcmask 1041409
    %v554 = vsel %vm553, %v552, %v550
    %s555 = scalar_lea.vmem %s0, 24
    %v556 = vld [vmem:[%s555] sm:$0x1]
    %s557 = scalar_lea.vmem %s0, 87
    %v558 = vld [vmem:[%s557] sm:$0x2]
    %vm559 = vcmask 1041409
    %v560 = vsel %vm559, %v558, %v556
    %vm561 = vcmask 457728
    %v562 = vsel %vm561, %v560, %v554
    %563 = vrot.lane.b32.xlu0 %v562, 72
    %v564 = vpop.permute.xlu0 %563
    %vm565 = vcmask 588800
    %s566 = scalar_lea.vmem [#allocation0], 88
    %567 = vst.msk [vmem:[%s566] sm:$0x3] %vm565, %v564
    %vm568 = vcmask 925248
    %s569 = scalar_lea.vmem [#allocation0], 88
    %570 = vst.msk [vmem:[%s569] sm:$0x3] %vm568, %v564
    %s571 = scalar_lea.vmem %s0, 16
    %v572 = vld [vmem:[%s571] sm:$0x1]
    %s573 = scalar_lea.vmem %s0, 79
    %v574 = vld [vmem:[%s573] sm:$0x2]
    %vm575 = vcmask 1041409
    %v576 = vsel %vm575, %v574, %v572
    %577 = vrot.lane.b32.xlu0 %v576, 72
    %v578 = vpop.permute.xlu0 %577
    %vm579 = vcmask 1048128
    %s580 = scalar_lea.vmem [#allocation0], 80
    %581 = vst.msk [vmem:[%s580] sm:$0x3] %vm579, %v578
    %s582 = scalar_lea.vmem %s0, 19
    %v583 = vld [vmem:[%s582] sm:$0x1]
    %s584 = scalar_lea.vmem %s0, 82
    %v585 = vld [vmem:[%s584] sm:$0x2]
    %vm586 = vcmask 1041409
    %v587 = vsel %vm586, %v585, %v583
    %s588 = scalar_lea.vmem %s0, 27
    %v589 = vld [vmem:[%s588] sm:$0x1]
    %s590 = scalar_lea.vmem %s0, 90
    %v591 = vld [vmem:[%s590] sm:$0x2]
    %vm592 = vcmask 1041409
    %v593 = vsel %vm592, %v591, %v589
    %vm594 = vcmask 498688
    %v595 = vsel %vm594, %v593, %v587
    %596 = vrot.lane.b32.xlu0 %v595, 67
    %v597 = vpop.permute.xlu0 %596
    %vm598 = vcmask 547840
    %s599 = scalar_lea.vmem [#allocation0], 120
    %600 = vst.msk [vmem:[%s599] sm:$0x3] %vm598, %v597
    %vm601 = vcmask 884248
    %s602 = scalar_lea.vmem [#allocation0], 120
    %603 = vst.msk [vmem:[%s602] sm:$0x3] %vm601, %v597
    %s604 = scalar_lea.vmem %s0, 19
    %v605 = vld [vmem:[%s604] sm:$0x1]
    %s606 = scalar_lea.vmem %s0, 82
    %v607 = vld [vmem:[%s606] sm:$0x2]
    %vm608 = vcmask 1041409
    %v609 = vsel %vm608, %v607, %v605
    %610 = vrot.lane.b32.xlu0 %v609, 67
    %v611 = vpop.permute.xlu0 %610
    %vm612 = vcmask 1048088
    %s613 = scalar_lea.vmem [#allocation0], 112
    %614 = vst.msk [vmem:[%s613] sm:$0x3] %vm612, %v611
    %s615 = scalar_lea.vmem %s0, 22
    %v616 = vld [vmem:[%s615] sm:$0x1]
    %s617 = scalar_lea.vmem %s0, 85
    %v618 = vld [vmem:[%s617] sm:$0x2]
    %vm619 = vcmask 1041409
    %v620 = vsel %vm619, %v618, %v616
    %s621 = scalar_lea.vmem %s0, 30
    %v622 = vld [vmem:[%s621] sm:$0x1]
    %s623 = scalar_lea.vmem %s0, 93
    %v624 = vld [vmem:[%s623] sm:$0x2]
    %vm625 = vcmask 1041409
    %v626 = vsel %vm625, %v624, %v622
    %vm627 = vcmask 539648
    %v628 = vsel %vm627, %v626, %v620
    %629 = vrot.lane.b32.xlu0 %v628, 62
    %v630 = vpop.permute.xlu0 %629
    %vm631 = vcmask 506880
    %s632 = scalar_lea.vmem [#allocation0], 152
    %633 = vst.msk [vmem:[%s632] sm:$0x3] %vm631, %v630
    %vm634 = vcmask 843248
    %s635 = scalar_lea.vmem [#allocation0], 152
    %636 = vst.msk [vmem:[%s635] sm:$0x3] %vm634, %v630
    %s637 = scalar_lea.vmem %s0, 22
    %v638 = vld [vmem:[%s637] sm:$0x1]
    %s639 = scalar_lea.vmem %s0, 85
    %v640 = vld [vmem:[%s639] sm:$0x2]
    %vm641 = vcmask 1041409
    %v642 = vsel %vm641, %v640, %v638
    %643 = vrot.lane.b32.xlu0 %v642, 62
    %v644 = vpop.permute.xlu0 %643
    %vm645 = vcmask 1048048
    %s646 = scalar_lea.vmem [#allocation0], 144
    %647 = vst.msk [vmem:[%s646] sm:$0x3] %vm645, %v644
    %s648 = scalar_lea.vmem %s0, 33
    %v649 = vld [vmem:[%s648] sm:$0x1]
    %s650 = scalar_lea.vmem %s0, 96
    %v651 = vld [vmem:[%s650] sm:$0x2]
    %vm652 = vcmask 1041409
    %v653 = vsel %vm652, %v651, %v649
    %s654 = scalar_lea.vmem %s0, 41
    %v655 = vld [vmem:[%s654] sm:$0x1]
    %s656 = scalar_lea.vmem %s0, 104
    %v657 = vld [vmem:[%s656] sm:$0x2]
    %vm658 = vcmask 1041409
    %v659 = vsel %vm658, %v657, %v655
    %vm660 = vcmask 580608
    %v661 = vsel %vm660, %v659, %v653
    %662 = vrot.lane.b32.xlu0 %v661, 57
    %v663 = vpop.permute.xlu0 %662
    %vm664 = vcmask 465920
    %s665 = scalar_lea.vmem [#allocation0], 184
    %666 = vst.msk [vmem:[%s665] sm:$0x3] %vm664, %v663
    %vm667 = vcmask 802248
    %s668 = scalar_lea.vmem [#allocation0], 184
    %669 = vst.msk [vmem:[%s668] sm:$0x3] %vm667, %v663
    %s670 = scalar_lea.vmem %s0, 33
    %v671 = vld [vmem:[%s670] sm:$0x1]
    %s672 = scalar_lea.vmem %s0, 96
    %v673 = vld [vmem:[%s672] sm:$0x2]
    %vm674 = vcmask 1041409
    %v675 = vsel %vm674, %v673, %v671
    %676 = vrot.lane.b32.xlu0 %v675, 57
    %v677 = vpop.permute.xlu0 %676
    %vm678 = vcmask 1048008
    %s679 = scalar_lea.vmem [#allocation0], 176
    %680 = vst.msk [vmem:[%s679] sm:$0x3] %vm678, %v677
    %s681 = scalar_lea.vmem %s0, 36
    %v682 = vld [vmem:[%s681] sm:$0x1]
    %s683 = scalar_lea.vmem %s0, 99
    %v684 = vld [vmem:[%s683] sm:$0x2]
    %vm685 = vcmask 1041409
    %v686 = vsel %vm685, %v684, %v682
    %s687 = scalar_lea.vmem %s0, 44
    %v688 = vld [vmem:[%s687] sm:$0x1]
    %s689 = scalar_lea.vmem %s0, 107
    %v690 = vld [vmem:[%s689] sm:$0x2]
    %vm691 = vcmask 1041409
    %v692 = vsel %vm691, %v690, %v688
    %vm693 = vcmask 621568
    %v694 = vsel %vm693, %v692, %v686
    %695 = vrot.lane.b32.xlu0 %v694, 52
    %v696 = vpop.permute.xlu0 %695
    %vm697 = vcmask 424960
    %s698 = scalar_lea.vmem [#allocation0], 216
    %699 = vst.msk [vmem:[%s698] sm:$0x3] %vm697, %v696
    %vm700 = vcmask 761248
    %s701 = scalar_lea.vmem [#allocation0], 216
    %702 = vst.msk [vmem:[%s701] sm:$0x3] %vm700, %v696
    %s703 = scalar_lea.vmem %s0, 36
    %v704 = vld [vmem:[%s703] sm:$0x1]
    %s705 = scalar_lea.vmem %s0, 99
    %v706 = vld [vmem:[%s705] sm:$0x2]
    %vm707 = vcmask 1041409
    %v708 = vsel %vm707, %v706, %v704
    %709 = vrot.lane.b32.xlu0 %v708, 52
    %v710 = vpop.permute.xlu0 %709
    %vm711 = vcmask 1047968
    %s712 = scalar_lea.vmem [#allocation0], 208
    %713 = vst.msk [vmem:[%s712] sm:$0x3] %vm711, %v710
    %s714 = scalar_lea.vmem %s0, 39
    %v715 = vld [vmem:[%s714] sm:$0x1]
    %s716 = scalar_lea.vmem %s0, 102
    %v717 = vld [vmem:[%s716] sm:$0x2]
    %vm718 = vcmask 1041409
    %v719 = vsel %vm718, %v717, %v715
    %s720 = scalar_lea.vmem %s0, 47
    %v721 = vld [vmem:[%s720] sm:$0x1]
    %s722 = scalar_lea.vmem %s0, 110
    %v723 = vld [vmem:[%s722] sm:$0x2]
    %vm724 = vcmask 1041409
    %v725 = vsel %vm724, %v723, %v721
    %vm726 = vcmask 662528
    %v727 = vsel %vm726, %v725, %v719
    %728 = vrot.lane.b32.xlu0 %v727, 47
    %v729 = vpop.permute.xlu0 %728
    %vm730 = vcmask 384000
    %s731 = scalar_lea.vmem [#allocation0], 248
    %732 = vst.msk [vmem:[%s731] sm:$0x3] %vm730, %v729
    %vm733 = vcmask 720248
    %s734 = scalar_lea.vmem [#allocation0], 248
    %735 = vst.msk [vmem:[%s734] sm:$0x3] %vm733, %v729
    %s736 = scalar_lea.vmem %s0, 39
    %v737 = vld [vmem:[%s736] sm:$0x1]
    %s738 = scalar_lea.vmem %s0, 102
    %v739 = vld [vmem:[%s738] sm:$0x2]
    %vm740 = vcmask 1041409
    %v741 = vsel %vm740, %v739, %v737
    %742 = vrot.lane.b32.xlu0 %v741, 47
    %v743 = vpop.permute.xlu0 %742
    %vm744 = vcmask 1047928
    %s745 = scalar_lea.vmem [#allocation0], 240
    %746 = vst.msk [vmem:[%s745] sm:$0x3] %vm744, %v743
    %s747 = scalar_lea.vmem %s0, 50
    %v748 = vld [vmem:[%s747] sm:$0x1]
    %s749 = scalar_lea.vmem %s0, 113
    %v750 = vld [vmem:[%s749] sm:$0x2]
    %vm751 = vcmask 1041409
    %v752 = vsel %vm751, %v750, %v748
    %s753 = scalar_lea.vmem %s0, 58
    %v754 = vld [vmem:[%s753] sm:$0x1]
    %s755 = scalar_lea.vmem %s0, 121
    %v756 = vld [vmem:[%s755] sm:$0x2]
    %vm757 = vcmask 1041409
    %v758 = vsel %vm757, %v756, %v754
    %vm759 = vcmask 703488
    %v760 = vsel %vm759, %v758, %v752
    %761 = vrot.lane.b32.xlu0 %v760, 42
    %v762 = vpop.permute.xlu0 %761
    %vm763 = vcmask 343040
    %s764 = scalar_lea.vmem [#allocation0], 280
    %765 = vst.msk [vmem:[%s764] sm:$0x3] %vm763, %v762
    %vm766 = vcmask 679248
    %s767 = scalar_lea.vmem [#allocation0], 280
    %768 = vst.msk [vmem:[%s767] sm:$0x3] %vm766, %v762
    %s769 = scalar_lea.vmem %s0, 50
    %v770 = vld [vmem:[%s769] sm:$0x1]
    %s771 = scalar_lea.vmem %s0, 113
    %v772 = vld [vmem:[%s771] sm:$0x2]
    %vm773 = vcmask 1041409
    %v774 = vsel %vm773, %v772, %v770
    %775 = vrot.lane.b32.xlu0 %v774, 42
    %v776 = vpop.permute.xlu0 %775
    %vm777 = vcmask 1047888
    %s778 = scalar_lea.vmem [#allocation0], 272
    %779 = vst.msk [vmem:[%s778] sm:$0x3] %vm777, %v776
    %s780 = scalar_lea.vmem %s0, 1
    %v781 = vld [vmem:[%s780] sm:$0x1]
    %s782 = scalar_lea.vmem %s0, 64
    %v783 = vld [vmem:[%s782] sm:$0x2]
    %vm784 = vcmask 1041409
    %v785 = vsel %vm784, %v783, %v781
    %s786 = scalar_lea.vmem %s0, 9
    %v787 = vld [vmem:[%s786] sm:$0x1]
    %s788 = scalar_lea.vmem %s0, 72
    %v789 = vld [vmem:[%s788] sm:$0x2]
    %vm790 = vcmask 1041409
    %v791 = vsel %vm790, %v789, %v787
    %vm792 = vcmask 711680
    %v793 = vsel %vm792, %v791, %v785
    %794 = vrot.lane.b32.xlu0 %v793, 41
    %v795 = vpop.permute.xlu0 %794
    %vm796 = vcmask 334848
    %s797 = scalar_lea.vmem [#allocation0], 16
    %798 = vst.msk [vmem:[%s797] sm:$0x3] %vm796, %v795
    %vm799 = vcmask 671048
    %s800 = scalar_lea.vmem [#allocation0], 16
    %801 = vst.msk [vmem:[%s800] sm:$0x3] %vm799, %v795
    %s802 = scalar_lea.vmem %s0, 1
    %v803 = vld [vmem:[%s802] sm:$0x1]
    %s804 = scalar_lea.vmem %s0, 64
    %v805 = vld [vmem:[%s804] sm:$0x2]
    %vm806 = vcmask 1041409
    %v807 = vsel %vm806, %v805, %v803
    %808 = vrot.lane.b32.xlu0 %v807, 41
    %v809 = vpop.permute.xlu0 %808
    %vm810 = vcmask 1047880
    %s811 = scalar_lea.vmem [#allocation0], 8
    %812 = vst.msk [vmem:[%s811] sm:$0x3] %vm810, %v809
    %s813 = scalar_lea.vmem %s0, 53
    %v814 = vld [vmem:[%s813] sm:$0x1]
    %s815 = scalar_lea.vmem %s0, 116
    %v816 = vld [vmem:[%s815] sm:$0x2]
    %vm817 = vcmask 1041409
    %v818 = vsel %vm817, %v816, %v814
    %s819 = scalar_lea.vmem %s0, 61
    %v820 = vld [vmem:[%s819] sm:$0x1]
    %s821 = scalar_lea.vmem %s0, 124
    %v822 = vld [vmem:[%s821] sm:$0x2]
    %vm823 = vcmask 1041409
    %v824 = vsel %vm823, %v822, %v820
    %vm825 = vcmask 744448
    %v826 = vsel %vm825, %v824, %v818
    %827 = vrot.lane.b32.xlu0 %v826, 37
    %v828 = vpop.permute.xlu0 %827
    %vm829 = vcmask 302080
    %s830 = scalar_lea.vmem [#allocation0], 312
    %831 = vst.msk [vmem:[%s830] sm:$0x3] %vm829, %v828
    %vm832 = vcmask 638248
    %s833 = scalar_lea.vmem [#allocation0], 312
    %834 = vst.msk [vmem:[%s833] sm:$0x3] %vm832, %v828
    %s835 = scalar_lea.vmem %s0, 53
    %v836 = vld [vmem:[%s835] sm:$0x1]
    %s837 = scalar_lea.vmem %s0, 116
    %v838 = vld [vmem:[%s837] sm:$0x2]
    %vm839 = vcmask 1041409
    %v840 = vsel %vm839, %v838, %v836
    %841 = vrot.lane.b32.xlu0 %v840, 37
    %v842 = vpop.permute.xlu0 %841
    %vm843 = vcmask 1047848
    %s844 = scalar_lea.vmem [#allocation0], 304
    %845 = vst.msk [vmem:[%s844] sm:$0x3] %vm843, %v842
    %s846 = scalar_lea.vmem %s0, 4
    %v847 = vld [vmem:[%s846] sm:$0x1]
    %s848 = scalar_lea.vmem %s0, 67
    %v849 = vld [vmem:[%s848] sm:$0x2]
    %vm850 = vcmask 1041409
    %v851 = vsel %vm850, %v849, %v847
    %s852 = scalar_lea.vmem %s0, 12
    %v853 = vld [vmem:[%s852] sm:$0x1]
    %s854 = scalar_lea.vmem %s0, 75
    %v855 = vld [vmem:[%s854] sm:$0x2]
    %vm856 = vcmask 1041409
    %v857 = vsel %vm856, %v855, %v853
    %vm858 = vcmask 752640
    %v859 = vsel %vm858, %v857, %v851
    %860 = vrot.lane.b32.xlu0 %v859, 36
    %v861 = vpop.permute.xlu0 %860
    %vm862 = vcmask 293888
    %s863 = scalar_lea.vmem [#allocation0], 48
    %864 = vst.msk [vmem:[%s863] sm:$0x3] %vm862, %v861
    %vm865 = vcmask 630048
    %s866 = scalar_lea.vmem [#allocation0], 48
    %867 = vst.msk [vmem:[%s866] sm:$0x3] %vm865, %v861
    %s868 = scalar_lea.vmem %s0, 4
    %v869 = vld [vmem:[%s868] sm:$0x1]
    %s870 = scalar_lea.vmem %s0, 67
    %v871 = vld [vmem:[%s870] sm:$0x2]
    %vm872 = vcmask 1041409
    %v873 = vsel %vm872, %v871, %v869
    %874 = vrot.lane.b32.xlu0 %v873, 36
    %v875 = vpop.permute.xlu0 %874
    %vm876 = vcmask 1047840
    %s877 = scalar_lea.vmem [#allocation0], 40
    %878 = vst.msk [vmem:[%s877] sm:$0x3] %vm876, %v875
    %s879 = scalar_lea.vmem %s0, 7
    %v880 = vld [vmem:[%s879] sm:$0x1]
    %s881 = scalar_lea.vmem %s0, 70
    %v882 = vld [vmem:[%s881] sm:$0x2]
    %vm883 = vcmask 1041409
    %v884 = vsel %vm883, %v882, %v880
    %s885 = scalar_lea.vmem %s0, 15
    %v886 = vld [vmem:[%s885] sm:$0x1]
    %s887 = scalar_lea.vmem %s0, 78
    %v888 = vld [vmem:[%s887] sm:$0x2]
    %vm889 = vcmask 1041409
    %v890 = vsel %vm889, %v888, %v886
    %vm891 = vcmask 793600
    %v892 = vsel %vm891, %v890, %v884
    %893 = vrot.lane.b32.xlu0 %v892, 31
    %v894 = vpop.permute.xlu0 %893
    %vm895 = vcmask 252928
    %s896 = scalar_lea.vmem [#allocation0], 80
    %897 = vst.msk [vmem:[%s896] sm:$0x3] %vm895, %v894
    %vm898 = vcmask 589048
    %s899 = scalar_lea.vmem [#allocation0], 80
    %900 = vst.msk [vmem:[%s899] sm:$0x3] %vm898, %v894
    %s901 = scalar_lea.vmem %s0, 7
    %v902 = vld [vmem:[%s901] sm:$0x1]
    %s903 = scalar_lea.vmem %s0, 70
    %v904 = vld [vmem:[%s903] sm:$0x2]
    %vm905 = vcmask 1041409
    %v906 = vsel %vm905, %v904, %v902
    %907 = vrot.lane.b32.xlu0 %v906, 31
    %v908 = vpop.permute.xlu0 %907
    %vm909 = vcmask 1047800
    %s910 = scalar_lea.vmem [#allocation0], 72
    %911 = vst.msk [vmem:[%s910] sm:$0x3] %vm909, %v908
    %s912 = scalar_lea.vmem %s0, 18
    %v913 = vld [vmem:[%s912] sm:$0x1]
    %s914 = scalar_lea.vmem %s0, 81
    %v915 = vld [vmem:[%s914] sm:$0x2]
    %vm916 = vcmask 1041409
    %v917 = vsel %vm916, %v915, %v913
    %s918 = scalar_lea.vmem %s0, 26
    %v919 = vld [vmem:[%s918] sm:$0x1]
    %s920 = scalar_lea.vmem %s0, 89
    %v921 = vld [vmem:[%s920] sm:$0x2]
    %vm922 = vcmask 1041409
    %v923 = vsel %vm922, %v921, %v919
    %vm924 = vcmask 834560
    %v925 = vsel %vm924, %v923, %v917
    %926 = vrot.lane.b32.xlu0 %v925, 26
    %v927 = vpop.permute.xlu0 %926
    %vm928 = vcmask 211968
    %s929 = scalar_lea.vmem [#allocation0], 112
    %930 = vst.msk [vmem:[%s929] sm:$0x3] %vm928, %v927
    %vm931 = vcmask 548048
    %s932 = scalar_lea.vmem [#allocation0], 112
    %933 = vst.msk [vmem:[%s932] sm:$0x3] %vm931, %v927
    %s934 = scalar_lea.vmem %s0, 18
    %v935 = vld [vmem:[%s934] sm:$0x1]
    %s936 = scalar_lea.vmem %s0, 81
    %v937 = vld [vmem:[%s936] sm:$0x2]
    %vm938 = vcmask 1041409
    %v939 = vsel %vm938, %v937, %v935
    %940 = vrot.lane.b32.xlu0 %v939, 26
    %v941 = vpop.permute.xlu0 %940
    %vm942 = vcmask 1047760
    %s943 = scalar_lea.vmem [#allocation0], 104
    %944 = vst.msk [vmem:[%s943] sm:$0x3] %vm942, %v941
    %s945 = scalar_lea.vmem %s0, 21
    %v946 = vld [vmem:[%s945] sm:$0x1]
    %s947 = scalar_lea.vmem %s0, 84
    %v948 = vld [vmem:[%s947] sm:$0x2]
    %vm949 = vcmask 1041409
    %v950 = vsel %vm949, %v948, %v946
    %s951 = scalar_lea.vmem %s0, 29
    %v952 = vld [vmem:[%s951] sm:$0x1]
    %s953 = scalar_lea.vmem %s0, 92
    %v954 = vld [vmem:[%s953] sm:$0x2]
    %vm955 = vcmask 1041409
    %v956 = vsel %vm955, %v954, %v952
    %vm957 = vcmask 875520
    %v958 = vsel %vm957, %v956, %v950
    %959 = vrot.lane.b32.xlu0 %v958, 21
    %v960 = vpop.permute.xlu0 %959
    %vm961 = vcmask 171008
    %s962 = scalar_lea.vmem [#allocation0], 144
    %963 = vst.msk [vmem:[%s962] sm:$0x3] %vm961, %v960
    %vm964 = vcmask 507048
    %s965 = scalar_lea.vmem [#allocation0], 144
    %966 = vst.msk [vmem:[%s965] sm:$0x3] %vm964, %v960
    %s967 = scalar_lea.vmem %s0, 21
    %v968 = vld [vmem:[%s967] sm:$0x1]
    %s969 = scalar_lea.vmem %s0, 84
    %v970 = vld [vmem:[%s969] sm:$0x2]
    %vm971 = vcmask 1041409
    %v972 = vsel %vm971, %v970, %v968
    %973 = vrot.lane.b32.xlu0 %v972, 21
    %v974 = vpop.permute.xlu0 %973
    %vm975 = vcmask 1047720
    %s976 = scalar_lea.vmem [#allocation0], 136
    %977 = vst.msk [vmem:[%s976] sm:$0x3] %vm975, %v974
    %s978 = scalar_lea.vmem %s0, 32
    %v979 = vld [vmem:[%s978] sm:$0x1]
    %s980 = scalar_lea.vmem %s0, 95
    %v981 = vld [vmem:[%s980] sm:$0x2]
    %vm982 = vcmask 1041409
    %v983 = vsel %vm982, %v981, %v979
    %s984 = scalar_lea.vmem %s0, 40
    %v985 = vld [vmem:[%s984] sm:$0x1]
    %s986 = scalar_lea.vmem %s0, 103
    %v987 = vld [vmem:[%s986] sm:$0x2]
    %vm988 = vcmask 1041409
    %v989 = vsel %vm988, %v987, %v985
    %vm990 = vcmask 916480
    %v991 = vsel %vm990, %v989, %v983
    %992 = vrot.lane.b32.xlu0 %v991, 16
    %v993 = vpop.permute.xlu0 %992
    %vm994 = vcmask 130048
    %s995 = scalar_lea.vmem [#allocation0], 176
    %996 = vst.msk [vmem:[%s995] sm:$0x3] %vm994, %v993
    %vm997 = vcmask 466048
    %s998 = scalar_lea.vmem [#allocation0], 176
    %999 = vst.msk [vmem:[%s998] sm:$0x3] %vm997, %v993
    %s1000 = scalar_lea.vmem %s0, 32
    %v1001 = vld [vmem:[%s1000] sm:$0x1]
    %s1002 = scalar_lea.vmem %s0, 95
    %v1003 = vld [vmem:[%s1002] sm:$0x2]
    %vm1004 = vcmask 1041409
    %v1005 = vsel %vm1004, %v1003, %v1001
    %1006 = vrot.lane.b32.xlu0 %v1005, 16
    %v1007 = vpop.permute.xlu0 %1006
    %vm1008 = vcmask 1047680
    %s1009 = scalar_lea.vmem [#allocation0], 168
    %1010 = vst.msk [vmem:[%s1009] sm:$0x3] %vm1008, %v1007
    %s1011 = scalar_lea.vmem %s0, 35
    %v1012 = vld [vmem:[%s1011] sm:$0x1]
    %s1013 = scalar_lea.vmem %s0, 98
    %v1014 = vld [vmem:[%s1013] sm:$0x2]
    %vm1015 = vcmask 1041409
    %v1016 = vsel %vm1015, %v1014, %v1012
    %s1017 = scalar_lea.vmem %s0, 43
    %v1018 = vld [vmem:[%s1017] sm:$0x1]
    %s1019 = scalar_lea.vmem %s0, 106
    %v1020 = vld [vmem:[%s1019] sm:$0x2]
    %vm1021 = vcmask 1041409
    %v1022 = vsel %vm1021, %v1020, %v1018
    %vm1023 = vcmask 957440
    %v1024 = vsel %vm1023, %v1022, %v1016
    %1025 = vrot.lane.b32.xlu0 %v1024, 11
    %v1026 = vpop.permute.xlu0 %1025
    %vm1027 = vcmask 89088
    %s1028 = scalar_lea.vmem [#allocation0], 208
    %1029 = vst.msk [vmem:[%s1028] sm:$0x3] %vm1027, %v1026
    %vm1030 = vcmask 425048
    %s1031 = scalar_lea.vmem [#allocation0], 208
    %1032 = vst.msk [vmem:[%s1031] sm:$0x3] %vm1030, %v1026
    %s1033 = scalar_lea.vmem %s0, 35
    %v1034 = vld [vmem:[%s1033] sm:$0x1]
    %s1035 = scalar_lea.vmem %s0, 98
    %v1036 = vld [vmem:[%s1035] sm:$0x2]
    %vm1037 = vcmask 1041409
    %v1038 = vsel %vm1037, %v1036, %v1034
    %1039 = vrot.lane.b32.xlu0 %v1038, 11
    %v1040 = vpop.permute.xlu0 %1039
    %vm1041 = vcmask 1047640
    %s1042 = scalar_lea.vmem [#allocation0], 200
    %1043 = vst.msk [vmem:[%s1042] sm:$0x3] %vm1041, %v1040
    %s1044 = scalar_lea.vmem %s0, 38
    %v1045 = vld [vmem:[%s1044] sm:$0x1]
    %s1046 = scalar_lea.vmem %s0, 101
    %v1047 = vld [vmem:[%s1046] sm:$0x2]
    %vm1048 = vcmask 1041409
    %v1049 = vsel %vm1048, %v1047, %v1045
    %s1050 = scalar_lea.vmem %s0, 46
    %v1051 = vld [vmem:[%s1050] sm:$0x1]
    %s1052 = scalar_lea.vmem %s0, 109
    %v1053 = vld [vmem:[%s1052] sm:$0x2]
    %vm1054 = vcmask 1041409
    %v1055 = vsel %vm1054, %v1053, %v1051
    %vm1056 = vcmask 998400
    %v1057 = vsel %vm1056, %v1055, %v1049
    %1058 = vrot.lane.b32.xlu0 %v1057, 6
    %v1059 = vpop.permute.xlu0 %1058
    %vm1060 = vcmask 48128
    %s1061 = scalar_lea.vmem [#allocation0], 240
    %1062 = vst.msk [vmem:[%s1061] sm:$0x3] %vm1060, %v1059
    %vm1063 = vcmask 384048
    %s1064 = scalar_lea.vmem [#allocation0], 240
    %1065 = vst.msk [vmem:[%s1064] sm:$0x3] %vm1063, %v1059
    %s1066 = scalar_lea.vmem %s0, 38
    %v1067 = vld [vmem:[%s1066] sm:$0x1]
    %s1068 = scalar_lea.vmem %s0, 101
    %v1069 = vld [vmem:[%s1068] sm:$0x2]
    %vm1070 = vcmask 1041409
    %v1071 = vsel %vm1070, %v1069, %v1067
    %1072 = vrot.lane.b32.xlu0 %v1071, 6
    %v1073 = vpop.permute.xlu0 %1072
    %vm1074 = vcmask 1047600
    %s1075 = scalar_lea.vmem [#allocation0], 232
    %1076 = vst.msk [vmem:[%s1075] sm:$0x3] %vm1074, %v1073
    %s1077 = scalar_lea.vmem %s0, 49
    %v1078 = vld [vmem:[%s1077] sm:$0x1]
    %s1079 = scalar_lea.vmem %s0, 112
    %v1080 = vld [vmem:[%s1079] sm:$0x2]
    %vm1081 = vcmask 1041409
    %v1082 = vsel %vm1081, %v1080, %v1078
    %s1083 = scalar_lea.vmem %s0, 57
    %v1084 = vld [vmem:[%s1083] sm:$0x1]
    %s1085 = scalar_lea.vmem %s0, 120
    %v1086 = vld [vmem:[%s1085] sm:$0x2]
    %vm1087 = vcmask 1041409
    %v1088 = vsel %vm1087, %v1086, %v1084
    %vm1089 = vcmask 1039360
    %v1090 = vsel %vm1089, %v1088, %v1082
    %1091 = vrot.lane.b32.xlu0 %v1090, 1
    %v1092 = vpop.permute.xlu0 %1091
    %vm1093 = vcmask 7168
    %s1094 = scalar_lea.vmem [#allocation0], 272
    %1095 = vst.msk [vmem:[%s1094] sm:$0x3] %vm1093, %v1092
    %vm1096 = vcmask 343048
    %s1097 = scalar_lea.vmem [#allocation0], 272
    %1098 = vst.msk [vmem:[%s1097] sm:$0x3] %vm1096, %v1092
    %s1099 = scalar_lea.vmem %s0, 49
    %v1100 = vld [vmem:[%s1099] sm:$0x1]
    %s1101 = scalar_lea.vmem %s0, 112
    %v1102 = vld [vmem:[%s1101] sm:$0x2]
    %vm1103 = vcmask 1041409
    %v1104 = vsel %vm1103, %v1102, %v1100
    %1105 = vrot.lane.b32.xlu0 %v1104, 1
    %v1106 = vpop.permute.xlu0 %1105
    %vm1107 = vcmask 1047560
    %s1108 = scalar_lea.vmem [#allocation0], 264
    %1109 = vst.msk [vmem:[%s1108] sm:$0x3] %vm1107, %v1106
    %s1111 = sshllo.u32 0, 2
    %v1113 = vld [vmem:[#allocation0] sm:%s1111]
    %s1114 = sshllo.u32 0, 2
    %1115 = vst [vmem:[%s1] sm:%s1114] %v1113
    %s1116 = scalar_lea.vmem [#allocation0], 8
    %v1117 = vld [vmem:[%s1116] sm:%s1111]
    %s1118 = sshllo.u32 0, 2
    %s1119 = scalar_lea.vmem %s1, 2
    %1120 = vst [vmem:[%s1119] sm:%s1118] %v1117
    %s1121 = scalar_lea.vmem [#allocation0], 16
    %v1122 = vld [vmem:[%s1121] sm:%s1111]
    %s1123 = sshllo.u32 0, 2
    %s1124 = smul.addr 2, 2
    %s1125 = scalar_lea.vmem %s1, %s1124
    %1126 = vst [vmem:[%s1125] sm:%s1123] %v1122
    %s1127 = scalar_lea.vmem [#allocation0], 24
    %v1128 = vld [vmem:[%s1127] sm:%s1111]
    %s1129 = sshllo.u32 0, 2
    %s1130 = smul.addr 2, 3
    %s1131 = scalar_lea.vmem %s1, %s1130
    %1132 = vst [vmem:[%s1131] sm:%s1129] %v1128
    %s1133 = scalar_lea.vmem [#allocation0], 32
    %v1134 = vld [vmem:[%s1133] sm:%s1111]
    %s1135 = sshllo.u32 0, 2
    %s1136 = smul.addr 2, 4
    %s1137 = scalar_lea.vmem %s1, %s1136
    %1138 = vst [vmem:[%s1137] sm:%s1135] %v1134
    %s1139 = scalar_lea.vmem [#allocation0], 40
    %v1140 = vld [vmem:[%s1139] sm:%s1111]
    %s1141 = sshllo.u32 0, 2
    %s1142 = smul.addr 2, 5
    %s1143 = scalar_lea.vmem %s1, %s1142
    %1144 = vst [vmem:[%s1143] sm:%s1141] %v1140
    %s1145 = scalar_lea.vmem [#allocation0], 48
    %v1146 = vld [vmem:[%s1145] sm:%s1111]
    %s1147 = sshllo.u32 0, 2
    %s1148 = smul.addr 2, 6
    %s1149 = scalar_lea.vmem %s1, %s1148
    %1150 = vst [vmem:[%s1149] sm:%s1147] %v1146
    %s1151 = scalar_lea.vmem [#allocation0], 56
    %v1152 = vld [vmem:[%s1151] sm:%s1111]
    %s1153 = sshllo.u32 0, 2
    %s1154 = smul.addr 2, 7
    %s1155 = scalar_lea.vmem %s1, %s1154
    %1156 = vst [vmem:[%s1155] sm:%s1153] %v1152
    %s1157 = scalar_lea.vmem [#allocation0], 64
    %v1158 = vld [vmem:[%s1157] sm:%s1111]
    %s1159 = sshllo.u32 0, 2
    %s1160 = smul.addr 2, 8
    %s1161 = scalar_lea.vmem %s1, %s1160
    %1162 = vst [vmem:[%s1161] sm:%s1159] %v1158
    %s1163 = scalar_lea.vmem [#allocation0], 72
    %v1164 = vld [vmem:[%s1163] sm:%s1111]
    %s1165 = sshllo.u32 0, 2
    %s1166 = smul.addr 2, 9
    %s1167 = scalar_lea.vmem %s1, %s1166
    %1168 = vst [vmem:[%s1167] sm:%s1165] %v1164
    %s1169 = scalar_lea.vmem [#allocation0], 80
    %v1170 = vld [vmem:[%s1169] sm:%s1111]
    %s1171 = sshllo.u32 0, 2
    %s1172 = smul.addr 2, 10
    %s1173 = scalar_lea.vmem %s1, %s1172
    %1174 = vst [vmem:[%s1173] sm:%s1171] %v1170
    %s1175 = scalar_lea.vmem [#allocation0], 88
    %v1176 = vld [vmem:[%s1175] sm:%s1111]
    %s1177 = sshllo.u32 0, 2
    %s1178 = smul.addr 2, 11
    %s1179 = scalar_lea.vmem %s1, %s1178
    %1180 = vst [vmem:[%s1179] sm:%s1177] %v1176
    %s1181 = scalar_lea.vmem [#allocation0], 96
    %v1182 = vld [vmem:[%s1181] sm:%s1111]
    %s1183 = sshllo.u32 0, 2
    %s1184 = smul.addr 2, 12
    %s1185 = scalar_lea.vmem %s1, %s1184
    %1186 = vst [vmem:[%s1185] sm:%s1183] %v1182
    %s1187 = scalar_lea.vmem [#allocation0], 104
    %v1188 = vld [vmem:[%s1187] sm:%s1111]
    %s1189 = sshllo.u32 0, 2
    %s1190 = smul.addr 2, 13
    %s1191 = scalar_lea.vmem %s1, %s1190
    %1192 = vst [vmem:[%s1191] sm:%s1189] %v1188
    %s1193 = scalar_lea.vmem [#allocation0], 112
    %v1194 = vld [vmem:[%s1193] sm:%s1111]
    %s1195 = sshllo.u32 0, 2
    %s1196 = smul.addr 2, 14
    %s1197 = scalar_lea.vmem %s1, %s1196
    %1198 = vst [vmem:[%s1197] sm:%s1195] %v1194
    %s1199 = scalar_lea.vmem [#allocation0], 120
    %v1200 = vld [vmem:[%s1199] sm:%s1111]
    %s1201 = sshllo.u32 0, 2
    %s1202 = smul.addr 2, 15
    %s1203 = scalar_lea.vmem %s1, %s1202
    %1204 = vst [vmem:[%s1203] sm:%s1201] %v1200
    %s1205 = scalar_lea.vmem [#allocation0], 128
    %v1206 = vld [vmem:[%s1205] sm:%s1111]
    %s1207 = sshllo.u32 0, 2
    %s1208 = smul.addr 2, 16
    %s1209 = scalar_lea.vmem %s1, %s1208
    %1210 = vst [vmem:[%s1209] sm:%s1207] %v1206
    %s1211 = scalar_lea.vmem [#allocation0], 136
    %v1212 = vld [vmem:[%s1211] sm:%s1111]
    %s1213 = sshllo.u32 0, 2
    %s1214 = smul.addr 2, 17
    %s1215 = scalar_lea.vmem %s1, %s1214
    %1216 = vst [vmem:[%s1215] sm:%s1213] %v1212
    %s1217 = scalar_lea.vmem [#allocation0], 144
    %v1218 = vld [vmem:[%s1217] sm:%s1111]
    %s1219 = sshllo.u32 0, 2
    %s1220 = smul.addr 2, 18
    %s1221 = scalar_lea.vmem %s1, %s1220
    %1222 = vst [vmem:[%s1221] sm:%s1219] %v1218
    %s1223 = scalar_lea.vmem [#allocation0], 152
    %v1224 = vld [vmem:[%s1223] sm:%s1111]
    %s1225 = sshllo.u32 0, 2
    %s1226 = smul.addr 2, 19
    %s1227 = scalar_lea.vmem %s1, %s1226
    %1228 = vst [vmem:[%s1227] sm:%s1225] %v1224
    %s1229 = scalar_lea.vmem [#allocation0], 160
    %v1230 = vld [vmem:[%s1229] sm:%s1111]
    %s1231 = sshllo.u32 0, 2
    %s1232 = smul.addr 2, 20
    %s1233 = scalar_lea.vmem %s1, %s1232
    %1234 = vst [vmem:[%s1233] sm:%s1231] %v1230
    %s1235 = scalar_lea.vmem [#allocation0], 168
    %v1236 = vld [vmem:[%s1235] sm:%s1111]
    %s1237 = sshllo.u32 0, 2
    %s1238 = smul.addr 2, 21
    %s1239 = scalar_lea.vmem %s1, %s1238
    %1240 = vst [vmem:[%s1239] sm:%s1237] %v1236
    %s1241 = scalar_lea.vmem [#allocation0], 176
    %v1242 = vld [vmem:[%s1241] sm:%s1111]
    %s1243 = sshllo.u32 0, 2
    %s1244 = smul.addr 2, 22
    %s1245 = scalar_lea.vmem %s1, %s1244
    %1246 = vst [vmem:[%s1245] sm:%s1243] %v1242
    %s1247 = scalar_lea.vmem [#allocation0], 184
    %v1248 = vld [vmem:[%s1247] sm:%s1111]
    %s1249 = sshllo.u32 0, 2
    %s1250 = smul.addr 2, 23
    %s1251 = scalar_lea.vmem %s1, %s1250
    %1252 = vst [vmem:[%s1251] sm:%s1249] %v1248
    %s1253 = scalar_lea.vmem [#allocation0], 192
    %v1254 = vld [vmem:[%s1253] sm:%s1111]
    %s1255 = sshllo.u32 0, 2
    %s1256 = smul.addr 2, 24
    %s1257 = scalar_lea.vmem %s1, %s1256
    %1258 = vst [vmem:[%s1257] sm:%s1255] %v1254
    %s1259 = scalar_lea.vmem [#allocation0], 200
    %v1260 = vld [vmem:[%s1259] sm:%s1111]
    %s1261 = sshllo.u32 0, 2
    %s1262 = smul.addr 2, 25
    %s1263 = scalar_lea.vmem %s1, %s1262
    %1264 = vst [vmem:[%s1263] sm:%s1261] %v1260
    %s1265 = scalar_lea.vmem [#allocation0], 208
    %v1266 = vld [vmem:[%s1265] sm:%s1111]
    %s1267 = sshllo.u32 0, 2
    %s1268 = smul.addr 2, 26
    %s1269 = scalar_lea.vmem %s1, %s1268
    %1270 = vst [vmem:[%s1269] sm:%s1267] %v1266
    %s1271 = scalar_lea.vmem [#allocation0], 216
    %v1272 = vld [vmem:[%s1271] sm:%s1111]
    %s1273 = sshllo.u32 0, 2
    %s1274 = smul.addr 2, 27
    %s1275 = scalar_lea.vmem %s1, %s1274
    %1276 = vst [vmem:[%s1275] sm:%s1273] %v1272
    %s1277 = scalar_lea.vmem [#allocation0], 224
    %v1278 = vld [vmem:[%s1277] sm:%s1111]
    %s1279 = sshllo.u32 0, 2
    %s1280 = smul.addr 2, 28
    %s1281 = scalar_lea.vmem %s1, %s1280
    %1282 = vst [vmem:[%s1281] sm:%s1279] %v1278
    %s1283 = scalar_lea.vmem [#allocation0], 232
    %v1284 = vld [vmem:[%s1283] sm:%s1111]
    %s1285 = sshllo.u32 0, 2
    %s1286 = smul.addr 2, 29
    %s1287 = scalar_lea.vmem %s1, %s1286
    %1288 = vst [vmem:[%s1287] sm:%s1285] %v1284
    %s1289 = scalar_lea.vmem [#allocation0], 240
    %v1290 = vld [vmem:[%s1289] sm:%s1111]
    %s1291 = sshllo.u32 0, 2
    %s1292 = smul.addr 2, 30
    %s1293 = scalar_lea.vmem %s1, %s1292
    %1294 = vst [vmem:[%s1293] sm:%s1291] %v1290
    %s1295 = scalar_lea.vmem [#allocation0], 248
    %v1296 = vld [vmem:[%s1295] sm:%s1111]
    %s1297 = sshllo.u32 0, 2
    %s1298 = smul.addr 2, 31
    %s1299 = scalar_lea.vmem %s1, %s1298
    %1300 = vst [vmem:[%s1299] sm:%s1297] %v1296
    %s1301 = scalar_lea.vmem [#allocation0], 256
    %v1302 = vld [vmem:[%s1301] sm:%s1111]
    %s1303 = sshllo.u32 0, 2
    %s1304 = smul.addr 2, 32
    %s1305 = scalar_lea.vmem %s1, %s1304
    %1306 = vst [vmem:[%s1305] sm:%s1303] %v1302
    %s1307 = scalar_lea.vmem [#allocation0], 264
    %v1308 = vld [vmem:[%s1307] sm:%s1111]
    %s1309 = sshllo.u32 0, 2
    %s1310 = smul.addr 2, 33
    %s1311 = scalar_lea.vmem %s1, %s1310
    %1312 = vst [vmem:[%s1311] sm:%s1309] %v1308
    %s1313 = scalar_lea.vmem [#allocation0], 272
    %v1314 = vld [vmem:[%s1313] sm:%s1111]
    %s1315 = sshllo.u32 0, 2
    %s1316 = smul.addr 2, 34
    %s1317 = scalar_lea.vmem %s1, %s1316
    %1318 = vst [vmem:[%s1317] sm:%s1315] %v1314
    %s1319 = scalar_lea.vmem [#allocation0], 280
    %v1320 = vld [vmem:[%s1319] sm:%s1111]
    %s1321 = sshllo.u32 0, 2
    %s1322 = smul.addr 2, 35
    %s1323 = scalar_lea.vmem %s1, %s1322
    %1324 = vst [vmem:[%s1323] sm:%s1321] %v1320
    %s1325 = scalar_lea.vmem [#allocation0], 288
    %v1326 = vld [vmem:[%s1325] sm:%s1111]
    %s1327 = sshllo.u32 0, 2
    %s1328 = smul.addr 2, 36
    %s1329 = scalar_lea.vmem %s1, %s1328
    %1330 = vst [vmem:[%s1329] sm:%s1327] %v1326
    %s1331 = scalar_lea.vmem [#allocation0], 296
    %v1332 = vld [vmem:[%s1331] sm:%s1111]
    %s1333 = sshllo.u32 0, 2
    %s1334 = smul.addr 2, 37
    %s1335 = scalar_lea.vmem %s1, %s1334
    %1336 = vst [vmem:[%s1335] sm:%s1333] %v1332
    %s1337 = scalar_lea.vmem [#allocation0], 304
    %v1338 = vld [vmem:[%s1337] sm:%s1111]
    %s1339 = sshllo.u32 0, 2
    %s1340 = smul.addr 2, 38
    %s1341 = scalar_lea.vmem %s1, %s1340
    %1342 = vst [vmem:[%s1341] sm:%s1339] %v1338
    %s1343 = scalar_lea.vmem [#allocation0], 312
    %v1344 = vld [vmem:[%s1343] sm:%s1111]
    %s1345 = sshllo.u32 0, 2
    %s1346 = smul.addr 2, 39
    %s1347 = scalar_lea.vmem %s1, %s1346
    %1348 = vst [vmem:[%s1347] sm:%s1345] %v1344
    %s1349 = scalar_lea.vmem [#allocation0], 320
    %v1350 = vld [vmem:[%s1349] sm:%s1111]
    %s1351 = sshllo.u32 0, 2
    %s1352 = smul.addr 2, 40
    %s1353 = scalar_lea.vmem %s1, %s1352
    %1354 = vst [vmem:[%s1353] sm:%s1351] %v1350
    %s1355 = scalar_lea.vmem [#allocation0], 328
    %v1356 = vld [vmem:[%s1355] sm:%s1111]
    %s1357 = sshllo.u32 0, 2
    %s1358 = smul.addr 2, 41
    %s1359 = scalar_lea.vmem %s1, %s1358
    %1360 = vst [vmem:[%s1359] sm:%s1357] %v1356
    %s1361 = scalar_lea.vmem [#allocation0], 336
    %v1362 = vld [vmem:[%s1361] sm:%s1111]
    %s1363 = sshllo.u32 0, 2
    %s1364 = smul.addr 2, 42
    %s1365 = scalar_lea.vmem %s1, %s1364
    %1366 = vst [vmem:[%s1365] sm:%s1363] %v1362

// kernel: evaluate.5
$region0: #{evaluate.5}
  #allocation0 [shape = 'u32[]', space=smem, size = 0x4, offset = 0x4, fixed_abs, tag = 'smem constant byte address 0x4 - core index']
  #allocation1 [shape = 'u32[144,128]{1,0:T(1,128)}', space=vmem, size = 0x12000, scoped, tag = 'internal scratch']
  #allocation2 [shape = 'f32[1,1]{1,0:T(1,128)S(1)}', space=vmem, size = 0x200, scoped, tag = 'scoped memory for evaluate.5']
  %s0 = inlined_call_operand.vmem [shape: f32[2,5408], index: 0, kind: input, shape index: {}]
  %s1 = inlined_call_operand.vmem [shape: f32[2,5408], index: 1, kind: input, shape index: {}]
  %s2 = inlined_call_operand.vmem [shape: f32[2,4], index: 2, kind: input, shape index: {}]
  %s3 = inlined_call_operand.vmem [shape: bf16[5408,128], index: 3, kind: input, shape index: {}]
  %s4 = inlined_call_operand.vmem [shape: f32[1,128], index: 4, kind: input, shape index: {}]
  %s5 = inlined_call_operand.vmem [shape: f32[128,4], index: 5, kind: input, shape index: {}]
  %s6 = inlined_call_operand.vmem [shape: f32[1,4], index: 6, kind: input, shape index: {}]
  %s7 = inlined_call_operand.vmem [shape: bf16[5408,128], index: 7, kind: input, shape index: {}]
  %s8 = inlined_call_operand.vmem [shape: f32[1,128], index: 8, kind: input, shape index: {}]
  %s9 = inlined_call_operand.vmem [shape: f32[128,1], index: 9, kind: input, shape index: {}]
  %s10 = inlined_call_operand.<no memory space> [shape: f32[1,1], index: 10, kind: input, shape index: {}]
  %s11 = inlined_call_operand.hbm [shape: f32[2,4], index: 11, kind: output, shape index: {0}]
  %s12 = inlined_call_operand.hbm [shape: f32[2,4], index: 12, kind: output, shape index: {1}]
  %s13 = inlined_call_operand.vmem [shape: f32[2,1], index: 13, kind: output, shape index: {2}]
  %14 = xla_tuple %s11, %s12, %s13
  %s15 = sld [smem:[#allocation0]]
  $region70: #{evaluate.5} parent=0
    _
  %s17 = ssub.s32 1, %s15
  %s18 = scalar_select 0, %s17, %s15
  %v19 = vstv %s10
  %20 = vst [vmem:[#allocation2] sm:$0x1] %v19
  $region1: #{evaluate.5} parent=0
    #allocation3 [shape = 'u8[1024]{0}', space=vmem, size = 0x400, scoped, tag = 'output window, operand 0, single buffered']
    #allocation4 [shape = 's32[1]{0}', space=sflag, size = 0x4, scoped, tag = 'scoped memory for evaluate.5']
    #allocation5 [shape = 'u8[1024]{0}', space=vmem, size = 0x400, scoped, tag = 'output window, operand 1, single buffered']
    #allocation6 [shape = 's32[1]{0}', space=sflag, size = 0x4, scoped, tag = 'scoped memory for evaluate.5']
    %21 = vsyncpa [#allocation4], 0
    %22 = vsyncpa [#allocation6], 0
    // Predicated region
    $region2: #{evaluate.5} parent=1 // pred_check
      _
    $region3: #{evaluate.5} parent=1 // pred_check_branch
      %24 = sbr.rel (0) target = $region5
    $region4: #{evaluate.5} parent=1 // pred_region
      _
    $region5: #{evaluate.5} parent=1 // pred_fallthru
      _
    // Predicated region
    $region6: #{evaluate.5} parent=1 // pred_check
      _
    $region7: #{evaluate.5} parent=1 // pred_check_branch
      %26 = sbr.rel (0) target = $region9
    $region8: #{evaluate.5} parent=1 // pred_region
      _
    $region9: #{evaluate.5} parent=1 // pred_fallthru
      _
    // Predicated region
    $region10: #{evaluate.5} parent=1 // pred_check
      _
    $region11: #{evaluate.5} parent=1 // pred_check_branch
      %28 = sbr.rel (0) target = $region13
    $region12: #{evaluate.5} parent=1 // pred_region
      _
    $region13: #{evaluate.5} parent=1 // pred_fallthru
      _
    // Predicated region
    $region14: #{evaluate.5} parent=1 // pred_check
      _
    $region15: #{evaluate.5} parent=1 // pred_check_branch
      %30 = sbr.rel (0) target = $region17
    $region16: #{evaluate.5} parent=1 // pred_region
      _
    $region17: #{evaluate.5} parent=1 // pred_fallthru
      _
    // Predicated region
    $region18: #{evaluate.5} parent=1 // pred_check
      _
    $region19: #{evaluate.5} parent=1 // pred_check_branch
      %32 = sbr.rel (0) target = $region21
    $region20: #{evaluate.5} parent=1 // pred_region
      _
    $region21: #{evaluate.5} parent=1 // pred_fallthru
      _
    // Predicated region
    $region22: #{evaluate.5} parent=1 // pred_check
      _
    $region23: #{evaluate.5} parent=1 // pred_check_branch
      %34 = sbr.rel (0) target = $region25
    $region24: #{evaluate.5} parent=1 // pred_region
      _
    $region25: #{evaluate.5} parent=1 // pred_fallthru
      _
    // Predicated region
    $region26: #{evaluate.5} parent=1 // pred_check
      _
    $region27: #{evaluate.5} parent=1 // pred_check_branch
      %36 = sbr.rel (0) target = $region29
    $region28: #{evaluate.5} parent=1 // pred_region
      _
    $region29: #{evaluate.5} parent=1 // pred_fallthru
      _
    // Predicated region
    $region30: #{evaluate.5} parent=1 // pred_check
      _
    $region31: #{evaluate.5} parent=1 // pred_check_branch
      %38 = sbr.rel (0) target = $region33
    $region32: #{evaluate.5} parent=1 // pred_region
      _
    $region33: #{evaluate.5} parent=1 // pred_fallthru
      _
    // Predicated region
    $region34: #{evaluate.5} parent=1 // pred_check
      _
    $region35: #{evaluate.5} parent=1 // pred_check_branch
      %40 = sbr.rel (0) target = $region37
    $region36: #{evaluate.5} parent=1 // pred_region
      _
    $region37: #{evaluate.5} parent=1 // pred_fallthru
      _
    // Predicated region
    $region38: #{evaluate.5} parent=1 // pred_check
      _
    $region39: #{evaluate.5} parent=1 // pred_check_branch
      %42 = sbr.rel (0) target = $region41
    $region40: #{evaluate.5} parent=1 // pred_region
      _
    $region41: #{evaluate.5} parent=1 // pred_fallthru
      _
    // Predicated region
    $region42: #{evaluate.5} parent=1 // pred_check
      _
    $region43: #{evaluate.5} parent=1 // pred_check_branch
      %44 = sbr.rel (0) target = $region45
    $region44: #{evaluate.5} parent=1 // pred_region
      _
    $region45: #{evaluate.5} parent=1 // pred_fallthru
      _
    %v46 = vld [vmem:[%s0] sm:$0xff]
    %v47 = vld [vmem:[%s0 + $0x8] sm:$0xff]
    %v48 = vld [vmem:[%s0 + $0x10] sm:$0xff]
    %v49 = vld [vmem:[%s0 + $0x18] sm:$0xff]
    %v50 = vld [vmem:[%s0 + $0x20] sm:$0xff]
    %v51 = vld [vmem:[%s0 + $0x28] sm:$0xff]
    %v52 = vld [vmem:[%s0 + $0x30] sm:$0xff]
    %v53 = vld [vmem:[%s0 + $0x38] sm:$0xff]
    %v54 = vld [vmem:[%s0 + $0x40] sm:$0xff]
    %v55 = vld [vmem:[%s0 + $0x48] sm:$0xff]
    %v56 = vld [vmem:[%s0 + $0x50] sm:$0x3f]
    %v68 = vcombine.high %v46, %v46
    %v70 = vunpack.c.l.s4 1983009808
    %v71 = vunpack.c.0.s8 %v70
    %v72 = vlaneseq
    %v73 = vshrl.u32 %v72, 7
    %v74 = vsub.s32 %v71, %v73
    %v75 = vrot.slane %v46, %v74
    %v77 = vunpack.c.l.s4 1983009808
    %v78 = vunpack.c.0.s8 %v77
    %v79 = vlaneseq
    %v80 = vshrl.u32 %v79, 7
    %v81 = vsub.s32 %v78, %v80
    %v82 = vrot.slane %v68, %v81
    %v83 = vcombine.high %v75, %v75
    %v84 = vcombine.high %v82, %v82
    %v85 = vcombine.high %v47, %v47
    %v87 = vunpack.c.l.s4 1983009808
    %v88 = vunpack.c.0.s8 %v87
    %v89 = vlaneseq
    %v90 = vshrl.u32 %v89, 7
    %v91 = vsub.s32 %v88, %v90
    %v92 = vrot.slane %v47, %v91
    %v94 = vunpack.c.l.s4 1983009808
    %v95 = vunpack.c.0.s8 %v94
    %v96 = vlaneseq
    %v97 = vshrl.u32 %v96, 7
    %v98 = vsub.s32 %v95, %v97
    %v99 = vrot.slane %v85, %v98
    %v100 = vcombine.high %v92, %v92
    %v101 = vcombine.high %v99, %v99
    %v102 = vcombine.high %v48, %v48
    %v104 = vunpack.c.l.s4 1983009808
    %v105 = vunpack.c.0.s8 %v104
    %v106 = vlaneseq
    %v107 = vshrl.u32 %v106, 7
    %v108 = vsub.s32 %v105, %v107
    %v109 = vrot.slane %v48, %v108
    %v111 = vunpack.c.l.s4 1983009808
    %v112 = vunpack.c.0.s8 %v111
    %v113 = vlaneseq
    %v114 = vshrl.u32 %v113, 7
    %v115 = vsub.s32 %v112, %v114
    %v116 = vrot.slane %v102, %v115
    %v117 = vcombine.high %v109, %v109
    %v118 = vcombine.high %v116, %v116
    %v119 = vcombine.high %v49, %v49
    %v121 = vunpack.c.l.s4 1983009808
    %v122 = vunpack.c.0.s8 %v121
    %v123 = vlaneseq
    %v124 = vshrl.u32 %v123, 7
    %v125 = vsub.s32 %v122, %v124
    %v126 = vrot.slane %v49, %v125
    %v128 = vunpack.c.l.s4 1983009808
    %v129 = vunpack.c.0.s8 %v128
    %v130 = vlaneseq
    %v131 = vshrl.u32 %v130, 7
    %v132 = vsub.s32 %v129, %v131
    %v133 = vrot.slane %v119, %v132
    %v134 = vcombine.high %v126, %v126
    %v135 = vcombine.high %v133, %v133
    %v136 = vcombine.high %v50, %v50
    %v138 = vunpack.c.l.s4 1983009808
    %v139 = vunpack.c.0.s8 %v138
    %v140 = vlaneseq
    %v141 = vshrl.u32 %v140, 7
    %v142 = vsub.s32 %v139, %v141
    %v143 = vrot.slane %v50, %v142
    %v145 = vunpack.c.l.s4 1983009808
    %v146 = vunpack.c.0.s8 %v145
    %v147 = vlaneseq
    %v148 = vshrl.u32 %v147, 7
    %v149 = vsub.s32 %v146, %v148
    %v150 = vrot.slane %v136, %v149
    %v151 = vcombine.high %v143, %v143
    %v152 = vcombine.high %v150, %v150
    %v153 = vcombine.high %v51, %v51
    %v155 = vunpack.c.l.s4 1983009808
    %v156 = vunpack.c.0.s8 %v155
    %v157 = vlaneseq
    %v158 = vshrl.u32 %v157, 7
    %v159 = vsub.s32 %v156, %v158
    %v160 = vrot.slane %v51, %v159
    %v162 = vunpack.c.l.s4 1983009808
    %v163 = vunpack.c.0.s8 %v162
    %v164 = vlaneseq
    %v165 = vshrl.u32 %v164, 7
    %v166 = vsub.s32 %v163, %v165
    %v167 = vrot.slane %v153, %v166
    %v168 = vcombine.high %v160, %v160
    %v169 = vcombine.high %v167, %v167
    %v170 = vcombine.high %v52, %v52
    %v172 = vunpack.c.l.s4 1983009808
    %v173 = vunpack.c.0.s8 %v172
    %v174 = vlaneseq
    %v175 = vshrl.u32 %v174, 7
    %v176 = vsub.s32 %v173, %v175
    %v177 = vrot.slane %v52, %v176
    %v179 = vunpack.c.l.s4 1983009808
    %v180 = vunpack.c.0.s8 %v179
    %v181 = vlaneseq
    %v182 = vshrl.u32 %v181, 7
    %v183 = vsub.s32 %v180, %v182
    %v184 = vrot.slane %v170, %v183
    %v185 = vcombine.high %v177, %v177
    %v186 = vcombine.high %v184, %v184
    %v187 = vcombine.high %v53, %v53
    %v189 = vunpack.c.l.s4 1983009808
    %v190 = vunpack.c.0.s8 %v189
    %v191 = vlaneseq
    %v192 = vshrl.u32 %v191, 7
    %v193 = vsub.s32 %v190, %v192
    %v194 = vrot.slane %v53, %v193
    %v196 = vunpack.c.l.s4 1983009808
    %v197 = vunpack.c.0.s8 %v196
    %v198 = vlaneseq
    %v199 = vshrl.u32 %v198, 7
    %v200 = vsub.s32 %v197, %v199
    %v201 = vrot.slane %v187, %v200
    %v202 = vcombine.high %v194, %v194
    %v203 = vcombine.high %v201, %v201
    %v204 = vcombine.high %v54, %v54
    %v206 = vunpack.c.l.s4 1983009808
    %v207 = vunpack.c.0.s8 %v206
    %v208 = vlaneseq
    %v209 = vshrl.u32 %v208, 7
    %v210 = vsub.s32 %v207, %v209
    %v211 = vrot.slane %v54, %v210
    %v213 = vunpack.c.l.s4 1983009808
    %v214 = vunpack.c.0.s8 %v213
    %v215 = vlaneseq
    %v216 = vshrl.u32 %v215, 7
    %v217 = vsub.s32 %v214, %v216
    %v218 = vrot.slane %v204, %v217
    %v219 = vcombine.high %v211, %v211
    %v220 = vcombine.high %v218, %v218
    %v221 = vcombine.high %v55, %v55
    %v223 = vunpack.c.l.s4 1983009808
    %v224 = vunpack.c.0.s8 %v223
    %v225 = vlaneseq
    %v226 = vshrl.u32 %v225, 7
    %v227 = vsub.s32 %v224, %v226
    %v228 = vrot.slane %v55, %v227
    %v230 = vunpack.c.l.s4 1983009808
    %v231 = vunpack.c.0.s8 %v230
    %v232 = vlaneseq
    %v233 = vshrl.u32 %v232, 7
    %v234 = vsub.s32 %v231, %v233
    %v235 = vrot.slane %v221, %v234
    %v236 = vcombine.high %v228, %v228
    %v237 = vcombine.high %v235, %v235
    %v238 = vcombine.high %v56, %v56
    %v240 = vunpack.c.l.s4 1983009808
    %v241 = vunpack.c.0.s8 %v240
    %v242 = vlaneseq
    %v243 = vshrl.u32 %v242, 7
    %v244 = vsub.s32 %v241, %v243
    %v245 = vrot.slane %v56, %v244
    %v247 = vunpack.c.l.s4 1983009808
    %v248 = vunpack.c.0.s8 %v247
    %v249 = vlaneseq
    %v250 = vshrl.u32 %v249, 7
    %v251 = vsub.s32 %v248, %v250
    %v252 = vrot.slane %v238, %v251
    %v253 = vcombine.high %v245, %v245
    %v297 = vpack.c.bf16 %v75, %v75
    %v298 = vpack.c.bf16 %v83, %v83
    %v299 = vpack.c.bf16 %v82, %v82
    %v300 = vpack.c.bf16 %v84, %v84
    %v301 = vpack.c.bf16 %v92, %v92
    %v302 = vpack.c.bf16 %v100, %v100
    %v303 = vpack.c.bf16 %v99, %v99
    %v304 = vpack.c.bf16 %v101, %v101
    %v305 = vpack.c.bf16 %v109, %v109
    %v306 = vpack.c.bf16 %v117, %v117
    %v307 = vpack.c.bf16 %v116, %v116
    %v308 = vpack.c.bf16 %v118, %v118
    %v309 = vpack.c.bf16 %v126, %v126
    %v310 = vpack.c.bf16 %v134, %v134
    %v311 = vpack.c.bf16 %v133, %v133
    %v312 = vpack.c.bf16 %v135, %v135
    %v313 = vpack.c.bf16 %v143, %v143
    %v314 = vpack.c.bf16 %v151, %v151
    %v315 = vpack.c.bf16 %v150, %v150
    %v316 = vpack.c.bf16 %v152, %v152
    %v317 = vpack.c.bf16 %v160, %v160
    %v318 = vpack.c.bf16 %v168, %v168
    %v319 = vpack.c.bf16 %v167, %v167
    %v320 = vpack.c.bf16 %v169, %v169
    %v321 = vpack.c.bf16 %v177, %v177
    %v322 = vpack.c.bf16 %v185, %v185
    %v323 = vpack.c.bf16 %v184, %v184
    %v324 = vpack.c.bf16 %v186, %v186
    %v325 = vpack.c.bf16 %v194, %v194
    %v326 = vpack.c.bf16 %v202, %v202
    %v327 = vpack.c.bf16 %v201, %v201
    %v328 = vpack.c.bf16 %v203, %v203
    %v329 = vpack.c.bf16 %v211, %v211
    %v330 = vpack.c.bf16 %v219, %v219
    %v331 = vpack.c.bf16 %v218, %v218
    %v332 = vpack.c.bf16 %v220, %v220
    %v333 = vpack.c.bf16 %v228, %v228
    %v334 = vpack.c.bf16 %v236, %v236
    %v335 = vpack.c.bf16 %v235, %v235
    %v336 = vpack.c.bf16 %v237, %v237
    %v337 = vpack.c.bf16 %v245, %v245
    %v338 = vpack.c.bf16 %v253, %v253
    %v339 = vpack.c.bf16 %v252, %v252
    %v340 = vld [vmem:[%s3] sm:$0xf]
    %v341 = vld [vmem:[%s3 + $0x4] sm:$0xf]
    %v342 = vld [vmem:[%s3 + $0x8] sm:$0xf]
    %v343 = vld [vmem:[%s3 + $0xc] sm:$0xf]
    %v344 = vld [vmem:[%s3 + $0x10] sm:$0xf]
    %v345 = vld [vmem:[%s3 + $0x14] sm:$0xf]
    %v346 = vld [vmem:[%s3 + $0x18] sm:$0xf]
    %v347 = vld [vmem:[%s3 + $0x1c] sm:$0xf]
    %v348 = vld [vmem:[%s3 + $0x20] sm:$0xf]
    %v349 = vld [vmem:[%s3 + $0x24] sm:$0xf]
    %v350 = vld [vmem:[%s3 + $0x28] sm:$0xf]
    %v351 = vld [vmem:[%s3 + $0x2c] sm:$0xf]
    %v352 = vld [vmem:[%s3 + $0x30] sm:$0xf]
    %v353 = vld [vmem:[%s3 + $0x34] sm:$0xf]
    %v354 = vld [vmem:[%s3 + $0x38] sm:$0xf]
    %v355 = vld [vmem:[%s3 + $0x3c] sm:$0xf]
    %v356 = vld [vmem:[%s3 + $0x40] sm:$0xf]
    %v357 = vld [vmem:[%s3 + $0x44] sm:$0xf]
    %v358 = vld [vmem:[%s3 + $0x48] sm:$0xf]
    %v359 = vld [vmem:[%s3 + $0x4c] sm:$0xf]
    %v360 = vld [vmem:[%s3 + $0x50] sm:$0xf]
    %v361 = vld [vmem:[%s3 + $0x54] sm:$0xf]
    %v362 = vld [vmem:[%s3 + $0x58] sm:$0xf]
    %v363 = vld [vmem:[%s3 + $0x5c] sm:$0xf]
    %v364 = vld [vmem:[%s3 + $0x60] sm:$0xf]
    %v365 = vld [vmem:[%s3 + $0x64] sm:$0xf]
    %v366 = vld [vmem:[%s3 + $0x68] sm:$0xf]
    %v367 = vld [vmem:[%s3 + $0x6c] sm:$0xf]
    %v368 = vld [vmem:[%s3 + $0x70] sm:$0xf]
    %v369 = vld [vmem:[%s3 + $0x74] sm:$0xf]
    %v370 = vld [vmem:[%s3 + $0x78] sm:$0xf]
    %v371 = vld [vmem:[%s3 + $0x7c] sm:$0xf]
    %v372 = vld [vmem:[%s3 + $0x80] sm:$0xf]
    %v373 = vld [vmem:[%s3 + $0x84] sm:$0xf]
    %v374 = vld [vmem:[%s3 + $0x88] sm:$0xf]
    %v375 = vld [vmem:[%s3 + $0x8c] sm:$0xf]
    %v376 = vld [vmem:[%s3 + $0x90] sm:$0xf]
    %v377 = vld [vmem:[%s3 + $0x94] sm:$0xf]
    %v378 = vld [vmem:[%s3 + $0x98] sm:$0xf]
    %v379 = vld [vmem:[%s3 + $0x9c] sm:$0xf]
    %v380 = vld [vmem:[%s3 + $0xa0] sm:$0xf]
    %v381 = vld [vmem:[%s3 + $0xa4] sm:$0xf]
    %v382 = vld [vmem:[%s3 + $0xa8] sm:$0xf]
    %v383 = vld [vmem:[%s3 + $0xac] sm:$0xf]
    %v384 = vld [vmem:[%s3 + $0xb0] sm:$0xf]
    %v385 = vld [vmem:[%s3 + $0xb4] sm:$0xf]
    %v386 = vld [vmem:[%s3 + $0xb8] sm:$0xf]
    %v387 = vld [vmem:[%s3 + $0xbc] sm:$0xf]
    %v388 = vld [vmem:[%s3 + $0xc0] sm:$0xf]
    %v389 = vld [vmem:[%s3 + $0xc4] sm:$0xf]
    %v390 = vld [vmem:[%s3 + $0xc8] sm:$0xf]
    %v391 = vld [vmem:[%s3 + $0xcc] sm:$0xf]
    %v392 = vld [vmem:[%s3 + $0xd0] sm:$0xf]
    %v393 = vld [vmem:[%s3 + $0xd4] sm:$0xf]
    %v394 = vld [vmem:[%s3 + $0xd8] sm:$0xf]
    %v395 = vld [vmem:[%s3 + $0xdc] sm:$0xf]
    %v396 = vld [vmem:[%s3 + $0xe0] sm:$0xf]
    %v397 = vld [vmem:[%s3 + $0xe4] sm:$0xf]
    %v398 = vld [vmem:[%s3 + $0xe8] sm:$0xf]
    %v399 = vld [vmem:[%s3 + $0xec] sm:$0xf]
    %v400 = vld [vmem:[%s3 + $0xf0] sm:$0xf]
    %v401 = vld [vmem:[%s3 + $0xf4] sm:$0xf]
    %v402 = vld [vmem:[%s3 + $0xf8] sm:$0xf]
    %v403 = vld [vmem:[%s3 + $0xfc] sm:$0xf]
    %v404 = vld [vmem:[%s3 + $0x100] sm:$0xf]
    %v405 = vld [vmem:[%s3 + $0x104] sm:$0xf]
    %v406 = vld [vmem:[%s3 + $0x108] sm:$0xf]
    %v407 = vld [vmem:[%s3 + $0x10c] sm:$0xf]
    %v408 = vld [vmem:[%s3 + $0x110] sm:$0xf]
    %v409 = vld [vmem:[%s3 + $0x114] sm:$0xf]
    %v410 = vld [vmem:[%s3 + $0x118] sm:$0xf]
    %v411 = vld [vmem:[%s3 + $0x11c] sm:$0xf]
    %v412 = vld [vmem:[%s3 + $0x120] sm:$0xf]
    %v413 = vld [vmem:[%s3 + $0x124] sm:$0xf]
    %v414 = vld [vmem:[%s3 + $0x128] sm:$0xf]
    %v415 = vld [vmem:[%s3 + $0x12c] sm:$0xf]
    %v416 = vld [vmem:[%s3 + $0x130] sm:$0xf]
    %v417 = vld [vmem:[%s3 + $0x134] sm:$0xf]
    %v418 = vld [vmem:[%s3 + $0x138] sm:$0xf]
    %v419 = vld [vmem:[%s3 + $0x13c] sm:$0xf]
    %v420 = vld [vmem:[%s3 + $0x140] sm:$0xf]
    %v421 = vld [vmem:[%s3 + $0x144] sm:$0xf]
    %v422 = vld [vmem:[%s3 + $0x148] sm:$0xf]
    %v423 = vld [vmem:[%s3 + $0x14c] sm:$0xf]
    %v424 = vld [vmem:[%s3 + $0x150] sm:$0xf]
    %v425 = vld [vmem:[%s3 + $0x154] sm:$0xf]
    %v426 = vld [vmem:[%s3 + $0x158] sm:$0xf]
    %v427 = vld [vmem:[%s3 + $0x15c] sm:$0xf]
    %v428 = vld [vmem:[%s3 + $0x160] sm:$0xf]
    %v429 = vld [vmem:[%s3 + $0x164] sm:$0xf]
    %v430 = vld [vmem:[%s3 + $0x168] sm:$0xf]
    %v431 = vld [vmem:[%s3 + $0x16c] sm:$0xf]
    %v432 = vld [vmem:[%s3 + $0x170] sm:$0xf]
    %v433 = vld [vmem:[%s3 + $0x174] sm:$0xf]
    %v434 = vld [vmem:[%s3 + $0x178] sm:$0xf]
    %v435 = vld [vmem:[%s3 + $0x17c] sm:$0xf]
    %v436 = vld [vmem:[%s3 + $0x180] sm:$0xf]
    %v437 = vld [vmem:[%s3 + $0x184] sm:$0xf]
    %v438 = vld [vmem:[%s3 + $0x188] sm:$0xf]
    %v439 = vld [vmem:[%s3 + $0x18c] sm:$0xf]
    %v440 = vld [vmem:[%s3 + $0x190] sm:$0xf]
    %v441 = vld [vmem:[%s3 + $0x194] sm:$0xf]
    %v442 = vld [vmem:[%s3 + $0x198] sm:$0xf]
    %v443 = vld [vmem:[%s3 + $0x19c] sm:$0xf]
    %v444 = vld [vmem:[%s3 + $0x1a0] sm:$0xf]
    %v445 = vld [vmem:[%s3 + $0x1a4] sm:$0xf]
    %v446 = vld [vmem:[%s3 + $0x1a8] sm:$0xf]
    %v447 = vld [vmem:[%s3 + $0x1ac] sm:$0xf]
    %v448 = vld [vmem:[%s3 + $0x1b0] sm:$0xf]
    %v449 = vld [vmem:[%s3 + $0x1b4] sm:$0xf]
    %v450 = vld [vmem:[%s3 + $0x1b8] sm:$0xf]
    %v451 = vld [vmem:[%s3 + $0x1bc] sm:$0xf]
    %v452 = vld [vmem:[%s3 + $0x1c0] sm:$0xf]
    %v453 = vld [vmem:[%s3 + $0x1c4] sm:$0xf]
    %v454 = vld [vmem:[%s3 + $0x1c8] sm:$0xf]
    %v455 = vld [vmem:[%s3 + $0x1cc] sm:$0xf]
    %v456 = vld [vmem:[%s3 + $0x1d0] sm:$0xf]
    %v457 = vld [vmem:[%s3 + $0x1d4] sm:$0xf]
    %v458 = vld [vmem:[%s3 + $0x1d8] sm:$0xf]
    %v459 = vld [vmem:[%s3 + $0x1dc] sm:$0xf]
    %v460 = vld [vmem:[%s3 + $0x1e0] sm:$0xf]
    %v461 = vld [vmem:[%s3 + $0x1e4] sm:$0xf]
    %v462 = vld [vmem:[%s3 + $0x1e8] sm:$0xf]
    %v463 = vld [vmem:[%s3 + $0x1ec] sm:$0xf]
    %v464 = vld [vmem:[%s3 + $0x1f0] sm:$0xf]
    %v465 = vld [vmem:[%s3 + $0x1f4] sm:$0xf]
    %v466 = vld [vmem:[%s3 + $0x1f8] sm:$0xf]
    %v467 = vld [vmem:[%s3 + $0x1fc] sm:$0xf]
    %v468 = vld [vmem:[%s3 + $0x200] sm:$0xf]
    %v469 = vld [vmem:[%s3 + $0x204] sm:$0xf]
    %v470 = vld [vmem:[%s3 + $0x208] sm:$0xf]
    %v471 = vld [vmem:[%s3 + $0x20c] sm:$0xf]
    %v472 = vld [vmem:[%s3 + $0x210] sm:$0xf]
    %v473 = vld [vmem:[%s3 + $0x214] sm:$0xf]
    %v474 = vld [vmem:[%s3 + $0x218] sm:$0xf]
    %v475 = vld [vmem:[%s3 + $0x21c] sm:$0xf]
    %v476 = vld [vmem:[%s3 + $0x220] sm:$0xf]
    %v477 = vld [vmem:[%s3 + $0x224] sm:$0xf]
    %v478 = vld [vmem:[%s3 + $0x228] sm:$0xf]
    %v479 = vld [vmem:[%s3 + $0x22c] sm:$0xf]
    %v480 = vld [vmem:[%s3 + $0x230] sm:$0xf]
    %v481 = vld [vmem:[%s3 + $0x234] sm:$0xf]
    %v482 = vld [vmem:[%s3 + $0x238] sm:$0xf]
    %v483 = vld [vmem:[%s3 + $0x23c] sm:$0xf]
    %v484 = vld [vmem:[%s3 + $0x240] sm:$0xf]
    %v485 = vld [vmem:[%s3 + $0x244] sm:$0xf]
    %v486 = vld [vmem:[%s3 + $0x248] sm:$0xf]
    %v487 = vld [vmem:[%s3 + $0x24c] sm:$0xf]
    %v488 = vld [vmem:[%s3 + $0x250] sm:$0xf]
    %v489 = vld [vmem:[%s3 + $0x254] sm:$0xf]
    %v490 = vld [vmem:[%s3 + $0x258] sm:$0xf]
    %v491 = vld [vmem:[%s3 + $0x25c] sm:$0xf]
    %v492 = vld [vmem:[%s3 + $0x260] sm:$0xf]
    %v493 = vld [vmem:[%s3 + $0x264] sm:$0xf]
    %v494 = vld [vmem:[%s3 + $0x268] sm:$0xf]
    %v495 = vld [vmem:[%s3 + $0x26c] sm:$0xf]
    %v496 = vld [vmem:[%s3 + $0x270] sm:$0xf]
    %v497 = vld [vmem:[%s3 + $0x274] sm:$0xf]
    %v498 = vld [vmem:[%s3 + $0x278] sm:$0xf]
    %v499 = vld [vmem:[%s3 + $0x27c] sm:$0xf]
    %v500 = vld [vmem:[%s3 + $0x280] sm:$0xf]
    %v501 = vld [vmem:[%s3 + $0x284] sm:$0xf]
    %v502 = vld [vmem:[%s3 + $0x288] sm:$0xf]
    %v503 = vld [vmem:[%s3 + $0x28c] sm:$0xf]
    %v504 = vld [vmem:[%s3 + $0x290] sm:$0xf]
    %v505 = vld [vmem:[%s3 + $0x294] sm:$0xf]
    %v506 = vld [vmem:[%s3 + $0x298] sm:$0xf]
    %v507 = vld [vmem:[%s3 + $0x29c] sm:$0xf]
    %v508 = vld [vmem:[%s3 + $0x2a0] sm:$0xf]
    %v509 = vld [vmem:[%s3 + $0x2a4] sm:$0xf]
    %v510 = vld [vmem:[%s3 + $0x2a8] sm:$0xf]
    %v511 = vld [vmem:[%s3 + $0x2ac] sm:$0xf]
    %v512 = vld [vmem:[%s3 + $0x2b0] sm:$0xf]
    %v513 = vld [vmem:[%s3 + $0x2b4] sm:$0xf]
    %v514 = vld [vmem:[%s3 + $0x2b8] sm:$0xf]
    %v515 = vld [vmem:[%s3 + $0x2bc] sm:$0xf]
    %v516 = vld [vmem:[%s3 + $0x2c0] sm:$0xf]
    %v517 = vld [vmem:[%s3 + $0x2c4] sm:$0xf]
    %v518 = vld [vmem:[%s3 + $0x2c8] sm:$0xf]
    %v519 = vld [vmem:[%s3 + $0x2cc] sm:$0xf]
    %v520 = vld [vmem:[%s3 + $0x2d0] sm:$0xf]
    %v521 = vld [vmem:[%s3 + $0x2d4] sm:$0xf]
    %v522 = vld [vmem:[%s3 + $0x2d8] sm:$0xf]
    %v523 = vld [vmem:[%s3 + $0x2dc] sm:$0xf]
    %v524 = vld [vmem:[%s3 + $0x2e0] sm:$0xf]
    %v525 = vld [vmem:[%s3 + $0x2e4] sm:$0xf]
    %v526 = vld [vmem:[%s3 + $0x2e8] sm:$0xf]
    %v527 = vld [vmem:[%s3 + $0x2ec] sm:$0xf]
    %v528 = vld [vmem:[%s3 + $0x2f0] sm:$0xf]
    %v529 = vld [vmem:[%s3 + $0x2f4] sm:$0xf]
    %v530 = vld [vmem:[%s3 + $0x2f8] sm:$0xf]
    %v531 = vld [vmem:[%s3 + $0x2fc] sm:$0xf]
    %v532 = vld [vmem:[%s3 + $0x300] sm:$0xf]
    %v533 = vld [vmem:[%s3 + $0x304] sm:$0xf]
    %v534 = vld [vmem:[%s3 + $0x308] sm:$0xf]
    %v535 = vld [vmem:[%s3 + $0x30c] sm:$0xf]
    %v536 = vld [vmem:[%s3 + $0x310] sm:$0xf]
    %v537 = vld [vmem:[%s3 + $0x314] sm:$0xf]
    %v538 = vld [vmem:[%s3 + $0x318] sm:$0xf]
    %v539 = vld [vmem:[%s3 + $0x31c] sm:$0xf]
    %v540 = vld [vmem:[%s3 + $0x320] sm:$0xf]
    %v541 = vld [vmem:[%s3 + $0x324] sm:$0xf]
    %v542 = vld [vmem:[%s3 + $0x328] sm:$0xf]
    %v543 = vld [vmem:[%s3 + $0x32c] sm:$0xf]
    %v544 = vld [vmem:[%s3 + $0x330] sm:$0xf]
    %v545 = vld [vmem:[%s3 + $0x334] sm:$0xf]
    %v546 = vld [vmem:[%s3 + $0x338] sm:$0xf]
    %v547 = vld [vmem:[%s3 + $0x33c] sm:$0xf]
    %v548 = vld [vmem:[%s3 + $0x340] sm:$0xf]
    %v549 = vld [vmem:[%s3 + $0x344] sm:$0xf]
    %v550 = vld [vmem:[%s3 + $0x348] sm:$0xf]
    %v551 = vld [vmem:[%s3 + $0x34c] sm:$0xf]
    %v552 = vld [vmem:[%s3 + $0x350] sm:$0xf]
    %v553 = vld [vmem:[%s3 + $0x354] sm:$0xf]
    %v554 = vld [vmem:[%s3 + $0x358] sm:$0xf]
    %v555 = vld [vmem:[%s3 + $0x35c] sm:$0xf]
    %v556 = vld [vmem:[%s3 + $0x360] sm:$0xf]
    %v557 = vld [vmem:[%s3 + $0x364] sm:$0xf]
    %v558 = vld [vmem:[%s3 + $0x368] sm:$0xf]
    %v559 = vld [vmem:[%s3 + $0x36c] sm:$0xf]
    %v560 = vld [vmem:[%s3 + $0x370] sm:$0xf]
    %v561 = vld [vmem:[%s3 + $0x374] sm:$0xf]
    %v562 = vld [vmem:[%s3 + $0x378] sm:$0xf]
    %v563 = vld [vmem:[%s3 + $0x37c] sm:$0xf]
    %v564 = vld [vmem:[%s3 + $0x380] sm:$0xf]
    %v565 = vld [vmem:[%s3 + $0x384] sm:$0xf]
    %v566 = vld [vmem:[%s3 + $0x388] sm:$0xf]
    %v567 = vld [vmem:[%s3 + $0x38c] sm:$0xf]
    %v568 = vld [vmem:[%s3 + $0x390] sm:$0xf]
    %v569 = vld [vmem:[%s3 + $0x394] sm:$0xf]
    %v570 = vld [vmem:[%s3 + $0x398] sm:$0xf]
    %v571 = vld [vmem:[%s3 + $0x39c] sm:$0xf]
    %v572 = vld [vmem:[%s3 + $0x3a0] sm:$0xf]
    %v573 = vld [vmem:[%s3 + $0x3a4] sm:$0xf]
    %v574 = vld [vmem:[%s3 + $0x3a8] sm:$0xf]
    %v575 = vld [vmem:[%s3 + $0x3ac] sm:$0xf]
    %v576 = vld [vmem:[%s3 + $0x3b0] sm:$0xf]
    %v577 = vld [vmem:[%s3 + $0x3b4] sm:$0xf]
    %v578 = vld [vmem:[%s3 + $0x3b8] sm:$0xf]
    %v579 = vld [vmem:[%s3 + $0x3bc] sm:$0xf]
    %v580 = vld [vmem:[%s3 + $0x3c0] sm:$0xf]
    %v581 = vld [vmem:[%s3 + $0x3c4] sm:$0xf]
    %v582 = vld [vmem:[%s3 + $0x3c8] sm:$0xf]
    %v583 = vld [vmem:[%s3 + $0x3cc] sm:$0xf]
    %v584 = vld [vmem:[%s3 + $0x3d0] sm:$0xf]
    %v585 = vld [vmem:[%s3 + $0x3d4] sm:$0xf]
    %v586 = vld [vmem:[%s3 + $0x3d8] sm:$0xf]
    %v587 = vld [vmem:[%s3 + $0x3dc] sm:$0xf]
    %v588 = vld [vmem:[%s3 + $0x3e0] sm:$0xf]
    %v589 = vld [vmem:[%s3 + $0x3e4] sm:$0xf]
    %v590 = vld [vmem:[%s3 + $0x3e8] sm:$0xf]
    %v591 = vld [vmem:[%s3 + $0x3ec] sm:$0xf]
    %v592 = vld [vmem:[%s3 + $0x3f0] sm:$0xf]
    %v593 = vld [vmem:[%s3 + $0x3f4] sm:$0xf]
    %v594 = vld [vmem:[%s3 + $0x3f8] sm:$0xf]
    %v595 = vld [vmem:[%s3 + $0x3fc] sm:$0xf]
    %v596 = vld [vmem:[%s3 + $0x400] sm:$0xf]
    %v597 = vld [vmem:[%s3 + $0x404] sm:$0xf]
    %v598 = vld [vmem:[%s3 + $0x408] sm:$0xf]
    %v599 = vld [vmem:[%s3 + $0x40c] sm:$0xf]
    %v600 = vld [vmem:[%s3 + $0x410] sm:$0xf]
    %v601 = vld [vmem:[%s3 + $0x414] sm:$0xf]
    %v602 = vld [vmem:[%s3 + $0x418] sm:$0xf]
    %v603 = vld [vmem:[%s3 + $0x41c] sm:$0xf]
    %v604 = vld [vmem:[%s3 + $0x420] sm:$0xf]
    %v605 = vld [vmem:[%s3 + $0x424] sm:$0xf]
    %v606 = vld [vmem:[%s3 + $0x428] sm:$0xf]
    %v607 = vld [vmem:[%s3 + $0x42c] sm:$0xf]
    %v608 = vld [vmem:[%s3 + $0x430] sm:$0xf]
    %v609 = vld [vmem:[%s3 + $0x434] sm:$0xf]
    %v610 = vld [vmem:[%s3 + $0x438] sm:$0xf]
    %v611 = vld [vmem:[%s3 + $0x43c] sm:$0xf]
    %v612 = vld [vmem:[%s3 + $0x440] sm:$0xf]
    %v613 = vld [vmem:[%s3 + $0x444] sm:$0xf]
    %v614 = vld [vmem:[%s3 + $0x448] sm:$0xf]
    %v615 = vld [vmem:[%s3 + $0x44c] sm:$0xf]
    %v616 = vld [vmem:[%s3 + $0x450] sm:$0xf]
    %v617 = vld [vmem:[%s3 + $0x454] sm:$0xf]
    %v618 = vld [vmem:[%s3 + $0x458] sm:$0xf]
    %v619 = vld [vmem:[%s3 + $0x45c] sm:$0xf]
    %v620 = vld [vmem:[%s3 + $0x460] sm:$0xf]
    %v621 = vld [vmem:[%s3 + $0x464] sm:$0xf]
    %v622 = vld [vmem:[%s3 + $0x468] sm:$0xf]
    %v623 = vld [vmem:[%s3 + $0x46c] sm:$0xf]
    %v624 = vld [vmem:[%s3 + $0x470] sm:$0xf]
    %v625 = vld [vmem:[%s3 + $0x474] sm:$0xf]
    %v626 = vld [vmem:[%s3 + $0x478] sm:$0xf]
    %v627 = vld [vmem:[%s3 + $0x47c] sm:$0xf]
    %v628 = vld [vmem:[%s3 + $0x480] sm:$0xf]
    %v629 = vld [vmem:[%s3 + $0x484] sm:$0xf]
    %v630 = vld [vmem:[%s3 + $0x488] sm:$0xf]
    %v631 = vld [vmem:[%s3 + $0x48c] sm:$0xf]
    %v632 = vld [vmem:[%s3 + $0x490] sm:$0xf]
    %v633 = vld [vmem:[%s3 + $0x494] sm:$0xf]
    %v634 = vld [vmem:[%s3 + $0x498] sm:$0xf]
    %v635 = vld [vmem:[%s3 + $0x49c] sm:$0xf]
    %v636 = vld [vmem:[%s3 + $0x4a0] sm:$0xf]
    %v637 = vld [vmem:[%s3 + $0x4a4] sm:$0xf]
    %v638 = vld [vmem:[%s3 + $0x4a8] sm:$0xf]
    %v639 = vld [vmem:[%s3 + $0x4ac] sm:$0xf]
    %v640 = vld [vmem:[%s3 + $0x4b0] sm:$0xf]
    %v641 = vld [vmem:[%s3 + $0x4b4] sm:$0xf]
    %v642 = vld [vmem:[%s3 + $0x4b8] sm:$0xf]
    %v643 = vld [vmem:[%s3 + $0x4bc] sm:$0xf]
    %v644 = vld [vmem:[%s3 + $0x4c0] sm:$0xf]
    %v645 = vld [vmem:[%s3 + $0x4c4] sm:$0xf]
    %v646 = vld [vmem:[%s3 + $0x4c8] sm:$0xf]
    %v647 = vld [vmem:[%s3 + $0x4cc] sm:$0xf]
    %v648 = vld [vmem:[%s3 + $0x4d0] sm:$0xf]
    %v649 = vld [vmem:[%s3 + $0x4d4] sm:$0xf]
    %v650 = vld [vmem:[%s3 + $0x4d8] sm:$0xf]
    %v651 = vld [vmem:[%s3 + $0x4dc] sm:$0xf]
    %v652 = vld [vmem:[%s3 + $0x4e0] sm:$0xf]
    %v653 = vld [vmem:[%s3 + $0x4e4] sm:$0xf]
    %v654 = vld [vmem:[%s3 + $0x4e8] sm:$0xf]
    %v655 = vld [vmem:[%s3 + $0x4ec] sm:$0xf]
    %v656 = vld [vmem:[%s3 + $0x4f0] sm:$0xf]
    %v657 = vld [vmem:[%s3 + $0x4f4] sm:$0xf]
    %v658 = vld [vmem:[%s3 + $0x4f8] sm:$0xf]
    %v659 = vld [vmem:[%s3 + $0x4fc] sm:$0xf]
    %v660 = vld [vmem:[%s3 + $0x500] sm:$0xf]
    %v661 = vld [vmem:[%s3 + $0x504] sm:$0xf]
    %v662 = vld [vmem:[%s3 + $0x508] sm:$0xf]
    %v663 = vld [vmem:[%s3 + $0x50c] sm:$0xf]
    %v664 = vld [vmem:[%s3 + $0x510] sm:$0xf]
    %v665 = vld [vmem:[%s3 + $0x514] sm:$0xf]
    %v666 = vld [vmem:[%s3 + $0x518] sm:$0xf]
    %v667 = vld [vmem:[%s3 + $0x51c] sm:$0xf]
    %v668 = vld [vmem:[%s3 + $0x520] sm:$0xf]
    %v669 = vld [vmem:[%s3 + $0x524] sm:$0xf]
    %v670 = vld [vmem:[%s3 + $0x528] sm:$0xf]
    %v671 = vld [vmem:[%s3 + $0x52c] sm:$0xf]
    %v672 = vld [vmem:[%s3 + $0x530] sm:$0xf]
    %v673 = vld [vmem:[%s3 + $0x534] sm:$0xf]
    %v674 = vld [vmem:[%s3 + $0x538] sm:$0xf]
    %v675 = vld [vmem:[%s3 + $0x53c] sm:$0xf]
    %v676 = vld [vmem:[%s3 + $0x540] sm:$0xf]
    %v677 = vld [vmem:[%s3 + $0x544] sm:$0xf]
    %v678 = vld [vmem:[%s3 + $0x548] sm:$0xf]
    %v679 = vld [vmem:[%s3 + $0x54c] sm:$0xf]
    %v680 = vld [vmem:[%s3 + $0x550] sm:$0xf]
    %v681 = vld [vmem:[%s3 + $0x554] sm:$0xf]
    %v682 = vld [vmem:[%s3 + $0x558] sm:$0xf]
    %v683 = vld [vmem:[%s3 + $0x55c] sm:$0xf]
    %v684 = vld [vmem:[%s3 + $0x560] sm:$0xf]
    %v685 = vld [vmem:[%s3 + $0x564] sm:$0xf]
    %v686 = vld [vmem:[%s3 + $0x568] sm:$0xf]
    %v687 = vld [vmem:[%s3 + $0x56c] sm:$0xf]
    %v688 = vld [vmem:[%s3 + $0x570] sm:$0xf]
    %v689 = vld [vmem:[%s3 + $0x574] sm:$0xf]
    %v690 = vld [vmem:[%s3 + $0x578] sm:$0xf]
    %v691 = vld [vmem:[%s3 + $0x57c] sm:$0xf]
    %v692 = vld [vmem:[%s3 + $0x580] sm:$0xf]
    %v693 = vld [vmem:[%s3 + $0x584] sm:$0xf]
    %v694 = vld [vmem:[%s3 + $0x588] sm:$0xf]
    %v695 = vld [vmem:[%s3 + $0x58c] sm:$0xf]
    %v696 = vld [vmem:[%s3 + $0x590] sm:$0xf]
    %v697 = vld [vmem:[%s3 + $0x594] sm:$0xf]
    %v698 = vld [vmem:[%s3 + $0x598] sm:$0xf]
    %v699 = vld [vmem:[%s3 + $0x59c] sm:$0xf]
    %v700 = vld [vmem:[%s3 + $0x5a0] sm:$0xf]
    %v701 = vld [vmem:[%s3 + $0x5a4] sm:$0xf]
    %v702 = vld [vmem:[%s3 + $0x5a8] sm:$0xf]
    %v703 = vld [vmem:[%s3 + $0x5ac] sm:$0xf]
    %v704 = vld [vmem:[%s3 + $0x5b0] sm:$0xf]
    %v705 = vld [vmem:[%s3 + $0x5b4] sm:$0xf]
    %v706 = vld [vmem:[%s3 + $0x5b8] sm:$0xf]
    %v707 = vld [vmem:[%s3 + $0x5bc] sm:$0xf]
    %v708 = vld [vmem:[%s3 + $0x5c0] sm:$0xf]
    %v709 = vld [vmem:[%s3 + $0x5c4] sm:$0xf]
    %v710 = vld [vmem:[%s3 + $0x5c8] sm:$0xf]
    %v711 = vld [vmem:[%s3 + $0x5cc] sm:$0xf]
    %v712 = vld [vmem:[%s3 + $0x5d0] sm:$0xf]
    %v713 = vld [vmem:[%s3 + $0x5d4] sm:$0xf]
    %v714 = vld [vmem:[%s3 + $0x5d8] sm:$0xf]
    %v715 = vld [vmem:[%s3 + $0x5dc] sm:$0xf]
    %v716 = vld [vmem:[%s3 + $0x5e0] sm:$0xf]
    %v717 = vld [vmem:[%s3 + $0x5e4] sm:$0xf]
    %v718 = vld [vmem:[%s3 + $0x5e8] sm:$0xf]
    %v719 = vld [vmem:[%s3 + $0x5ec] sm:$0xf]
    %v720 = vld [vmem:[%s3 + $0x5f0] sm:$0xf]
    %v721 = vld [vmem:[%s3 + $0x5f4] sm:$0xf]
    %v722 = vld [vmem:[%s3 + $0x5f8] sm:$0xf]
    %v723 = vld [vmem:[%s3 + $0x5fc] sm:$0xf]
    %v724 = vld [vmem:[%s3 + $0x600] sm:$0xf]
    %v725 = vld [vmem:[%s3 + $0x604] sm:$0xf]
    %v726 = vld [vmem:[%s3 + $0x608] sm:$0xf]
    %v727 = vld [vmem:[%s3 + $0x60c] sm:$0xf]
    %v728 = vld [vmem:[%s3 + $0x610] sm:$0xf]
    %v729 = vld [vmem:[%s3 + $0x614] sm:$0xf]
    %v730 = vld [vmem:[%s3 + $0x618] sm:$0xf]
    %v731 = vld [vmem:[%s3 + $0x61c] sm:$0xf]
    %v732 = vld [vmem:[%s3 + $0x620] sm:$0xf]
    %v733 = vld [vmem:[%s3 + $0x624] sm:$0xf]
    %v734 = vld [vmem:[%s3 + $0x628] sm:$0xf]
    %v735 = vld [vmem:[%s3 + $0x62c] sm:$0xf]
    %v736 = vld [vmem:[%s3 + $0x630] sm:$0xf]
    %v737 = vld [vmem:[%s3 + $0x634] sm:$0xf]
    %v738 = vld [vmem:[%s3 + $0x638] sm:$0xf]
    %v739 = vld [vmem:[%s3 + $0x63c] sm:$0xf]
    %v740 = vld [vmem:[%s3 + $0x640] sm:$0xf]
    %v741 = vld [vmem:[%s3 + $0x644] sm:$0xf]
    %v742 = vld [vmem:[%s3 + $0x648] sm:$0xf]
    %v743 = vld [vmem:[%s3 + $0x64c] sm:$0xf]
    %v744 = vld [vmem:[%s3 + $0x650] sm:$0xf]
    %v745 = vld [vmem:[%s3 + $0x654] sm:$0xf]
    %v746 = vld [vmem:[%s3 + $0x658] sm:$0xf]
    %v747 = vld [vmem:[%s3 + $0x65c] sm:$0xf]
    %v748 = vld [vmem:[%s3 + $0x660] sm:$0xf]
    %v749 = vld [vmem:[%s3 + $0x664] sm:$0xf]
    %v750 = vld [vmem:[%s3 + $0x668] sm:$0xf]
    %v751 = vld [vmem:[%s3 + $0x66c] sm:$0xf]
    %v752 = vld [vmem:[%s3 + $0x670] sm:$0xf]
    %v753 = vld [vmem:[%s3 + $0x674] sm:$0xf]
    %v754 = vld [vmem:[%s3 + $0x678] sm:$0xf]
    %v755 = vld [vmem:[%s3 + $0x67c] sm:$0xf]
    %v756 = vld [vmem:[%s3 + $0x680] sm:$0xf]
    %v757 = vld [vmem:[%s3 + $0x684] sm:$0xf]
    %v758 = vld [vmem:[%s3 + $0x688] sm:$0xf]
    %v759 = vld [vmem:[%s3 + $0x68c] sm:$0xf]
    %v760 = vld [vmem:[%s3 + $0x690] sm:$0xf]
    %v761 = vld [vmem:[%s3 + $0x694] sm:$0xf]
    %v762 = vld [vmem:[%s3 + $0x698] sm:$0xf]
    %v763 = vld [vmem:[%s3 + $0x69c] sm:$0xf]
    %v764 = vld [vmem:[%s3 + $0x6a0] sm:$0xf]
    %v765 = vld [vmem:[%s3 + $0x6a4] sm:$0xf]
    %v766 = vld [vmem:[%s3 + $0x6a8] sm:$0xf]
    %v767 = vld [vmem:[%s3 + $0x6ac] sm:$0xf]
    %v768 = vld [vmem:[%s3 + $0x6b0] sm:$0xf]
    %v769 = vld [vmem:[%s3 + $0x6b4] sm:$0xf]
    %v770 = vld [vmem:[%s3 + $0x6b8] sm:$0xf]
    %v771 = vld [vmem:[%s3 + $0x6bc] sm:$0xf]
    %v772 = vld [vmem:[%s3 + $0x6c0] sm:$0xf]
    %v773 = vld [vmem:[%s3 + $0x6c4] sm:$0xf]
    %v774 = vld [vmem:[%s3 + $0x6c8] sm:$0xf]
    %v775 = vld [vmem:[%s3 + $0x6cc] sm:$0xf]
    %v776 = vld [vmem:[%s3 + $0x6d0] sm:$0xf]
    %v777 = vld [vmem:[%s3 + $0x6d4] sm:$0xf]
    %v778 = vld [vmem:[%s3 + $0x6d8] sm:$0xf]
    %v779 = vld [vmem:[%s3 + $0x6dc] sm:$0xf]
    %v780 = vld [vmem:[%s3 + $0x6e0] sm:$0xf]
    %v781 = vld [vmem:[%s3 + $0x6e4] sm:$0xf]
    %v782 = vld [vmem:[%s3 + $0x6e8] sm:$0xf]
    %v783 = vld [vmem:[%s3 + $0x6ec] sm:$0xf]
    %v784 = vld [vmem:[%s3 + $0x6f0] sm:$0xf]
    %v785 = vld [vmem:[%s3 + $0x6f4] sm:$0xf]
    %v786 = vld [vmem:[%s3 + $0x6f8] sm:$0xf]
    %v787 = vld [vmem:[%s3 + $0x6fc] sm:$0xf]
    %v788 = vld [vmem:[%s3 + $0x700] sm:$0xf]
    %v789 = vld [vmem:[%s3 + $0x704] sm:$0xf]
    %v790 = vld [vmem:[%s3 + $0x708] sm:$0xf]
    %v791 = vld [vmem:[%s3 + $0x70c] sm:$0xf]
    %v792 = vld [vmem:[%s3 + $0x710] sm:$0xf]
    %v793 = vld [vmem:[%s3 + $0x714] sm:$0xf]
    %v794 = vld [vmem:[%s3 + $0x718] sm:$0xf]
    %v795 = vld [vmem:[%s3 + $0x71c] sm:$0xf]
    %v796 = vld [vmem:[%s3 + $0x720] sm:$0xf]
    %v797 = vld [vmem:[%s3 + $0x724] sm:$0xf]
    %v798 = vld [vmem:[%s3 + $0x728] sm:$0xf]
    %v799 = vld [vmem:[%s3 + $0x72c] sm:$0xf]
    %v800 = vld [vmem:[%s3 + $0x730] sm:$0xf]
    %v801 = vld [vmem:[%s3 + $0x734] sm:$0xf]
    %v802 = vld [vmem:[%s3 + $0x738] sm:$0xf]
    %v803 = vld [vmem:[%s3 + $0x73c] sm:$0xf]
    %v804 = vld [vmem:[%s3 + $0x740] sm:$0xf]
    %v805 = vld [vmem:[%s3 + $0x744] sm:$0xf]
    %v806 = vld [vmem:[%s3 + $0x748] sm:$0xf]
    %v807 = vld [vmem:[%s3 + $0x74c] sm:$0xf]
    %v808 = vld [vmem:[%s3 + $0x750] sm:$0xf]
    %v809 = vld [vmem:[%s3 + $0x754] sm:$0xf]
    %v810 = vld [vmem:[%s3 + $0x758] sm:$0xf]
    %v811 = vld [vmem:[%s3 + $0x75c] sm:$0xf]
    %v812 = vld [vmem:[%s3 + $0x760] sm:$0xf]
    %v813 = vld [vmem:[%s3 + $0x764] sm:$0xf]
    %v814 = vld [vmem:[%s3 + $0x768] sm:$0xf]
    %v815 = vld [vmem:[%s3 + $0x76c] sm:$0xf]
    %v816 = vld [vmem:[%s3 + $0x770] sm:$0xf]
    %v817 = vld [vmem:[%s3 + $0x774] sm:$0xf]
    %v818 = vld [vmem:[%s3 + $0x778] sm:$0xf]
    %v819 = vld [vmem:[%s3 + $0x77c] sm:$0xf]
    %v820 = vld [vmem:[%s3 + $0x780] sm:$0xf]
    %v821 = vld [vmem:[%s3 + $0x784] sm:$0xf]
    %v822 = vld [vmem:[%s3 + $0x788] sm:$0xf]
    %v823 = vld [vmem:[%s3 + $0x78c] sm:$0xf]
    %v824 = vld [vmem:[%s3 + $0x790] sm:$0xf]
    %v825 = vld [vmem:[%s3 + $0x794] sm:$0xf]
    %v826 = vld [vmem:[%s3 + $0x798] sm:$0xf]
    %v827 = vld [vmem:[%s3 + $0x79c] sm:$0xf]
    %v828 = vld [vmem:[%s3 + $0x7a0] sm:$0xf]
    %v829 = vld [vmem:[%s3 + $0x7a4] sm:$0xf]
    %v830 = vld [vmem:[%s3 + $0x7a8] sm:$0xf]
    %v831 = vld [vmem:[%s3 + $0x7ac] sm:$0xf]
    %v832 = vld [vmem:[%s3 + $0x7b0] sm:$0xf]
    %v833 = vld [vmem:[%s3 + $0x7b4] sm:$0xf]
    %v834 = vld [vmem:[%s3 + $0x7b8] sm:$0xf]
    %v835 = vld [vmem:[%s3 + $0x7bc] sm:$0xf]
    %v836 = vld [vmem:[%s3 + $0x7c0] sm:$0xf]
    %v837 = vld [vmem:[%s3 + $0x7c4] sm:$0xf]
    %v838 = vld [vmem:[%s3 + $0x7c8] sm:$0xf]
    %v839 = vld [vmem:[%s3 + $0x7cc] sm:$0xf]
    %v840 = vld [vmem:[%s3 + $0x7d0] sm:$0xf]
    %v841 = vld [vmem:[%s3 + $0x7d4] sm:$0xf]
    %v842 = vld [vmem:[%s3 + $0x7d8] sm:$0xf]
    %v843 = vld [vmem:[%s3 + $0x7dc] sm:$0xf]
    %v844 = vld [vmem:[%s3 + $0x7e0] sm:$0xf]
    %v845 = vld [vmem:[%s3 + $0x7e4] sm:$0xf]
    %v846 = vld [vmem:[%s3 + $0x7e8] sm:$0xf]
    %v847 = vld [vmem:[%s3 + $0x7ec] sm:$0xf]
    %v848 = vld [vmem:[%s3 + $0x7f0] sm:$0xf]
    %v849 = vld [vmem:[%s3 + $0x7f4] sm:$0xf]
    %v850 = vld [vmem:[%s3 + $0x7f8] sm:$0xf]
    %v851 = vld [vmem:[%s3 + $0x7fc] sm:$0xf]
    %v852 = vld [vmem:[%s3 + $0x800] sm:$0xf]
    %v853 = vld [vmem:[%s3 + $0x804] sm:$0xf]
    %v854 = vld [vmem:[%s3 + $0x808] sm:$0xf]
    %v855 = vld [vmem:[%s3 + $0x80c] sm:$0xf]
    %v856 = vld [vmem:[%s3 + $0x810] sm:$0xf]
    %v857 = vld [vmem:[%s3 + $0x814] sm:$0xf]
    %v858 = vld [vmem:[%s3 + $0x818] sm:$0xf]
    %v859 = vld [vmem:[%s3 + $0x81c] sm:$0xf]
    %v860 = vld [vmem:[%s3 + $0x820] sm:$0xf]
    %v861 = vld [vmem:[%s3 + $0x824] sm:$0xf]
    %v862 = vld [vmem:[%s3 + $0x828] sm:$0xf]
    %v863 = vld [vmem:[%s3 + $0x82c] sm:$0xf]
    %v864 = vld [vmem:[%s3 + $0x830] sm:$0xf]
    %v865 = vld [vmem:[%s3 + $0x834] sm:$0xf]
    %v866 = vld [vmem:[%s3 + $0x838] sm:$0xf]
    %v867 = vld [vmem:[%s3 + $0x83c] sm:$0xf]
    %v868 = vld [vmem:[%s3 + $0x840] sm:$0xf]
    %v869 = vld [vmem:[%s3 + $0x844] sm:$0xf]
    %v870 = vld [vmem:[%s3 + $0x848] sm:$0xf]
    %v871 = vld [vmem:[%s3 + $0x84c] sm:$0xf]
    %v872 = vld [vmem:[%s3 + $0x850] sm:$0xf]
    %v873 = vld [vmem:[%s3 + $0x854] sm:$0xf]
    %v874 = vld [vmem:[%s3 + $0x858] sm:$0xf]
    %v875 = vld [vmem:[%s3 + $0x85c] sm:$0xf]
    %v876 = vld [vmem:[%s3 + $0x860] sm:$0xf]
    %v877 = vld [vmem:[%s3 + $0x864] sm:$0xf]
    %v878 = vld [vmem:[%s3 + $0x868] sm:$0xf]
    %v879 = vld [vmem:[%s3 + $0x86c] sm:$0xf]
    %v880 = vld [vmem:[%s3 + $0x870] sm:$0xf]
    %v881 = vld [vmem:[%s3 + $0x874] sm:$0xf]
    %v882 = vld [vmem:[%s3 + $0x878] sm:$0xf]
    %v883 = vld [vmem:[%s3 + $0x87c] sm:$0xf]
    %v884 = vld [vmem:[%s3 + $0x880] sm:$0xf]
    %v885 = vld [vmem:[%s3 + $0x884] sm:$0xf]
    %v886 = vld [vmem:[%s3 + $0x888] sm:$0xf]
    %v887 = vld [vmem:[%s3 + $0x88c] sm:$0xf]
    %v888 = vld [vmem:[%s3 + $0x890] sm:$0xf]
    %v889 = vld [vmem:[%s3 + $0x894] sm:$0xf]
    %v890 = vld [vmem:[%s3 + $0x898] sm:$0xf]
    %v891 = vld [vmem:[%s3 + $0x89c] sm:$0xf]
    %v892 = vld [vmem:[%s3 + $0x8a0] sm:$0xf]
    %v893 = vld [vmem:[%s3 + $0x8a4] sm:$0xf]
    %v894 = vld [vmem:[%s3 + $0x8a8] sm:$0xf]
    %v895 = vld [vmem:[%s3 + $0x8ac] sm:$0xf]
    %v896 = vld [vmem:[%s3 + $0x8b0] sm:$0xf]
    %v897 = vld [vmem:[%s3 + $0x8b4] sm:$0xf]
    %v898 = vld [vmem:[%s3 + $0x8b8] sm:$0xf]
    %v899 = vld [vmem:[%s3 + $0x8bc] sm:$0xf]
    %v900 = vld [vmem:[%s3 + $0x8c0] sm:$0xf]
    %v901 = vld [vmem:[%s3 + $0x8c4] sm:$0xf]
    %v902 = vld [vmem:[%s3 + $0x8c8] sm:$0xf]
    %v903 = vld [vmem:[%s3 + $0x8cc] sm:$0xf]
    %v904 = vld [vmem:[%s3 + $0x8d0] sm:$0xf]
    %v905 = vld [vmem:[%s3 + $0x8d4] sm:$0xf]
    %v906 = vld [vmem:[%s3 + $0x8d8] sm:$0xf]
    %v907 = vld [vmem:[%s3 + $0x8dc] sm:$0xf]
    %v908 = vld [vmem:[%s3 + $0x8e0] sm:$0xf]
    %v909 = vld [vmem:[%s3 + $0x8e4] sm:$0xf]
    %v910 = vld [vmem:[%s3 + $0x8e8] sm:$0xf]
    %v911 = vld [vmem:[%s3 + $0x8ec] sm:$0xf]
    %v912 = vld [vmem:[%s3 + $0x8f0] sm:$0xf]
    %v913 = vld [vmem:[%s3 + $0x8f4] sm:$0xf]
    %v914 = vld [vmem:[%s3 + $0x8f8] sm:$0xf]
    %v915 = vld [vmem:[%s3 + $0x8fc] sm:$0xf]
    %v916 = vld [vmem:[%s3 + $0x900] sm:$0xf]
    %v917 = vld [vmem:[%s3 + $0x904] sm:$0xf]
    %v918 = vld [vmem:[%s3 + $0x908] sm:$0xf]
    %v919 = vld [vmem:[%s3 + $0x90c] sm:$0xf]
    %v920 = vld [vmem:[%s3 + $0x910] sm:$0xf]
    %v921 = vld [vmem:[%s3 + $0x914] sm:$0xf]
    %v922 = vld [vmem:[%s3 + $0x918] sm:$0xf]
    %v923 = vld [vmem:[%s3 + $0x91c] sm:$0xf]
    %v924 = vld [vmem:[%s3 + $0x920] sm:$0xf]
    %v925 = vld [vmem:[%s3 + $0x924] sm:$0xf]
    %v926 = vld [vmem:[%s3 + $0x928] sm:$0xf]
    %v927 = vld [vmem:[%s3 + $0x92c] sm:$0xf]
    %v928 = vld [vmem:[%s3 + $0x930] sm:$0xf]
    %v929 = vld [vmem:[%s3 + $0x934] sm:$0xf]
    %v930 = vld [vmem:[%s3 + $0x938] sm:$0xf]
    %v931 = vld [vmem:[%s3 + $0x93c] sm:$0xf]
    %v932 = vld [vmem:[%s3 + $0x940] sm:$0xf]
    %v933 = vld [vmem:[%s3 + $0x944] sm:$0xf]
    %v934 = vld [vmem:[%s3 + $0x948] sm:$0xf]
    %v935 = vld [vmem:[%s3 + $0x94c] sm:$0xf]
    %v936 = vld [vmem:[%s3 + $0x950] sm:$0xf]
    %v937 = vld [vmem:[%s3 + $0x954] sm:$0xf]
    %v938 = vld [vmem:[%s3 + $0x958] sm:$0xf]
    %v939 = vld [vmem:[%s3 + $0x95c] sm:$0xf]
    %v940 = vld [vmem:[%s3 + $0x960] sm:$0xf]
    %v941 = vld [vmem:[%s3 + $0x964] sm:$0xf]
    %v942 = vld [vmem:[%s3 + $0x968] sm:$0xf]
    %v943 = vld [vmem:[%s3 + $0x96c] sm:$0xf]
    %v944 = vld [vmem:[%s3 + $0x970] sm:$0xf]
    %v945 = vld [vmem:[%s3 + $0x974] sm:$0xf]
    %v946 = vld [vmem:[%s3 + $0x978] sm:$0xf]
    %v947 = vld [vmem:[%s3 + $0x97c] sm:$0xf]
    %v948 = vld [vmem:[%s3 + $0x980] sm:$0xf]
    %v949 = vld [vmem:[%s3 + $0x984] sm:$0xf]
    %v950 = vld [vmem:[%s3 + $0x988] sm:$0xf]
    %v951 = vld [vmem:[%s3 + $0x98c] sm:$0xf]
    %v952 = vld [vmem:[%s3 + $0x990] sm:$0xf]
    %v953 = vld [vmem:[%s3 + $0x994] sm:$0xf]
    %v954 = vld [vmem:[%s3 + $0x998] sm:$0xf]
    %v955 = vld [vmem:[%s3 + $0x99c] sm:$0xf]
    %v956 = vld [vmem:[%s3 + $0x9a0] sm:$0xf]
    %v957 = vld [vmem:[%s3 + $0x9a4] sm:$0xf]
    %v958 = vld [vmem:[%s3 + $0x9a8] sm:$0xf]
    %v959 = vld [vmem:[%s3 + $0x9ac] sm:$0xf]
    %v960 = vld [vmem:[%s3 + $0x9b0] sm:$0xf]
    %v961 = vld [vmem:[%s3 + $0x9b4] sm:$0xf]
    %v962 = vld [vmem:[%s3 + $0x9b8] sm:$0xf]
    %v963 = vld [vmem:[%s3 + $0x9bc] sm:$0xf]
    %v964 = vld [vmem:[%s3 + $0x9c0] sm:$0xf]
    %v965 = vld [vmem:[%s3 + $0x9c4] sm:$0xf]
    %v966 = vld [vmem:[%s3 + $0x9c8] sm:$0xf]
    %v967 = vld [vmem:[%s3 + $0x9cc] sm:$0xf]
    %v968 = vld [vmem:[%s3 + $0x9d0] sm:$0xf]
    %v969 = vld [vmem:[%s3 + $0x9d4] sm:$0xf]
    %v970 = vld [vmem:[%s3 + $0x9d8] sm:$0xf]
    %v971 = vld [vmem:[%s3 + $0x9dc] sm:$0xf]
    %v972 = vld [vmem:[%s3 + $0x9e0] sm:$0xf]
    %v973 = vld [vmem:[%s3 + $0x9e4] sm:$0xf]
    %v974 = vld [vmem:[%s3 + $0x9e8] sm:$0xf]
    %v975 = vld [vmem:[%s3 + $0x9ec] sm:$0xf]
    %v976 = vld [vmem:[%s3 + $0x9f0] sm:$0xf]
    %v977 = vld [vmem:[%s3 + $0x9f4] sm:$0xf]
    %v978 = vld [vmem:[%s3 + $0x9f8] sm:$0xf]
    %v979 = vld [vmem:[%s3 + $0x9fc] sm:$0xf]
    %v980 = vld [vmem:[%s3 + $0xa00] sm:$0xf]
    %v981 = vld [vmem:[%s3 + $0xa04] sm:$0xf]
    %v982 = vld [vmem:[%s3 + $0xa08] sm:$0xf]
    %v983 = vld [vmem:[%s3 + $0xa0c] sm:$0xf]
    %v984 = vld [vmem:[%s3 + $0xa10] sm:$0xf]
    %v985 = vld [vmem:[%s3 + $0xa14] sm:$0xf]
    %v986 = vld [vmem:[%s3 + $0xa18] sm:$0xf]
    %v987 = vld [vmem:[%s3 + $0xa1c] sm:$0xf]
    %v988 = vld [vmem:[%s3 + $0xa20] sm:$0xf]
    %v989 = vld [vmem:[%s3 + $0xa24] sm:$0xf]
    %v990 = vld [vmem:[%s3 + $0xa28] sm:$0xf]
    %v991 = vld [vmem:[%s3 + $0xa2c] sm:$0xf]
    %v992 = vld [vmem:[%s3 + $0xa30] sm:$0xf]
    %v993 = vld [vmem:[%s3 + $0xa34] sm:$0xf]
    %v994 = vld [vmem:[%s3 + $0xa38] sm:$0xf]
    %v995 = vld [vmem:[%s3 + $0xa3c] sm:$0xf]
    %v996 = vld [vmem:[%s3 + $0xa40] sm:$0xf]
    %v997 = vld [vmem:[%s3 + $0xa44] sm:$0xf]
    %v998 = vld [vmem:[%s3 + $0xa48] sm:$0xf]
    %v999 = vld [vmem:[%s3 + $0xa4c] sm:$0xf]
    %v1000 = vld [vmem:[%s3 + $0xa50] sm:$0xf]
    %v1001 = vld [vmem:[%s3 + $0xa54] sm:$0xf]
    %v1002 = vld [vmem:[%s3 + $0xa58] sm:$0xf]
    %v1003 = vld [vmem:[%s3 + $0xa5c] sm:$0xf]
    %v1004 = vld [vmem:[%s3 + $0xa60] sm:$0xf]
    %v1005 = vld [vmem:[%s3 + $0xa64] sm:$0xf]
    %v1006 = vld [vmem:[%s3 + $0xa68] sm:$0xf]
    %v1007 = vld [vmem:[%s3 + $0xa6c] sm:$0xf]
    %v1008 = vld [vmem:[%s3 + $0xa70] sm:$0xf]
    %v1009 = vld [vmem:[%s3 + $0xa74] sm:$0xf]
    %v1010 = vld [vmem:[%s3 + $0xa78] sm:$0xf]
    %v1011 = vld [vmem:[%s3 + $0xa7c] sm:$0xf]
    %v1012 = vld [vmem:[%s3 + $0xa80] sm:$0xf]
    %v1013 = vld [vmem:[%s3 + $0xa84] sm:$0xf]
    %v1014 = vld [vmem:[%s3 + $0xa88] sm:$0xf]
    %v1015 = vld [vmem:[%s3 + $0xa8c] sm:$0xf]
    %v1016 = vld [vmem:[%s4] sm:$0x1]
    %v1018 = vlaneseq
    %v1019 = vshrl.u32 %v1018, 7
    %v1020 = vsub.s32 0, %v1019
    %v1021 = vrot.slane %v1016, %v1020
    %v1699 = vunpack.c.l.b16 %v340
    %v1700 = vunpack.c.l.b16 %v341
    %v1701 = vunpack.c.l.b16 %v342
    %v1702 = vunpack.c.l.b16 %v343
    %v1703 = vunpack.c.l.b16 %v344
    %v1704 = vunpack.c.l.b16 %v345
    %v1705 = vunpack.c.l.b16 %v346
    %v1706 = vunpack.c.l.b16 %v347
    %v1707 = vunpack.c.l.b16 %v348
    %v1708 = vunpack.c.l.b16 %v349
    %v1709 = vunpack.c.l.b16 %v350
    %v1710 = vunpack.c.l.b16 %v351
    %v1711 = vunpack.c.l.b16 %v352
    %v1712 = vunpack.c.l.b16 %v353
    %v1713 = vunpack.c.l.b16 %v354
    %v1714 = vunpack.c.l.b16 %v355
    %v1715 = vunpack.c.l.b16 %v356
    %v1716 = vunpack.c.l.b16 %v357
    %v1717 = vunpack.c.l.b16 %v358
    %v1718 = vunpack.c.l.b16 %v359
    %v1719 = vunpack.c.l.b16 %v360
    %v1720 = vunpack.c.l.b16 %v361
    %v1721 = vunpack.c.l.b16 %v362
    %v1722 = vunpack.c.l.b16 %v363
    %v1723 = vunpack.c.l.b16 %v364
    %v1724 = vunpack.c.l.b16 %v365
    %v1725 = vunpack.c.l.b16 %v366
    %v1726 = vunpack.c.l.b16 %v367
    %v1727 = vunpack.c.l.b16 %v368
    %v1728 = vunpack.c.l.b16 %v369
    %v1729 = vunpack.c.l.b16 %v370
    %v1730 = vunpack.c.l.b16 %v371
    %v1731 = vunpack.c.l.b16 %v372
    %v1732 = vunpack.c.l.b16 %v373
    %v1733 = vunpack.c.l.b16 %v374
    %v1734 = vunpack.c.l.b16 %v375
    %v1735 = vunpack.c.l.b16 %v376
    %v1736 = vunpack.c.l.b16 %v377
    %v1737 = vunpack.c.l.b16 %v378
    %v1738 = vunpack.c.l.b16 %v379
    %v1739 = vunpack.c.l.b16 %v380
    %v1740 = vunpack.c.l.b16 %v381
    %v1741 = vunpack.c.l.b16 %v382
    %v1742 = vunpack.c.l.b16 %v383
    %v1743 = vunpack.c.l.b16 %v384
    %v1744 = vunpack.c.l.b16 %v385
    %v1745 = vunpack.c.l.b16 %v386
    %v1746 = vunpack.c.l.b16 %v387
    %v1747 = vunpack.c.l.b16 %v388
    %v1748 = vunpack.c.l.b16 %v389
    %v1749 = vunpack.c.l.b16 %v390
    %v1750 = vunpack.c.l.b16 %v391
    %v1751 = vunpack.c.l.b16 %v392
    %v1752 = vunpack.c.l.b16 %v393
    %v1753 = vunpack.c.l.b16 %v394
    %v1754 = vunpack.c.l.b16 %v395
    %v1755 = vunpack.c.l.b16 %v396
    %v1756 = vunpack.c.l.b16 %v397
    %v1757 = vunpack.c.l.b16 %v398
    %v1758 = vunpack.c.l.b16 %v399
    %v1759 = vunpack.c.l.b16 %v400
    %v1760 = vunpack.c.l.b16 %v401
    %v1761 = vunpack.c.l.b16 %v402
    %v1762 = vunpack.c.l.b16 %v403
    %v1763 = vunpack.c.l.b16 %v404
    %v1764 = vunpack.c.l.b16 %v405
    %v1765 = vunpack.c.l.b16 %v406
    %v1766 = vunpack.c.l.b16 %v407
    %v1767 = vunpack.c.l.b16 %v408
    %v1768 = vunpack.c.l.b16 %v409
    %v1769 = vunpack.c.l.b16 %v410
    %v1770 = vunpack.c.l.b16 %v411
    %v1771 = vunpack.c.l.b16 %v412
    %v1772 = vunpack.c.l.b16 %v413
    %v1773 = vunpack.c.l.b16 %v414
    %v1774 = vunpack.c.l.b16 %v415
    %v1775 = vunpack.c.l.b16 %v416
    %v1776 = vunpack.c.l.b16 %v417
    %v1777 = vunpack.c.l.b16 %v418
    %v1778 = vunpack.c.l.b16 %v419
    %v1779 = vunpack.c.l.b16 %v420
    %v1780 = vunpack.c.l.b16 %v421
    %v1781 = vunpack.c.l.b16 %v422
    %v1782 = vunpack.c.l.b16 %v423
    %v1783 = vunpack.c.l.b16 %v424
    %v1784 = vunpack.c.l.b16 %v425
    %v1785 = vunpack.c.l.b16 %v426
    %v1786 = vunpack.c.l.b16 %v427
    %v1787 = vunpack.c.l.b16 %v428
    %v1788 = vunpack.c.l.b16 %v429
    %v1789 = vunpack.c.l.b16 %v430
    %v1790 = vunpack.c.l.b16 %v431
    %v1791 = vunpack.c.l.b16 %v432
    %v1792 = vunpack.c.l.b16 %v433
    %v1793 = vunpack.c.l.b16 %v434
    %v1794 = vunpack.c.l.b16 %v435
    %v1795 = vunpack.c.l.b16 %v436
    %v1796 = vunpack.c.l.b16 %v437
    %v1797 = vunpack.c.l.b16 %v438
    %v1798 = vunpack.c.l.b16 %v439
    %v1799 = vunpack.c.l.b16 %v440
    %v1800 = vunpack.c.l.b16 %v441
    %v1801 = vunpack.c.l.b16 %v442
    %v1802 = vunpack.c.l.b16 %v443
    %v1803 = vunpack.c.l.b16 %v444
    %v1804 = vunpack.c.l.b16 %v445
    %v1805 = vunpack.c.l.b16 %v446
    %v1806 = vunpack.c.l.b16 %v447
    %v1807 = vunpack.c.l.b16 %v448
    %v1808 = vunpack.c.l.b16 %v449
    %v1809 = vunpack.c.l.b16 %v450
    %v1810 = vunpack.c.l.b16 %v451
    %v1811 = vunpack.c.l.b16 %v452
    %v1812 = vunpack.c.l.b16 %v453
    %v1813 = vunpack.c.l.b16 %v454
    %v1814 = vunpack.c.l.b16 %v455
    %v1815 = vunpack.c.l.b16 %v456
    %v1816 = vunpack.c.l.b16 %v457
    %v1817 = vunpack.c.l.b16 %v458
    %v1818 = vunpack.c.l.b16 %v459
    %v1819 = vunpack.c.l.b16 %v460
    %v1820 = vunpack.c.l.b16 %v461
    %v1821 = vunpack.c.l.b16 %v462
    %v1822 = vunpack.c.l.b16 %v463
    %v1823 = vunpack.c.l.b16 %v464
    %v1824 = vunpack.c.l.b16 %v465
    %v1825 = vunpack.c.l.b16 %v466
    %v1826 = vunpack.c.l.b16 %v467
    %v1827 = vunpack.c.l.b16 %v468
    %v1828 = vunpack.c.l.b16 %v469
    %v1829 = vunpack.c.l.b16 %v470
    %v1830 = vunpack.c.l.b16 %v471
    %v1831 = vunpack.c.l.b16 %v472
    %v1832 = vunpack.c.l.b16 %v473
    %v1833 = vunpack.c.l.b16 %v474
    %v1834 = vunpack.c.l.b16 %v475
    %v1835 = vunpack.c.l.b16 %v476
    %v1836 = vunpack.c.l.b16 %v477
    %v1837 = vunpack.c.l.b16 %v478
    %v1838 = vunpack.c.l.b16 %v479
    %v1839 = vunpack.c.l.b16 %v480
    %v1840 = vunpack.c.l.b16 %v481
    %v1841 = vunpack.c.l.b16 %v482
    %v1842 = vunpack.c.l.b16 %v483
    %v1843 = vunpack.c.l.b16 %v484
    %v1844 = vunpack.c.l.b16 %v485
    %v1845 = vunpack.c.l.b16 %v486
    %v1846 = vunpack.c.l.b16 %v487
    %v1847 = vunpack.c.l.b16 %v488
    %v1848 = vunpack.c.l.b16 %v489
    %v1849 = vunpack.c.l.b16 %v490
    %v1850 = vunpack.c.l.b16 %v491
    %v1851 = vunpack.c.l.b16 %v492
    %v1852 = vunpack.c.l.b16 %v493
    %v1853 = vunpack.c.l.b16 %v494
    %v1854 = vunpack.c.l.b16 %v495
    %v1855 = vunpack.c.l.b16 %v496
    %v1856 = vunpack.c.l.b16 %v497
    %v1857 = vunpack.c.l.b16 %v498
    %v1858 = vunpack.c.l.b16 %v499
    %v1859 = vunpack.c.l.b16 %v500
    %v1860 = vunpack.c.l.b16 %v501
    %v1861 = vunpack.c.l.b16 %v502
    %v1862 = vunpack.c.l.b16 %v503
    %v1863 = vunpack.c.l.b16 %v504
    %v1864 = vunpack.c.l.b16 %v505
    %v1865 = vunpack.c.l.b16 %v506
    %v1866 = vunpack.c.l.b16 %v507
    %v1867 = vunpack.c.l.b16 %v508
    %v1868 = vunpack.c.l.b16 %v509
    %v1869 = vunpack.c.l.b16 %v510
    %v1870 = vunpack.c.l.b16 %v511
    %v1871 = vunpack.c.l.b16 %v512
    %v1872 = vunpack.c.l.b16 %v513
    %v1873 = vunpack.c.l.b16 %v514
    %v1874 = vunpack.c.l.b16 %v515
    %v1875 = vunpack.c.l.b16 %v516
    %v1876 = vunpack.c.l.b16 %v517
    %v1877 = vunpack.c.l.b16 %v518
    %v1878 = vunpack.c.l.b16 %v519
    %v1879 = vunpack.c.l.b16 %v520
    %v1880 = vunpack.c.l.b16 %v521
    %v1881 = vunpack.c.l.b16 %v522
    %v1882 = vunpack.c.l.b16 %v523
    %v1883 = vunpack.c.l.b16 %v524
    %v1884 = vunpack.c.l.b16 %v525
    %v1885 = vunpack.c.l.b16 %v526
    %v1886 = vunpack.c.l.b16 %v527
    %v1887 = vunpack.c.l.b16 %v528
    %v1888 = vunpack.c.l.b16 %v529
    %v1889 = vunpack.c.l.b16 %v530
    %v1890 = vunpack.c.l.b16 %v531
    %v1891 = vunpack.c.l.b16 %v532
    %v1892 = vunpack.c.l.b16 %v533
    %v1893 = vunpack.c.l.b16 %v534
    %v1894 = vunpack.c.l.b16 %v535
    %v1895 = vunpack.c.l.b16 %v536
    %v1896 = vunpack.c.l.b16 %v537
    %v1897 = vunpack.c.l.b16 %v538
    %v1898 = vunpack.c.l.b16 %v539
    %v1899 = vunpack.c.l.b16 %v540
    %v1900 = vunpack.c.l.b16 %v541
    %v1901 = vunpack.c.l.b16 %v542
    %v1902 = vunpack.c.l.b16 %v543
    %v1903 = vunpack.c.l.b16 %v544
    %v1904 = vunpack.c.l.b16 %v545
    %v1905 = vunpack.c.l.b16 %v546
    %v1906 = vunpack.c.l.b16 %v547
    %v1907 = vunpack.c.l.b16 %v548
    %v1908 = vunpack.c.l.b16 %v549
    %v1909 = vunpack.c.l.b16 %v550
    %v1910 = vunpack.c.l.b16 %v551
    %v1911 = vunpack.c.l.b16 %v552
    %v1912 = vunpack.c.l.b16 %v553
    %v1913 = vunpack.c.l.b16 %v554
    %v1914 = vunpack.c.l.b16 %v555
    %v1915 = vunpack.c.l.b16 %v556
    %v1916 = vunpack.c.l.b16 %v557
    %v1917 = vunpack.c.l.b16 %v558
    %v1918 = vunpack.c.l.b16 %v559
    %v1919 = vunpack.c.l.b16 %v560
    %v1920 = vunpack.c.l.b16 %v561
    %v1921 = vunpack.c.l.b16 %v562
    %v1922 = vunpack.c.l.b16 %v563
    %v1923 = vunpack.c.l.b16 %v564
    %v1924 = vunpack.c.l.b16 %v565
    %v1925 = vunpack.c.l.b16 %v566
    %v1926 = vunpack.c.l.b16 %v567
    %v1927 = vunpack.c.l.b16 %v568
    %v1928 = vunpack.c.l.b16 %v569
    %v1929 = vunpack.c.l.b16 %v570
    %v1930 = vunpack.c.l.b16 %v571
    %v1931 = vunpack.c.l.b16 %v572
    %v1932 = vunpack.c.l.b16 %v573
    %v1933 = vunpack.c.l.b16 %v574
    %v1934 = vunpack.c.l.b16 %v575
    %v1935 = vunpack.c.l.b16 %v576
    %v1936 = vunpack.c.l.b16 %v577
    %v1937 = vunpack.c.l.b16 %v578
    %v1938 = vunpack.c.l.b16 %v579
    %v1939 = vunpack.c.l.b16 %v580
    %v1940 = vunpack.c.l.b16 %v581
    %v1941 = vunpack.c.l.b16 %v582
    %v1942 = vunpack.c.l.b16 %v583
    %v1943 = vunpack.c.l.b16 %v584
    %v1944 = vunpack.c.l.b16 %v585
    %v1945 = vunpack.c.l.b16 %v586
    %v1946 = vunpack.c.l.b16 %v587
    %v1947 = vunpack.c.l.b16 %v588
    %v1948 = vunpack.c.l.b16 %v589
    %v1949 = vunpack.c.l.b16 %v590
    %v1950 = vunpack.c.l.b16 %v591
    %v1951 = vunpack.c.l.b16 %v592
    %v1952 = vunpack.c.l.b16 %v593
    %v1953 = vunpack.c.l.b16 %v594
    %v1954 = vunpack.c.l.b16 %v595
    %v1955 = vunpack.c.l.b16 %v596
    %v1956 = vunpack.c.l.b16 %v597
    %v1957 = vunpack.c.l.b16 %v598
    %v1958 = vunpack.c.l.b16 %v599
    %v1959 = vunpack.c.l.b16 %v600
    %v1960 = vunpack.c.l.b16 %v601
    %v1961 = vunpack.c.l.b16 %v602
    %v1962 = vunpack.c.l.b16 %v603
    %v1963 = vunpack.c.l.b16 %v604
    %v1964 = vunpack.c.l.b16 %v605
    %v1965 = vunpack.c.l.b16 %v606
    %v1966 = vunpack.c.l.b16 %v607
    %v1967 = vunpack.c.l.b16 %v608
    %v1968 = vunpack.c.l.b16 %v609
    %v1969 = vunpack.c.l.b16 %v610
    %v1970 = vunpack.c.l.b16 %v611
    %v1971 = vunpack.c.l.b16 %v612
    %v1972 = vunpack.c.l.b16 %v613
    %v1973 = vunpack.c.l.b16 %v614
    %v1974 = vunpack.c.l.b16 %v615
    %v1975 = vunpack.c.l.b16 %v616
    %v1976 = vunpack.c.l.b16 %v617
    %v1977 = vunpack.c.l.b16 %v618
    %v1978 = vunpack.c.l.b16 %v619
    %v1979 = vunpack.c.l.b16 %v620
    %v1980 = vunpack.c.l.b16 %v621
    %v1981 = vunpack.c.l.b16 %v622
    %v1982 = vunpack.c.l.b16 %v623
    %v1983 = vunpack.c.l.b16 %v624
    %v1984 = vunpack.c.l.b16 %v625
    %v1985 = vunpack.c.l.b16 %v626
    %v1986 = vunpack.c.l.b16 %v627
    %v1987 = vunpack.c.l.b16 %v628
    %v1988 = vunpack.c.l.b16 %v629
    %v1989 = vunpack.c.l.b16 %v630
    %v1990 = vunpack.c.l.b16 %v631
    %v1991 = vunpack.c.l.b16 %v632
    %v1992 = vunpack.c.l.b16 %v633
    %v1993 = vunpack.c.l.b16 %v634
    %v1994 = vunpack.c.l.b16 %v635
    %v1995 = vunpack.c.l.b16 %v636
    %v1996 = vunpack.c.l.b16 %v637
    %v1997 = vunpack.c.l.b16 %v638
    %v1998 = vunpack.c.l.b16 %v639
    %v1999 = vunpack.c.l.b16 %v640
    %v2000 = vunpack.c.l.b16 %v641
    %v2001 = vunpack.c.l.b16 %v642
    %v2002 = vunpack.c.l.b16 %v643
    %v2003 = vunpack.c.l.b16 %v644
    %v2004 = vunpack.c.l.b16 %v645
    %v2005 = vunpack.c.l.b16 %v646
    %v2006 = vunpack.c.l.b16 %v647
    %v2007 = vunpack.c.l.b16 %v648
    %v2008 = vunpack.c.l.b16 %v649
    %v2009 = vunpack.c.l.b16 %v650
    %v2010 = vunpack.c.l.b16 %v651
    %v2011 = vunpack.c.l.b16 %v652
    %v2012 = vunpack.c.l.b16 %v653
    %v2013 = vunpack.c.l.b16 %v654
    %v2014 = vunpack.c.l.b16 %v655
    %v2015 = vunpack.c.l.b16 %v656
    %v2016 = vunpack.c.l.b16 %v657
    %v2017 = vunpack.c.l.b16 %v658
    %v2018 = vunpack.c.l.b16 %v659
    %v2019 = vunpack.c.l.b16 %v660
    %v2020 = vunpack.c.l.b16 %v661
    %v2021 = vunpack.c.l.b16 %v662
    %v2022 = vunpack.c.l.b16 %v663
    %v2023 = vunpack.c.l.b16 %v664
    %v2024 = vunpack.c.l.b16 %v665
    %v2025 = vunpack.c.l.b16 %v666
    %v2026 = vunpack.c.l.b16 %v667
    %v2027 = vunpack.c.l.b16 %v668
    %v2028 = vunpack.c.l.b16 %v669
    %v2029 = vunpack.c.l.b16 %v670
    %v2030 = vunpack.c.l.b16 %v671
    %v2031 = vunpack.c.l.b16 %v672
    %v2032 = vunpack.c.l.b16 %v673
    %v2033 = vunpack.c.l.b16 %v674
    %v2034 = vunpack.c.l.b16 %v675
    %v2035 = vunpack.c.l.b16 %v676
    %v2036 = vunpack.c.l.b16 %v677
    %v2037 = vunpack.c.l.b16 %v678
    %v2038 = vunpack.c.l.b16 %v679
    %v2039 = vunpack.c.l.b16 %v680
    %v2040 = vunpack.c.l.b16 %v681
    %v2041 = vunpack.c.l.b16 %v682
    %v2042 = vunpack.c.l.b16 %v683
    %v2043 = vunpack.c.l.b16 %v684
    %v2044 = vunpack.c.l.b16 %v685
    %v2045 = vunpack.c.l.b16 %v686
    %v2046 = vunpack.c.l.b16 %v687
    %v2047 = vunpack.c.l.b16 %v688
    %v2048 = vunpack.c.l.b16 %v689
    %v2049 = vunpack.c.l.b16 %v690
    %v2050 = vunpack.c.l.b16 %v691
    %v2051 = vunpack.c.l.b16 %v692
    %v2052 = vunpack.c.l.b16 %v693
    %v2053 = vunpack.c.l.b16 %v694
    %v2054 = vunpack.c.l.b16 %v695
    %v2055 = vunpack.c.l.b16 %v696
    %v2056 = vunpack.c.l.b16 %v697
    %v2057 = vunpack.c.l.b16 %v698
    %v2058 = vunpack.c.l.b16 %v699
    %v2059 = vunpack.c.l.b16 %v700
    %v2060 = vunpack.c.l.b16 %v701
    %v2061 = vunpack.c.l.b16 %v702
    %v2062 = vunpack.c.l.b16 %v703
    %v2063 = vunpack.c.l.b16 %v704
    %v2064 = vunpack.c.l.b16 %v705
    %v2065 = vunpack.c.l.b16 %v706
    %v2066 = vunpack.c.l.b16 %v707
    %v2067 = vunpack.c.l.b16 %v708
    %v2068 = vunpack.c.l.b16 %v709
    %v2069 = vunpack.c.l.b16 %v710
    %v2070 = vunpack.c.l.b16 %v711
    %v2071 = vunpack.c.l.b16 %v712
    %v2072 = vunpack.c.l.b16 %v713
    %v2073 = vunpack.c.l.b16 %v714
    %v2074 = vunpack.c.l.b16 %v715
    %v2075 = vunpack.c.l.b16 %v716
    %v2076 = vunpack.c.l.b16 %v717
    %v2077 = vunpack.c.l.b16 %v718
    %v2078 = vunpack.c.l.b16 %v719
    %v2079 = vunpack.c.l.b16 %v720
    %v2080 = vunpack.c.l.b16 %v721
    %v2081 = vunpack.c.l.b16 %v722
    %v2082 = vunpack.c.l.b16 %v723
    %v2083 = vunpack.c.l.b16 %v724
    %v2084 = vunpack.c.l.b16 %v725
    %v2085 = vunpack.c.l.b16 %v726
    %v2086 = vunpack.c.l.b16 %v727
    %v2087 = vunpack.c.l.b16 %v728
    %v2088 = vunpack.c.l.b16 %v729
    %v2089 = vunpack.c.l.b16 %v730
    %v2090 = vunpack.c.l.b16 %v731
    %v2091 = vunpack.c.l.b16 %v732
    %v2092 = vunpack.c.l.b16 %v733
    %v2093 = vunpack.c.l.b16 %v734
    %v2094 = vunpack.c.l.b16 %v735
    %v2095 = vunpack.c.l.b16 %v736
    %v2096 = vunpack.c.l.b16 %v737
    %v2097 = vunpack.c.l.b16 %v738
    %v2098 = vunpack.c.l.b16 %v739
    %v2099 = vunpack.c.l.b16 %v740
    %v2100 = vunpack.c.l.b16 %v741
    %v2101 = vunpack.c.l.b16 %v742
    %v2102 = vunpack.c.l.b16 %v743
    %v2103 = vunpack.c.l.b16 %v744
    %v2104 = vunpack.c.l.b16 %v745
    %v2105 = vunpack.c.l.b16 %v746
    %v2106 = vunpack.c.l.b16 %v747
    %v2107 = vunpack.c.l.b16 %v748
    %v2108 = vunpack.c.l.b16 %v749
    %v2109 = vunpack.c.l.b16 %v750
    %v2110 = vunpack.c.l.b16 %v751
    %v2111 = vunpack.c.l.b16 %v752
    %v2112 = vunpack.c.l.b16 %v753
    %v2113 = vunpack.c.l.b16 %v754
    %v2114 = vunpack.c.l.b16 %v755
    %v2115 = vunpack.c.l.b16 %v756
    %v2116 = vunpack.c.l.b16 %v757
    %v2117 = vunpack.c.l.b16 %v758
    %v2118 = vunpack.c.l.b16 %v759
    %v2119 = vunpack.c.l.b16 %v760
    %v2120 = vunpack.c.l.b16 %v761
    %v2121 = vunpack.c.l.b16 %v762
    %v2122 = vunpack.c.l.b16 %v763
    %v2123 = vunpack.c.l.b16 %v764
    %v2124 = vunpack.c.l.b16 %v765
    %v2125 = vunpack.c.l.b16 %v766
    %v2126 = vunpack.c.l.b16 %v767
    %v2127 = vunpack.c.l.b16 %v768
    %v2128 = vunpack.c.l.b16 %v769
    %v2129 = vunpack.c.l.b16 %v770
    %v2130 = vunpack.c.l.b16 %v771
    %v2131 = vunpack.c.l.b16 %v772
    %v2132 = vunpack.c.l.b16 %v773
    %v2133 = vunpack.c.l.b16 %v774
    %v2134 = vunpack.c.l.b16 %v775
    %v2135 = vunpack.c.l.b16 %v776
    %v2136 = vunpack.c.l.b16 %v777
    %v2137 = vunpack.c.l.b16 %v778
    %v2138 = vunpack.c.l.b16 %v779
    %v2139 = vunpack.c.l.b16 %v780
    %v2140 = vunpack.c.l.b16 %v781
    %v2141 = vunpack.c.l.b16 %v782
    %v2142 = vunpack.c.l.b16 %v783
    %v2143 = vunpack.c.l.b16 %v784
    %v2144 = vunpack.c.l.b16 %v785
    %v2145 = vunpack.c.l.b16 %v786
    %v2146 = vunpack.c.l.b16 %v787
    %v2147 = vunpack.c.l.b16 %v788
    %v2148 = vunpack.c.l.b16 %v789
    %v2149 = vunpack.c.l.b16 %v790
    %v2150 = vunpack.c.l.b16 %v791
    %v2151 = vunpack.c.l.b16 %v792
    %v2152 = vunpack.c.l.b16 %v793
    %v2153 = vunpack.c.l.b16 %v794
    %v2154 = vunpack.c.l.b16 %v795
    %v2155 = vunpack.c.l.b16 %v796
    %v2156 = vunpack.c.l.b16 %v797
    %v2157 = vunpack.c.l.b16 %v798
    %v2158 = vunpack.c.l.b16 %v799
    %v2159 = vunpack.c.l.b16 %v800
    %v2160 = vunpack.c.l.b16 %v801
    %v2161 = vunpack.c.l.b16 %v802
    %v2162 = vunpack.c.l.b16 %v803
    %v2163 = vunpack.c.l.b16 %v804
    %v2164 = vunpack.c.l.b16 %v805
    %v2165 = vunpack.c.l.b16 %v806
    %v2166 = vunpack.c.l.b16 %v807
    %v2167 = vunpack.c.l.b16 %v808
    %v2168 = vunpack.c.l.b16 %v809
    %v2169 = vunpack.c.l.b16 %v810
    %v2170 = vunpack.c.l.b16 %v811
    %v2171 = vunpack.c.l.b16 %v812
    %v2172 = vunpack.c.l.b16 %v813
    %v2173 = vunpack.c.l.b16 %v814
    %v2174 = vunpack.c.l.b16 %v815
    %v2175 = vunpack.c.l.b16 %v816
    %v2176 = vunpack.c.l.b16 %v817
    %v2177 = vunpack.c.l.b16 %v818
    %v2178 = vunpack.c.l.b16 %v819
    %v2179 = vunpack.c.l.b16 %v820
    %v2180 = vunpack.c.l.b16 %v821
    %v2181 = vunpack.c.l.b16 %v822
    %v2182 = vunpack.c.l.b16 %v823
    %v2183 = vunpack.c.l.b16 %v824
    %v2184 = vunpack.c.l.b16 %v825
    %v2185 = vunpack.c.l.b16 %v826
    %v2186 = vunpack.c.l.b16 %v827
    %v2187 = vunpack.c.l.b16 %v828
    %v2188 = vunpack.c.l.b16 %v829
    %v2189 = vunpack.c.l.b16 %v830
    %v2190 = vunpack.c.l.b16 %v831
    %v2191 = vunpack.c.l.b16 %v832
    %v2192 = vunpack.c.l.b16 %v833
    %v2193 = vunpack.c.l.b16 %v834
    %v2194 = vunpack.c.l.b16 %v835
    %v2195 = vunpack.c.l.b16 %v836
    %v2196 = vunpack.c.l.b16 %v837
    %v2197 = vunpack.c.l.b16 %v838
    %v2198 = vunpack.c.l.b16 %v839
    %v2199 = vunpack.c.l.b16 %v840
    %v2200 = vunpack.c.l.b16 %v841
    %v2201 = vunpack.c.l.b16 %v842
    %v2202 = vunpack.c.l.b16 %v843
    %v2203 = vunpack.c.l.b16 %v844
    %v2204 = vunpack.c.l.b16 %v845
    %v2205 = vunpack.c.l.b16 %v846
    %v2206 = vunpack.c.l.b16 %v847
    %v2207 = vunpack.c.l.b16 %v848
    %v2208 = vunpack.c.l.b16 %v849
    %v2209 = vunpack.c.l.b16 %v850
    %v2210 = vunpack.c.l.b16 %v851
    %v2211 = vunpack.c.l.b16 %v852
    %v2212 = vunpack.c.l.b16 %v853
    %v2213 = vunpack.c.l.b16 %v854
    %v2214 = vunpack.c.l.b16 %v855
    %v2215 = vunpack.c.l.b16 %v856
    %v2216 = vunpack.c.l.b16 %v857
    %v2217 = vunpack.c.l.b16 %v858
    %v2218 = vunpack.c.l.b16 %v859
    %v2219 = vunpack.c.l.b16 %v860
    %v2220 = vunpack.c.l.b16 %v861
    %v2221 = vunpack.c.l.b16 %v862
    %v2222 = vunpack.c.l.b16 %v863
    %v2223 = vunpack.c.l.b16 %v864
    %v2224 = vunpack.c.l.b16 %v865
    %v2225 = vunpack.c.l.b16 %v866
    %v2226 = vunpack.c.l.b16 %v867
    %v2227 = vunpack.c.l.b16 %v868
    %v2228 = vunpack.c.l.b16 %v869
    %v2229 = vunpack.c.l.b16 %v870
    %v2230 = vunpack.c.l.b16 %v871
    %v2231 = vunpack.c.l.b16 %v872
    %v2232 = vunpack.c.l.b16 %v873
    %v2233 = vunpack.c.l.b16 %v874
    %v2234 = vunpack.c.l.b16 %v875
    %v2235 = vunpack.c.l.b16 %v876
    %v2236 = vunpack.c.l.b16 %v877
    %v2237 = vunpack.c.l.b16 %v878
    %v2238 = vunpack.c.l.b16 %v879
    %v2239 = vunpack.c.l.b16 %v880
    %v2240 = vunpack.c.l.b16 %v881
    %v2241 = vunpack.c.l.b16 %v882
    %v2242 = vunpack.c.l.b16 %v883
    %v2243 = vunpack.c.l.b16 %v884
    %v2244 = vunpack.c.l.b16 %v885
    %v2245 = vunpack.c.l.b16 %v886
    %v2246 = vunpack.c.l.b16 %v887
    %v2247 = vunpack.c.l.b16 %v888
    %v2248 = vunpack.c.l.b16 %v889
    %v2249 = vunpack.c.l.b16 %v890
    %v2250 = vunpack.c.l.b16 %v891
    %v2251 = vunpack.c.l.b16 %v892
    %v2252 = vunpack.c.l.b16 %v893
    %v2253 = vunpack.c.l.b16 %v894
    %v2254 = vunpack.c.l.b16 %v895
    %v2255 = vunpack.c.l.b16 %v896
    %v2256 = vunpack.c.l.b16 %v897
    %v2257 = vunpack.c.l.b16 %v898
    %v2258 = vunpack.c.l.b16 %v899
    %v2259 = vunpack.c.l.b16 %v900
    %v2260 = vunpack.c.l.b16 %v901
    %v2261 = vunpack.c.l.b16 %v902
    %v2262 = vunpack.c.l.b16 %v903
    %v2263 = vunpack.c.l.b16 %v904
    %v2264 = vunpack.c.l.b16 %v905
    %v2265 = vunpack.c.l.b16 %v906
    %v2266 = vunpack.c.l.b16 %v907
    %v2267 = vunpack.c.l.b16 %v908
    %v2268 = vunpack.c.l.b16 %v909
    %v2269 = vunpack.c.l.b16 %v910
    %v2270 = vunpack.c.l.b16 %v911
    %v2271 = vunpack.c.l.b16 %v912
    %v2272 = vunpack.c.l.b16 %v913
    %v2273 = vunpack.c.l.b16 %v914
    %v2274 = vunpack.c.l.b16 %v915
    %v2275 = vunpack.c.l.b16 %v916
    %v2276 = vunpack.c.l.b16 %v917
    %v2277 = vunpack.c.l.b16 %v918
    %v2278 = vunpack.c.l.b16 %v919
    %v2279 = vunpack.c.l.b16 %v920
    %v2280 = vunpack.c.l.b16 %v921
    %v2281 = vunpack.c.l.b16 %v922
    %v2282 = vunpack.c.l.b16 %v923
    %v2283 = vunpack.c.l.b16 %v924
    %v2284 = vunpack.c.l.b16 %v925
    %v2285 = vunpack.c.l.b16 %v926
    %v2286 = vunpack.c.l.b16 %v927
    %v2287 = vunpack.c.l.b16 %v928
    %v2288 = vunpack.c.l.b16 %v929
    %v2289 = vunpack.c.l.b16 %v930
    %v2290 = vunpack.c.l.b16 %v931
    %v2291 = vunpack.c.l.b16 %v932
    %v2292 = vunpack.c.l.b16 %v933
    %v2293 = vunpack.c.l.b16 %v934
    %v2294 = vunpack.c.l.b16 %v935
    %v2295 = vunpack.c.l.b16 %v936
    %v2296 = vunpack.c.l.b16 %v937
    %v2297 = vunpack.c.l.b16 %v938
    %v2298 = vunpack.c.l.b16 %v939
    %v2299 = vunpack.c.l.b16 %v940
    %v2300 = vunpack.c.l.b16 %v941
    %v2301 = vunpack.c.l.b16 %v942
    %v2302 = vunpack.c.l.b16 %v943
    %v2303 = vunpack.c.l.b16 %v944
    %v2304 = vunpack.c.l.b16 %v945
    %v2305 = vunpack.c.l.b16 %v946
    %v2306 = vunpack.c.l.b16 %v947
    %v2307 = vunpack.c.l.b16 %v948
    %v2308 = vunpack.c.l.b16 %v949
    %v2309 = vunpack.c.l.b16 %v950
    %v2310 = vunpack.c.l.b16 %v951
    %v2311 = vunpack.c.l.b16 %v952
    %v2312 = vunpack.c.l.b16 %v953
    %v2313 = vunpack.c.l.b16 %v954
    %v2314 = vunpack.c.l.b16 %v955
    %v2315 = vunpack.c.l.b16 %v956
    %v2316 = vunpack.c.l.b16 %v957
    %v2317 = vunpack.c.l.b16 %v958
    %v2318 = vunpack.c.l.b16 %v959
    %v2319 = vunpack.c.l.b16 %v960
    %v2320 = vunpack.c.l.b16 %v961
    %v2321 = vunpack.c.l.b16 %v962
    %v2322 = vunpack.c.l.b16 %v963
    %v2323 = vunpack.c.l.b16 %v964
    %v2324 = vunpack.c.l.b16 %v965
    %v2325 = vunpack.c.l.b16 %v966
    %v2326 = vunpack.c.l.b16 %v967
    %v2327 = vunpack.c.l.b16 %v968
    %v2328 = vunpack.c.l.b16 %v969
    %v2329 = vunpack.c.l.b16 %v970
    %v2330 = vunpack.c.l.b16 %v971
    %v2331 = vunpack.c.l.b16 %v972
    %v2332 = vunpack.c.l.b16 %v973
    %v2333 = vunpack.c.l.b16 %v974
    %v2334 = vunpack.c.l.b16 %v975
    %v2335 = vunpack.c.l.b16 %v976
    %v2336 = vunpack.c.l.b16 %v977
    %v2337 = vunpack.c.l.b16 %v978
    %v2338 = vunpack.c.l.b16 %v979
    %v2339 = vunpack.c.l.b16 %v980
    %v2340 = vunpack.c.l.b16 %v981
    %v2341 = vunpack.c.l.b16 %v982
    %v2342 = vunpack.c.l.b16 %v983
    %v2343 = vunpack.c.l.b16 %v984
    %v2344 = vunpack.c.l.b16 %v985
    %v2345 = vunpack.c.l.b16 %v986
    %v2346 = vunpack.c.l.b16 %v987
    %v2347 = vunpack.c.l.b16 %v988
    %v2348 = vunpack.c.l.b16 %v989
    %v2349 = vunpack.c.l.b16 %v990
    %v2350 = vunpack.c.l.b16 %v991
    %v2351 = vunpack.c.l.b16 %v992
    %v2352 = vunpack.c.l.b16 %v993
    %v2353 = vunpack.c.l.b16 %v994
    %v2354 = vunpack.c.l.b16 %v995
    %v2355 = vunpack.c.l.b16 %v996
    %v2356 = vunpack.c.l.b16 %v997
    %v2357 = vunpack.c.l.b16 %v998
    %v2358 = vunpack.c.l.b16 %v999
    %v2359 = vunpack.c.l.b16 %v1000
    %v2360 = vunpack.c.l.b16 %v1001
    %v2361 = vunpack.c.l.b16 %v1002
    %v2362 = vunpack.c.l.b16 %v1003
    %v2363 = vunpack.c.l.b16 %v1004
    %v2364 = vunpack.c.l.b16 %v1005
    %v2365 = vunpack.c.l.b16 %v1006
    %v2366 = vunpack.c.l.b16 %v1007
    %v2367 = vunpack.c.l.b16 %v1008
    %v2368 = vunpack.c.l.b16 %v1009
    %v2369 = vunpack.c.l.b16 %v1010
    %v2370 = vunpack.c.l.b16 %v1011
    %v2371 = vunpack.c.l.b16 %v1012
    %v2372 = vunpack.c.l.b16 %v1013
    %v2373 = vunpack.c.l.b16 %v1014
    %v2374 = vunpack.c.l.b16 %v1015
    %v2375 = vpack.c.b16 %v1700, %v1699
    %v2376 = vpack.c.b16 %v1702, %v1701
    %v2377 = vpack.c.b16 %v1704, %v1703
    %v2378 = vpack.c.b16 %v1706, %v1705
    %v2379 = vpack.c.b16 %v1708, %v1707
    %v2380 = vpack.c.b16 %v1710, %v1709
    %v2381 = vpack.c.b16 %v1712, %v1711
    %v2382 = vpack.c.b16 %v1714, %v1713
    %v2383 = vpack.c.b16 %v1716, %v1715
    %v2384 = vpack.c.b16 %v1718, %v1717
    %v2385 = vpack.c.b16 %v1720, %v1719
    %v2386 = vpack.c.b16 %v1722, %v1721
    %v2387 = vpack.c.b16 %v1724, %v1723
    %v2388 = vpack.c.b16 %v1726, %v1725
    %v2389 = vpack.c.b16 %v1728, %v1727
    %v2390 = vpack.c.b16 %v1730, %v1729
    %v2391 = vpack.c.b16 %v1732, %v1731
    %v2392 = vpack.c.b16 %v1734, %v1733
    %v2393 = vpack.c.b16 %v1736, %v1735
    %v2394 = vpack.c.b16 %v1738, %v1737
    %v2395 = vpack.c.b16 %v1740, %v1739
    %v2396 = vpack.c.b16 %v1742, %v1741
    %v2397 = vpack.c.b16 %v1744, %v1743
    %v2398 = vpack.c.b16 %v1746, %v1745
    %v2399 = vpack.c.b16 %v1748, %v1747
    %v2400 = vpack.c.b16 %v1750, %v1749
    %v2401 = vpack.c.b16 %v1752, %v1751
    %v2402 = vpack.c.b16 %v1754, %v1753
    %v2403 = vpack.c.b16 %v1756, %v1755
    %v2404 = vpack.c.b16 %v1758, %v1757
    %v2405 = vpack.c.b16 %v1760, %v1759
    %v2406 = vpack.c.b16 %v1762, %v1761
    %v2407 = vpack.c.b16 %v1764, %v1763
    %v2408 = vpack.c.b16 %v1766, %v1765
    %v2409 = vpack.c.b16 %v1768, %v1767
    %v2410 = vpack.c.b16 %v1770, %v1769
    %v2411 = vpack.c.b16 %v1772, %v1771
    %v2412 = vpack.c.b16 %v1774, %v1773
    %v2413 = vpack.c.b16 %v1776, %v1775
    %v2414 = vpack.c.b16 %v1778, %v1777
    %v2415 = vpack.c.b16 %v1780, %v1779
    %v2416 = vpack.c.b16 %v1782, %v1781
    %v2417 = vpack.c.b16 %v1784, %v1783
    %v2418 = vpack.c.b16 %v1786, %v1785
    %v2419 = vpack.c.b16 %v1788, %v1787
    %v2420 = vpack.c.b16 %v1790, %v1789
    %v2421 = vpack.c.b16 %v1792, %v1791
    %v2422 = vpack.c.b16 %v1794, %v1793
    %v2423 = vpack.c.b16 %v1796, %v1795
    %v2424 = vpack.c.b16 %v1798, %v1797
    %v2425 = vpack.c.b16 %v1800, %v1799
    %v2426 = vpack.c.b16 %v1802, %v1801
    %v2427 = vpack.c.b16 %v1804, %v1803
    %v2428 = vpack.c.b16 %v1806, %v1805
    %v2429 = vpack.c.b16 %v1808, %v1807
    %v2430 = vpack.c.b16 %v1810, %v1809
    %v2431 = vpack.c.b16 %v1812, %v1811
    %v2432 = vpack.c.b16 %v1814, %v1813
    %v2433 = vpack.c.b16 %v1816, %v1815
    %v2434 = vpack.c.b16 %v1818, %v1817
    %v2435 = vpack.c.b16 %v1820, %v1819
    %v2436 = vpack.c.b16 %v1822, %v1821
    %v2437 = vpack.c.b16 %v1824, %v1823
    %v2438 = vpack.c.b16 %v1826, %v1825
    %v2439 = vpack.c.b16 %v1828, %v1827
    %v2440 = vpack.c.b16 %v1830, %v1829
    %v2441 = vpack.c.b16 %v1832, %v1831
    %v2442 = vpack.c.b16 %v1834, %v1833
    %v2443 = vpack.c.b16 %v1836, %v1835
    %v2444 = vpack.c.b16 %v1838, %v1837
    %v2445 = vpack.c.b16 %v1840, %v1839
    %v2446 = vpack.c.b16 %v1842, %v1841
    %v2447 = vpack.c.b16 %v1844, %v1843
    %v2448 = vpack.c.b16 %v1846, %v1845
    %v2449 = vpack.c.b16 %v1848, %v1847
    %v2450 = vpack.c.b16 %v1850, %v1849
    %v2451 = vpack.c.b16 %v1852, %v1851
    %v2452 = vpack.c.b16 %v1854, %v1853
    %v2453 = vpack.c.b16 %v1856, %v1855
    %v2454 = vpack.c.b16 %v1858, %v1857
    %v2455 = vpack.c.b16 %v1860, %v1859
    %v2456 = vpack.c.b16 %v1862, %v1861
    %v2457 = vpack.c.b16 %v1864, %v1863
    %v2458 = vpack.c.b16 %v1866, %v1865
    %v2459 = vpack.c.b16 %v1868, %v1867
    %v2460 = vpack.c.b16 %v1870, %v1869
    %v2461 = vpack.c.b16 %v1872, %v1871
    %v2462 = vpack.c.b16 %v1874, %v1873
    %v2463 = vpack.c.b16 %v1876, %v1875
    %v2464 = vpack.c.b16 %v1878, %v1877
    %v2465 = vpack.c.b16 %v1880, %v1879
    %v2466 = vpack.c.b16 %v1882, %v1881
    %v2467 = vpack.c.b16 %v1884, %v1883
    %v2468 = vpack.c.b16 %v1886, %v1885
    %v2469 = vpack.c.b16 %v1888, %v1887
    %v2470 = vpack.c.b16 %v1890, %v1889
    %v2471 = vpack.c.b16 %v1892, %v1891
    %v2472 = vpack.c.b16 %v1894, %v1893
    %v2473 = vpack.c.b16 %v1896, %v1895
    %v2474 = vpack.c.b16 %v1898, %v1897
    %v2475 = vpack.c.b16 %v1900, %v1899
    %v2476 = vpack.c.b16 %v1902, %v1901
    %v2477 = vpack.c.b16 %v1904, %v1903
    %v2478 = vpack.c.b16 %v1906, %v1905
    %v2479 = vpack.c.b16 %v1908, %v1907
    %v2480 = vpack.c.b16 %v1910, %v1909
    %v2481 = vpack.c.b16 %v1912, %v1911
    %v2482 = vpack.c.b16 %v1914, %v1913
    %v2483 = vpack.c.b16 %v1916, %v1915
    %v2484 = vpack.c.b16 %v1918, %v1917
    %v2485 = vpack.c.b16 %v1920, %v1919
    %v2486 = vpack.c.b16 %v1922, %v1921
    %v2487 = vpack.c.b16 %v1924, %v1923
    %v2488 = vpack.c.b16 %v1926, %v1925
    %v2489 = vpack.c.b16 %v1928, %v1927
    %v2490 = vpack.c.b16 %v1930, %v1929
    %v2491 = vpack.c.b16 %v1932, %v1931
    %v2492 = vpack.c.b16 %v1934, %v1933
    %v2493 = vpack.c.b16 %v1936, %v1935
    %v2494 = vpack.c.b16 %v1938, %v1937
    %v2495 = vpack.c.b16 %v1940, %v1939
    %v2496 = vpack.c.b16 %v1942, %v1941
    %v2497 = vpack.c.b16 %v1944, %v1943
    %v2498 = vpack.c.b16 %v1946, %v1945
    %v2499 = vpack.c.b16 %v1948, %v1947
    %v2500 = vpack.c.b16 %v1950, %v1949
    %v2501 = vpack.c.b16 %v1952, %v1951
    %v2502 = vpack.c.b16 %v1954, %v1953
    %v2503 = vpack.c.b16 %v1956, %v1955
    %v2504 = vpack.c.b16 %v1958, %v1957
    %v2505 = vpack.c.b16 %v1960, %v1959
    %v2506 = vpack.c.b16 %v1962, %v1961
    %v2507 = vpack.c.b16 %v1964, %v1963
    %v2508 = vpack.c.b16 %v1966, %v1965
    %v2509 = vpack.c.b16 %v1968, %v1967
    %v2510 = vpack.c.b16 %v1970, %v1969
    %v2511 = vpack.c.b16 %v1972, %v1971
    %v2512 = vpack.c.b16 %v1974, %v1973
    %v2513 = vpack.c.b16 %v1976, %v1975
    %v2514 = vpack.c.b16 %v1978, %v1977
    %v2515 = vpack.c.b16 %v1980, %v1979
    %v2516 = vpack.c.b16 %v1982, %v1981
    %v2517 = vpack.c.b16 %v1984, %v1983
    %v2518 = vpack.c.b16 %v1986, %v1985
    %v2519 = vpack.c.b16 %v1988, %v1987
    %v2520 = vpack.c.b16 %v1990, %v1989
    %v2521 = vpack.c.b16 %v1992, %v1991
    %v2522 = vpack.c.b16 %v1994, %v1993
    %v2523 = vpack.c.b16 %v1996, %v1995
    %v2524 = vpack.c.b16 %v1998, %v1997
    %v2525 = vpack.c.b16 %v2000, %v1999
    %v2526 = vpack.c.b16 %v2002, %v2001
    %v2527 = vpack.c.b16 %v2004, %v2003
    %v2528 = vpack.c.b16 %v2006, %v2005
    %v2529 = vpack.c.b16 %v2008, %v2007
    %v2530 = vpack.c.b16 %v2010, %v2009
    %v2531 = vpack.c.b16 %v2012, %v2011
    %v2532 = vpack.c.b16 %v2014, %v2013
    %v2533 = vpack.c.b16 %v2016, %v2015
    %v2534 = vpack.c.b16 %v2018, %v2017
    %v2535 = vpack.c.b16 %v2020, %v2019
    %v2536 = vpack.c.b16 %v2022, %v2021
    %v2537 = vpack.c.b16 %v2024, %v2023
    %v2538 = vpack.c.b16 %v2026, %v2025
    %v2539 = vpack.c.b16 %v2028, %v2027
    %v2540 = vpack.c.b16 %v2030, %v2029
    %v2541 = vpack.c.b16 %v2032, %v2031
    %v2542 = vpack.c.b16 %v2034, %v2033
    %v2543 = vpack.c.b16 %v2036, %v2035
    %v2544 = vpack.c.b16 %v2038, %v2037
    %v2545 = vpack.c.b16 %v2040, %v2039
    %v2546 = vpack.c.b16 %v2042, %v2041
    %v2547 = vpack.c.b16 %v2044, %v2043
    %v2548 = vpack.c.b16 %v2046, %v2045
    %v2549 = vpack.c.b16 %v2048, %v2047
    %v2550 = vpack.c.b16 %v2050, %v2049
    %v2551 = vpack.c.b16 %v2052, %v2051
    %v2552 = vpack.c.b16 %v2054, %v2053
    %v2553 = vpack.c.b16 %v2056, %v2055
    %v2554 = vpack.c.b16 %v2058, %v2057
    %v2555 = vpack.c.b16 %v2060, %v2059
    %v2556 = vpack.c.b16 %v2062, %v2061
    %v2557 = vpack.c.b16 %v2064, %v2063
    %v2558 = vpack.c.b16 %v2066, %v2065
    %v2559 = vpack.c.b16 %v2068, %v2067
    %v2560 = vpack.c.b16 %v2070, %v2069
    %v2561 = vpack.c.b16 %v2072, %v2071
    %v2562 = vpack.c.b16 %v2074, %v2073
    %v2563 = vpack.c.b16 %v2076, %v2075
    %v2564 = vpack.c.b16 %v2078, %v2077
    %v2565 = vpack.c.b16 %v2080, %v2079
    %v2566 = vpack.c.b16 %v2082, %v2081
    %v2567 = vpack.c.b16 %v2084, %v2083
    %v2568 = vpack.c.b16 %v2086, %v2085
    %v2569 = vpack.c.b16 %v2088, %v2087
    %v2570 = vpack.c.b16 %v2090, %v2089
    %v2571 = vpack.c.b16 %v2092, %v2091
    %v2572 = vpack.c.b16 %v2094, %v2093
    %v2573 = vpack.c.b16 %v2096, %v2095
    %v2574 = vpack.c.b16 %v2098, %v2097
    %v2575 = vpack.c.b16 %v2100, %v2099
    %v2576 = vpack.c.b16 %v2102, %v2101
    %v2577 = vpack.c.b16 %v2104, %v2103
    %v2578 = vpack.c.b16 %v2106, %v2105
    %v2579 = vpack.c.b16 %v2108, %v2107
    %v2580 = vpack.c.b16 %v2110, %v2109
    %v2581 = vpack.c.b16 %v2112, %v2111
    %v2582 = vpack.c.b16 %v2114, %v2113
    %v2583 = vpack.c.b16 %v2116, %v2115
    %v2584 = vpack.c.b16 %v2118, %v2117
    %v2585 = vpack.c.b16 %v2120, %v2119
    %v2586 = vpack.c.b16 %v2122, %v2121
    %v2587 = vpack.c.b16 %v2124, %v2123
    %v2588 = vpack.c.b16 %v2126, %v2125
    %v2589 = vpack.c.b16 %v2128, %v2127
    %v2590 = vpack.c.b16 %v2130, %v2129
    %v2591 = vpack.c.b16 %v2132, %v2131
    %v2592 = vpack.c.b16 %v2134, %v2133
    %v2593 = vpack.c.b16 %v2136, %v2135
    %v2594 = vpack.c.b16 %v2138, %v2137
    %v2595 = vpack.c.b16 %v2140, %v2139
    %v2596 = vpack.c.b16 %v2142, %v2141
    %v2597 = vpack.c.b16 %v2144, %v2143
    %v2598 = vpack.c.b16 %v2146, %v2145
    %v2599 = vpack.c.b16 %v2148, %v2147
    %v2600 = vpack.c.b16 %v2150, %v2149
    %v2601 = vpack.c.b16 %v2152, %v2151
    %v2602 = vpack.c.b16 %v2154, %v2153
    %v2603 = vpack.c.b16 %v2156, %v2155
    %v2604 = vpack.c.b16 %v2158, %v2157
    %v2605 = vpack.c.b16 %v2160, %v2159
    %v2606 = vpack.c.b16 %v2162, %v2161
    %v2607 = vpack.c.b16 %v2164, %v2163
    %v2608 = vpack.c.b16 %v2166, %v2165
    %v2609 = vpack.c.b16 %v2168, %v2167
    %v2610 = vpack.c.b16 %v2170, %v2169
    %v2611 = vpack.c.b16 %v2172, %v2171
    %v2612 = vpack.c.b16 %v2174, %v2173
    %v2613 = vpack.c.b16 %v2176, %v2175
    %v2614 = vpack.c.b16 %v2178, %v2177
    %v2615 = vpack.c.b16 %v2180, %v2179
    %v2616 = vpack.c.b16 %v2182, %v2181
    %v2617 = vpack.c.b16 %v2184, %v2183
    %v2618 = vpack.c.b16 %v2186, %v2185
    %v2619 = vpack.c.b16 %v2188, %v2187
    %v2620 = vpack.c.b16 %v2190, %v2189
    %v2621 = vpack.c.b16 %v2192, %v2191
    %v2622 = vpack.c.b16 %v2194, %v2193
    %v2623 = vpack.c.b16 %v2196, %v2195
    %v2624 = vpack.c.b16 %v2198, %v2197
    %v2625 = vpack.c.b16 %v2200, %v2199
    %v2626 = vpack.c.b16 %v2202, %v2201
    %v2627 = vpack.c.b16 %v2204, %v2203
    %v2628 = vpack.c.b16 %v2206, %v2205
    %v2629 = vpack.c.b16 %v2208, %v2207
    %v2630 = vpack.c.b16 %v2210, %v2209
    %v2631 = vpack.c.b16 %v2212, %v2211
    %v2632 = vpack.c.b16 %v2214, %v2213
    %v2633 = vpack.c.b16 %v2216, %v2215
    %v2634 = vpack.c.b16 %v2218, %v2217
    %v2635 = vpack.c.b16 %v2220, %v2219
    %v2636 = vpack.c.b16 %v2222, %v2221
    %v2637 = vpack.c.b16 %v2224, %v2223
    %v2638 = vpack.c.b16 %v2226, %v2225
    %v2639 = vpack.c.b16 %v2228, %v2227
    %v2640 = vpack.c.b16 %v2230, %v2229
    %v2641 = vpack.c.b16 %v2232, %v2231
    %v2642 = vpack.c.b16 %v2234, %v2233
    %v2643 = vpack.c.b16 %v2236, %v2235
    %v2644 = vpack.c.b16 %v2238, %v2237
    %v2645 = vpack.c.b16 %v2240, %v2239
    %v2646 = vpack.c.b16 %v2242, %v2241
    %v2647 = vpack.c.b16 %v2244, %v2243
    %v2648 = vpack.c.b16 %v2246, %v2245
    %v2649 = vpack.c.b16 %v2248, %v2247
    %v2650 = vpack.c.b16 %v2250, %v2249
    %v2651 = vpack.c.b16 %v2252, %v2251
    %v2652 = vpack.c.b16 %v2254, %v2253
    %v2653 = vpack.c.b16 %v2256, %v2255
    %v2654 = vpack.c.b16 %v2258, %v2257
    %v2655 = vpack.c.b16 %v2260, %v2259
    %v2656 = vpack.c.b16 %v2262, %v2261
    %v2657 = vpack.c.b16 %v2264, %v2263
    %v2658 = vpack.c.b16 %v2266, %v2265
    %v2659 = vpack.c.b16 %v2268, %v2267
    %v2660 = vpack.c.b16 %v2270, %v2269
    %v2661 = vpack.c.b16 %v2272, %v2271
    %v2662 = vpack.c.b16 %v2274, %v2273
    %v2663 = vpack.c.b16 %v2276, %v2275
    %v2664 = vpack.c.b16 %v2278, %v2277
    %v2665 = vpack.c.b16 %v2280, %v2279
    %v2666 = vpack.c.b16 %v2282, %v2281
    %v2667 = vpack.c.b16 %v2284, %v2283
    %v2668 = vpack.c.b16 %v2286, %v2285
    %v2669 = vpack.c.b16 %v2288, %v2287
    %v2670 = vpack.c.b16 %v2290, %v2289
    %v2671 = vpack.c.b16 %v2292, %v2291
    %v2672 = vpack.c.b16 %v2294, %v2293
    %v2673 = vpack.c.b16 %v2296, %v2295
    %v2674 = vpack.c.b16 %v2298, %v2297
    %v2675 = vpack.c.b16 %v2300, %v2299
    %v2676 = vpack.c.b16 %v2302, %v2301
    %v2677 = vpack.c.b16 %v2304, %v2303
    %v2678 = vpack.c.b16 %v2306, %v2305
    %v2679 = vpack.c.b16 %v2308, %v2307
    %v2680 = vpack.c.b16 %v2310, %v2309
    %v2681 = vpack.c.b16 %v2312, %v2311
    %v2682 = vpack.c.b16 %v2314, %v2313
    %v2683 = vpack.c.b16 %v2316, %v2315
    %v2684 = vpack.c.b16 %v2318, %v2317
    %v2685 = vpack.c.b16 %v2320, %v2319
    %v2686 = vpack.c.b16 %v2322, %v2321
    %v2687 = vpack.c.b16 %v2324, %v2323
    %v2688 = vpack.c.b16 %v2326, %v2325
    %v2689 = vpack.c.b16 %v2328, %v2327
    %v2690 = vpack.c.b16 %v2330, %v2329
    %v2691 = vpack.c.b16 %v2332, %v2331
    %v2692 = vpack.c.b16 %v2334, %v2333
    %v2693 = vpack.c.b16 %v2336, %v2335
    %v2694 = vpack.c.b16 %v2338, %v2337
    %v2695 = vpack.c.b16 %v2340, %v2339
    %v2696 = vpack.c.b16 %v2342, %v2341
    %v2697 = vpack.c.b16 %v2344, %v2343
    %v2698 = vpack.c.b16 %v2346, %v2345
    %v2699 = vpack.c.b16 %v2348, %v2347
    %v2700 = vpack.c.b16 %v2350, %v2349
    %v2701 = vpack.c.b16 %v2352, %v2351
    %v2702 = vpack.c.b16 %v2354, %v2353
    %v2703 = vpack.c.b16 %v2356, %v2355
    %v2704 = vpack.c.b16 %v2358, %v2357
    %v2705 = vpack.c.b16 %v2360, %v2359
    %v2706 = vpack.c.b16 %v2362, %v2361
    %v2707 = vpack.c.b16 %v2364, %v2363
    %v2708 = vpack.c.b16 %v2366, %v2365
    %v2709 = vpack.c.b16 %v2368, %v2367
    %v2710 = vpack.c.b16 %v2370, %v2369
    %v2711 = vpack.c.b16 %v2372, %v2371
    %v2712 = vpack.c.b16 %v2374, %v2373
    %vm3051 = vcmask 261120
    %v3053 = vsel %vm3051, %v339, 0
    %3055 = vmatprep.subr.bf16.mxu0 0
    %3056 = vmatpush1.bf16.msra.mxu0 %v2375
    %3057 = vmatprep.subr.bf16.mxu0 0
    %3058 = vmatpush1.bf16.msra.mxu0 %v2376
    %3059 = vmatprep.subr.bf16.mxu0 0
    %3060 = vmatpush1.bf16.msra.mxu0 %v2377
    %3061 = vmatprep.subr.bf16.mxu0 0
    %3062 = vmatpush1.bf16.msra.mxu0 %v2378
    %3063 = vmatprep.subr.bf16.mxu0 0
    %3064 = vmatpush1.bf16.msra.mxu0 %v2379
    %3065 = vmatprep.subr.bf16.mxu0 0
    %3066 = vmatpush1.bf16.msra.mxu0 %v2380
    %3067 = vmatprep.subr.bf16.mxu0 0
    %3068 = vmatpush1.bf16.msra.mxu0 %v2381
    %3069 = vmatprep.subr.bf16.mxu0 0
    %3070 = vmatpush1.bf16.msra.mxu0 %v2382
    %3071 = vmatprep.subr.bf16.mxu0 0
    %3072 = vmatpush1.bf16.msra.mxu0 %v2383
    %3073 = vmatprep.subr.bf16.mxu0 0
    %3074 = vmatpush1.bf16.msra.mxu0 %v2384
    %3075 = vmatprep.subr.bf16.mxu0 0
    %3076 = vmatpush1.bf16.msra.mxu0 %v2385
    %3077 = vmatprep.subr.bf16.mxu0 0
    %3078 = vmatpush1.bf16.msra.mxu0 %v2386
    %3079 = vmatprep.subr.bf16.mxu0 0
    %3080 = vmatpush1.bf16.msra.mxu0 %v2387
    %3081 = vmatprep.subr.bf16.mxu0 0
    %3082 = vmatpush1.bf16.msra.mxu0 %v2388
    %3083 = vmatprep.subr.bf16.mxu0 0
    %3084 = vmatpush1.bf16.msra.mxu0 %v2389
    %3085 = vmatprep.subr.bf16.mxu0 0
    %3086 = vmatpush1.bf16.msra.mxu0 %v2390
    %3087 = vmatprep.mubr.bf16.mxu0 %v298
    %3088 = vmatmul.mubr.bf16.gmra.mrb[0].mxu0 %v297
    %v3089 = vpop.f32.mrb[0].mxu0
    %v3090 = vadd.f32 %v1021, %v3089
    %v3091 = vpop.f32.mrb[0].mxu0
    %v3092 = vpop.f32.mrb[0].mxu0
    %v3093 = vpop.f32.mrb[0].mxu0
    %3094 = vdwg.mxu0
    %3095 = vmatprep.subr.bf16.mxu0 0
    %3096 = vmatpush1.bf16.msra.mxu0 %v2391
    %3097 = vmatprep.subr.bf16.mxu0 0
    %3098 = vmatpush1.bf16.msra.mxu0 %v2392
    %3099 = vmatprep.subr.bf16.mxu0 0
    %3100 = vmatpush1.bf16.msra.mxu0 %v2393
    %3101 = vmatprep.subr.bf16.mxu0 0
    %3102 = vmatpush1.bf16.msra.mxu0 %v2394
    %3103 = vmatprep.subr.bf16.mxu0 0
    %3104 = vmatpush1.bf16.msra.mxu0 %v2395
    %3105 = vmatprep.subr.bf16.mxu0 0
    %3106 = vmatpush1.bf16.msra.mxu0 %v2396
    %3107 = vmatprep.subr.bf16.mxu0 0
    %3108 = vmatpush1.bf16.msra.mxu0 %v2397
    %3109 = vmatprep.subr.bf16.mxu0 0
    %3110 = vmatpush1.bf16.msra.mxu0 %v2398
    %3111 = vmatprep.subr.bf16.mxu0 0
    %3112 = vmatpush1.bf16.msra.mxu0 %v2399
    %3113 = vmatprep.subr.bf16.mxu0 0
    %3114 = vmatpush1.bf16.msra.mxu0 %v2400
    %3115 = vmatprep.subr.bf16.mxu0 0
    %3116 = vmatpush1.bf16.msra.mxu0 %v2401
    %3117 = vmatprep.subr.bf16.mxu0 0
    %3118 = vmatpush1.bf16.msra.mxu0 %v2402
    %3119 = vmatprep.subr.bf16.mxu0 0
    %3120 = vmatpush1.bf16.msra.mxu0 %v2403
    %3121 = vmatprep.subr.bf16.mxu0 0
    %3122 = vmatpush1.bf16.msra.mxu0 %v2404
    %3123 = vmatprep.subr.bf16.mxu0 0
    %3124 = vmatpush1.bf16.msra.mxu0 %v2405
    %3125 = vmatprep.subr.bf16.mxu0 0
    %3126 = vmatpush1.bf16.msra.mxu0 %v2406
    %3127 = vmatprep.mubr.bf16.mxu0 %v300
    %3128 = vmatmul.mubr.bf16.gmra.mrb[0].mxu0 %v299
    %v3129 = vpop.f32.mrb[0].mxu0
    %v3130 = vadd.f32 %v3090, %v3129
    %v3131 = vpop.f32.mrb[0].mxu0
    %v3132 = vpop.f32.mrb[0].mxu0
    %v3133 = vpop.f32.mrb[0].mxu0
    %3134 = vdwg.mxu0
    %3135 = vmatprep.subr.bf16.mxu0 0
    %3136 = vmatpush1.bf16.msra.mxu0 %v2407
    %3137 = vmatprep.subr.bf16.mxu0 0
    %3138 = vmatpush1.bf16.msra.mxu0 %v2408
    %3139 = vmatprep.subr.bf16.mxu0 0
    %3140 = vmatpush1.bf16.msra.mxu0 %v2409
    %3141 = vmatprep.subr.bf16.mxu0 0
    %3142 = vmatpush1.bf16.msra.mxu0 %v2410
    %3143 = vmatprep.subr.bf16.mxu0 0
    %3144 = vmatpush1.bf16.msra.mxu0 %v2411
    %3145 = vmatprep.subr.bf16.mxu0 0
    %3146 = vmatpush1.bf16.msra.mxu0 %v2412
    %3147 = vmatprep.subr.bf16.mxu0 0
    %3148 = vmatpush1.bf16.msra.mxu0 %v2413
    %3149 = vmatprep.subr.bf16.mxu0 0
    %3150 = vmatpush1.bf16.msra.mxu0 %v2414
    %3151 = vmatprep.subr.bf16.mxu0 0
    %3152 = vmatpush1.bf16.msra.mxu0 %v2415
    %3153 = vmatprep.subr.bf16.mxu0 0
    %3154 = vmatpush1.bf16.msra.mxu0 %v2416
    %3155 = vmatprep.subr.bf16.mxu0 0
    %3156 = vmatpush1.bf16.msra.mxu0 %v2417
    %3157 = vmatprep.subr.bf16.mxu0 0
    %3158 = vmatpush1.bf16.msra.mxu0 %v2418
    %3159 = vmatprep.subr.bf16.mxu0 0
    %3160 = vmatpush1.bf16.msra.mxu0 %v2419
    %3161 = vmatprep.subr.bf16.mxu0 0
    %3162 = vmatpush1.bf16.msra.mxu0 %v2420
    %3163 = vmatprep.subr.bf16.mxu0 0
    %3164 = vmatpush1.bf16.msra.mxu0 %v2421
    %3165 = vmatprep.subr.bf16.mxu0 0
    %3166 = vmatpush1.bf16.msra.mxu0 %v2422
    %3167 = vmatprep.mubr.bf16.mxu0 %v302
    %3168 = vmatmul.mubr.bf16.gmra.mrb[0].mxu0 %v301
    %v3169 = vpop.f32.mrb[0].mxu0
    %v3170 = vadd.f32 %v3130, %v3169
    %v3171 = vpop.f32.mrb[0].mxu0
    %v3172 = vpop.f32.mrb[0].mxu0
    %v3173 = vpop.f32.mrb[0].mxu0
    %3174 = vdwg.mxu0
    %3175 = vmatprep.subr.bf16.mxu0 0
    %3176 = vmatpush1.bf16.msra.mxu0 %v2423
    %3177 = vmatprep.subr.bf16.mxu0 0
    %3178 = vmatpush1.bf16.msra.mxu0 %v2424
    %3179 = vmatprep.subr.bf16.mxu0 0
    %3180 = vmatpush1.bf16.msra.mxu0 %v2425
    %3181 = vmatprep.subr.bf16.mxu0 0
    %3182 = vmatpush1.bf16.msra.mxu0 %v2426
    %3183 = vmatprep.subr.bf16.mxu0 0
    %3184 = vmatpush1.bf16.msra.mxu0 %v2427
    %3185 = vmatprep.subr.bf16.mxu0 0
    %3186 = vmatpush1.bf16.msra.mxu0 %v2428
    %3187 = vmatprep.subr.bf16.mxu0 0
    %3188 = vmatpush1.bf16.msra.mxu0 %v2429
    %3189 = vmatprep.subr.bf16.mxu0 0
    %3190 = vmatpush1.bf16.msra.mxu0 %v2430
    %3191 = vmatprep.subr.bf16.mxu0 0
    %3192 = vmatpush1.bf16.msra.mxu0 %v2431
    %3193 = vmatprep.subr.bf16.mxu0 0
    %3194 = vmatpush1.bf16.msra.mxu0 %v2432
    %3195 = vmatprep.subr.bf16.mxu0 0
    %3196 = vmatpush1.bf16.msra.mxu0 %v2433
    %3197 = vmatprep.subr.bf16.mxu0 0
    %3198 = vmatpush1.bf16.msra.mxu0 %v2434
    %3199 = vmatprep.subr.bf16.mxu0 0
    %3200 = vmatpush1.bf16.msra.mxu0 %v2435
    %3201 = vmatprep.subr.bf16.mxu0 0
    %3202 = vmatpush1.bf16.msra.mxu0 %v2436
    %3203 = vmatprep.subr.bf16.mxu0 0
    %3204 = vmatpush1.bf16.msra.mxu0 %v2437
    %3205 = vmatprep.subr.bf16.mxu0 0
    %3206 = vmatpush1.bf16.msra.mxu0 %v2438
    %3207 = vmatprep.mubr.bf16.mxu0 %v304
    %3208 = vmatmul.mubr.bf16.gmra.mrb[0].mxu0 %v303
    %v3209 = vpop.f32.mrb[0].mxu0
    %v3210 = vadd.f32 %v3170, %v3209
    %v3211 = vpop.f32.mrb[0].mxu0
    %v3212 = vpop.f32.mrb[0].mxu0
    %v3213 = vpop.f32.mrb[0].mxu0
    %3214 = vdwg.mxu0
    %3215 = vmatprep.subr.bf16.mxu0 0
    %3216 = vmatpush1.bf16.msra.mxu0 %v2439
    %3217 = vmatprep.subr.bf16.mxu0 0
    %3218 = vmatpush1.bf16.msra.mxu0 %v2440
    %3219 = vmatprep.subr.bf16.mxu0 0
    %3220 = vmatpush1.bf16.msra.mxu0 %v2441
    %3221 = vmatprep.subr.bf16.mxu0 0
    %3222 = vmatpush1.bf16.msra.mxu0 %v2442
    %3223 = vmatprep.subr.bf16.mxu0 0
    %3224 = vmatpush1.bf16.msra.mxu0 %v2443
    %3225 = vmatprep.subr.bf16.mxu0 0
    %3226 = vmatpush1.bf16.msra.mxu0 %v2444
    %3227 = vmatprep.subr.bf16.mxu0 0
    %3228 = vmatpush1.bf16.msra.mxu0 %v2445
    %3229 = vmatprep.subr.bf16.mxu0 0
    %3230 = vmatpush1.bf16.msra.mxu0 %v2446
    %3231 = vmatprep.subr.bf16.mxu0 0
    %3232 = vmatpush1.bf16.msra.mxu0 %v2447
    %3233 = vmatprep.subr.bf16.mxu0 0
    %3234 = vmatpush1.bf16.msra.mxu0 %v2448
    %3235 = vmatprep.subr.bf16.mxu0 0
    %3236 = vmatpush1.bf16.msra.mxu0 %v2449
    %3237 = vmatprep.subr.bf16.mxu0 0
    %3238 = vmatpush1.bf16.msra.mxu0 %v2450
    %3239 = vmatprep.subr.bf16.mxu0 0
    %3240 = vmatpush1.bf16.msra.mxu0 %v2451
    %3241 = vmatprep.subr.bf16.mxu0 0
    %3242 = vmatpush1.bf16.msra.mxu0 %v2452
    %3243 = vmatprep.subr.bf16.mxu0 0
    %3244 = vmatpush1.bf16.msra.mxu0 %v2453
    %3245 = vmatprep.subr.bf16.mxu0 0
    %3246 = vmatpush1.bf16.msra.mxu0 %v2454
    %3247 = vmatprep.mubr.bf16.mxu0 %v306
    %3248 = vmatmul.mubr.bf16.gmra.mrb[0].mxu0 %v305
    %v3249 = vpop.f32.mrb[0].mxu0
    %v3250 = vadd.f32 %v3210, %v3249
    %v3251 = vpop.f32.mrb[0].mxu0
    %v3252 = vpop.f32.mrb[0].mxu0
    %v3253 = vpop.f32.mrb[0].mxu0
    %3254 = vdwg.mxu0
    %3255 = vmatprep.subr.bf16.mxu0 0
    %3256 = vmatpush1.bf16.msra.mxu0 %v2455
    %3257 = vmatprep.subr.bf16.mxu0 0
    %3258 = vmatpush1.bf16.msra.mxu0 %v2456
    %3259 = vmatprep.subr.bf16.mxu0 0
    %3260 = vmatpush1.bf16.msra.mxu0 %v2457
    %3261 = vmatprep.subr.bf16.mxu0 0
    %3262 = vmatpush1.bf16.msra.mxu0 %v2458
    %3263 = vmatprep.subr.bf16.mxu0 0
    %3264 = vmatpush1.bf16.msra.mxu0 %v2459
    %3265 = vmatprep.subr.bf16.mxu0 0
    %3266 = vmatpush1.bf16.msra.mxu0 %v2460
    %3267 = vmatprep.subr.bf16.mxu0 0
    %3268 = vmatpush1.bf16.msra.mxu0 %v2461
    %3269 = vmatprep.subr.bf16.mxu0 0
    %3270 = vmatpush1.bf16.msra.mxu0 %v2462
    %3271 = vmatprep.subr.bf16.mxu0 0
    %3272 = vmatpush1.bf16.msra.mxu0 %v2463
    %3273 = vmatprep.subr.bf16.mxu0 0
    %3274 = vmatpush1.bf16.msra.mxu0 %v2464
    %3275 = vmatprep.subr.bf16.mxu0 0
    %3276 = vmatpush1.bf16.msra.mxu0 %v2465
    %3277 = vmatprep.subr.bf16.mxu0 0
    %3278 = vmatpush1.bf16.msra.mxu0 %v2466
    %3279 = vmatprep.subr.bf16.mxu0 0
    %3280 = vmatpush1.bf16.msra.mxu0 %v2467
    %3281 = vmatprep.subr.bf16.mxu0 0
    %3282 = vmatpush1.bf16.msra.mxu0 %v2468
    %3283 = vmatprep.subr.bf16.mxu0 0
    %3284 = vmatpush1.bf16.msra.mxu0 %v2469
    %3285 = vmatprep.subr.bf16.mxu0 0
    %3286 = vmatpush1.bf16.msra.mxu0 %v2470
    %3287 = vmatprep.mubr.bf16.mxu0 %v308
    %3288 = vmatmul.mubr.bf16.gmra.mrb[0].mxu0 %v307
    %v3289 = vpop.f32.mrb[0].mxu0
    %v3290 = vadd.f32 %v3250, %v3289
    %v3291 = vpop.f32.mrb[0].mxu0
    %v3292 = vpop.f32.mrb[0].mxu0
    %v3293 = vpop.f32.mrb[0].mxu0
    %3294 = vdwg.mxu0
    %3295 = vmatprep.subr.bf16.mxu0 0
    %3296 = vmatpush1.bf16.msra.mxu0 %v2471
    %3297 = vmatprep.subr.bf16.mxu0 0
    %3298 = vmatpush1.bf16.msra.mxu0 %v2472
    %3299 = vmatprep.subr.bf16.mxu0 0
    %3300 = vmatpush1.bf16.msra.mxu0 %v2473
    %3301 = vmatprep.subr.bf16.mxu0 0
    %3302 = vmatpush1.bf16.msra.mxu0 %v2474
    %3303 = vmatprep.subr.bf16.mxu0 0
    %3304 = vmatpush1.bf16.msra.mxu0 %v2475
    %3305 = vmatprep.subr.bf16.mxu0 0
    %3306 = vmatpush1.bf16.msra.mxu0 %v2476
    %3307 = vmatprep.subr.bf16.mxu0 0
    %3308 = vmatpush1.bf16.msra.mxu0 %v2477
    %3309 = vmatprep.subr.bf16.mxu0 0
    %3310 = vmatpush1.bf16.msra.mxu0 %v2478
    %3311 = vmatprep.subr.bf16.mxu0 0
    %3312 = vmatpush1.bf16.msra.mxu0 %v2479
    %3313 = vmatprep.subr.bf16.mxu0 0
    %3314 = vmatpush1.bf16.msra.mxu0 %v2480
    %3315 = vmatprep.subr.bf16.mxu0 0
    %3316 = vmatpush1.bf16.msra.mxu0 %v2481
    %3317 = vmatprep.subr.bf16.mxu0 0
    %3318 = vmatpush1.bf16.msra.mxu0 %v2482
    %3319 = vmatprep.subr.bf16.mxu0 0
    %3320 = vmatpush1.bf16.msra.mxu0 %v2483
    %3321 = vmatprep.subr.bf16.mxu0 0
    %3322 = vmatpush1.bf16.msra.mxu0 %v2484
    %3323 = vmatprep.subr.bf16.mxu0 0
    %3324 = vmatpush1.bf16.msra.mxu0 %v2485
    %3325 = vmatprep.subr.bf16.mxu0 0
    %3326 = vmatpush1.bf16.msra.mxu0 %v2486
    %3327 = vmatprep.mubr.bf16.mxu0 %v310
    %3328 = vmatmul.mubr.bf16.gmra.mrb[0].mxu0 %v309
    %v3329 = vpop.f32.mrb[0].mxu0
    %v3330 = vadd.f32 %v3290, %v3329
    %v3331 = vpop.f32.mrb[0].mxu0
    %v3332 = vpop.f32.mrb[0].mxu0
    %v3333 = vpop.f32.mrb[0].mxu0
    %3334 = vdwg.mxu0
    %3335 = vmatprep.subr.bf16.mxu0 0
    %3336 = vmatpush1.bf16.msra.mxu0 %v2487
    %3337 = vmatprep.subr.bf16.mxu0 0
    %3338 = vmatpush1.bf16.msra.mxu0 %v2488
    %3339 = vmatprep.subr.bf16.mxu0 0
    %3340 = vmatpush1.bf16.msra.mxu0 %v2489
    %3341 = vmatprep.subr.bf16.mxu0 0
    %3342 = vmatpush1.bf16.msra.mxu0 %v2490
    %3343 = vmatprep.subr.bf16.mxu0 0
    %3344 = vmatpush1.bf16.msra.mxu0 %v2491
    %3345 = vmatprep.subr.bf16.mxu0 0
    %3346 = vmatpush1.bf16.msra.mxu0 %v2492
    %3347 = vmatprep.subr.bf16.mxu0 0
    %3348 = vmatpush1.bf16.msra.mxu0 %v2493
    %3349 = vmatprep.subr.bf16.mxu0 0
    %3350 = vmatpush1.bf16.msra.mxu0 %v2494
    %3351 = vmatprep.subr.bf16.mxu0 0
    %3352 = vmatpush1.bf16.msra.mxu0 %v2495
    %3353 = vmatprep.subr.bf16.mxu0 0
    %3354 = vmatpush1.bf16.msra.mxu0 %v2496
    %3355 = vmatprep.subr.bf16.mxu0 0
    %3356 = vmatpush1.bf16.msra.mxu0 %v2497
    %3357 = vmatprep.subr.bf16.mxu0 0
    %3358 = vmatpush1.bf16.msra.mxu0 %v2498
    %3359 = vmatprep.subr.bf16.mxu0 0
    %3360 = vmatpush1.bf16.msra.mxu0 %v2499
    %3361 = vmatprep.subr.bf16.mxu0 0
    %3362 = vmatpush1.bf16.msra.mxu0 %v2500
    %3363 = vmatprep.subr.bf16.mxu0 0
    %3364 = vmatpush1.bf16.msra.mxu0 %v2501
    %3365 = vmatprep.subr.bf16.mxu0 0
    %3366 = vmatpush1.bf16.msra.mxu0 %v2502
    %3367 = vmatprep.mubr.bf16.mxu0 %v312
    %3368 = vmatmul.mubr.bf16.gmra.mrb[0].mxu0 %v311
    %v3369 = vpop.f32.mrb[0].mxu0
    %v3370 = vadd.f32 %v3330, %v3369
    %v3371 = vpop.f32.mrb[0].mxu0
    %v3372 = vpop.f32.mrb[0].mxu0
    %v3373 = vpop.f32.mrb[0].mxu0
    %3374 = vdwg.mxu0
    %3375 = vmatprep.subr.bf16.mxu0 0
    %3376 = vmatpush1.bf16.msra.mxu0 %v2503
    %3377 = vmatprep.subr.bf16.mxu0 0
    %3378 = vmatpush1.bf16.msra.mxu0 %v2504
    %3379 = vmatprep.subr.bf16.mxu0 0
    %3380 = vmatpush1.bf16.msra.mxu0 %v2505
    %3381 = vmatprep.subr.bf16.mxu0 0
    %3382 = vmatpush1.bf16.msra.mxu0 %v2506
    %3383 = vmatprep.subr.bf16.mxu0 0
    %3384 = vmatpush1.bf16.msra.mxu0 %v2507
    %3385 = vmatprep.subr.bf16.mxu0 0
    %3386 = vmatpush1.bf16.msra.mxu0 %v2508
    %3387 = vmatprep.subr.bf16.mxu0 0
    %3388 = vmatpush1.bf16.msra.mxu0 %v2509
    %3389 = vmatprep.subr.bf16.mxu0 0
    %3390 = vmatpush1.bf16.msra.mxu0 %v2510
    %3391 = vmatprep.subr.bf16.mxu0 0
    %3392 = vmatpush1.bf16.msra.mxu0 %v2511
    %3393 = vmatprep.subr.bf16.mxu0 0
    %3394 = vmatpush1.bf16.msra.mxu0 %v2512
    %3395 = vmatprep.subr.bf16.mxu0 0
    %3396 = vmatpush1.bf16.msra.mxu0 %v2513
    %3397 = vmatprep.subr.bf16.mxu0 0
    %3398 = vmatpush1.bf16.msra.mxu0 %v2514
    %3399 = vmatprep.subr.bf16.mxu0 0
    %3400 = vmatpush1.bf16.msra.mxu0 %v2515
    %3401 = vmatprep.subr.bf16.mxu0 0
    %3402 = vmatpush1.bf16.msra.mxu0 %v2516
    %3403 = vmatprep.subr.bf16.mxu0 0
    %3404 = vmatpush1.bf16.msra.mxu0 %v2517
    %3405 = vmatprep.subr.bf16.mxu0 0
    %3406 = vmatpush1.bf16.msra.mxu0 %v2518
    %3407 = vmatprep.mubr.bf16.mxu0 %v314
    %3408 = vmatmul.mubr.bf16.gmra.mrb[0].mxu0 %v313
    %v3409 = vpop.f32.mrb[0].mxu0
    %v3410 = vadd.f32 %v3370, %v3409
    %v3411 = vpop.f32.mrb[0].mxu0
    %v3412 = vpop.f32.mrb[0].mxu0
    %v3413 = vpop.f32.mrb[0].mxu0
    %3414 = vdwg.mxu0
    %3415 = vmatprep.subr.bf16.mxu0 0
    %3416 = vmatpush1.bf16.msra.mxu0 %v2519
    %3417 = vmatprep.subr.bf16.mxu0 0
    %3418 = vmatpush1.bf16.msra.mxu0 %v2520
    %3419 = vmatprep.subr.bf16.mxu0 0
    %3420 = vmatpush1.bf16.msra.mxu0 %v2521
    %3421 = vmatprep.subr.bf16.mxu0 0
    %3422 = vmatpush1.bf16.msra.mxu0 %v2522
    %3423 = vmatprep.subr.bf16.mxu0 0
    %3424 = vmatpush1.bf16.msra.mxu0 %v2523
    %3425 = vmatprep.subr.bf16.mxu0 0
    %3426 = vmatpush1.bf16.msra.mxu0 %v2524
    %3427 = vmatprep.subr.bf16.mxu0 0
    %3428 = vmatpush1.bf16.msra.mxu0 %v2525
    %3429 = vmatprep.subr.bf16.mxu0 0
    %3430 = vmatpush1.bf16.msra.mxu0 %v2526
    %3431 = vmatprep.subr.bf16.mxu0 0
    %3432 = vmatpush1.bf16.msra.mxu0 %v2527
    %3433 = vmatprep.subr.bf16.mxu0 0
    %3434 = vmatpush1.bf16.msra.mxu0 %v2528
    %3435 = vmatprep.subr.bf16.mxu0 0
    %3436 = vmatpush1.bf16.msra.mxu0 %v2529
    %3437 = vmatprep.subr.bf16.mxu0 0
    %3438 = vmatpush1.bf16.msra.mxu0 %v2530
    %3439 = vmatprep.subr.bf16.mxu0 0
    %3440 = vmatpush1.bf16.msra.mxu0 %v2531
    %3441 = vmatprep.subr.bf16.mxu0 0
    %3442 = vmatpush1.bf16.msra.mxu0 %v2532
    %3443 = vmatprep.subr.bf16.mxu0 0
    %3444 = vmatpush1.bf16.msra.mxu0 %v2533
    %3445 = vmatprep.subr.bf16.mxu0 0
    %3446 = vmatpush1.bf16.msra.mxu0 %v2534
    %3447 = vmatprep.mubr.bf16.mxu0 %v316
    %3448 = vmatmul.mubr.bf16.gmra.mrb[0].mxu0 %v315
    %v3449 = vpop.f32.mrb[0].mxu0
    %v3450 = vadd.f32 %v3410, %v3449
    %v3451 = vpop.f32.mrb[0].mxu0
    %v3452 = vpop.f32.mrb[0].mxu0
    %v3453 = vpop.f32.mrb[0].mxu0
    %3454 = vdwg.mxu0
    %3455 = vmatprep.subr.bf16.mxu0 0
    %3456 = vmatpush1.bf16.msra.mxu0 %v2535
    %3457 = vmatprep.subr.bf16.mxu0 0
    %3458 = vmatpush1.bf16.msra.mxu0 %v2536
    %3459 = vmatprep.subr.bf16.mxu0 0
    %3460 = vmatpush1.bf16.msra.mxu0 %v2537
    %3461 = vmatprep.subr.bf16.mxu0 0
    %3462 = vmatpush1.bf16.msra.mxu0 %v2538
    %3463 = vmatprep.subr.bf16.mxu0 0
    %3464 = vmatpush1.bf16.msra.mxu0 %v2539
    %3465 = vmatprep.subr.bf16.mxu0 0
    %3466 = vmatpush1.bf16.msra.mxu0 %v2540
    %3467 = vmatprep.subr.bf16.mxu0 0
    %3468 = vmatpush1.bf16.msra.mxu0 %v2541
    %3469 = vmatprep.subr.bf16.mxu0 0
    %3470 = vmatpush1.bf16.msra.mxu0 %v2542
    %3471 = vmatprep.subr.bf16.mxu0 0
    %3472 = vmatpush1.bf16.msra.mxu0 %v2543
    %3473 = vmatprep.subr.bf16.mxu0 0
    %3474 = vmatpush1.bf16.msra.mxu0 %v2544
    %3475 = vmatprep.subr.bf16.mxu0 0
    %3476 = vmatpush1.bf16.msra.mxu0 %v2545
    %3477 = vmatprep.subr.bf16.mxu0 0
    %3478 = vmatpush1.bf16.msra.mxu0 %v2546
    %3479 = vmatprep.subr.bf16.mxu0 0
    %3480 = vmatpush1.bf16.msra.mxu0 %v2547
    %3481 = vmatprep.subr.bf16.mxu0 0
    %3482 = vmatpush1.bf16.msra.mxu0 %v2548
    %3483 = vmatprep.subr.bf16.mxu0 0
    %3484 = vmatpush1.bf16.msra.mxu0 %v2549
    %3485 = vmatprep.subr.bf16.mxu0 0
    %3486 = vmatpush1.bf16.msra.mxu0 %v2550
    %3487 = vmatprep.mubr.bf16.mxu0 %v318
    %3488 = vmatmul.mubr.bf16.gmra.mrb[0].mxu0 %v317
    %v3489 = vpop.f32.mrb[0].mxu0
    %v3490 = vadd.f32 %v3450, %v3489
    %v3491 = vpop.f32.mrb[0].mxu0
    %v3492 = vpop.f32.mrb[0].mxu0
    %v3493 = vpop.f32.mrb[0].mxu0
    %3494 = vdwg.mxu0
    %3495 = vmatprep.subr.bf16.mxu0 0
    %3496 = vmatpush1.bf16.msra.mxu0 %v2551
    %3497 = vmatprep.subr.bf16.mxu0 0
    %3498 = vmatpush1.bf16.msra.mxu0 %v2552
    %3499 = vmatprep.subr.bf16.mxu0 0
    %3500 = vmatpush1.bf16.msra.mxu0 %v2553
    %3501 = vmatprep.subr.bf16.mxu0 0
    %3502 = vmatpush1.bf16.msra.mxu0 %v2554
    %3503 = vmatprep.subr.bf16.mxu0 0
    %3504 = vmatpush1.bf16.msra.mxu0 %v2555
    %3505 = vmatprep.subr.bf16.mxu0 0
    %3506 = vmatpush1.bf16.msra.mxu0 %v2556
    %3507 = vmatprep.subr.bf16.mxu0 0
    %3508 = vmatpush1.bf16.msra.mxu0 %v2557
    %3509 = vmatprep.subr.bf16.mxu0 0
    %3510 = vmatpush1.bf16.msra.mxu0 %v2558
    %3511 = vmatprep.subr.bf16.mxu0 0
    %3512 = vmatpush1.bf16.msra.mxu0 %v2559
    %3513 = vmatprep.subr.bf16.mxu0 0
    %3514 = vmatpush1.bf16.msra.mxu0 %v2560
    %3515 = vmatprep.subr.bf16.mxu0 0
    %3516 = vmatpush1.bf16.msra.mxu0 %v2561
    %3517 = vmatprep.subr.bf16.mxu0 0
    %3518 = vmatpush1.bf16.msra.mxu0 %v2562
    %3519 = vmatprep.subr.bf16.mxu0 0
    %3520 = vmatpush1.bf16.msra.mxu0 %v2563
    %3521 = vmatprep.subr.bf16.mxu0 0
    %3522 = vmatpush1.bf16.msra.mxu0 %v2564
    %3523 = vmatprep.subr.bf16.mxu0 0
    %3524 = vmatpush1.bf16.msra.mxu0 %v2565
    %3525 = vmatprep.subr.bf16.mxu0 0
    %3526 = vmatpush1.bf16.msra.mxu0 %v2566
    %3527 = vmatprep.mubr.bf16.mxu0 %v320
    %3528 = vmatmul.mubr.bf16.gmra.mrb[0].mxu0 %v319
    %v3529 = vpop.f32.mrb[0].mxu0
    %v3530 = vadd.f32 %v3490, %v3529
    %v3531 = vpop.f32.mrb[0].mxu0
    %v3532 = vpop.f32.mrb[0].mxu0
    %v3533 = vpop.f32.mrb[0].mxu0
    %3534 = vdwg.mxu0
    %3535 = vmatprep.subr.bf16.mxu0 0
    %3536 = vmatpush1.bf16.msra.mxu0 %v2567
    %3537 = vmatprep.subr.bf16.mxu0 0
    %3538 = vmatpush1.bf16.msra.mxu0 %v2568
    %3539 = vmatprep.subr.bf16.mxu0 0
    %3540 = vmatpush1.bf16.msra.mxu0 %v2569
    %3541 = vmatprep.subr.bf16.mxu0 0
    %3542 = vmatpush1.bf16.msra.mxu0 %v2570
    %3543 = vmatprep.subr.bf16.mxu0 0
    %3544 = vmatpush1.bf16.msra.mxu0 %v2571
    %3545 = vmatprep.subr.bf16.mxu0 0
    %3546 = vmatpush1.bf16.msra.mxu0 %v2572
    %3547 = vmatprep.subr.bf16.mxu0 0
    %3548 = vmatpush1.bf16.msra.mxu0 %v2573
    %3549 = vmatprep.subr.bf16.mxu0 0
    %3550 = vmatpush1.bf16.msra.mxu0 %v2574
    %3551 = vmatprep.subr.bf16.mxu0 0
    %3552 = vmatpush1.bf16.msra.mxu0 %v2575
    %3553 = vmatprep.subr.bf16.mxu0 0
    %3554 = vmatpush1.bf16.msra.mxu0 %v2576
    %3555 = vmatprep.subr.bf16.mxu0 0
    %3556 = vmatpush1.bf16.msra.mxu0 %v2577
    %3557 = vmatprep.subr.bf16.mxu0 0
    %3558 = vmatpush1.bf16.msra.mxu0 %v2578
    %3559 = vmatprep.subr.bf16.mxu0 0
    %3560 = vmatpush1.bf16.msra.mxu0 %v2579
    %3561 = vmatprep.subr.bf16.mxu0 0
    %3562 = vmatpush1.bf16.msra.mxu0 %v2580
    %3563 = vmatprep.subr.bf16.mxu0 0
    %3564 = vmatpush1.bf16.msra.mxu0 %v2581
    %3565 = vmatprep.subr.bf16.mxu0 0
    %3566 = vmatpush1.bf16.msra.mxu0 %v2582
    %3567 = vmatprep.mubr.bf16.mxu0 %v322
    %3568 = vmatmul.mubr.bf16.gmra.mrb[0].mxu0 %v321
    %v3569 = vpop.f32.mrb[0].mxu0
    %v3570 = vadd.f32 %v3530, %v3569
    %v3571 = vpop.f32.mrb[0].mxu0
    %v3572 = vpop.f32.mrb[0].mxu0
    %v3573 = vpop.f32.mrb[0].mxu0
    %3574 = vdwg.mxu0
    %3575 = vmatprep.subr.bf16.mxu0 0
    %3576 = vmatpush1.bf16.msra.mxu0 %v2583
    %3577 = vmatprep.subr.bf16.mxu0 0
    %3578 = vmatpush1.bf16.msra.mxu0 %v2584
    %3579 = vmatprep.subr.bf16.mxu0 0
    %3580 = vmatpush1.bf16.msra.mxu0 %v2585
    %3581 = vmatprep.subr.bf16.mxu0 0
    %3582 = vmatpush1.bf16.msra.mxu0 %v2586
    %3583 = vmatprep.subr.bf16.mxu0 0
    %3584 = vmatpush1.bf16.msra.mxu0 %v2587
    %3585 = vmatprep.subr.bf16.mxu0 0
    %3586 = vmatpush1.bf16.msra.mxu0 %v2588
    %3587 = vmatprep.subr.bf16.mxu0 0
    %3588 = vmatpush1.bf16.msra.mxu0 %v2589
    %3589 = vmatprep.subr.bf16.mxu0 0
    %3590 = vmatpush1.bf16.msra.mxu0 %v2590
    %3591 = vmatprep.subr.bf16.mxu0 0
    %3592 = vmatpush1.bf16.msra.mxu0 %v2591
    %3593 = vmatprep.subr.bf16.mxu0 0
    %3594 = vmatpush1.bf16.msra.mxu0 %v2592
    %3595 = vmatprep.subr.bf16.mxu0 0
    %3596 = vmatpush1.bf16.msra.mxu0 %v2593
    %3597 = vmatprep.subr.bf16.mxu0 0
    %3598 = vmatpush1.bf16.msra.mxu0 %v2594
    %3599 = vmatprep.subr.bf16.mxu0 0
    %3600 = vmatpush1.bf16.msra.mxu0 %v2595
    %3601 = vmatprep.subr.bf16.mxu0 0
    %3602 = vmatpush1.bf16.msra.mxu0 %v2596
    %3603 = vmatprep.subr.bf16.mxu0 0
    %3604 = vmatpush1.bf16.msra.mxu0 %v2597
    %3605 = vmatprep.subr.bf16.mxu0 0
    %3606 = vmatpush1.bf16.msra.mxu0 %v2598
    %3607 = vmatprep.mubr.bf16.mxu0 %v324
    %3608 = vmatmul.mubr.bf16.gmra.mrb[0].mxu0 %v323
    %v3609 = vpop.f32.mrb[0].mxu0
    %v3610 = vadd.f32 %v3570, %v3609
    %v3611 = vpop.f32.mrb[0].mxu0
    %v3612 = vpop.f32.mrb[0].mxu0
    %v3613 = vpop.f32.mrb[0].mxu0
    %3614 = vdwg.mxu0
    %3615 = vmatprep.subr.bf16.mxu0 0
    %3616 = vmatpush1.bf16.msra.mxu0 %v2599
    %3617 = vmatprep.subr.bf16.mxu0 0
    %3618 = vmatpush1.bf16.msra.mxu0 %v2600
    %3619 = vmatprep.subr.bf16.mxu0 0
    %3620 = vmatpush1.bf16.msra.mxu0 %v2601
    %3621 = vmatprep.subr.bf16.mxu0 0
    %3622 = vmatpush1.bf16.msra.mxu0 %v2602
    %3623 = vmatprep.subr.bf16.mxu0 0
    %3624 = vmatpush1.bf16.msra.mxu0 %v2603
    %3625 = vmatprep.subr.bf16.mxu0 0
    %3626 = vmatpush1.bf16.msra.mxu0 %v2604
    %3627 = vmatprep.subr.bf16.mxu0 0
    %3628 = vmatpush1.bf16.msra.mxu0 %v2605
    %3629 = vmatprep.subr.bf16.mxu0 0
    %3630 = vmatpush1.bf16.msra.mxu0 %v2606
    %3631 = vmatprep.subr.bf16.mxu0 0
    %3632 = vmatpush1.bf16.msra.mxu0 %v2607
    %3633 = vmatprep.subr.bf16.mxu0 0
    %3634 = vmatpush1.bf16.msra.mxu0 %v2608
    %3635 = vmatprep.subr.bf16.mxu0 0
    %3636 = vmatpush1.bf16.msra.mxu0 %v2609
    %3637 = vmatprep.subr.bf16.mxu0 0
    %3638 = vmatpush1.bf16.msra.mxu0 %v2610
    %3639 = vmatprep.subr.bf16.mxu0 0
    %3640 = vmatpush1.bf16.msra.mxu0 %v2611
    %3641 = vmatprep.subr.bf16.mxu0 0
    %3642 = vmatpush1.bf16.msra.mxu0 %v2612
    %3643 = vmatprep.subr.bf16.mxu0 0
    %3644 = vmatpush1.bf16.msra.mxu0 %v2613
    %3645 = vmatprep.subr.bf16.mxu0 0
    %3646 = vmatpush1.bf16.msra.mxu0 %v2614
    %3647 = vmatprep.mubr.bf16.mxu0 %v326
    %3648 = vmatmul.mubr.bf16.gmra.mrb[0].mxu0 %v325
    %v3649 = vpop.f32.mrb[0].mxu0
    %v3650 = vadd.f32 %v3610, %v3649
    %v3651 = vpop.f32.mrb[0].mxu0
    %v3652 = vpop.f32.mrb[0].mxu0
    %v3653 = vpop.f32.mrb[0].mxu0
    %3654 = vdwg.mxu0
    %3655 = vmatprep.subr.bf16.mxu0 0
    %3656 = vmatpush1.bf16.msra.mxu0 %v2615
    %3657 = vmatprep.subr.bf16.mxu0 0
    %3658 = vmatpush1.bf16.msra.mxu0 %v2616
    %3659 = vmatprep.subr.bf16.mxu0 0
    %3660 = vmatpush1.bf16.msra.mxu0 %v2617
    %3661 = vmatprep.subr.bf16.mxu0 0
    %3662 = vmatpush1.bf16.msra.mxu0 %v2618
    %3663 = vmatprep.subr.bf16.mxu0 0
    %3664 = vmatpush1.bf16.msra.mxu0 %v2619
    %3665 = vmatprep.subr.bf16.mxu0 0
    %3666 = vmatpush1.bf16.msra.mxu0 %v2620
    %3667 = vmatprep.subr.bf16.mxu0 0
    %3668 = vmatpush1.bf16.msra.mxu0 %v2621
    %3669 = vmatprep.subr.bf16.mxu0 0
    %3670 = vmatpush1.bf16.msra.mxu0 %v2622
    %3671 = vmatprep.subr.bf16.mxu0 0
    %3672 = vmatpush1.bf16.msra.mxu0 %v2623
    %3673 = vmatprep.subr.bf16.mxu0 0
    %3674 = vmatpush1.bf16.msra.mxu0 %v2624
    %3675 = vmatprep.subr.bf16.mxu0 0
    %3676 = vmatpush1.bf16.msra.mxu0 %v2625
    %3677 = vmatprep.subr.bf16.mxu0 0
    %3678 = vmatpush1.bf16.msra.mxu0 %v2626
    %3679 = vmatprep.subr.bf16.mxu0 0
    %3680 = vmatpush1.bf16.msra.mxu0 %v2627
    %3681 = vmatprep.subr.bf16.mxu0 0
    %3682 = vmatpush1.bf16.msra.mxu0 %v2628
    %3683 = vmatprep.subr.bf16.mxu0 0
    %3684 = vmatpush1.bf16.msra.mxu0 %v2629
    %3685 = vmatprep.subr.bf16.mxu0 0
    %3686 = vmatpush1.bf16.msra.mxu0 %v2630
    %3687 = vmatprep.mubr.bf16.mxu0 %v328
    %3688 = vmatmul.mubr.bf16.gmra.mrb[0].mxu0 %v327
    %v3689 = vpop.f32.mrb[0].mxu0
    %v3690 = vadd.f32 %v3650, %v3689
    %v3691 = vpop.f32.mrb[0].mxu0
    %v3692 = vpop.f32.mrb[0].mxu0
    %v3693 = vpop.f32.mrb[0].mxu0
    %3694 = vdwg.mxu0
    %3695 = vmatprep.subr.bf16.mxu0 0
    %3696 = vmatpush1.bf16.msra.mxu0 %v2631
    %3697 = vmatprep.subr.bf16.mxu0 0
    %3698 = vmatpush1.bf16.msra.mxu0 %v2632
    %3699 = vmatprep.subr.bf16.mxu0 0
    %3700 = vmatpush1.bf16.msra.mxu0 %v2633
    %3701 = vmatprep.subr.bf16.mxu0 0
    %3702 = vmatpush1.bf16.msra.mxu0 %v2634
    %3703 = vmatprep.subr.bf16.mxu0 0
    %3704 = vmatpush1.bf16.msra.mxu0 %v2635
    %3705 = vmatprep.subr.bf16.mxu0 0
    %3706 = vmatpush1.bf16.msra.mxu0 %v2636
    %3707 = vmatprep.subr.bf16.mxu0 0
    %3708 = vmatpush1.bf16.msra.mxu0 %v2637
    %3709 = vmatprep.subr.bf16.mxu0 0
    %3710 = vmatpush1.bf16.msra.mxu0 %v2638
    %3711 = vmatprep.subr.bf16.mxu0 0
    %3712 = vmatpush1.bf16.msra.mxu0 %v2639
    %3713 = vmatprep.subr.bf16.mxu0 0
    %3714 = vmatpush1.bf16.msra.mxu0 %v2640
    %3715 = vmatprep.subr.bf16.mxu0 0
    %3716 = vmatpush1.bf16.msra.mxu0 %v2641
    %3717 = vmatprep.subr.bf16.mxu0 0
    %3718 = vmatpush1.bf16.msra.mxu0 %v2642
    %3719 = vmatprep.subr.bf16.mxu0 0
    %3720 = vmatpush1.bf16.msra.mxu0 %v2643
    %3721 = vmatprep.subr.bf16.mxu0 0
    %3722 = vmatpush1.bf16.msra.mxu0 %v2644
    %3723 = vmatprep.subr.bf16.mxu0 0
    %3724 = vmatpush1.bf16.msra.mxu0 %v2645
    %3725 = vmatprep.subr.bf16.mxu0 0
    %3726 = vmatpush1.bf16.msra.mxu0 %v2646
    %3727 = vmatprep.mubr.bf16.mxu0 %v330
    %3728 = vmatmul.mubr.bf16.gmra.mrb[0].mxu0 %v329
    %v3729 = vpop.f32.mrb[0].mxu0
    %v3730 = vadd.f32 %v3690, %v3729
    %v3731 = vpop.f32.mrb[0].mxu0
    %v3732 = vpop.f32.mrb[0].mxu0
    %v3733 = vpop.f32.mrb[0].mxu0
    %3734 = vdwg.mxu0
    %3735 = vmatprep.subr.bf16.mxu0 0
    %3736 = vmatpush1.bf16.msra.mxu0 %v2647
    %3737 = vmatprep.subr.bf16.mxu0 0
    %3738 = vmatpush1.bf16.msra.mxu0 %v2648
    %3739 = vmatprep.subr.bf16.mxu0 0
    %3740 = vmatpush1.bf16.msra.mxu0 %v2649
    %3741 = vmatprep.subr.bf16.mxu0 0
    %3742 = vmatpush1.bf16.msra.mxu0 %v2650
    %3743 = vmatprep.subr.bf16.mxu0 0
    %3744 = vmatpush1.bf16.msra.mxu0 %v2651
    %3745 = vmatprep.subr.bf16.mxu0 0
    %3746 = vmatpush1.bf16.msra.mxu0 %v2652
    %3747 = vmatprep.subr.bf16.mxu0 0
    %3748 = vmatpush1.bf16.msra.mxu0 %v2653
    %3749 = vmatprep.subr.bf16.mxu0 0
    %3750 = vmatpush1.bf16.msra.mxu0 %v2654
    %3751 = vmatprep.subr.bf16.mxu0 0
    %3752 = vmatpush1.bf16.msra.mxu0 %v2655
    %3753 = vmatprep.subr.bf16.mxu0 0
    %3754 = vmatpush1.bf16.msra.mxu0 %v2656
    %3755 = vmatprep.subr.bf16.mxu0 0
    %3756 = vmatpush1.bf16.msra.mxu0 %v2657
    %3757 = vmatprep.subr.bf16.mxu0 0
    %3758 = vmatpush1.bf16.msra.mxu0 %v2658
    %3759 = vmatprep.subr.bf16.mxu0 0
    %3760 = vmatpush1.bf16.msra.mxu0 %v2659
    %3761 = vmatprep.subr.bf16.mxu0 0
    %3762 = vmatpush1.bf16.msra.mxu0 %v2660
    %3763 = vmatprep.subr.bf16.mxu0 0
    %3764 = vmatpush1.bf16.msra.mxu0 %v2661
    %3765 = vmatprep.subr.bf16.mxu0 0
    %3766 = vmatpush1.bf16.msra.mxu0 %v2662
    %3767 = vmatprep.mubr.bf16.mxu0 %v332
    %3768 = vmatmul.mubr.bf16.gmra.mrb[0].mxu0 %v331
    %v3769 = vpop.f32.mrb[0].mxu0
    %v3770 = vadd.f32 %v3730, %v3769
    %v3771 = vpop.f32.mrb[0].mxu0
    %v3772 = vpop.f32.mrb[0].mxu0
    %v3773 = vpop.f32.mrb[0].mxu0
    %3774 = vdwg.mxu0
    %3775 = vmatprep.subr.bf16.mxu0 0
    %3776 = vmatpush1.bf16.msra.mxu0 %v2663
    %3777 = vmatprep.subr.bf16.mxu0 0
    %3778 = vmatpush1.bf16.msra.mxu0 %v2664
    %3779 = vmatprep.subr.bf16.mxu0 0
    %3780 = vmatpush1.bf16.msra.mxu0 %v2665
    %3781 = vmatprep.subr.bf16.mxu0 0
    %3782 = vmatpush1.bf16.msra.mxu0 %v2666
    %3783 = vmatprep.subr.bf16.mxu0 0
    %3784 = vmatpush1.bf16.msra.mxu0 %v2667
    %3785 = vmatprep.subr.bf16.mxu0 0
    %3786 = vmatpush1.bf16.msra.mxu0 %v2668
    %3787 = vmatprep.subr.bf16.mxu0 0
    %3788 = vmatpush1.bf16.msra.mxu0 %v2669
    %3789 = vmatprep.subr.bf16.mxu0 0
    %3790 = vmatpush1.bf16.msra.mxu0 %v2670
    %3791 = vmatprep.subr.bf16.mxu0 0
    %3792 = vmatpush1.bf16.msra.mxu0 %v2671
    %3793 = vmatprep.subr.bf16.mxu0 0
    %3794 = vmatpush1.bf16.msra.mxu0 %v2672
    %3795 = vmatprep.subr.bf16.mxu0 0
    %3796 = vmatpush1.bf16.msra.mxu0 %v2673
    %3797 = vmatprep.subr.bf16.mxu0 0
    %3798 = vmatpush1.bf16.msra.mxu0 %v2674
    %3799 = vmatprep.subr.bf16.mxu0 0
    %3800 = vmatpush1.bf16.msra.mxu0 %v2675
    %3801 = vmatprep.subr.bf16.mxu0 0
    %3802 = vmatpush1.bf16.msra.mxu0 %v2676
    %3803 = vmatprep.subr.bf16.mxu0 0
    %3804 = vmatpush1.bf16.msra.mxu0 %v2677
    %3805 = vmatprep.subr.bf16.mxu0 0
    %3806 = vmatpush1.bf16.msra.mxu0 %v2678
    %3807 = vmatprep.mubr.bf16.mxu0 %v334
    %3808 = vmatmul.mubr.bf16.gmra.mrb[0].mxu0 %v333
    %v3809 = vpop.f32.mrb[0].mxu0
    %v3810 = vadd.f32 %v3770, %v3809
    %v3811 = vpop.f32.mrb[0].mxu0
    %v3812 = vpop.f32.mrb[0].mxu0
    %v3813 = vpop.f32.mrb[0].mxu0
    %3814 = vdwg.mxu0
    %3815 = vmatprep.subr.bf16.mxu0 0
    %3816 = vmatpush1.bf16.msra.mxu0 %v2679
    %3817 = vmatprep.subr.bf16.mxu0 0
    %3818 = vmatpush1.bf16.msra.mxu0 %v2680
    %3819 = vmatprep.subr.bf16.mxu0 0
    %3820 = vmatpush1.bf16.msra.mxu0 %v2681
    %3821 = vmatprep.subr.bf16.mxu0 0
    %3822 = vmatpush1.bf16.msra.mxu0 %v2682
    %3823 = vmatprep.subr.bf16.mxu0 0
    %3824 = vmatpush1.bf16.msra.mxu0 %v2683
    %3825 = vmatprep.subr.bf16.mxu0 0
    %3826 = vmatpush1.bf16.msra.mxu0 %v2684
    %3827 = vmatprep.subr.bf16.mxu0 0
    %3828 = vmatpush1.bf16.msra.mxu0 %v2685
    %3829 = vmatprep.subr.bf16.mxu0 0
    %3830 = vmatpush1.bf16.msra.mxu0 %v2686
    %3831 = vmatprep.subr.bf16.mxu0 0
    %3832 = vmatpush1.bf16.msra.mxu0 %v2687
    %3833 = vmatprep.subr.bf16.mxu0 0
    %3834 = vmatpush1.bf16.msra.mxu0 %v2688
    %3835 = vmatprep.subr.bf16.mxu0 0
    %3836 = vmatpush1.bf16.msra.mxu0 %v2689
    %3837 = vmatprep.subr.bf16.mxu0 0
    %3838 = vmatpush1.bf16.msra.mxu0 %v2690
    %3839 = vmatprep.subr.bf16.mxu0 0
    %3840 = vmatpush1.bf16.msra.mxu0 %v2691
    %3841 = vmatprep.subr.bf16.mxu0 0
    %3842 = vmatpush1.bf16.msra.mxu0 %v2692
    %3843 = vmatprep.subr.bf16.mxu0 0
    %3844 = vmatpush1.bf16.msra.mxu0 %v2693
    %3845 = vmatprep.subr.bf16.mxu0 0
    %3846 = vmatpush1.bf16.msra.mxu0 %v2694
    %3847 = vmatprep.mubr.bf16.mxu0 %v336
    %3848 = vmatmul.mubr.bf16.gmra.mrb[0].mxu0 %v335
    %v3849 = vpop.f32.mrb[0].mxu0
    %v3850 = vadd.f32 %v3810, %v3849
    %v3851 = vpop.f32.mrb[0].mxu0
    %v3852 = vpop.f32.mrb[0].mxu0
    %v3853 = vpop.f32.mrb[0].mxu0
    %3854 = vdwg.mxu0
    %3855 = vmatprep.subr.bf16.mxu0 0
    %3856 = vmatpush1.bf16.msra.mxu0 %v2695
    %3857 = vmatprep.subr.bf16.mxu0 0
    %3858 = vmatpush1.bf16.msra.mxu0 %v2696
    %3859 = vmatprep.subr.bf16.mxu0 0
    %3860 = vmatpush1.bf16.msra.mxu0 %v2697
    %3861 = vmatprep.subr.bf16.mxu0 0
    %3862 = vmatpush1.bf16.msra.mxu0 %v2698
    %3863 = vmatprep.subr.bf16.mxu0 0
    %3864 = vmatpush1.bf16.msra.mxu0 %v2699
    %3865 = vmatprep.subr.bf16.mxu0 0
    %3866 = vmatpush1.bf16.msra.mxu0 %v2700
    %3867 = vmatprep.subr.bf16.mxu0 0
    %3868 = vmatpush1.bf16.msra.mxu0 %v2701
    %3869 = vmatprep.subr.bf16.mxu0 0
    %3870 = vmatpush1.bf16.msra.mxu0 %v2702
    %3871 = vmatprep.subr.bf16.mxu0 0
    %3872 = vmatpush1.bf16.msra.mxu0 %v2703
    %3873 = vmatprep.subr.bf16.mxu0 0
    %3874 = vmatpush1.bf16.msra.mxu0 %v2704
    %3875 = vmatprep.subr.bf16.mxu0 0
    %3876 = vmatpush1.bf16.msra.mxu0 %v2705
    %3877 = vmatprep.subr.bf16.mxu0 0
    %3878 = vmatpush1.bf16.msra.mxu0 %v2706
    %3879 = vmatprep.subr.bf16.mxu0 0
    %3880 = vmatpush1.bf16.msra.mxu0 %v2707
    %3881 = vmatprep.subr.bf16.mxu0 0
    %3882 = vmatpush1.bf16.msra.mxu0 %v2708
    %3883 = vmatprep.subr.bf16.mxu0 0
    %3884 = vmatpush1.bf16.msra.mxu0 %v2709
    %3885 = vmatprep.subr.bf16.mxu0 0
    %3886 = vmatpush1.bf16.msra.mxu0 %v2710
    %3887 = vmatprep.mubr.bf16.mxu0 %v338
    %3888 = vmatmul.mubr.bf16.gmra.mrb[0].mxu0 %v337
    %v3889 = vpop.f32.mrb[0].mxu0
    %v3890 = vadd.f32 %v3850, %v3889
    %v3891 = vpop.f32.mrb[0].mxu0
    %v3892 = vpop.f32.mrb[0].mxu0
    %v3893 = vpop.f32.mrb[0].mxu0
    %3894 = vdwg.mxu0
    %3895 = vmatprep.subr.bf16.mxu0 0
    %3896 = vmatpush1.bf16.msra.mxu0 %v2711
    %3897 = vmatprep.subr.bf16.mxu0 0
    %3898 = vmatpush1.bf16.msra.mxu0 %v2712
    %3899 = vmatprep.subr.bf16.mxu0 0
    %3900 = vmatpush1.bf16.msra.mxu0 0
    %3901 = vmatprep.subr.bf16.mxu0 0
    %3902 = vmatpush1.bf16.msra.mxu0 0
    %3903 = vmatprep.subr.bf16.mxu0 0
    %3904 = vmatpush1.bf16.msra.mxu0 0
    %3905 = vmatprep.subr.bf16.mxu0 0
    %3906 = vmatpush1.bf16.msra.mxu0 0
    %3907 = vmatprep.subr.bf16.mxu0 0
    %3908 = vmatpush1.bf16.msra.mxu0 0
    %3909 = vmatprep.subr.bf16.mxu0 0
    %3910 = vmatpush1.bf16.msra.mxu0 0
    %3911 = vmatprep.subr.bf16.mxu0 0
    %3912 = vmatpush1.bf16.msra.mxu0 0
    %3913 = vmatprep.subr.bf16.mxu0 0
    %3914 = vmatpush1.bf16.msra.mxu0 0
    %3915 = vmatprep.subr.bf16.mxu0 0
    %3916 = vmatpush1.bf16.msra.mxu0 0
    %3917 = vmatprep.subr.bf16.mxu0 0
    %3918 = vmatpush1.bf16.msra.mxu0 0
    %3919 = vmatprep.subr.bf16.mxu0 0
    %3920 = vmatpush1.bf16.msra.mxu0 0
    %3921 = vmatprep.subr.bf16.mxu0 0
    %3922 = vmatpush1.bf16.msra.mxu0 0
    %3923 = vmatprep.subr.bf16.mxu0 0
    %3924 = vmatpush1.bf16.msra.mxu0 0
    %3925 = vmatprep.subr.bf16.mxu0 0
    %3926 = vmatpush1.bf16.msra.mxu0 0
    %3927 = vmatprep.mubr.bf16.mxu0 0
    %3928 = vmatmul.mubr.bf16.gmra.mrb[0].mxu0 %v3053
    %v3929 = vpop.f32.mrb[0].mxu0
    %v3930 = vadd.f32 %v3890, %v3929
    %v3931 = vpop.f32.mrb[0].mxu0
    %v3932 = vpop.f32.mrb[0].mxu0
    %v3933 = vpop.f32.mrb[0].mxu0
    %3934 = vdwg.mxu0
    %v3935 = vtanh.pop %v3930
    %v3936 = vld [vmem:[%s5] sm:$0xff]
    %v3937 = vld [vmem:[%s5 + $0x8] sm:$0xff]
    %v3938 = vld [vmem:[%s5 + $0x10] sm:$0xff]
    %v3939 = vld [vmem:[%s5 + $0x18] sm:$0xff]
    %v3940 = vld [vmem:[%s5 + $0x20] sm:$0xff]
    %v3941 = vld [vmem:[%s5 + $0x28] sm:$0xff]
    %v3942 = vld [vmem:[%s5 + $0x30] sm:$0xff]
    %v3943 = vld [vmem:[%s5 + $0x38] sm:$0xff]
    %v3944 = vld [vmem:[%s5 + $0x40] sm:$0xff]
    %v3945 = vld [vmem:[%s5 + $0x48] sm:$0xff]
    %v3946 = vld [vmem:[%s5 + $0x50] sm:$0xff]
    %v3947 = vld [vmem:[%s5 + $0x58] sm:$0xff]
    %v3948 = vld [vmem:[%s5 + $0x60] sm:$0xff]
    %v3949 = vld [vmem:[%s5 + $0x68] sm:$0xff]
    %v3950 = vld [vmem:[%s5 + $0x70] sm:$0xff]
    %v3951 = vld [vmem:[%s5 + $0x78] sm:$0xff]
    %v3952 = vld [vmem:[%s6] sm:$0x1]
    %v3954 = vlaneseq
    %v3955 = vshrl.u32 %v3954, 7
    %v3956 = vsub.s32 0, %v3955
    %v3957 = vrot.slane %v3952, %v3956
    %3959 = vmatprep.subr.mxu0 0.0
    %3960 = vmatpush1.msra.mxu0 %v3936
    %3961 = vmatprep.subr.mxu0 0.0
    %3962 = vmatpush1.msra.mxu0 %v3937
    %3963 = vmatprep.subr.mxu0 0.0
    %3964 = vmatpush1.msra.mxu0 %v3938
    %3965 = vmatprep.subr.mxu0 0.0
    %3966 = vmatpush1.msra.mxu0 %v3939
    %3967 = vmatprep.subr.mxu0 0.0
    %3968 = vmatpush1.msra.mxu0 %v3940
    %3969 = vmatprep.subr.mxu0 0.0
    %3970 = vmatpush1.msra.mxu0 %v3941
    %3971 = vmatprep.subr.mxu0 0.0
    %3972 = vmatpush1.msra.mxu0 %v3942
    %3973 = vmatprep.subr.mxu0 0.0
    %3974 = vmatpush1.msra.mxu0 %v3943
    %3975 = vmatprep.subr.mxu0 0.0
    %3976 = vmatpush1.msra.mxu0 %v3944
    %3977 = vmatprep.subr.mxu0 0.0
    %3978 = vmatpush1.msra.mxu0 %v3945
    %3979 = vmatprep.subr.mxu0 0.0
    %3980 = vmatpush1.msra.mxu0 %v3946
    %3981 = vmatprep.subr.mxu0 0.0
    %3982 = vmatpush1.msra.mxu0 %v3947
    %3983 = vmatprep.subr.mxu0 0.0
    %3984 = vmatpush1.msra.mxu0 %v3948
    %3985 = vmatprep.subr.mxu0 0.0
    %3986 = vmatpush1.msra.mxu0 %v3949
    %3987 = vmatprep.subr.mxu0 0.0
    %3988 = vmatpush1.msra.mxu0 %v3950
    %3989 = vmatprep.subr.mxu0 0.0
    %3990 = vmatpush1.msra.mxu0 %v3951
    %3991 = vmatprep.subr.mxu0 0.0
    %3992 = vmatpush1.msra.mxu0 0.0
    %3993 = vmatprep.subr.mxu0 0.0
    %3994 = vmatpush1.msra.mxu0 0.0
    %3995 = vmatprep.subr.mxu0 0.0
    %3996 = vmatpush1.msra.mxu0 0.0
    %3997 = vmatprep.subr.mxu0 0.0
    %3998 = vmatpush1.msra.mxu0 0.0
    %3999 = vmatprep.subr.mxu0 0.0
    %4000 = vmatpush1.msra.mxu0 0.0
    %4001 = vmatprep.subr.mxu0 0.0
    %4002 = vmatpush1.msra.mxu0 0.0
    %4003 = vmatprep.subr.mxu0 0.0
    %4004 = vmatpush1.msra.mxu0 0.0
    %4005 = vmatprep.subr.mxu0 0.0
    %4006 = vmatpush1.msra.mxu0 0.0
    %4007 = vmatprep.subr.mxu0 0.0
    %4008 = vmatpush1.msra.mxu0 0.0
    %4009 = vmatprep.subr.mxu0 0.0
    %4010 = vmatpush1.msra.mxu0 0.0
    %4011 = vmatprep.subr.mxu0 0.0
    %4012 = vmatpush1.msra.mxu0 0.0
    %4013 = vmatprep.subr.mxu0 0.0
    %4014 = vmatpush1.msra.mxu0 0.0
    %4015 = vmatprep.subr.mxu0 0.0
    %4016 = vmatpush1.msra.mxu0 0.0
    %4017 = vmatprep.subr.mxu0 0.0
    %4018 = vmatpush1.msra.mxu0 0.0
    %4019 = vmatprep.subr.mxu0 0.0
    %4020 = vmatpush1.msra.mxu0 0.0
    %4021 = vmatprep.subr.mxu0 0.0
    %4022 = vmatpush1.msra.mxu0 0.0
    %4023 = vmatprep.mubr.f32.mxu0 0.0
    %4024 = vmatmul.mubr.f32.gmra.mrb[0].mxu0 %v3935
    %v4025 = vpop.f32.mrb[0].mxu0
    %v4026 = vadd.f32 %v3957, %v4025
    %v4027 = vpop.f32.mrb[0].mxu0
    %4028 = vdwg.mxu0
    %v4029 = vld [vmem:[%s2] sm:$0x3]
    %v4030 = vsub.f32 %v4029, %v4026
    %v4031 = vmul.f32 %v4030, %v4030
    %v4032 = vsub.f32 0.0, %v4031
    %v4033 = vmul.f32 %v4032, 50.0
    %v4034 = vsub.f32 %v4033, -1.3836466
    %vm4035 = vcmask 25600
    %4036 = vst.msk [vmem:[#allocation3] sm:$0x3] %vm4035, %v4034
    %4037 = vst.msk [vmem:[#allocation5] sm:$0x3] %vm4035, -0.88364655
    %v4038 = vld [vmem:[%s1] sm:$0xff]
    %v4039 = vld [vmem:[%s1 + $0x8] sm:$0xff]
    %v4040 = vld [vmem:[%s1 + $0x10] sm:$0xff]
    %v4041 = vld [vmem:[%s1 + $0x18] sm:$0xff]
    %v4042 = vld [vmem:[%s1 + $0x20] sm:$0xff]
    %v4043 = vld [vmem:[%s1 + $0x28] sm:$0xff]
    %v4044 = vld [vmem:[%s1 + $0x30] sm:$0xff]
    %v4045 = vld [vmem:[%s1 + $0x38] sm:$0xff]
    %v4046 = vld [vmem:[%s1 + $0x40] sm:$0xff]
    %v4047 = vld [vmem:[%s1 + $0x48] sm:$0xff]
    %v4048 = vld [vmem:[%s1 + $0x50] sm:$0x3f]
    %v4060 = vcombine.high %v4038, %v4038
    %v4062 = vunpack.c.l.s4 1983009808
    %v4063 = vunpack.c.0.s8 %v4062
    %v4064 = vlaneseq
    %v4065 = vshrl.u32 %v4064, 7
    %v4066 = vsub.s32 %v4063, %v4065
    %v4067 = vrot.slane %v4038, %v4066
    %v4069 = vunpack.c.l.s4 1983009808
    %v4070 = vunpack.c.0.s8 %v4069
    %v4071 = vlaneseq
    %v4072 = vshrl.u32 %v4071, 7
    %v4073 = vsub.s32 %v4070, %v4072
    %v4074 = vrot.slane %v4060, %v4073
    %v4075 = vcombine.high %v4067, %v4067
    %v4076 = vcombine.high %v4074, %v4074
    %v4077 = vcombine.high %v4039, %v4039
    %v4079 = vunpack.c.l.s4 1983009808
    %v4080 = vunpack.c.0.s8 %v4079
    %v4081 = vlaneseq
    %v4082 = vshrl.u32 %v4081, 7
    %v4083 = vsub.s32 %v4080, %v4082
    %v4084 = vrot.slane %v4039, %v4083
    %v4086 = vunpack.c.l.s4 1983009808
    %v4087 = vunpack.c.0.s8 %v4086
    %v4088 = vlaneseq
    %v4089 = vshrl.u32 %v4088, 7
    %v4090 = vsub.s32 %v4087, %v4089
    %v4091 = vrot.slane %v4077, %v4090
    %v4092 = vcombine.high %v4084, %v4084
    %v4093 = vcombine.high %v4091, %v4091
    %v4094 = vcombine.high %v4040, %v4040
    %v4096 = vunpack.c.l.s4 1983009808
    %v4097 = vunpack.c.0.s8 %v4096
    %v4098 = vlaneseq
    %v4099 = vshrl.u32 %v4098, 7
    %v4100 = vsub.s32 %v4097, %v4099
    %v4101 = vrot.slane %v4040, %v4100
    %v4103 = vunpack.c.l.s4 1983009808
    %v4104 = vunpack.c.0.s8 %v4103
    %v4105 = vlaneseq
    %v4106 = vshrl.u32 %v4105, 7
    %v4107 = vsub.s32 %v4104, %v4106
    %v4108 = vrot.slane %v4094, %v4107
    %v4109 = vcombine.high %v4101, %v4101
    %v4110 = vcombine.high %v4108, %v4108
    %v4111 = vcombine.high %v4041, %v4041
    %v4113 = vunpack.c.l.s4 1983009808
    %v4114 = vunpack.c.0.s8 %v4113
    %v4115 = vlaneseq
    %v4116 = vshrl.u32 %v4115, 7
    %v4117 = vsub.s32 %v4114, %v4116
    %v4118 = vrot.slane %v4041, %v4117
    %v4120 = vunpack.c.l.s4 1983009808
    %v4121 = vunpack.c.0.s8 %v4120
    %v4122 = vlaneseq
    %v4123 = vshrl.u32 %v4122, 7
    %v4124 = vsub.s32 %v4121, %v4123
    %v4125 = vrot.slane %v4111, %v4124
    %v4126 = vcombine.high %v4118, %v4118
    %v4127 = vcombine.high %v4125, %v4125
    %v4128 = vcombine.high %v4042, %v4042
    %v4130 = vunpack.c.l.s4 1983009808
    %v4131 = vunpack.c.0.s8 %v4130
    %v4132 = vlaneseq
    %v4133 = vshrl.u32 %v4132, 7
    %v4134 = vsub.s32 %v4131, %v4133
    %v4135 = vrot.slane %v4042, %v4134
    %v4137 = vunpack.c.l.s4 1983009808
    %v4138 = vunpack.c.0.s8 %v4137
    %v4139 = vlaneseq
    %v4140 = vshrl.u32 %v4139, 7
    %v4141 = vsub.s32 %v4138, %v4140
    %v4142 = vrot.slane %v4128, %v4141
    %v4143 = vcombine.high %v4135, %v4135
    %v4144 = vcombine.high %v4142, %v4142
    %v4145 = vcombine.high %v4043, %v4043
    %v4147 = vunpack.c.l.s4 1983009808
    %v4148 = vunpack.c.0.s8 %v4147
    %v4149 = vlaneseq
    %v4150 = vshrl.u32 %v4149, 7
    %v4151 = vsub.s32 %v4148, %v4150
    %v4152 = vrot.slane %v4043, %v4151
    %v4154 = vunpack.c.l.s4 1983009808
    %v4155 = vunpack.c.0.s8 %v4154
    %v4156 = vlaneseq
    %v4157 = vshrl.u32 %v4156, 7
    %v4158 = vsub.s32 %v4155, %v4157
    %v4159 = vrot.slane %v4145, %v4158
    %v4160 = vcombine.high %v4152, %v4152
    %v4161 = vcombine.high %v4159, %v4159
    %v4162 = vcombine.high %v4044, %v4044
    %v4164 = vunpack.c.l.s4 1983009808
    %v4165 = vunpack.c.0.s8 %v4164
    %v4166 = vlaneseq
    %v4167 = vshrl.u32 %v4166, 7
    %v4168 = vsub.s32 %v4165, %v4167
    %v4169 = vrot.slane %v4044, %v4168
    %v4171 = vunpack.c.l.s4 1983009808
    %v4172 = vunpack.c.0.s8 %v4171
    %v4173 = vlaneseq
    %v4174 = vshrl.u32 %v4173, 7
    %v4175 = vsub.s32 %v4172, %v4174
    %v4176 = vrot.slane %v4162, %v4175
    %v4177 = vcombine.high %v4169, %v4169
    %v4178 = vcombine.high %v4176, %v4176
    %v4179 = vcombine.high %v4045, %v4045
    %v4181 = vunpack.c.l.s4 1983009808
    %v4182 = vunpack.c.0.s8 %v4181
    %v4183 = vlaneseq
    %v4184 = vshrl.u32 %v4183, 7
    %v4185 = vsub.s32 %v4182, %v4184
    %v4186 = vrot.slane %v4045, %v4185
    %v4188 = vunpack.c.l.s4 1983009808
    %v4189 = vunpack.c.0.s8 %v4188
    %v4190 = vlaneseq
    %v4191 = vshrl.u32 %v4190, 7
    %v4192 = vsub.s32 %v4189, %v4191
    %v4193 = vrot.slane %v4179, %v4192
    %v4194 = vcombine.high %v4186, %v4186
    %v4195 = vcombine.high %v4193, %v4193
    %v4196 = vcombine.high %v4046, %v4046
    %v4198 = vunpack.c.l.s4 1983009808
    %v4199 = vunpack.c.0.s8 %v4198
    %v4200 = vlaneseq
    %v4201 = vshrl.u32 %v4200, 7
    %v4202 = vsub.s32 %v4199, %v4201
    %v4203 = vrot.slane %v4046, %v4202
    %v4205 = vunpack.c.l.s4 1983009808
    %v4206 = vunpack.c.0.s8 %v4205
    %v4207 = vlaneseq
    %v4208 = vshrl.u32 %v4207, 7
    %v4209 = vsub.s32 %v4206, %v4208
    %v4210 = vrot.slane %v4196, %v4209
    %v4211 = vcombine.high %v4203, %v4203
    %v4212 = vcombine.high %v4210, %v4210
    %v4213 = vcombine.high %v4047, %v4047
    %v4215 = vunpack.c.l.s4 1983009808
    %v4216 = vunpack.c.0.s8 %v4215
    %v4217 = vlaneseq
    %v4218 = vshrl.u32 %v4217, 7
    %v4219 = vsub.s32 %v4216, %v4218
    %v4220 = vrot.slane %v4047, %v4219
    %v4222 = vunpack.c.l.s4 1983009808
    %v4223 = vunpack.c.0.s8 %v4222
    %v4224 = vlaneseq
    %v4225 = vshrl.u32 %v4224, 7
    %v4226 = vsub.s32 %v4223, %v4225
    %v4227 = vrot.slane %v4213, %v4226
    %v4228 = vcombine.high %v4220, %v4220
    %v4229 = vcombine.high %v4227, %v4227
    %v4230 = vcombine.high %v4048, %v4048
    %v4232 = vunpack.c.l.s4 1983009808
    %v4233 = vunpack.c.0.s8 %v4232
    %v4234 = vlaneseq
    %v4235 = vshrl.u32 %v4234, 7
    %v4236 = vsub.s32 %v4233, %v4235
    %v4237 = vrot.slane %v4048, %v4236
    %v4239 = vunpack.c.l.s4 1983009808
    %v4240 = vunpack.c.0.s8 %v4239
    %v4241 = vlaneseq
    %v4242 = vshrl.u32 %v4241, 7
    %v4243 = vsub.s32 %v4240, %v4242
    %v4244 = vrot.slane %v4230, %v4243
    %v4245 = vcombine.high %v4237, %v4237
    %v4289 = vpack.c.bf16 %v4067, %v4067
    %v4290 = vpack.c.bf16 %v4075, %v4075
    %v4291 = vpack.c.bf16 %v4074, %v4074
    %v4292 = vpack.c.bf16 %v4076, %v4076
    %v4293 = vpack.c.bf16 %v4084, %v4084
    %v4294 = vpack.c.bf16 %v4092, %v4092
    %v4295 = vpack.c.bf16 %v4091, %v4091
    %v4296 = vpack.c.bf16 %v4093, %v4093
    %v4297 = vpack.c.bf16 %v4101, %v4101
    %v4298 = vpack.c.bf16 %v4109, %v4109
    %v4299 = vpack.c.bf16 %v4108, %v4108
    %v4300 = vpack.c.bf16 %v4110, %v4110
    %v4301 = vpack.c.bf16 %v4118, %v4118
    %v4302 = vpack.c.bf16 %v4126, %v4126
    %v4303 = vpack.c.bf16 %v4125, %v4125
    %v4304 = vpack.c.bf16 %v4127, %v4127
    %v4305 = vpack.c.bf16 %v4135, %v4135
    %v4306 = vpack.c.bf16 %v4143, %v4143
    %v4307 = vpack.c.bf16 %v4142, %v4142
    %v4308 = vpack.c.bf16 %v4144, %v4144
    %v4309 = vpack.c.bf16 %v4152, %v4152
    %v4310 = vpack.c.bf16 %v4160, %v4160
    %v4311 = vpack.c.bf16 %v4159, %v4159
    %v4312 = vpack.c.bf16 %v4161, %v4161
    %v4313 = vpack.c.bf16 %v4169, %v4169
    %v4314 = vpack.c.bf16 %v4177, %v4177
    %v4315 = vpack.c.bf16 %v4176, %v4176
    %v4316 = vpack.c.bf16 %v4178, %v4178
    %v4317 = vpack.c.bf16 %v4186, %v4186
    %v4318 = vpack.c.bf16 %v4194, %v4194
    %v4319 = vpack.c.bf16 %v4193, %v4193
    %v4320 = vpack.c.bf16 %v4195, %v4195
    %v4321 = vpack.c.bf16 %v4203, %v4203
    %v4322 = vpack.c.bf16 %v4211, %v4211
    %v4323 = vpack.c.bf16 %v4210, %v4210
    %v4324 = vpack.c.bf16 %v4212, %v4212
    %v4325 = vpack.c.bf16 %v4220, %v4220
    %v4326 = vpack.c.bf16 %v4228, %v4228
    %v4327 = vpack.c.bf16 %v4227, %v4227
    %v4328 = vpack.c.bf16 %v4229, %v4229
    %v4329 = vpack.c.bf16 %v4237, %v4237
    %v4330 = vpack.c.bf16 %v4245, %v4245
    %v4331 = vpack.c.bf16 %v4244, %v4244
    %v4332 = vld [vmem:[%s7] sm:$0xf]
    %v4333 = vld [vmem:[%s7 + $0x4] sm:$0xf]
    %v4334 = vld [vmem:[%s7 + $0x8] sm:$0xf]
    %v4335 = vld [vmem:[%s7 + $0xc] sm:$0xf]
    %v4336 = vld [vmem:[%s7 + $0x10] sm:$0xf]
    %v4337 = vld [vmem:[%s7 + $0x14] sm:$0xf]
    %v4338 = vld [vmem:[%s7 + $0x18] sm:$0xf]
    %v4339 = vld [vmem:[%s7 + $0x1c] sm:$0xf]
    %v4340 = vld [vmem:[%s7 + $0x20] sm:$0xf]
    %v4341 = vld [vmem:[%s7 + $0x24] sm:$0xf]
    %v4342 = vld [vmem:[%s7 + $0x28] sm:$0xf]
    %v4343 = vld [vmem:[%s7 + $0x2c] sm:$0xf]
    %v4344 = vld [vmem:[%s7 + $0x30] sm:$0xf]
    %v4345 = vld [vmem:[%s7 + $0x34] sm:$0xf]
    %v4346 = vld [vmem:[%s7 + $0x38] sm:$0xf]
    %v4347 = vld [vmem:[%s7 + $0x3c] sm:$0xf]
    %v4348 = vld [vmem:[%s7 + $0x40] sm:$0xf]
    %v4349 = vld [vmem:[%s7 + $0x44] sm:$0xf]
    %v4350 = vld [vmem:[%s7 + $0x48] sm:$0xf]
    %v4351 = vld [vmem:[%s7 + $0x4c] sm:$0xf]
    %v4352 = vld [vmem:[%s7 + $0x50] sm:$0xf]
    %v4353 = vld [vmem:[%s7 + $0x54] sm:$0xf]
    %v4354 = vld [vmem:[%s7 + $0x58] sm:$0xf]
    %v4355 = vld [vmem:[%s7 + $0x5c] sm:$0xf]
    %v4356 = vld [vmem:[%s7 + $0x60] sm:$0xf]
    %v4357 = vld [vmem:[%s7 + $0x64] sm:$0xf]
    %v4358 = vld [vmem:[%s7 + $0x68] sm:$0xf]
    %v4359 = vld [vmem:[%s7 + $0x6c] sm:$0xf]
    %v4360 = vld [vmem:[%s7 + $0x70] sm:$0xf]
    %v4361 = vld [vmem:[%s7 + $0x74] sm:$0xf]
    %v4362 = vld [vmem:[%s7 + $0x78] sm:$0xf]
    %v4363 = vld [vmem:[%s7 + $0x7c] sm:$0xf]
    %v4364 = vld [vmem:[%s7 + $0x80] sm:$0xf]
    %v4365 = vld [vmem:[%s7 + $0x84] sm:$0xf]
    %v4366 = vld [vmem:[%s7 + $0x88] sm:$0xf]
    %v4367 = vld [vmem:[%s7 + $0x8c] sm:$0xf]
    %v4368 = vld [vmem:[%s7 + $0x90] sm:$0xf]
    %v4369 = vld [vmem:[%s7 + $0x94] sm:$0xf]
    %v4370 = vld [vmem:[%s7 + $0x98] sm:$0xf]
    %v4371 = vld [vmem:[%s7 + $0x9c] sm:$0xf]
    %v4372 = vld [vmem:[%s7 + $0xa0] sm:$0xf]
    %v4373 = vld [vmem:[%s7 + $0xa4] sm:$0xf]
    %v4374 = vld [vmem:[%s7 + $0xa8] sm:$0xf]
    %v4375 = vld [vmem:[%s7 + $0xac] sm:$0xf]
    %v4376 = vld [vmem:[%s7 + $0xb0] sm:$0xf]
    %v4377 = vld [vmem:[%s7 + $0xb4] sm:$0xf]
    %v4378 = vld [vmem:[%s7 + $0xb8] sm:$0xf]
    %v4379 = vld [vmem:[%s7 + $0xbc] sm:$0xf]
    %v4380 = vld [vmem:[%s7 + $0xc0] sm:$0xf]
    %v4381 = vld [vmem:[%s7 + $0xc4] sm:$0xf]
    %v4382 = vld [vmem:[%s7 + $0xc8] sm:$0xf]
    %v4383 = vld [vmem:[%s7 + $0xcc] sm:$0xf]
    %v4384 = vld [vmem:[%s7 + $0xd0] sm:$0xf]
    %v4385 = vld [vmem:[%s7 + $0xd4] sm:$0xf]
    %v4386 = vld [vmem:[%s7 + $0xd8] sm:$0xf]
    %v4387 = vld [vmem:[%s7 + $0xdc] sm:$0xf]
    %v4388 = vld [vmem:[%s7 + $0xe0] sm:$0xf]
    %v4389 = vld [vmem:[%s7 + $0xe4] sm:$0xf]
    %v4390 = vld [vmem:[%s7 + $0xe8] sm:$0xf]
    %v4391 = vld [vmem:[%s7 + $0xec] sm:$0xf]
    %v4392 = vld [vmem:[%s7 + $0xf0] sm:$0xf]
    %v4393 = vld [vmem:[%s7 + $0xf4] sm:$0xf]
    %v4394 = vld [vmem:[%s7 + $0xf8] sm:$0xf]
    %v4395 = vld [vmem:[%s7 + $0xfc] sm:$0xf]
    %v4396 = vld [vmem:[%s7 + $0x100] sm:$0xf]
    %v4397 = vld [vmem:[%s7 + $0x104] sm:$0xf]
    %v4398 = vld [vmem:[%s7 + $0x108] sm:$0xf]
    %v4399 = vld [vmem:[%s7 + $0x10c] sm:$0xf]
    %v4400 = vld [vmem:[%s7 + $0x110] sm:$0xf]
    %v4401 = vld [vmem:[%s7 + $0x114] sm:$0xf]
    %v4402 = vld [vmem:[%s7 + $0x118] sm:$0xf]
    %v4403 = vld [vmem:[%s7 + $0x11c] sm:$0xf]
    %v4404 = vld [vmem:[%s7 + $0x120] sm:$0xf]
    %v4405 = vld [vmem:[%s7 + $0x124] sm:$0xf]
    %v4406 = vld [vmem:[%s7 + $0x128] sm:$0xf]
    %v4407 = vld [vmem:[%s7 + $0x12c] sm:$0xf]
    %v4408 = vld [vmem:[%s7 + $0x130] sm:$0xf]
    %v4409 = vld [vmem:[%s7 + $0x134] sm:$0xf]
    %v4410 = vld [vmem:[%s7 + $0x138] sm:$0xf]
    %v4411 = vld [vmem:[%s7 + $0x13c] sm:$0xf]
    %v4412 = vld [vmem:[%s7 + $0x140] sm:$0xf]
    %v4413 = vld [vmem:[%s7 + $0x144] sm:$0xf]
    %v4414 = vld [vmem:[%s7 + $0x148] sm:$0xf]
    %v4415 = vld [vmem:[%s7 + $0x14c] sm:$0xf]
    %v4416 = vld [vmem:[%s7 + $0x150] sm:$0xf]
    %v4417 = vld [vmem:[%s7 + $0x154] sm:$0xf]
    %v4418 = vld [vmem:[%s7 + $0x158] sm:$0xf]
    %v4419 = vld [vmem:[%s7 + $0x15c] sm:$0xf]
    %v4420 = vld [vmem:[%s7 + $0x160] sm:$0xf]
    %v4421 = vld [vmem:[%s7 + $0x164] sm:$0xf]
    %v4422 = vld [vmem:[%s7 + $0x168] sm:$0xf]
    %v4423 = vld [vmem:[%s7 + $0x16c] sm:$0xf]
    %v4424 = vld [vmem:[%s7 + $0x170] sm:$0xf]
    %v4425 = vld [vmem:[%s7 + $0x174] sm:$0xf]
    %v4426 = vld [vmem:[%s7 + $0x178] sm:$0xf]
    %v4427 = vld [vmem:[%s7 + $0x17c] sm:$0xf]
    %v4428 = vld [vmem:[%s7 + $0x180] sm:$0xf]
    %v4429 = vld [vmem:[%s7 + $0x184] sm:$0xf]
    %v4430 = vld [vmem:[%s7 + $0x188] sm:$0xf]
    %v4431 = vld [vmem:[%s7 + $0x18c] sm:$0xf]
    %v4432 = vld [vmem:[%s7 + $0x190] sm:$0xf]
    %v4433 = vld [vmem:[%s7 + $0x194] sm:$0xf]
    %v4434 = vld [vmem:[%s7 + $0x198] sm:$0xf]
    %v4435 = vld [vmem:[%s7 + $0x19c] sm:$0xf]
    %v4436 = vld [vmem:[%s7 + $0x1a0] sm:$0xf]
    %v4437 = vld [vmem:[%s7 + $0x1a4] sm:$0xf]
    %v4438 = vld [vmem:[%s7 + $0x1a8] sm:$0xf]
    %v4439 = vld [vmem:[%s7 + $0x1ac] sm:$0xf]
    %v4440 = vld [vmem:[%s7 + $0x1b0] sm:$0xf]
    %v4441 = vld [vmem:[%s7 + $0x1b4] sm:$0xf]
    %v4442 = vld [vmem:[%s7 + $0x1b8] sm:$0xf]
    %v4443 = vld [vmem:[%s7 + $0x1bc] sm:$0xf]
    %v4444 = vld [vmem:[%s7 + $0x1c0] sm:$0xf]
    %v4445 = vld [vmem:[%s7 + $0x1c4] sm:$0xf]
    %v4446 = vld [vmem:[%s7 + $0x1c8] sm:$0xf]
    %v4447 = vld [vmem:[%s7 + $0x1cc] sm:$0xf]
    %v4448 = vld [vmem:[%s7 + $0x1d0] sm:$0xf]
    %v4449 = vld [vmem:[%s7 + $0x1d4] sm:$0xf]
    %v4450 = vld [vmem:[%s7 + $0x1d8] sm:$0xf]
    %v4451 = vld [vmem:[%s7 + $0x1dc] sm:$0xf]
    %v4452 = vld [vmem:[%s7 + $0x1e0] sm:$0xf]
    %v4453 = vld [vmem:[%s7 + $0x1e4] sm:$0xf]
    %v4454 = vld [vmem:[%s7 + $0x1e8] sm:$0xf]
    %v4455 = vld [vmem:[%s7 + $0x1ec] sm:$0xf]
    %v4456 = vld [vmem:[%s7 + $0x1f0] sm:$0xf]
    %v4457 = vld [vmem:[%s7 + $0x1f4] sm:$0xf]
    %v4458 = vld [vmem:[%s7 + $0x1f8] sm:$0xf]
    %v4459 = vld [vmem:[%s7 + $0x1fc] sm:$0xf]
    %v4460 = vld [vmem:[%s7 + $0x200] sm:$0xf]
    %v4461 = vld [vmem:[%s7 + $0x204] sm:$0xf]
    %v4462 = vld [vmem:[%s7 + $0x208] sm:$0xf]
    %v4463 = vld [vmem:[%s7 + $0x20c] sm:$0xf]
    %v4464 = vld [vmem:[%s7 + $0x210] sm:$0xf]
    %v4465 = vld [vmem:[%s7 + $0x214] sm:$0xf]
    %v4466 = vld [vmem:[%s7 + $0x218] sm:$0xf]
    %v4467 = vld [vmem:[%s7 + $0x21c] sm:$0xf]
    %v4468 = vld [vmem:[%s7 + $0x220] sm:$0xf]
    %v4469 = vld [vmem:[%s7 + $0x224] sm:$0xf]
    %v4470 = vld [vmem:[%s7 + $0x228] sm:$0xf]
    %v4471 = vld [vmem:[%s7 + $0x22c] sm:$0xf]
    %v4472 = vld [vmem:[%s7 + $0x230] sm:$0xf]
    %v4473 = vld [vmem:[%s7 + $0x234] sm:$0xf]
    %v4474 = vld [vmem:[%s7 + $0x238] sm:$0xf]
    %v4475 = vld [vmem:[%s7 + $0x23c] sm:$0xf]
    %v4476 = vld [vmem:[%s7 + $0x240] sm:$0xf]
    %v4477 = vld [vmem:[%s7 + $0x244] sm:$0xf]
    %v4478 = vld [vmem:[%s7 + $0x248] sm:$0xf]
    %v4479 = vld [vmem:[%s7 + $0x24c] sm:$0xf]
    %v4480 = vld [vmem:[%s7 + $0x250] sm:$0xf]
    %v4481 = vld [vmem:[%s7 + $0x254] sm:$0xf]
    %v4482 = vld [vmem:[%s7 + $0x258] sm:$0xf]
    %v4483 = vld [vmem:[%s7 + $0x25c] sm:$0xf]
    %v4484 = vld [vmem:[%s7 + $0x260] sm:$0xf]
    %v4485 = vld [vmem:[%s7 + $0x264] sm:$0xf]
    %v4486 = vld [vmem:[%s7 + $0x268] sm:$0xf]
    %v4487 = vld [vmem:[%s7 + $0x26c] sm:$0xf]
    %v4488 = vld [vmem:[%s7 + $0x270] sm:$0xf]
    %v4489 = vld [vmem:[%s7 + $0x274] sm:$0xf]
    %v4490 = vld [vmem:[%s7 + $0x278] sm:$0xf]
    %v4491 = vld [vmem:[%s7 + $0x27c] sm:$0xf]
    %v4492 = vld [vmem:[%s7 + $0x280] sm:$0xf]
    %v4493 = vld [vmem:[%s7 + $0x284] sm:$0xf]
    %v4494 = vld [vmem:[%s7 + $0x288] sm:$0xf]
    %v4495 = vld [vmem:[%s7 + $0x28c] sm:$0xf]
    %v4496 = vld [vmem:[%s7 + $0x290] sm:$0xf]
    %v4497 = vld [vmem:[%s7 + $0x294] sm:$0xf]
    %v4498 = vld [vmem:[%s7 + $0x298] sm:$0xf]
    %v4499 = vld [vmem:[%s7 + $0x29c] sm:$0xf]
    %v4500 = vld [vmem:[%s7 + $0x2a0] sm:$0xf]
    %v4501 = vld [vmem:[%s7 + $0x2a4] sm:$0xf]
    %v4502 = vld [vmem:[%s7 + $0x2a8] sm:$0xf]
    %v4503 = vld [vmem:[%s7 + $0x2ac] sm:$0xf]
    %v4504 = vld [vmem:[%s7 + $0x2b0] sm:$0xf]
    %v4505 = vld [vmem:[%s7 + $0x2b4] sm:$0xf]
    %v4506 = vld [vmem:[%s7 + $0x2b8] sm:$0xf]
    %v4507 = vld [vmem:[%s7 + $0x2bc] sm:$0xf]
    %v4508 = vld [vmem:[%s7 + $0x2c0] sm:$0xf]
    %v4509 = vld [vmem:[%s7 + $0x2c4] sm:$0xf]
    %v4510 = vld [vmem:[%s7 + $0x2c8] sm:$0xf]
    %v4511 = vld [vmem:[%s7 + $0x2cc] sm:$0xf]
    %v4512 = vld [vmem:[%s7 + $0x2d0] sm:$0xf]
    %v4513 = vld [vmem:[%s7 + $0x2d4] sm:$0xf]
    %v4514 = vld [vmem:[%s7 + $0x2d8] sm:$0xf]
    %v4515 = vld [vmem:[%s7 + $0x2dc] sm:$0xf]
    %v4516 = vld [vmem:[%s7 + $0x2e0] sm:$0xf]
    %v4517 = vld [vmem:[%s7 + $0x2e4] sm:$0xf]
    %v4518 = vld [vmem:[%s7 + $0x2e8] sm:$0xf]
    %v4519 = vld [vmem:[%s7 + $0x2ec] sm:$0xf]
    %v4520 = vld [vmem:[%s7 + $0x2f0] sm:$0xf]
    %v4521 = vld [vmem:[%s7 + $0x2f4] sm:$0xf]
    %v4522 = vld [vmem:[%s7 + $0x2f8] sm:$0xf]
    %v4523 = vld [vmem:[%s7 + $0x2fc] sm:$0xf]
    %v4524 = vld [vmem:[%s7 + $0x300] sm:$0xf]
    %v4525 = vld [vmem:[%s7 + $0x304] sm:$0xf]
    %v4526 = vld [vmem:[%s7 + $0x308] sm:$0xf]
    %v4527 = vld [vmem:[%s7 + $0x30c] sm:$0xf]
    %v4528 = vld [vmem:[%s7 + $0x310] sm:$0xf]
    %v4529 = vld [vmem:[%s7 + $0x314] sm:$0xf]
    %v4530 = vld [vmem:[%s7 + $0x318] sm:$0xf]
    %v4531 = vld [vmem:[%s7 + $0x31c] sm:$0xf]
    %v4532 = vld [vmem:[%s7 + $0x320] sm:$0xf]
    %v4533 = vld [vmem:[%s7 + $0x324] sm:$0xf]
    %v4534 = vld [vmem:[%s7 + $0x328] sm:$0xf]
    %v4535 = vld [vmem:[%s7 + $0x32c] sm:$0xf]
    %v4536 = vld [vmem:[%s7 + $0x330] sm:$0xf]
    %v4537 = vld [vmem:[%s7 + $0x334] sm:$0xf]
    %v4538 = vld [vmem:[%s7 + $0x338] sm:$0xf]
    %v4539 = vld [vmem:[%s7 + $0x33c] sm:$0xf]
    %v4540 = vld [vmem:[%s7 + $0x340] sm:$0xf]
    %v4541 = vld [vmem:[%s7 + $0x344] sm:$0xf]
    %v4542 = vld [vmem:[%s7 + $0x348] sm:$0xf]
    %v4543 = vld [vmem:[%s7 + $0x34c] sm:$0xf]
    %v4544 = vld [vmem:[%s7 + $0x350] sm:$0xf]
    %v4545 = vld [vmem:[%s7 + $0x354] sm:$0xf]
    %v4546 = vld [vmem:[%s7 + $0x358] sm:$0xf]
    %v4547 = vld [vmem:[%s7 + $0x35c] sm:$0xf]
    %v4548 = vld [vmem:[%s7 + $0x360] sm:$0xf]
    %v4549 = vld [vmem:[%s7 + $0x364] sm:$0xf]
    %v4550 = vld [vmem:[%s7 + $0x368] sm:$0xf]
    %v4551 = vld [vmem:[%s7 + $0x36c] sm:$0xf]
    %v4552 = vld [vmem:[%s7 + $0x370] sm:$0xf]
    %v4553 = vld [vmem:[%s7 + $0x374] sm:$0xf]
    %v4554 = vld [vmem:[%s7 + $0x378] sm:$0xf]
    %v4555 = vld [vmem:[%s7 + $0x37c] sm:$0xf]
    %v4556 = vld [vmem:[%s7 + $0x380] sm:$0xf]
    %v4557 = vld [vmem:[%s7 + $0x384] sm:$0xf]
    %v4558 = vld [vmem:[%s7 + $0x388] sm:$0xf]
    %v4559 = vld [vmem:[%s7 + $0x38c] sm:$0xf]
    %v4560 = vld [vmem:[%s7 + $0x390] sm:$0xf]
    %v4561 = vld [vmem:[%s7 + $0x394] sm:$0xf]
    %v4562 = vld [vmem:[%s7 + $0x398] sm:$0xf]
    %v4563 = vld [vmem:[%s7 + $0x39c] sm:$0xf]
    %v4564 = vld [vmem:[%s7 + $0x3a0] sm:$0xf]
    %v4565 = vld [vmem:[%s7 + $0x3a4] sm:$0xf]
    %v4566 = vld [vmem:[%s7 + $0x3a8] sm:$0xf]
    %v4567 = vld [vmem:[%s7 + $0x3ac] sm:$0xf]
    %v4568 = vld [vmem:[%s7 + $0x3b0] sm:$0xf]
    %v4569 = vld [vmem:[%s7 + $0x3b4] sm:$0xf]
    %v4570 = vld [vmem:[%s7 + $0x3b8] sm:$0xf]
    %v4571 = vld [vmem:[%s7 + $0x3bc] sm:$0xf]
    %v4572 = vld [vmem:[%s7 + $0x3c0] sm:$0xf]
    %v4573 = vld [vmem:[%s7 + $0x3c4] sm:$0xf]
    %v4574 = vld [vmem:[%s7 + $0x3c8] sm:$0xf]
    %v4575 = vld [vmem:[%s7 + $0x3cc] sm:$0xf]
    %v4576 = vld [vmem:[%s7 + $0x3d0] sm:$0xf]
    %v4577 = vld [vmem:[%s7 + $0x3d4] sm:$0xf]
    %v4578 = vld [vmem:[%s7 + $0x3d8] sm:$0xf]
    %v4579 = vld [vmem:[%s7 + $0x3dc] sm:$0xf]
    %v4580 = vld [vmem:[%s7 + $0x3e0] sm:$0xf]
    %v4581 = vld [vmem:[%s7 + $0x3e4] sm:$0xf]
    %v4582 = vld [vmem:[%s7 + $0x3e8] sm:$0xf]
    %v4583 = vld [vmem:[%s7 + $0x3ec] sm:$0xf]
    %v4584 = vld [vmem:[%s7 + $0x3f0] sm:$0xf]
    %v4585 = vld [vmem:[%s7 + $0x3f4] sm:$0xf]
    %v4586 = vld [vmem:[%s7 + $0x3f8] sm:$0xf]
    %v4587 = vld [vmem:[%s7 + $0x3fc] sm:$0xf]
    %v4588 = vld [vmem:[%s7 + $0x400] sm:$0xf]
    %v4589 = vld [vmem:[%s7 + $0x404] sm:$0xf]
    %v4590 = vld [vmem:[%s7 + $0x408] sm:$0xf]
    %v4591 = vld [vmem:[%s7 + $0x40c] sm:$0xf]
    %v4592 = vld [vmem:[%s7 + $0x410] sm:$0xf]
    %v4593 = vld [vmem:[%s7 + $0x414] sm:$0xf]
    %v4594 = vld [vmem:[%s7 + $0x418] sm:$0xf]
    %v4595 = vld [vmem:[%s7 + $0x41c] sm:$0xf]
    %v4596 = vld [vmem:[%s7 + $0x420] sm:$0xf]
    %v4597 = vld [vmem:[%s7 + $0x424] sm:$0xf]
    %v4598 = vld [vmem:[%s7 + $0x428] sm:$0xf]
    %v4599 = vld [vmem:[%s7 + $0x42c] sm:$0xf]
    %v4600 = vld [vmem:[%s7 + $0x430] sm:$0xf]
    %v4601 = vld [vmem:[%s7 + $0x434] sm:$0xf]
    %v4602 = vld [vmem:[%s7 + $0x438] sm:$0xf]
    %v4603 = vld [vmem:[%s7 + $0x43c] sm:$0xf]
    %v4604 = vld [vmem:[%s7 + $0x440] sm:$0xf]
    %v4605 = vld [vmem:[%s7 + $0x444] sm:$0xf]
    %v4606 = vld [vmem:[%s7 + $0x448] sm:$0xf]
    %v4607 = vld [vmem:[%s7 + $0x44c] sm:$0xf]
    %v4608 = vld [vmem:[%s7 + $0x450] sm:$0xf]
    %v4609 = vld [vmem:[%s7 + $0x454] sm:$0xf]
    %v4610 = vld [vmem:[%s7 + $0x458] sm:$0xf]
    %v4611 = vld [vmem:[%s7 + $0x45c] sm:$0xf]
    %v4612 = vld [vmem:[%s7 + $0x460] sm:$0xf]
    %v4613 = vld [vmem:[%s7 + $0x464] sm:$0xf]
    %v4614 = vld [vmem:[%s7 + $0x468] sm:$0xf]
    %v4615 = vld [vmem:[%s7 + $0x46c] sm:$0xf]
    %v4616 = vld [vmem:[%s7 + $0x470] sm:$0xf]
    %v4617 = vld [vmem:[%s7 + $0x474] sm:$0xf]
    %v4618 = vld [vmem:[%s7 + $0x478] sm:$0xf]
    %v4619 = vld [vmem:[%s7 + $0x47c] sm:$0xf]
    %v4620 = vld [vmem:[%s7 + $0x480] sm:$0xf]
    %v4621 = vld [vmem:[%s7 + $0x484] sm:$0xf]
    %v4622 = vld [vmem:[%s7 + $0x488] sm:$0xf]
    %v4623 = vld [vmem:[%s7 + $0x48c] sm:$0xf]
    %v4624 = vld [vmem:[%s7 + $0x490] sm:$0xf]
    %v4625 = vld [vmem:[%s7 + $0x494] sm:$0xf]
    %v4626 = vld [vmem:[%s7 + $0x498] sm:$0xf]
    %v4627 = vld [vmem:[%s7 + $0x49c] sm:$0xf]
    %v4628 = vld [vmem:[%s7 + $0x4a0] sm:$0xf]
    %v4629 = vld [vmem:[%s7 + $0x4a4] sm:$0xf]
    %v4630 = vld [vmem:[%s7 + $0x4a8] sm:$0xf]
    %v4631 = vld [vmem:[%s7 + $0x4ac] sm:$0xf]
    %v4632 = vld [vmem:[%s7 + $0x4b0] sm:$0xf]
    %v4633 = vld [vmem:[%s7 + $0x4b4] sm:$0xf]
    %v4634 = vld [vmem:[%s7 + $0x4b8] sm:$0xf]
    %v4635 = vld [vmem:[%s7 + $0x4bc] sm:$0xf]
    %v4636 = vld [vmem:[%s7 + $0x4c0] sm:$0xf]
    %v4637 = vld [vmem:[%s7 + $0x4c4] sm:$0xf]
    %v4638 = vld [vmem:[%s7 + $0x4c8] sm:$0xf]
    %v4639 = vld [vmem:[%s7 + $0x4cc] sm:$0xf]
    %v4640 = vld [vmem:[%s7 + $0x4d0] sm:$0xf]
    %v4641 = vld [vmem:[%s7 + $0x4d4] sm:$0xf]
    %v4642 = vld [vmem:[%s7 + $0x4d8] sm:$0xf]
    %v4643 = vld [vmem:[%s7 + $0x4dc] sm:$0xf]
    %v4644 = vld [vmem:[%s7 + $0x4e0] sm:$0xf]
    %v4645 = vld [vmem:[%s7 + $0x4e4] sm:$0xf]
    %v4646 = vld [vmem:[%s7 + $0x4e8] sm:$0xf]
    %v4647 = vld [vmem:[%s7 + $0x4ec] sm:$0xf]
    %v4648 = vld [vmem:[%s7 + $0x4f0] sm:$0xf]
    %v4649 = vld [vmem:[%s7 + $0x4f4] sm:$0xf]
    %v4650 = vld [vmem:[%s7 + $0x4f8] sm:$0xf]
    %v4651 = vld [vmem:[%s7 + $0x4fc] sm:$0xf]
    %v4652 = vld [vmem:[%s7 + $0x500] sm:$0xf]
    %v4653 = vld [vmem:[%s7 + $0x504] sm:$0xf]
    %v4654 = vld [vmem:[%s7 + $0x508] sm:$0xf]
    %v4655 = vld [vmem:[%s7 + $0x50c] sm:$0xf]
    %v4656 = vld [vmem:[%s7 + $0x510] sm:$0xf]
    %v4657 = vld [vmem:[%s7 + $0x514] sm:$0xf]
    %v4658 = vld [vmem:[%s7 + $0x518] sm:$0xf]
    %v4659 = vld [vmem:[%s7 + $0x51c] sm:$0xf]
    %v4660 = vld [vmem:[%s7 + $0x520] sm:$0xf]
    %v4661 = vld [vmem:[%s7 + $0x524] sm:$0xf]
    %v4662 = vld [vmem:[%s7 + $0x528] sm:$0xf]
    %v4663 = vld [vmem:[%s7 + $0x52c] sm:$0xf]
    %v4664 = vld [vmem:[%s7 + $0x530] sm:$0xf]
    %v4665 = vld [vmem:[%s7 + $0x534] sm:$0xf]
    %v4666 = vld [vmem:[%s7 + $0x538] sm:$0xf]
    %v4667 = vld [vmem:[%s7 + $0x53c] sm:$0xf]
    %v4668 = vld [vmem:[%s7 + $0x540] sm:$0xf]
    %v4669 = vld [vmem:[%s7 + $0x544] sm:$0xf]
    %v4670 = vld [vmem:[%s7 + $0x548] sm:$0xf]
    %v4671 = vld [vmem:[%s7 + $0x54c] sm:$0xf]
    %v4672 = vld [vmem:[%s7 + $0x550] sm:$0xf]
    %v4673 = vld [vmem:[%s7 + $0x554] sm:$0xf]
    %v4674 = vld [vmem:[%s7 + $0x558] sm:$0xf]
    %v4675 = vld [vmem:[%s7 + $0x55c] sm:$0xf]
    %v4676 = vld [vmem:[%s7 + $0x560] sm:$0xf]
    %v4677 = vld [vmem:[%s7 + $0x564] sm:$0xf]
    %v4678 = vld [vmem:[%s7 + $0x568] sm:$0xf]
    %v4679 = vld [vmem:[%s7 + $0x56c] sm:$0xf]
    %v4680 = vld [vmem:[%s7 + $0x570] sm:$0xf]
    %v4681 = vld [vmem:[%s7 + $0x574] sm:$0xf]
    %v4682 = vld [vmem:[%s7 + $0x578] sm:$0xf]
    %v4683 = vld [vmem:[%s7 + $0x57c] sm:$0xf]
    %v4684 = vld [vmem:[%s7 + $0x580] sm:$0xf]
    %v4685 = vld [vmem:[%s7 + $0x584] sm:$0xf]
    %v4686 = vld [vmem:[%s7 + $0x588] sm:$0xf]
    %v4687 = vld [vmem:[%s7 + $0x58c] sm:$0xf]
    %v4688 = vld [vmem:[%s7 + $0x590] sm:$0xf]
    %v4689 = vld [vmem:[%s7 + $0x594] sm:$0xf]
    %v4690 = vld [vmem:[%s7 + $0x598] sm:$0xf]
    %v4691 = vld [vmem:[%s7 + $0x59c] sm:$0xf]
    %v4692 = vld [vmem:[%s7 + $0x5a0] sm:$0xf]
    %v4693 = vld [vmem:[%s7 + $0x5a4] sm:$0xf]
    %v4694 = vld [vmem:[%s7 + $0x5a8] sm:$0xf]
    %v4695 = vld [vmem:[%s7 + $0x5ac] sm:$0xf]
    %v4696 = vld [vmem:[%s7 + $0x5b0] sm:$0xf]
    %v4697 = vld [vmem:[%s7 + $0x5b4] sm:$0xf]
    %v4698 = vld [vmem:[%s7 + $0x5b8] sm:$0xf]
    %v4699 = vld [vmem:[%s7 + $0x5bc] sm:$0xf]
    %v4700 = vld [vmem:[%s7 + $0x5c0] sm:$0xf]
    %v4701 = vld [vmem:[%s7 + $0x5c4] sm:$0xf]
    %v4702 = vld [vmem:[%s7 + $0x5c8] sm:$0xf]
    %v4703 = vld [vmem:[%s7 + $0x5cc] sm:$0xf]
    %v4704 = vld [vmem:[%s7 + $0x5d0] sm:$0xf]
    %v4705 = vld [vmem:[%s7 + $0x5d4] sm:$0xf]
    %v4706 = vld [vmem:[%s7 + $0x5d8] sm:$0xf]
    %v4707 = vld [vmem:[%s7 + $0x5dc] sm:$0xf]
    %v4708 = vld [vmem:[%s7 + $0x5e0] sm:$0xf]
    %v4709 = vld [vmem:[%s7 + $0x5e4] sm:$0xf]
    %v4710 = vld [vmem:[%s7 + $0x5e8] sm:$0xf]
    %v4711 = vld [vmem:[%s7 + $0x5ec] sm:$0xf]
    %v4712 = vld [vmem:[%s7 + $0x5f0] sm:$0xf]
    %v4713 = vld [vmem:[%s7 + $0x5f4] sm:$0xf]
    %v4714 = vld [vmem:[%s7 + $0x5f8] sm:$0xf]
    %v4715 = vld [vmem:[%s7 + $0x5fc] sm:$0xf]
    %v4716 = vld [vmem:[%s7 + $0x600] sm:$0xf]
    %v4717 = vld [vmem:[%s7 + $0x604] sm:$0xf]
    %v4718 = vld [vmem:[%s7 + $0x608] sm:$0xf]
    %v4719 = vld [vmem:[%s7 + $0x60c] sm:$0xf]
    %v4720 = vld [vmem:[%s7 + $0x610] sm:$0xf]
    %v4721 = vld [vmem:[%s7 + $0x614] sm:$0xf]
    %v4722 = vld [vmem:[%s7 + $0x618] sm:$0xf]
    %v4723 = vld [vmem:[%s7 + $0x61c] sm:$0xf]
    %v4724 = vld [vmem:[%s7 + $0x620] sm:$0xf]
    %v4725 = vld [vmem:[%s7 + $0x624] sm:$0xf]
    %v4726 = vld [vmem:[%s7 + $0x628] sm:$0xf]
    %v4727 = vld [vmem:[%s7 + $0x62c] sm:$0xf]
    %v4728 = vld [vmem:[%s7 + $0x630] sm:$0xf]
    %v4729 = vld [vmem:[%s7 + $0x634] sm:$0xf]
    %v4730 = vld [vmem:[%s7 + $0x638] sm:$0xf]
    %v4731 = vld [vmem:[%s7 + $0x63c] sm:$0xf]
    %v4732 = vld [vmem:[%s7 + $0x640] sm:$0xf]
    %v4733 = vld [vmem:[%s7 + $0x644] sm:$0xf]
    %v4734 = vld [vmem:[%s7 + $0x648] sm:$0xf]
    %v4735 = vld [vmem:[%s7 + $0x64c] sm:$0xf]
    %v4736 = vld [vmem:[%s7 + $0x650] sm:$0xf]
    %v4737 = vld [vmem:[%s7 + $0x654] sm:$0xf]
    %v4738 = vld [vmem:[%s7 + $0x658] sm:$0xf]
    %v4739 = vld [vmem:[%s7 + $0x65c] sm:$0xf]
    %v4740 = vld [vmem:[%s7 + $0x660] sm:$0xf]
    %v4741 = vld [vmem:[%s7 + $0x664] sm:$0xf]
    %v4742 = vld [vmem:[%s7 + $0x668] sm:$0xf]
    %v4743 = vld [vmem:[%s7 + $0x66c] sm:$0xf]
    %v4744 = vld [vmem:[%s7 + $0x670] sm:$0xf]
    %v4745 = vld [vmem:[%s7 + $0x674] sm:$0xf]
    %v4746 = vld [vmem:[%s7 + $0x678] sm:$0xf]
    %v4747 = vld [vmem:[%s7 + $0x67c] sm:$0xf]
    %v4748 = vld [vmem:[%s7 + $0x680] sm:$0xf]
    %v4749 = vld [vmem:[%s7 + $0x684] sm:$0xf]
    %v4750 = vld [vmem:[%s7 + $0x688] sm:$0xf]
    %v4751 = vld [vmem:[%s7 + $0x68c] sm:$0xf]
    %v4752 = vld [vmem:[%s7 + $0x690] sm:$0xf]
    %v4753 = vld [vmem:[%s7 + $0x694] sm:$0xf]
    %v4754 = vld [vmem:[%s7 + $0x698] sm:$0xf]
    %v4755 = vld [vmem:[%s7 + $0x69c] sm:$0xf]
    %v4756 = vld [vmem:[%s7 + $0x6a0] sm:$0xf]
    %v4757 = vld [vmem:[%s7 + $0x6a4] sm:$0xf]
    %v4758 = vld [vmem:[%s7 + $0x6a8] sm:$0xf]
    %v4759 = vld [vmem:[%s7 + $0x6ac] sm:$0xf]
    %v4760 = vld [vmem:[%s7 + $0x6b0] sm:$0xf]
    %v4761 = vld [vmem:[%s7 + $0x6b4] sm:$0xf]
    %v4762 = vld [vmem:[%s7 + $0x6b8] sm:$0xf]
    %v4763 = vld [vmem:[%s7 + $0x6bc] sm:$0xf]
    %v4764 = vld [vmem:[%s7 + $0x6c0] sm:$0xf]
    %v4765 = vld [vmem:[%s7 + $0x6c4] sm:$0xf]
    %v4766 = vld [vmem:[%s7 + $0x6c8] sm:$0xf]
    %v4767 = vld [vmem:[%s7 + $0x6cc] sm:$0xf]
    %v4768 = vld [vmem:[%s7 + $0x6d0] sm:$0xf]
    %v4769 = vld [vmem:[%s7 + $0x6d4] sm:$0xf]
    %v4770 = vld [vmem:[%s7 + $0x6d8] sm:$0xf]
    %v4771 = vld [vmem:[%s7 + $0x6dc] sm:$0xf]
    %v4772 = vld [vmem:[%s7 + $0x6e0] sm:$0xf]
    %v4773 = vld [vmem:[%s7 + $0x6e4] sm:$0xf]
    %v4774 = vld [vmem:[%s7 + $0x6e8] sm:$0xf]
    %v4775 = vld [vmem:[%s7 + $0x6ec] sm:$0xf]
    %v4776 = vld [vmem:[%s7 + $0x6f0] sm:$0xf]
    %v4777 = vld [vmem:[%s7 + $0x6f4] sm:$0xf]
    %v4778 = vld [vmem:[%s7 + $0x6f8] sm:$0xf]
    %v4779 = vld [vmem:[%s7 + $0x6fc] sm:$0xf]
    %v4780 = vld [vmem:[%s7 + $0x700] sm:$0xf]
    %v4781 = vld [vmem:[%s7 + $0x704] sm:$0xf]
    %v4782 = vld [vmem:[%s7 + $0x708] sm:$0xf]
    %v4783 = vld [vmem:[%s7 + $0x70c] sm:$0xf]
    %v4784 = vld [vmem:[%s7 + $0x710] sm:$0xf]
    %v4785 = vld [vmem:[%s7 + $0x714] sm:$0xf]
    %v4786 = vld [vmem:[%s7 + $0x718] sm:$0xf]
    %v4787 = vld [vmem:[%s7 + $0x71c] sm:$0xf]
    %v4788 = vld [vmem:[%s7 + $0x720] sm:$0xf]
    %v4789 = vld [vmem:[%s7 + $0x724] sm:$0xf]
    %v4790 = vld [vmem:[%s7 + $0x728] sm:$0xf]
    %v4791 = vld [vmem:[%s7 + $0x72c] sm:$0xf]
    %v4792 = vld [vmem:[%s7 + $0x730] sm:$0xf]
    %v4793 = vld [vmem:[%s7 + $0x734] sm:$0xf]
    %v4794 = vld [vmem:[%s7 + $0x738] sm:$0xf]
    %v4795 = vld [vmem:[%s7 + $0x73c] sm:$0xf]
    %v4796 = vld [vmem:[%s7 + $0x740] sm:$0xf]
    %v4797 = vld [vmem:[%s7 + $0x744] sm:$0xf]
    %v4798 = vld [vmem:[%s7 + $0x748] sm:$0xf]
    %v4799 = vld [vmem:[%s7 + $0x74c] sm:$0xf]
    %v4800 = vld [vmem:[%s7 + $0x750] sm:$0xf]
    %v4801 = vld [vmem:[%s7 + $0x754] sm:$0xf]
    %v4802 = vld [vmem:[%s7 + $0x758] sm:$0xf]
    %v4803 = vld [vmem:[%s7 + $0x75c] sm:$0xf]
    %v4804 = vld [vmem:[%s7 + $0x760] sm:$0xf]
    %v4805 = vld [vmem:[%s7 + $0x764] sm:$0xf]
    %v4806 = vld [vmem:[%s7 + $0x768] sm:$0xf]
    %v4807 = vld [vmem:[%s7 + $0x76c] sm:$0xf]
    %v4808 = vld [vmem:[%s7 + $0x770] sm:$0xf]
    %v4809 = vld [vmem:[%s7 + $0x774] sm:$0xf]
    %v4810 = vld [vmem:[%s7 + $0x778] sm:$0xf]
    %v4811 = vld [vmem:[%s7 + $0x77c] sm:$0xf]
    %v4812 = vld [vmem:[%s7 + $0x780] sm:$0xf]
    %v4813 = vld [vmem:[%s7 + $0x784] sm:$0xf]
    %v4814 = vld [vmem:[%s7 + $0x788] sm:$0xf]
    %v4815 = vld [vmem:[%s7 + $0x78c] sm:$0xf]
    %v4816 = vld [vmem:[%s7 + $0x790] sm:$0xf]
    %v4817 = vld [vmem:[%s7 + $0x794] sm:$0xf]
    %v4818 = vld [vmem:[%s7 + $0x798] sm:$0xf]
    %v4819 = vld [vmem:[%s7 + $0x79c] sm:$0xf]
    %v4820 = vld [vmem:[%s7 + $0x7a0] sm:$0xf]
    %v4821 = vld [vmem:[%s7 + $0x7a4] sm:$0xf]
    %v4822 = vld [vmem:[%s7 + $0x7a8] sm:$0xf]
    %v4823 = vld [vmem:[%s7 + $0x7ac] sm:$0xf]
    %v4824 = vld [vmem:[%s7 + $0x7b0] sm:$0xf]
    %v4825 = vld [vmem:[%s7 + $0x7b4] sm:$0xf]
    %v4826 = vld [vmem:[%s7 + $0x7b8] sm:$0xf]
    %v4827 = vld [vmem:[%s7 + $0x7bc] sm:$0xf]
    %v4828 = vld [vmem:[%s7 + $0x7c0] sm:$0xf]
    %v4829 = vld [vmem:[%s7 + $0x7c4] sm:$0xf]
    %v4830 = vld [vmem:[%s7 + $0x7c8] sm:$0xf]
    %v4831 = vld [vmem:[%s7 + $0x7cc] sm:$0xf]
    %v4832 = vld [vmem:[%s7 + $0x7d0] sm:$0xf]
    %v4833 = vld [vmem:[%s7 + $0x7d4] sm:$0xf]
    %v4834 = vld [vmem:[%s7 + $0x7d8] sm:$0xf]
    %v4835 = vld [vmem:[%s7 + $0x7dc] sm:$0xf]
    %v4836 = vld [vmem:[%s7 + $0x7e0] sm:$0xf]
    %v4837 = vld [vmem:[%s7 + $0x7e4] sm:$0xf]
    %v4838 = vld [vmem:[%s7 + $0x7e8] sm:$0xf]
    %v4839 = vld [vmem:[%s7 + $0x7ec] sm:$0xf]
    %v4840 = vld [vmem:[%s7 + $0x7f0] sm:$0xf]
    %v4841 = vld [vmem:[%s7 + $0x7f4] sm:$0xf]
    %v4842 = vld [vmem:[%s7 + $0x7f8] sm:$0xf]
    %v4843 = vld [vmem:[%s7 + $0x7fc] sm:$0xf]
    %v4844 = vld [vmem:[%s7 + $0x800] sm:$0xf]
    %v4845 = vld [vmem:[%s7 + $0x804] sm:$0xf]
    %v4846 = vld [vmem:[%s7 + $0x808] sm:$0xf]
    %v4847 = vld [vmem:[%s7 + $0x80c] sm:$0xf]
    %v4848 = vld [vmem:[%s7 + $0x810] sm:$0xf]
    %v4849 = vld [vmem:[%s7 + $0x814] sm:$0xf]
    %v4850 = vld [vmem:[%s7 + $0x818] sm:$0xf]
    %v4851 = vld [vmem:[%s7 + $0x81c] sm:$0xf]
    %v4852 = vld [vmem:[%s7 + $0x820] sm:$0xf]
    %v4853 = vld [vmem:[%s7 + $0x824] sm:$0xf]
    %v4854 = vld [vmem:[%s7 + $0x828] sm:$0xf]
    %v4855 = vld [vmem:[%s7 + $0x82c] sm:$0xf]
    %v4856 = vld [vmem:[%s7 + $0x830] sm:$0xf]
    %v4857 = vld [vmem:[%s7 + $0x834] sm:$0xf]
    %v4858 = vld [vmem:[%s7 + $0x838] sm:$0xf]
    %v4859 = vld [vmem:[%s7 + $0x83c] sm:$0xf]
    %v4860 = vld [vmem:[%s7 + $0x840] sm:$0xf]
    %v4861 = vld [vmem:[%s7 + $0x844] sm:$0xf]
    %v4862 = vld [vmem:[%s7 + $0x848] sm:$0xf]
    %v4863 = vld [vmem:[%s7 + $0x84c] sm:$0xf]
    %v4864 = vld [vmem:[%s7 + $0x850] sm:$0xf]
    %v4865 = vld [vmem:[%s7 + $0x854] sm:$0xf]
    %v4866 = vld [vmem:[%s7 + $0x858] sm:$0xf]
    %v4867 = vld [vmem:[%s7 + $0x85c] sm:$0xf]
    %v4868 = vld [vmem:[%s7 + $0x860] sm:$0xf]
    %v4869 = vld [vmem:[%s7 + $0x864] sm:$0xf]
    %v4870 = vld [vmem:[%s7 + $0x868] sm:$0xf]
    %v4871 = vld [vmem:[%s7 + $0x86c] sm:$0xf]
    %v4872 = vld [vmem:[%s7 + $0x870] sm:$0xf]
    %v4873 = vld [vmem:[%s7 + $0x874] sm:$0xf]
    %v4874 = vld [vmem:[%s7 + $0x878] sm:$0xf]
    %v4875 = vld [vmem:[%s7 + $0x87c] sm:$0xf]
    %v4876 = vld [vmem:[%s7 + $0x880] sm:$0xf]
    %v4877 = vld [vmem:[%s7 + $0x884] sm:$0xf]
    %v4878 = vld [vmem:[%s7 + $0x888] sm:$0xf]
    %v4879 = vld [vmem:[%s7 + $0x88c] sm:$0xf]
    %v4880 = vld [vmem:[%s7 + $0x890] sm:$0xf]
    %v4881 = vld [vmem:[%s7 + $0x894] sm:$0xf]
    %v4882 = vld [vmem:[%s7 + $0x898] sm:$0xf]
    %v4883 = vld [vmem:[%s7 + $0x89c] sm:$0xf]
    %v4884 = vld [vmem:[%s7 + $0x8a0] sm:$0xf]
    %v4885 = vld [vmem:[%s7 + $0x8a4] sm:$0xf]
    %v4886 = vld [vmem:[%s7 + $0x8a8] sm:$0xf]
    %v4887 = vld [vmem:[%s7 + $0x8ac] sm:$0xf]
    %v4888 = vld [vmem:[%s7 + $0x8b0] sm:$0xf]
    %v4889 = vld [vmem:[%s7 + $0x8b4] sm:$0xf]
    %v4890 = vld [vmem:[%s7 + $0x8b8] sm:$0xf]
    %v4891 = vld [vmem:[%s7 + $0x8bc] sm:$0xf]
    %v4892 = vld [vmem:[%s7 + $0x8c0] sm:$0xf]
    %v4893 = vld [vmem:[%s7 + $0x8c4] sm:$0xf]
    %v4894 = vld [vmem:[%s7 + $0x8c8] sm:$0xf]
    %v4895 = vld [vmem:[%s7 + $0x8cc] sm:$0xf]
    %v4896 = vld [vmem:[%s7 + $0x8d0] sm:$0xf]
    %v4897 = vld [vmem:[%s7 + $0x8d4] sm:$0xf]
    %v4898 = vld [vmem:[%s7 + $0x8d8] sm:$0xf]
    %v4899 = vld [vmem:[%s7 + $0x8dc] sm:$0xf]
    %v4900 = vld [vmem:[%s7 + $0x8e0] sm:$0xf]
    %v4901 = vld [vmem:[%s7 + $0x8e4] sm:$0xf]
    %v4902 = vld [vmem:[%s7 + $0x8e8] sm:$0xf]
    %v4903 = vld [vmem:[%s7 + $0x8ec] sm:$0xf]
    %v4904 = vld [vmem:[%s7 + $0x8f0] sm:$0xf]
    %v4905 = vld [vmem:[%s7 + $0x8f4] sm:$0xf]
    %v4906 = vld [vmem:[%s7 + $0x8f8] sm:$0xf]
    %v4907 = vld [vmem:[%s7 + $0x8fc] sm:$0xf]
    %v4908 = vld [vmem:[%s7 + $0x900] sm:$0xf]
    %v4909 = vld [vmem:[%s7 + $0x904] sm:$0xf]
    %v4910 = vld [vmem:[%s7 + $0x908] sm:$0xf]
    %v4911 = vld [vmem:[%s7 + $0x90c] sm:$0xf]
    %v4912 = vld [vmem:[%s7 + $0x910] sm:$0xf]
    %v4913 = vld [vmem:[%s7 + $0x914] sm:$0xf]
    %v4914 = vld [vmem:[%s7 + $0x918] sm:$0xf]
    %v4915 = vld [vmem:[%s7 + $0x91c] sm:$0xf]
    %v4916 = vld [vmem:[%s7 + $0x920] sm:$0xf]
    %v4917 = vld [vmem:[%s7 + $0x924] sm:$0xf]
    %v4918 = vld [vmem:[%s7 + $0x928] sm:$0xf]
    %v4919 = vld [vmem:[%s7 + $0x92c] sm:$0xf]
    %v4920 = vld [vmem:[%s7 + $0x930] sm:$0xf]
    %v4921 = vld [vmem:[%s7 + $0x934] sm:$0xf]
    %v4922 = vld [vmem:[%s7 + $0x938] sm:$0xf]
    %v4923 = vld [vmem:[%s7 + $0x93c] sm:$0xf]
    %v4924 = vld [vmem:[%s7 + $0x940] sm:$0xf]
    %v4925 = vld [vmem:[%s7 + $0x944] sm:$0xf]
    %v4926 = vld [vmem:[%s7 + $0x948] sm:$0xf]
    %v4927 = vld [vmem:[%s7 + $0x94c] sm:$0xf]
    %v4928 = vld [vmem:[%s7 + $0x950] sm:$0xf]
    %v4929 = vld [vmem:[%s7 + $0x954] sm:$0xf]
    %v4930 = vld [vmem:[%s7 + $0x958] sm:$0xf]
    %v4931 = vld [vmem:[%s7 + $0x95c] sm:$0xf]
    %v4932 = vld [vmem:[%s7 + $0x960] sm:$0xf]
    %v4933 = vld [vmem:[%s7 + $0x964] sm:$0xf]
    %v4934 = vld [vmem:[%s7 + $0x968] sm:$0xf]
    %v4935 = vld [vmem:[%s7 + $0x96c] sm:$0xf]
    %v4936 = vld [vmem:[%s7 + $0x970] sm:$0xf]
    %v4937 = vld [vmem:[%s7 + $0x974] sm:$0xf]
    %v4938 = vld [vmem:[%s7 + $0x978] sm:$0xf]
    %v4939 = vld [vmem:[%s7 + $0x97c] sm:$0xf]
    %v4940 = vld [vmem:[%s7 + $0x980] sm:$0xf]
    %v4941 = vld [vmem:[%s7 + $0x984] sm:$0xf]
    %v4942 = vld [vmem:[%s7 + $0x988] sm:$0xf]
    %v4943 = vld [vmem:[%s7 + $0x98c] sm:$0xf]
    %v4944 = vld [vmem:[%s7 + $0x990] sm:$0xf]
    %v4945 = vld [vmem:[%s7 + $0x994] sm:$0xf]
    %v4946 = vld [vmem:[%s7 + $0x998] sm:$0xf]
    %v4947 = vld [vmem:[%s7 + $0x99c] sm:$0xf]
    %v4948 = vld [vmem:[%s7 + $0x9a0] sm:$0xf]
    %v4949 = vld [vmem:[%s7 + $0x9a4] sm:$0xf]
    %v4950 = vld [vmem:[%s7 + $0x9a8] sm:$0xf]
    %v4951 = vld [vmem:[%s7 + $0x9ac] sm:$0xf]
    %v4952 = vld [vmem:[%s7 + $0x9b0] sm:$0xf]
    %v4953 = vld [vmem:[%s7 + $0x9b4] sm:$0xf]
    %v4954 = vld [vmem:[%s7 + $0x9b8] sm:$0xf]
    %v4955 = vld [vmem:[%s7 + $0x9bc] sm:$0xf]
    %v4956 = vld [vmem:[%s7 + $0x9c0] sm:$0xf]
    %v4957 = vld [vmem:[%s7 + $0x9c4] sm:$0xf]
    %v4958 = vld [vmem:[%s7 + $0x9c8] sm:$0xf]
    %v4959 = vld [vmem:[%s7 + $0x9cc] sm:$0xf]
    %v4960 = vld [vmem:[%s7 + $0x9d0] sm:$0xf]
    %v4961 = vld [vmem:[%s7 + $0x9d4] sm:$0xf]
    %v4962 = vld [vmem:[%s7 + $0x9d8] sm:$0xf]
    %v4963 = vld [vmem:[%s7 + $0x9dc] sm:$0xf]
    %v4964 = vld [vmem:[%s7 + $0x9e0] sm:$0xf]
    %v4965 = vld [vmem:[%s7 + $0x9e4] sm:$0xf]
    %v4966 = vld [vmem:[%s7 + $0x9e8] sm:$0xf]
    %v4967 = vld [vmem:[%s7 + $0x9ec] sm:$0xf]
    %v4968 = vld [vmem:[%s7 + $0x9f0] sm:$0xf]
    %v4969 = vld [vmem:[%s7 + $0x9f4] sm:$0xf]
    %v4970 = vld [vmem:[%s7 + $0x9f8] sm:$0xf]
    %v4971 = vld [vmem:[%s7 + $0x9fc] sm:$0xf]
    %v4972 = vld [vmem:[%s7 + $0xa00] sm:$0xf]
    %v4973 = vld [vmem:[%s7 + $0xa04] sm:$0xf]
    %v4974 = vld [vmem:[%s7 + $0xa08] sm:$0xf]
    %v4975 = vld [vmem:[%s7 + $0xa0c] sm:$0xf]
    %v4976 = vld [vmem:[%s7 + $0xa10] sm:$0xf]
    %v4977 = vld [vmem:[%s7 + $0xa14] sm:$0xf]
    %v4978 = vld [vmem:[%s7 + $0xa18] sm:$0xf]
    %v4979 = vld [vmem:[%s7 + $0xa1c] sm:$0xf]
    %v4980 = vld [vmem:[%s7 + $0xa20] sm:$0xf]
    %v4981 = vld [vmem:[%s7 + $0xa24] sm:$0xf]
    %v4982 = vld [vmem:[%s7 + $0xa28] sm:$0xf]
    %v4983 = vld [vmem:[%s7 + $0xa2c] sm:$0xf]
    %v4984 = vld [vmem:[%s7 + $0xa30] sm:$0xf]
    %v4985 = vld [vmem:[%s7 + $0xa34] sm:$0xf]
    %v4986 = vld [vmem:[%s7 + $0xa38] sm:$0xf]
    %v4987 = vld [vmem:[%s7 + $0xa3c] sm:$0xf]
    %v4988 = vld [vmem:[%s7 + $0xa40] sm:$0xf]
    %v4989 = vld [vmem:[%s7 + $0xa44] sm:$0xf]
    %v4990 = vld [vmem:[%s7 + $0xa48] sm:$0xf]
    %v4991 = vld [vmem:[%s7 + $0xa4c] sm:$0xf]
    %v4992 = vld [vmem:[%s7 + $0xa50] sm:$0xf]
    %v4993 = vld [vmem:[%s7 + $0xa54] sm:$0xf]
    %v4994 = vld [vmem:[%s7 + $0xa58] sm:$0xf]
    %v4995 = vld [vmem:[%s7 + $0xa5c] sm:$0xf]
    %v4996 = vld [vmem:[%s7 + $0xa60] sm:$0xf]
    %v4997 = vld [vmem:[%s7 + $0xa64] sm:$0xf]
    %v4998 = vld [vmem:[%s7 + $0xa68] sm:$0xf]
    %v4999 = vld [vmem:[%s7 + $0xa6c] sm:$0xf]
    %v5000 = vld [vmem:[%s7 + $0xa70] sm:$0xf]
    %v5001 = vld [vmem:[%s7 + $0xa74] sm:$0xf]
    %v5002 = vld [vmem:[%s7 + $0xa78] sm:$0xf]
    %v5003 = vld [vmem:[%s7 + $0xa7c] sm:$0xf]
    %v5004 = vld [vmem:[%s7 + $0xa80] sm:$0xf]
    %v5005 = vld [vmem:[%s7 + $0xa84] sm:$0xf]
    %v5006 = vld [vmem:[%s7 + $0xa88] sm:$0xf]
    %v5007 = vld [vmem:[%s7 + $0xa8c] sm:$0xf]
    %v5008 = vld [vmem:[%s8] sm:$0x1]
    %v5010 = vlaneseq
    %v5011 = vshrl.u32 %v5010, 7
    %v5012 = vsub.s32 0, %v5011
    %v5013 = vrot.slane %v5008, %v5012
    %v5691 = vunpack.c.l.b16 %v4332
    %v5692 = vunpack.c.l.b16 %v4333
    %v5693 = vunpack.c.l.b16 %v4334
    %v5694 = vunpack.c.l.b16 %v4335
    %v5695 = vunpack.c.l.b16 %v4336
    %v5696 = vunpack.c.l.b16 %v4337
    %v5697 = vunpack.c.l.b16 %v4338
    %v5698 = vunpack.c.l.b16 %v4339
    %v5699 = vunpack.c.l.b16 %v4340
    %v5700 = vunpack.c.l.b16 %v4341
    %v5701 = vunpack.c.l.b16 %v4342
    %v5702 = vunpack.c.l.b16 %v4343
    %v5703 = vunpack.c.l.b16 %v4344
    %v5704 = vunpack.c.l.b16 %v4345
    %v5705 = vunpack.c.l.b16 %v4346
    %v5706 = vunpack.c.l.b16 %v4347
    %v5707 = vunpack.c.l.b16 %v4348
    %v5708 = vunpack.c.l.b16 %v4349
    %v5709 = vunpack.c.l.b16 %v4350
    %v5710 = vunpack.c.l.b16 %v4351
    %v5711 = vunpack.c.l.b16 %v4352
    %v5712 = vunpack.c.l.b16 %v4353
    %v5713 = vunpack.c.l.b16 %v4354
    %v5714 = vunpack.c.l.b16 %v4355
    %v5715 = vunpack.c.l.b16 %v4356
    %v5716 = vunpack.c.l.b16 %v4357
    %v5717 = vunpack.c.l.b16 %v4358
    %v5718 = vunpack.c.l.b16 %v4359
    %v5719 = vunpack.c.l.b16 %v4360
    %v5720 = vunpack.c.l.b16 %v4361
    %v5721 = vunpack.c.l.b16 %v4362
    %v5722 = vunpack.c.l.b16 %v4363
    %v5723 = vunpack.c.l.b16 %v4364
    %v5724 = vunpack.c.l.b16 %v4365
    %v5725 = vunpack.c.l.b16 %v4366
    %v5726 = vunpack.c.l.b16 %v4367
    %v5727 = vunpack.c.l.b16 %v4368
    %v5728 = vunpack.c.l.b16 %v4369
    %v5729 = vunpack.c.l.b16 %v4370
    %v5730 = vunpack.c.l.b16 %v4371
    %v5731 = vunpack.c.l.b16 %v4372
    %v5732 = vunpack.c.l.b16 %v4373
    %v5733 = vunpack.c.l.b16 %v4374
    %v5734 = vunpack.c.l.b16 %v4375
    %v5735 = vunpack.c.l.b16 %v4376
    %v5736 = vunpack.c.l.b16 %v4377
    %v5737 = vunpack.c.l.b16 %v4378
    %v5738 = vunpack.c.l.b16 %v4379
    %v5739 = vunpack.c.l.b16 %v4380
    %v5740 = vunpack.c.l.b16 %v4381
    %v5741 = vunpack.c.l.b16 %v4382
    %v5742 = vunpack.c.l.b16 %v4383
    %v5743 = vunpack.c.l.b16 %v4384
    %v5744 = vunpack.c.l.b16 %v4385
    %v5745 = vunpack.c.l.b16 %v4386
    %v5746 = vunpack.c.l.b16 %v4387
    %v5747 = vunpack.c.l.b16 %v4388
    %v5748 = vunpack.c.l.b16 %v4389
    %v5749 = vunpack.c.l.b16 %v4390
    %v5750 = vunpack.c.l.b16 %v4391
    %v5751 = vunpack.c.l.b16 %v4392
    %v5752 = vunpack.c.l.b16 %v4393
    %v5753 = vunpack.c.l.b16 %v4394
    %v5754 = vunpack.c.l.b16 %v4395
    %v5755 = vunpack.c.l.b16 %v4396
    %v5756 = vunpack.c.l.b16 %v4397
    %v5757 = vunpack.c.l.b16 %v4398
    %v5758 = vunpack.c.l.b16 %v4399
    %v5759 = vunpack.c.l.b16 %v4400
    %v5760 = vunpack.c.l.b16 %v4401
    %v5761 = vunpack.c.l.b16 %v4402
    %v5762 = vunpack.c.l.b16 %v4403
    %v5763 = vunpack.c.l.b16 %v4404
    %v5764 = vunpack.c.l.b16 %v4405
    %v5765 = vunpack.c.l.b16 %v4406
    %v5766 = vunpack.c.l.b16 %v4407
    %v5767 = vunpack.c.l.b16 %v4408
    %v5768 = vunpack.c.l.b16 %v4409
    %v5769 = vunpack.c.l.b16 %v4410
    %v5770 = vunpack.c.l.b16 %v4411
    %v5771 = vunpack.c.l.b16 %v4412
    %v5772 = vunpack.c.l.b16 %v4413
    %v5773 = vunpack.c.l.b16 %v4414
    %v5774 = vunpack.c.l.b16 %v4415
    %v5775 = vunpack.c.l.b16 %v4416
    %v5776 = vunpack.c.l.b16 %v4417
    %v5777 = vunpack.c.l.b16 %v4418
    %v5778 = vunpack.c.l.b16 %v4419
    %v5779 = vunpack.c.l.b16 %v4420
    %v5780 = vunpack.c.l.b16 %v4421
    %v5781 = vunpack.c.l.b16 %v4422
    %v5782 = vunpack.c.l.b16 %v4423
    %v5783 = vunpack.c.l.b16 %v4424
    %v5784 = vunpack.c.l.b16 %v4425
    %v5785 = vunpack.c.l.b16 %v4426
    %v5786 = vunpack.c.l.b16 %v4427
    %v5787 = vunpack.c.l.b16 %v4428
    %v5788 = vunpack.c.l.b16 %v4429
    %v5789 = vunpack.c.l.b16 %v4430
    %v5790 = vunpack.c.l.b16 %v4431
    %v5791 = vunpack.c.l.b16 %v4432
    %v5792 = vunpack.c.l.b16 %v4433
    %v5793 = vunpack.c.l.b16 %v4434
    %v5794 = vunpack.c.l.b16 %v4435
    %v5795 = vunpack.c.l.b16 %v4436
    %v5796 = vunpack.c.l.b16 %v4437
    %v5797 = vunpack.c.l.b16 %v4438
    %v5798 = vunpack.c.l.b16 %v4439
    %v5799 = vunpack.c.l.b16 %v4440
    %v5800 = vunpack.c.l.b16 %v4441
    %v5801 = vunpack.c.l.b16 %v4442
    %v5802 = vunpack.c.l.b16 %v4443
    %v5803 = vunpack.c.l.b16 %v4444
    %v5804 = vunpack.c.l.b16 %v4445
    %v5805 = vunpack.c.l.b16 %v4446
    %v5806 = vunpack.c.l.b16 %v4447
    %v5807 = vunpack.c.l.b16 %v4448
    %v5808 = vunpack.c.l.b16 %v4449
    %v5809 = vunpack.c.l.b16 %v4450
    %v5810 = vunpack.c.l.b16 %v4451
    %v5811 = vunpack.c.l.b16 %v4452
    %v5812 = vunpack.c.l.b16 %v4453
    %v5813 = vunpack.c.l.b16 %v4454
    %v5814 = vunpack.c.l.b16 %v4455
    %v5815 = vunpack.c.l.b16 %v4456
    %v5816 = vunpack.c.l.b16 %v4457
    %v5817 = vunpack.c.l.b16 %v4458
    %v5818 = vunpack.c.l.b16 %v4459
    %v5819 = vunpack.c.l.b16 %v4460
    %v5820 = vunpack.c.l.b16 %v4461
    %v5821 = vunpack.c.l.b16 %v4462
    %v5822 = vunpack.c.l.b16 %v4463
    %v5823 = vunpack.c.l.b16 %v4464
    %v5824 = vunpack.c.l.b16 %v4465
    %v5825 = vunpack.c.l.b16 %v4466
    %v5826 = vunpack.c.l.b16 %v4467
    %v5827 = vunpack.c.l.b16 %v4468
    %v5828 = vunpack.c.l.b16 %v4469
    %v5829 = vunpack.c.l.b16 %v4470
    %v5830 = vunpack.c.l.b16 %v4471
    %v5831 = vunpack.c.l.b16 %v4472
    %v5832 = vunpack.c.l.b16 %v4473
    %v5833 = vunpack.c.l.b16 %v4474
    %v5834 = vunpack.c.l.b16 %v4475
    %v5835 = vunpack.c.l.b16 %v4476
    %v5836 = vunpack.c.l.b16 %v4477
    %v5837 = vunpack.c.l.b16 %v4478
    %v5838 = vunpack.c.l.b16 %v4479
    %v5839 = vunpack.c.l.b16 %v4480
    %v5840 = vunpack.c.l.b16 %v4481
    %v5841 = vunpack.c.l.b16 %v4482
    %v5842 = vunpack.c.l.b16 %v4483
    %v5843 = vunpack.c.l.b16 %v4484
    %v5844 = vunpack.c.l.b16 %v4485
    %v5845 = vunpack.c.l.b16 %v4486
    %v5846 = vunpack.c.l.b16 %v4487
    %v5847 = vunpack.c.l.b16 %v4488
    %v5848 = vunpack.c.l.b16 %v4489
    %v5849 = vunpack.c.l.b16 %v4490
    %v5850 = vunpack.c.l.b16 %v4491
    %v5851 = vunpack.c.l.b16 %v4492
    %v5852 = vunpack.c.l.b16 %v4493
    %v5853 = vunpack.c.l.b16 %v4494
    %v5854 = vunpack.c.l.b16 %v4495
    %v5855 = vunpack.c.l.b16 %v4496
    %v5856 = vunpack.c.l.b16 %v4497
    %v5857 = vunpack.c.l.b16 %v4498
    %v5858 = vunpack.c.l.b16 %v4499
    %v5859 = vunpack.c.l.b16 %v4500
    %v5860 = vunpack.c.l.b16 %v4501
    %v5861 = vunpack.c.l.b16 %v4502
    %v5862 = vunpack.c.l.b16 %v4503
    %v5863 = vunpack.c.l.b16 %v4504
    %v5864 = vunpack.c.l.b16 %v4505
    %v5865 = vunpack.c.l.b16 %v4506
    %v5866 = vunpack.c.l.b16 %v4507
    %v5867 = vunpack.c.l.b16 %v4508
    %v5868 = vunpack.c.l.b16 %v4509
    %v5869 = vunpack.c.l.b16 %v4510
    %v5870 = vunpack.c.l.b16 %v4511
    %v5871 = vunpack.c.l.b16 %v4512
    %v5872 = vunpack.c.l.b16 %v4513
    %v5873 = vunpack.c.l.b16 %v4514
    %v5874 = vunpack.c.l.b16 %v4515
    %v5875 = vunpack.c.l.b16 %v4516
    %v5876 = vunpack.c.l.b16 %v4517
    %v5877 = vunpack.c.l.b16 %v4518
    %v5878 = vunpack.c.l.b16 %v4519
    %v5879 = vunpack.c.l.b16 %v4520
    %v5880 = vunpack.c.l.b16 %v4521
    %v5881 = vunpack.c.l.b16 %v4522
    %v5882 = vunpack.c.l.b16 %v4523
    %v5883 = vunpack.c.l.b16 %v4524
    %v5884 = vunpack.c.l.b16 %v4525
    %v5885 = vunpack.c.l.b16 %v4526
    %v5886 = vunpack.c.l.b16 %v4527
    %v5887 = vunpack.c.l.b16 %v4528
    %v5888 = vunpack.c.l.b16 %v4529
    %v5889 = vunpack.c.l.b16 %v4530
    %v5890 = vunpack.c.l.b16 %v4531
    %v5891 = vunpack.c.l.b16 %v4532
    %v5892 = vunpack.c.l.b16 %v4533
    %v5893 = vunpack.c.l.b16 %v4534
    %v5894 = vunpack.c.l.b16 %v4535
    %v5895 = vunpack.c.l.b16 %v4536
    %v5896 = vunpack.c.l.b16 %v4537
    %v5897 = vunpack.c.l.b16 %v4538
    %v5898 = vunpack.c.l.b16 %v4539
    %v5899 = vunpack.c.l.b16 %v4540
    %v5900 = vunpack.c.l.b16 %v4541
    %v5901 = vunpack.c.l.b16 %v4542
    %v5902 = vunpack.c.l.b16 %v4543
    %v5903 = vunpack.c.l.b16 %v4544
    %v5904 = vunpack.c.l.b16 %v4545
    %v5905 = vunpack.c.l.b16 %v4546
    %v5906 = vunpack.c.l.b16 %v4547
    %v5907 = vunpack.c.l.b16 %v4548
    %v5908 = vunpack.c.l.b16 %v4549
    %v5909 = vunpack.c.l.b16 %v4550
    %v5910 = vunpack.c.l.b16 %v4551
    %v5911 = vunpack.c.l.b16 %v4552
    %v5912 = vunpack.c.l.b16 %v4553
    %v5913 = vunpack.c.l.b16 %v4554
    %v5914 = vunpack.c.l.b16 %v4555
    %v5915 = vunpack.c.l.b16 %v4556
    %v5916 = vunpack.c.l.b16 %v4557
    %v5917 = vunpack.c.l.b16 %v4558
    %v5918 = vunpack.c.l.b16 %v4559
    %v5919 = vunpack.c.l.b16 %v4560
    %v5920 = vunpack.c.l.b16 %v4561
    %v5921 = vunpack.c.l.b16 %v4562
    %v5922 = vunpack.c.l.b16 %v4563
    %v5923 = vunpack.c.l.b16 %v4564
    %v5924 = vunpack.c.l.b16 %v4565
    %v5925 = vunpack.c.l.b16 %v4566
    %v5926 = vunpack.c.l.b16 %v4567
    %v5927 = vunpack.c.l.b16 %v4568
    %v5928 = vunpack.c.l.b16 %v4569
    %v5929 = vunpack.c.l.b16 %v4570
    %v5930 = vunpack.c.l.b16 %v4571
    %v5931 = vunpack.c.l.b16 %v4572
    %v5932 = vunpack.c.l.b16 %v4573
    %v5933 = vunpack.c.l.b16 %v4574
    %v5934 = vunpack.c.l.b16 %v4575
    %v5935 = vunpack.c.l.b16 %v4576
    %v5936 = vunpack.c.l.b16 %v4577
    %v5937 = vunpack.c.l.b16 %v4578
    %v5938 = vunpack.c.l.b16 %v4579
    %v5939 = vunpack.c.l.b16 %v4580
    %v5940 = vunpack.c.l.b16 %v4581
    %v5941 = vunpack.c.l.b16 %v4582
    %v5942 = vunpack.c.l.b16 %v4583
    %v5943 = vunpack.c.l.b16 %v4584
    %v5944 = vunpack.c.l.b16 %v4585
    %v5945 = vunpack.c.l.b16 %v4586
    %v5946 = vunpack.c.l.b16 %v4587
    %v5947 = vunpack.c.l.b16 %v4588
    %v5948 = vunpack.c.l.b16 %v4589
    %v5949 = vunpack.c.l.b16 %v4590
    %v5950 = vunpack.c.l.b16 %v4591
    %v5951 = vunpack.c.l.b16 %v4592
    %v5952 = vunpack.c.l.b16 %v4593
    %v5953 = vunpack.c.l.b16 %v4594
    %v5954 = vunpack.c.l.b16 %v4595
    %v5955 = vunpack.c.l.b16 %v4596
    %v5956 = vunpack.c.l.b16 %v4597
    %v5957 = vunpack.c.l.b16 %v4598
    %v5958 = vunpack.c.l.b16 %v4599
    %v5959 = vunpack.c.l.b16 %v4600
    %v5960 = vunpack.c.l.b16 %v4601
    %v5961 = vunpack.c.l.b16 %v4602
    %v5962 = vunpack.c.l.b16 %v4603
    %v5963 = vunpack.c.l.b16 %v4604
    %v5964 = vunpack.c.l.b16 %v4605
    %v5965 = vunpack.c.l.b16 %v4606
    %v5966 = vunpack.c.l.b16 %v4607
    %v5967 = vunpack.c.l.b16 %v4608
    %v5968 = vunpack.c.l.b16 %v4609
    %v5969 = vunpack.c.l.b16 %v4610
    %v5970 = vunpack.c.l.b16 %v4611
    %v5971 = vunpack.c.l.b16 %v4612
    %v5972 = vunpack.c.l.b16 %v4613
    %v5973 = vunpack.c.l.b16 %v4614
    %v5974 = vunpack.c.l.b16 %v4615
    %v5975 = vunpack.c.l.b16 %v4616
    %v5976 = vunpack.c.l.b16 %v4617
    %v5977 = vunpack.c.l.b16 %v4618
    %v5978 = vunpack.c.l.b16 %v4619
    %v5979 = vunpack.c.l.b16 %v4620
    %v5980 = vunpack.c.l.b16 %v4621
    %v5981 = vunpack.c.l.b16 %v4622
    %v5982 = vunpack.c.l.b16 %v4623
    %v5983 = vunpack.c.l.b16 %v4624
    %v5984 = vunpack.c.l.b16 %v4625
    %v5985 = vunpack.c.l.b16 %v4626
    %v5986 = vunpack.c.l.b16 %v4627
    %v5987 = vunpack.c.l.b16 %v4628
    %v5988 = vunpack.c.l.b16 %v4629
    %v5989 = vunpack.c.l.b16 %v4630
    %v5990 = vunpack.c.l.b16 %v4631
    %v5991 = vunpack.c.l.b16 %v4632
    %v5992 = vunpack.c.l.b16 %v4633
    %v5993 = vunpack.c.l.b16 %v4634
    %v5994 = vunpack.c.l.b16 %v4635
    %v5995 = vunpack.c.l.b16 %v4636
    %v5996 = vunpack.c.l.b16 %v4637
    %v5997 = vunpack.c.l.b16 %v4638
    %v5998 = vunpack.c.l.b16 %v4639
    %v5999 = vunpack.c.l.b16 %v4640
    %v6000 = vunpack.c.l.b16 %v4641
    %v6001 = vunpack.c.l.b16 %v4642
    %v6002 = vunpack.c.l.b16 %v4643
    %v6003 = vunpack.c.l.b16 %v4644
    %v6004 = vunpack.c.l.b16 %v4645
    %v6005 = vunpack.c.l.b16 %v4646
    %v6006 = vunpack.c.l.b16 %v4647
    %v6007 = vunpack.c.l.b16 %v4648
    %v6008 = vunpack.c.l.b16 %v4649
    %v6009 = vunpack.c.l.b16 %v4650
    %v6010 = vunpack.c.l.b16 %v4651
    %v6011 = vunpack.c.l.b16 %v4652
    %v6012 = vunpack.c.l.b16 %v4653
    %v6013 = vunpack.c.l.b16 %v4654
    %v6014 = vunpack.c.l.b16 %v4655
    %v6015 = vunpack.c.l.b16 %v4656
    %v6016 = vunpack.c.l.b16 %v4657
    %v6017 = vunpack.c.l.b16 %v4658
    %v6018 = vunpack.c.l.b16 %v4659
    %v6019 = vunpack.c.l.b16 %v4660
    %v6020 = vunpack.c.l.b16 %v4661
    %v6021 = vunpack.c.l.b16 %v4662
    %v6022 = vunpack.c.l.b16 %v4663
    %v6023 = vunpack.c.l.b16 %v4664
    %v6024 = vunpack.c.l.b16 %v4665
    %v6025 = vunpack.c.l.b16 %v4666
    %v6026 = vunpack.c.l.b16 %v4667
    %v6027 = vunpack.c.l.b16 %v4668
    %v6028 = vunpack.c.l.b16 %v4669
    %v6029 = vunpack.c.l.b16 %v4670
    %v6030 = vunpack.c.l.b16 %v4671
    %v6031 = vunpack.c.l.b16 %v4672
    %v6032 = vunpack.c.l.b16 %v4673
    %v6033 = vunpack.c.l.b16 %v4674
    %v6034 = vunpack.c.l.b16 %v4675
    %v6035 = vunpack.c.l.b16 %v4676
    %v6036 = vunpack.c.l.b16 %v4677
    %v6037 = vunpack.c.l.b16 %v4678
    %v6038 = vunpack.c.l.b16 %v4679
    %v6039 = vunpack.c.l.b16 %v4680
    %v6040 = vunpack.c.l.b16 %v4681
    %v6041 = vunpack.c.l.b16 %v4682
    %v6042 = vunpack.c.l.b16 %v4683
    %v6043 = vunpack.c.l.b16 %v4684
    %v6044 = vunpack.c.l.b16 %v4685
    %v6045 = vunpack.c.l.b16 %v4686
    %v6046 = vunpack.c.l.b16 %v4687
    %v6047 = vunpack.c.l.b16 %v4688
    %v6048 = vunpack.c.l.b16 %v4689
    %v6049 = vunpack.c.l.b16 %v4690
    %v6050 = vunpack.c.l.b16 %v4691
    %v6051 = vunpack.c.l.b16 %v4692
    %v6052 = vunpack.c.l.b16 %v4693
    %v6053 = vunpack.c.l.b16 %v4694
    %v6054 = vunpack.c.l.b16 %v4695
    %v6055 = vunpack.c.l.b16 %v4696
    %v6056 = vunpack.c.l.b16 %v4697
    %v6057 = vunpack.c.l.b16 %v4698
    %v6058 = vunpack.c.l.b16 %v4699
    %v6059 = vunpack.c.l.b16 %v4700
    %v6060 = vunpack.c.l.b16 %v4701
    %v6061 = vunpack.c.l.b16 %v4702
    %v6062 = vunpack.c.l.b16 %v4703
    %v6063 = vunpack.c.l.b16 %v4704
    %v6064 = vunpack.c.l.b16 %v4705
    %v6065 = vunpack.c.l.b16 %v4706
    %v6066 = vunpack.c.l.b16 %v4707
    %v6067 = vunpack.c.l.b16 %v4708
    %v6068 = vunpack.c.l.b16 %v4709
    %v6069 = vunpack.c.l.b16 %v4710
    %v6070 = vunpack.c.l.b16 %v4711
    %v6071 = vunpack.c.l.b16 %v4712
    %v6072 = vunpack.c.l.b16 %v4713
    %v6073 = vunpack.c.l.b16 %v4714
    %v6074 = vunpack.c.l.b16 %v4715
    %v6075 = vunpack.c.l.b16 %v4716
    %v6076 = vunpack.c.l.b16 %v4717
    %v6077 = vunpack.c.l.b16 %v4718
    %v6078 = vunpack.c.l.b16 %v4719
    %v6079 = vunpack.c.l.b16 %v4720
    %v6080 = vunpack.c.l.b16 %v4721
    %v6081 = vunpack.c.l.b16 %v4722
    %v6082 = vunpack.c.l.b16 %v4723
    %v6083 = vunpack.c.l.b16 %v4724
    %v6084 = vunpack.c.l.b16 %v4725
    %v6085 = vunpack.c.l.b16 %v4726
    %v6086 = vunpack.c.l.b16 %v4727
    %v6087 = vunpack.c.l.b16 %v4728
    %v6088 = vunpack.c.l.b16 %v4729
    %v6089 = vunpack.c.l.b16 %v4730
    %v6090 = vunpack.c.l.b16 %v4731
    %v6091 = vunpack.c.l.b16 %v4732
    %v6092 = vunpack.c.l.b16 %v4733
    %v6093 = vunpack.c.l.b16 %v4734
    %v6094 = vunpack.c.l.b16 %v4735
    %v6095 = vunpack.c.l.b16 %v4736
    %v6096 = vunpack.c.l.b16 %v4737
    %v6097 = vunpack.c.l.b16 %v4738
    %v6098 = vunpack.c.l.b16 %v4739
    %v6099 = vunpack.c.l.b16 %v4740
    %v6100 = vunpack.c.l.b16 %v4741
    %v6101 = vunpack.c.l.b16 %v4742
    %v6102 = vunpack.c.l.b16 %v4743
    %v6103 = vunpack.c.l.b16 %v4744
    %v6104 = vunpack.c.l.b16 %v4745
    %v6105 = vunpack.c.l.b16 %v4746
    %v6106 = vunpack.c.l.b16 %v4747
    %v6107 = vunpack.c.l.b16 %v4748
    %v6108 = vunpack.c.l.b16 %v4749
    %v6109 = vunpack.c.l.b16 %v4750
    %v6110 = vunpack.c.l.b16 %v4751
    %v6111 = vunpack.c.l.b16 %v4752
    %v6112 = vunpack.c.l.b16 %v4753
    %v6113 = vunpack.c.l.b16 %v4754
    %v6114 = vunpack.c.l.b16 %v4755
    %v6115 = vunpack.c.l.b16 %v4756
    %v6116 = vunpack.c.l.b16 %v4757
    %v6117 = vunpack.c.l.b16 %v4758
    %v6118 = vunpack.c.l.b16 %v4759
    %v6119 = vunpack.c.l.b16 %v4760
    %v6120 = vunpack.c.l.b16 %v4761
    %v6121 = vunpack.c.l.b16 %v4762
    %v6122 = vunpack.c.l.b16 %v4763
    %v6123 = vunpack.c.l.b16 %v4764
    %v6124 = vunpack.c.l.b16 %v4765
    %v6125 = vunpack.c.l.b16 %v4766
    %v6126 = vunpack.c.l.b16 %v4767
    %v6127 = vunpack.c.l.b16 %v4768
    %v6128 = vunpack.c.l.b16 %v4769
    %v6129 = vunpack.c.l.b16 %v4770
    %v6130 = vunpack.c.l.b16 %v4771
    %v6131 = vunpack.c.l.b16 %v4772
    %v6132 = vunpack.c.l.b16 %v4773
    %v6133 = vunpack.c.l.b16 %v4774
    %v6134 = vunpack.c.l.b16 %v4775
    %v6135 = vunpack.c.l.b16 %v4776
    %v6136 = vunpack.c.l.b16 %v4777
    %v6137 = vunpack.c.l.b16 %v4778
    %v6138 = vunpack.c.l.b16 %v4779
    %v6139 = vunpack.c.l.b16 %v4780
    %v6140 = vunpack.c.l.b16 %v4781
    %v6141 = vunpack.c.l.b16 %v4782
    %v6142 = vunpack.c.l.b16 %v4783
    %v6143 = vunpack.c.l.b16 %v4784
    %v6144 = vunpack.c.l.b16 %v4785
    %v6145 = vunpack.c.l.b16 %v4786
    %v6146 = vunpack.c.l.b16 %v4787
    %v6147 = vunpack.c.l.b16 %v4788
    %v6148 = vunpack.c.l.b16 %v4789
    %v6149 = vunpack.c.l.b16 %v4790
    %v6150 = vunpack.c.l.b16 %v4791
    %v6151 = vunpack.c.l.b16 %v4792
    %v6152 = vunpack.c.l.b16 %v4793
    %v6153 = vunpack.c.l.b16 %v4794
    %v6154 = vunpack.c.l.b16 %v4795
    %v6155 = vunpack.c.l.b16 %v4796
    %v6156 = vunpack.c.l.b16 %v4797
    %v6157 = vunpack.c.l.b16 %v4798
    %v6158 = vunpack.c.l.b16 %v4799
    %v6159 = vunpack.c.l.b16 %v4800
    %v6160 = vunpack.c.l.b16 %v4801
    %v6161 = vunpack.c.l.b16 %v4802
    %v6162 = vunpack.c.l.b16 %v4803
    %v6163 = vunpack.c.l.b16 %v4804
    %v6164 = vunpack.c.l.b16 %v4805
    %v6165 = vunpack.c.l.b16 %v4806
    %v6166 = vunpack.c.l.b16 %v4807
    %v6167 = vunpack.c.l.b16 %v4808
    %v6168 = vunpack.c.l.b16 %v4809
    %v6169 = vunpack.c.l.b16 %v4810
    %v6170 = vunpack.c.l.b16 %v4811
    %v6171 = vunpack.c.l.b16 %v4812
    %v6172 = vunpack.c.l.b16 %v4813
    %v6173 = vunpack.c.l.b16 %v4814
    %v6174 = vunpack.c.l.b16 %v4815
    %v6175 = vunpack.c.l.b16 %v4816
    %v6176 = vunpack.c.l.b16 %v4817
    %v6177 = vunpack.c.l.b16 %v4818
    %v6178 = vunpack.c.l.b16 %v4819
    %v6179 = vunpack.c.l.b16 %v4820
    %v6180 = vunpack.c.l.b16 %v4821
    %v6181 = vunpack.c.l.b16 %v4822
    %v6182 = vunpack.c.l.b16 %v4823
    %v6183 = vunpack.c.l.b16 %v4824
    %v6184 = vunpack.c.l.b16 %v4825
    %v6185 = vunpack.c.l.b16 %v4826
    %v6186 = vunpack.c.l.b16 %v4827
    %v6187 = vunpack.c.l.b16 %v4828
    %v6188 = vunpack.c.l.b16 %v4829
    %v6189 = vunpack.c.l.b16 %v4830
    %v6190 = vunpack.c.l.b16 %v4831
    %v6191 = vunpack.c.l.b16 %v4832
    %v6192 = vunpack.c.l.b16 %v4833
    %v6193 = vunpack.c.l.b16 %v4834
    %v6194 = vunpack.c.l.b16 %v4835
    %v6195 = vunpack.c.l.b16 %v4836
    %v6196 = vunpack.c.l.b16 %v4837
    %v6197 = vunpack.c.l.b16 %v4838
    %v6198 = vunpack.c.l.b16 %v4839
    %v6199 = vunpack.c.l.b16 %v4840
    %v6200 = vunpack.c.l.b16 %v4841
    %v6201 = vunpack.c.l.b16 %v4842
    %v6202 = vunpack.c.l.b16 %v4843
    %v6203 = vunpack.c.l.b16 %v4844
    %v6204 = vunpack.c.l.b16 %v4845
    %v6205 = vunpack.c.l.b16 %v4846
    %v6206 = vunpack.c.l.b16 %v4847
    %v6207 = vunpack.c.l.b16 %v4848
    %v6208 = vunpack.c.l.b16 %v4849
    %v6209 = vunpack.c.l.b16 %v4850
    %v6210 = vunpack.c.l.b16 %v4851
    %v6211 = vunpack.c.l.b16 %v4852
    %v6212 = vunpack.c.l.b16 %v4853
    %v6213 = vunpack.c.l.b16 %v4854
    %v6214 = vunpack.c.l.b16 %v4855
    %v6215 = vunpack.c.l.b16 %v4856
    %v6216 = vunpack.c.l.b16 %v4857
    %v6217 = vunpack.c.l.b16 %v4858
    %v6218 = vunpack.c.l.b16 %v4859
    %v6219 = vunpack.c.l.b16 %v4860
    %v6220 = vunpack.c.l.b16 %v4861
    %v6221 = vunpack.c.l.b16 %v4862
    %v6222 = vunpack.c.l.b16 %v4863
    %v6223 = vunpack.c.l.b16 %v4864
    %v6224 = vunpack.c.l.b16 %v4865
    %v6225 = vunpack.c.l.b16 %v4866
    %v6226 = vunpack.c.l.b16 %v4867
    %v6227 = vunpack.c.l.b16 %v4868
    %v6228 = vunpack.c.l.b16 %v4869
    %v6229 = vunpack.c.l.b16 %v4870
    %v6230 = vunpack.c.l.b16 %v4871
    %v6231 = vunpack.c.l.b16 %v4872
    %v6232 = vunpack.c.l.b16 %v4873
    %v6233 = vunpack.c.l.b16 %v4874
    %v6234 = vunpack.c.l.b16 %v4875
    %v6235 = vunpack.c.l.b16 %v4876
    %v6236 = vunpack.c.l.b16 %v4877
    %v6237 = vunpack.c.l.b16 %v4878
    %v6238 = vunpack.c.l.b16 %v4879
    %v6239 = vunpack.c.l.b16 %v4880
    %v6240 = vunpack.c.l.b16 %v4881
    %v6241 = vunpack.c.l.b16 %v4882
    %v6242 = vunpack.c.l.b16 %v4883
    %v6243 = vunpack.c.l.b16 %v4884
    %v6244 = vunpack.c.l.b16 %v4885
    %v6245 = vunpack.c.l.b16 %v4886
    %v6246 = vunpack.c.l.b16 %v4887
    %v6247 = vunpack.c.l.b16 %v4888
    %v6248 = vunpack.c.l.b16 %v4889
    %v6249 = vunpack.c.l.b16 %v4890
    %v6250 = vunpack.c.l.b16 %v4891
    %v6251 = vunpack.c.l.b16 %v4892
    %v6252 = vunpack.c.l.b16 %v4893
    %v6253 = vunpack.c.l.b16 %v4894
    %v6254 = vunpack.c.l.b16 %v4895
    %v6255 = vunpack.c.l.b16 %v4896
    %v6256 = vunpack.c.l.b16 %v4897
    %v6257 = vunpack.c.l.b16 %v4898
    %v6258 = vunpack.c.l.b16 %v4899
    %v6259 = vunpack.c.l.b16 %v4900
    %v6260 = vunpack.c.l.b16 %v4901
    %v6261 = vunpack.c.l.b16 %v4902
    %v6262 = vunpack.c.l.b16 %v4903
    %v6263 = vunpack.c.l.b16 %v4904
    %v6264 = vunpack.c.l.b16 %v4905
    %v6265 = vunpack.c.l.b16 %v4906
    %v6266 = vunpack.c.l.b16 %v4907
    %v6267 = vunpack.c.l.b16 %v4908
    %v6268 = vunpack.c.l.b16 %v4909
    %v6269 = vunpack.c.l.b16 %v4910
    %v6270 = vunpack.c.l.b16 %v4911
    %v6271 = vunpack.c.l.b16 %v4912
    %v6272 = vunpack.c.l.b16 %v4913
    %v6273 = vunpack.c.l.b16 %v4914
    %v6274 = vunpack.c.l.b16 %v4915
    %v6275 = vunpack.c.l.b16 %v4916
    %v6276 = vunpack.c.l.b16 %v4917
    %v6277 = vunpack.c.l.b16 %v4918
    %v6278 = vunpack.c.l.b16 %v4919
    %v6279 = vunpack.c.l.b16 %v4920
    %v6280 = vunpack.c.l.b16 %v4921
    %v6281 = vunpack.c.l.b16 %v4922
    %v6282 = vunpack.c.l.b16 %v4923
    %v6283 = vunpack.c.l.b16 %v4924
    %v6284 = vunpack.c.l.b16 %v4925
    %v6285 = vunpack.c.l.b16 %v4926
    %v6286 = vunpack.c.l.b16 %v4927
    %v6287 = vunpack.c.l.b16 %v4928
    %v6288 = vunpack.c.l.b16 %v4929
    %v6289 = vunpack.c.l.b16 %v4930
    %v6290 = vunpack.c.l.b16 %v4931
    %v6291 = vunpack.c.l.b16 %v4932
    %v6292 = vunpack.c.l.b16 %v4933
    %v6293 = vunpack.c.l.b16 %v4934
    %v6294 = vunpack.c.l.b16 %v4935
    %v6295 = vunpack.c.l.b16 %v4936
    %v6296 = vunpack.c.l.b16 %v4937
    %v6297 = vunpack.c.l.b16 %v4938
    %v6298 = vunpack.c.l.b16 %v4939
    %v6299 = vunpack.c.l.b16 %v4940
    %v6300 = vunpack.c.l.b16 %v4941
    %v6301 = vunpack.c.l.b16 %v4942
    %v6302 = vunpack.c.l.b16 %v4943
    %v6303 = vunpack.c.l.b16 %v4944
    %v6304 = vunpack.c.l.b16 %v4945
    %v6305 = vunpack.c.l.b16 %v4946
    %v6306 = vunpack.c.l.b16 %v4947
    %v6307 = vunpack.c.l.b16 %v4948
    %v6308 = vunpack.c.l.b16 %v4949
    %v6309 = vunpack.c.l.b16 %v4950
    %v6310 = vunpack.c.l.b16 %v4951
    %v6311 = vunpack.c.l.b16 %v4952
    %v6312 = vunpack.c.l.b16 %v4953
    %v6313 = vunpack.c.l.b16 %v4954
    %v6314 = vunpack.c.l.b16 %v4955
    %v6315 = vunpack.c.l.b16 %v4956
    %v6316 = vunpack.c.l.b16 %v4957
    %v6317 = vunpack.c.l.b16 %v4958
    %v6318 = vunpack.c.l.b16 %v4959
    %v6319 = vunpack.c.l.b16 %v4960
    %v6320 = vunpack.c.l.b16 %v4961
    %v6321 = vunpack.c.l.b16 %v4962
    %v6322 = vunpack.c.l.b16 %v4963
    %v6323 = vunpack.c.l.b16 %v4964
    %v6324 = vunpack.c.l.b16 %v4965
    %v6325 = vunpack.c.l.b16 %v4966
    %v6326 = vunpack.c.l.b16 %v4967
    %v6327 = vunpack.c.l.b16 %v4968
    %v6328 = vunpack.c.l.b16 %v4969
    %v6329 = vunpack.c.l.b16 %v4970
    %v6330 = vunpack.c.l.b16 %v4971
    %v6331 = vunpack.c.l.b16 %v4972
    %v6332 = vunpack.c.l.b16 %v4973
    %v6333 = vunpack.c.l.b16 %v4974
    %v6334 = vunpack.c.l.b16 %v4975
    %v6335 = vunpack.c.l.b16 %v4976
    %v6336 = vunpack.c.l.b16 %v4977
    %v6337 = vunpack.c.l.b16 %v4978
    %v6338 = vunpack.c.l.b16 %v4979
    %v6339 = vunpack.c.l.b16 %v4980
    %v6340 = vunpack.c.l.b16 %v4981
    %v6341 = vunpack.c.l.b16 %v4982
    %v6342 = vunpack.c.l.b16 %v4983
    %v6343 = vunpack.c.l.b16 %v4984
    %v6344 = vunpack.c.l.b16 %v4985
    %v6345 = vunpack.c.l.b16 %v4986
    %v6346 = vunpack.c.l.b16 %v4987
    %v6347 = vunpack.c.l.b16 %v4988
    %v6348 = vunpack.c.l.b16 %v4989
    %v6349 = vunpack.c.l.b16 %v4990
    %v6350 = vunpack.c.l.b16 %v4991
    %v6351 = vunpack.c.l.b16 %v4992
    %v6352 = vunpack.c.l.b16 %v4993
    %v6353 = vunpack.c.l.b16 %v4994
    %v6354 = vunpack.c.l.b16 %v4995
    %v6355 = vunpack.c.l.b16 %v4996
    %v6356 = vunpack.c.l.b16 %v4997
    %v6357 = vunpack.c.l.b16 %v4998
    %v6358 = vunpack.c.l.b16 %v4999
    %v6359 = vunpack.c.l.b16 %v5000
    %v6360 = vunpack.c.l.b16 %v5001
    %v6361 = vunpack.c.l.b16 %v5002
    %v6362 = vunpack.c.l.b16 %v5003
    %v6363 = vunpack.c.l.b16 %v5004
    %v6364 = vunpack.c.l.b16 %v5005
    %v6365 = vunpack.c.l.b16 %v5006
    %v6366 = vunpack.c.l.b16 %v5007
    %v6367 = vpack.c.b16 %v5692, %v5691
    %v6368 = vpack.c.b16 %v5694, %v5693
    %v6369 = vpack.c.b16 %v5696, %v5695
    %v6370 = vpack.c.b16 %v5698, %v5697
    %v6371 = vpack.c.b16 %v5700, %v5699
    %v6372 = vpack.c.b16 %v5702, %v5701
    %v6373 = vpack.c.b16 %v5704, %v5703
    %v6374 = vpack.c.b16 %v5706, %v5705
    %v6375 = vpack.c.b16 %v5708, %v5707
    %v6376 = vpack.c.b16 %v5710, %v5709
    %v6377 = vpack.c.b16 %v5712, %v5711
    %v6378 = vpack.c.b16 %v5714, %v5713
    %v6379 = vpack.c.b16 %v5716, %v5715
    %v6380 = vpack.c.b16 %v5718, %v5717
    %v6381 = vpack.c.b16 %v5720, %v5719
    %v6382 = vpack.c.b16 %v5722, %v5721
    %v6383 = vpack.c.b16 %v5724, %v5723
    %v6384 = vpack.c.b16 %v5726, %v5725
    %v6385 = vpack.c.b16 %v5728, %v5727
    %v6386 = vpack.c.b16 %v5730, %v5729
    %v6387 = vpack.c.b16 %v5732, %v5731
    %v6388 = vpack.c.b16 %v5734, %v5733
    %v6389 = vpack.c.b16 %v5736, %v5735
    %v6390 = vpack.c.b16 %v5738, %v5737
    %v6391 = vpack.c.b16 %v5740, %v5739
    %v6392 = vpack.c.b16 %v5742, %v5741
    %v6393 = vpack.c.b16 %v5744, %v5743
    %v6394 = vpack.c.b16 %v5746, %v5745
    %v6395 = vpack.c.b16 %v5748, %v5747
    %v6396 = vpack.c.b16 %v5750, %v5749
    %v6397 = vpack.c.b16 %v5752, %v5751
    %v6398 = vpack.c.b16 %v5754, %v5753
    %v6399 = vpack.c.b16 %v5756, %v5755
    %v6400 = vpack.c.b16 %v5758, %v5757
    %v6401 = vpack.c.b16 %v5760, %v5759
    %v6402 = vpack.c.b16 %v5762, %v5761
    %v6403 = vpack.c.b16 %v5764, %v5763
    %v6404 = vpack.c.b16 %v5766, %v5765
    %v6405 = vpack.c.b16 %v5768, %v5767
    %v6406 = vpack.c.b16 %v5770, %v5769
    %v6407 = vpack.c.b16 %v5772, %v5771
    %v6408 = vpack.c.b16 %v5774, %v5773
    %v6409 = vpack.c.b16 %v5776, %v5775
    %v6410 = vpack.c.b16 %v5778, %v5777
    %v6411 = vpack.c.b16 %v5780, %v5779
    %v6412 = vpack.c.b16 %v5782, %v5781
    %v6413 = vpack.c.b16 %v5784, %v5783
    %v6414 = vpack.c.b16 %v5786, %v5785
    %v6415 = vpack.c.b16 %v5788, %v5787
    %v6416 = vpack.c.b16 %v5790, %v5789
    %v6417 = vpack.c.b16 %v5792, %v5791
    %v6418 = vpack.c.b16 %v5794, %v5793
    %v6419 = vpack.c.b16 %v5796, %v5795
    %v6420 = vpack.c.b16 %v5798, %v5797
    %v6421 = vpack.c.b16 %v5800, %v5799
    %v6422 = vpack.c.b16 %v5802, %v5801
    %v6423 = vpack.c.b16 %v5804, %v5803
    %v6424 = vpack.c.b16 %v5806, %v5805
    %v6425 = vpack.c.b16 %v5808, %v5807
    %v6426 = vpack.c.b16 %v5810, %v5809
    %v6427 = vpack.c.b16 %v5812, %v5811
    %v6428 = vpack.c.b16 %v5814, %v5813
    %v6429 = vpack.c.b16 %v5816, %v5815
    %v6430 = vpack.c.b16 %v5818, %v5817
    %v6431 = vpack.c.b16 %v5820, %v5819
    %v6432 = vpack.c.b16 %v5822, %v5821
    %v6433 = vpack.c.b16 %v5824, %v5823
    %v6434 = vpack.c.b16 %v5826, %v5825
    %v6435 = vpack.c.b16 %v5828, %v5827
    %v6436 = vpack.c.b16 %v5830, %v5829
    %v6437 = vpack.c.b16 %v5832, %v5831
    %v6438 = vpack.c.b16 %v5834, %v5833
    %v6439 = vpack.c.b16 %v5836, %v5835
    %v6440 = vpack.c.b16 %v5838, %v5837
    %v6441 = vpack.c.b16 %v5840, %v5839
    %v6442 = vpack.c.b16 %v5842, %v5841
    %v6443 = vpack.c.b16 %v5844, %v5843
    %v6444 = vpack.c.b16 %v5846, %v5845
    %v6445 = vpack.c.b16 %v5848, %v5847
    %v6446 = vpack.c.b16 %v5850, %v5849
    %v6447 = vpack.c.b16 %v5852, %v5851
    %v6448 = vpack.c.b16 %v5854, %v5853
    %v6449 = vpack.c.b16 %v5856, %v5855
    %v6450 = vpack.c.b16 %v5858, %v5857
    %v6451 = vpack.c.b16 %v5860, %v5859
    %v6452 = vpack.c.b16 %v5862, %v5861
    %v6453 = vpack.c.b16 %v5864, %v5863
    %v6454 = vpack.c.b16 %v5866, %v5865
    %v6455 = vpack.c.b16 %v5868, %v5867
    %v6456 = vpack.c.b16 %v5870, %v5869
    %v6457 = vpack.c.b16 %v5872, %v5871
    %v6458 = vpack.c.b16 %v5874, %v5873
    %v6459 = vpack.c.b16 %v5876, %v5875
    %v6460 = vpack.c.b16 %v5878, %v5877
    %v6461 = vpack.c.b16 %v5880, %v5879
    %v6462 = vpack.c.b16 %v5882, %v5881
    %v6463 = vpack.c.b16 %v5884, %v5883
    %v6464 = vpack.c.b16 %v5886, %v5885
    %v6465 = vpack.c.b16 %v5888, %v5887
    %v6466 = vpack.c.b16 %v5890, %v5889
    %v6467 = vpack.c.b16 %v5892, %v5891
    %v6468 = vpack.c.b16 %v5894, %v5893
    %v6469 = vpack.c.b16 %v5896, %v5895
    %v6470 = vpack.c.b16 %v5898, %v5897
    %v6471 = vpack.c.b16 %v5900, %v5899
    %v6472 = vpack.c.b16 %v5902, %v5901
    %v6473 = vpack.c.b16 %v5904, %v5903
    %v6474 = vpack.c.b16 %v5906, %v5905
    %v6475 = vpack.c.b16 %v5908, %v5907
    %v6476 = vpack.c.b16 %v5910, %v5909
    %v6477 = vpack.c.b16 %v5912, %v5911
    %v6478 = vpack.c.b16 %v5914, %v5913
    %v6479 = vpack.c.b16 %v5916, %v5915
    %v6480 = vpack.c.b16 %v5918, %v5917
    %v6481 = vpack.c.b16 %v5920, %v5919
    %v6482 = vpack.c.b16 %v5922, %v5921
    %v6483 = vpack.c.b16 %v5924, %v5923
    %v6484 = vpack.c.b16 %v5926, %v5925
    %v6485 = vpack.c.b16 %v5928, %v5927
    %v6486 = vpack.c.b16 %v5930, %v5929
    %v6487 = vpack.c.b16 %v5932, %v5931
    %v6488 = vpack.c.b16 %v5934, %v5933
    %v6489 = vpack.c.b16 %v5936, %v5935
    %v6490 = vpack.c.b16 %v5938, %v5937
    %v6491 = vpack.c.b16 %v5940, %v5939
    %v6492 = vpack.c.b16 %v5942, %v5941
    %v6493 = vpack.c.b16 %v5944, %v5943
    %v6494 = vpack.c.b16 %v5946, %v5945
    %v6495 = vpack.c.b16 %v5948, %v5947
    %v6496 = vpack.c.b16 %v5950, %v5949
    %v6497 = vpack.c.b16 %v5952, %v5951
    %v6498 = vpack.c.b16 %v5954, %v5953
    %v6499 = vpack.c.b16 %v5956, %v5955
    %v6500 = vpack.c.b16 %v5958, %v5957
    %v6501 = vpack.c.b16 %v5960, %v5959
    %v6502 = vpack.c.b16 %v5962, %v5961
    %v6503 = vpack.c.b16 %v5964, %v5963
    %v6504 = vpack.c.b16 %v5966, %v5965
    %v6505 = vpack.c.b16 %v5968, %v5967
    %v6506 = vpack.c.b16 %v5970, %v5969
    %v6507 = vpack.c.b16 %v5972, %v5971
    %v6508 = vpack.c.b16 %v5974, %v5973
    %v6509 = vpack.c.b16 %v5976, %v5975
    %v6510 = vpack.c.b16 %v5978, %v5977
    %v6511 = vpack.c.b16 %v5980, %v5979
    %v6512 = vpack.c.b16 %v5982, %v5981
    %v6513 = vpack.c.b16 %v5984, %v5983
    %v6514 = vpack.c.b16 %v5986, %v5985
    %v6515 = vpack.c.b16 %v5988, %v5987
    %v6516 = vpack.c.b16 %v5990, %v5989
    %v6517 = vpack.c.b16 %v5992, %v5991
    %v6518 = vpack.c.b16 %v5994, %v5993
    %v6519 = vpack.c.b16 %v5996, %v5995
    %v6520 = vpack.c.b16 %v5998, %v5997
    %v6521 = vpack.c.b16 %v6000, %v5999
    %v6522 = vpack.c.b16 %v6002, %v6001
    %v6523 = vpack.c.b16 %v6004, %v6003
    %v6524 = vpack.c.b16 %v6006, %v6005
    %v6525 = vpack.c.b16 %v6008, %v6007
    %v6526 = vpack.c.b16 %v6010, %v6009
    %v6527 = vpack.c.b16 %v6012, %v6011
    %v6528 = vpack.c.b16 %v6014, %v6013
    %v6529 = vpack.c.b16 %v6016, %v6015
    %v6530 = vpack.c.b16 %v6018, %v6017
    %v6531 = vpack.c.b16 %v6020, %v6019
    %v6532 = vpack.c.b16 %v6022, %v6021
    %v6533 = vpack.c.b16 %v6024, %v6023
    %v6534 = vpack.c.b16 %v6026, %v6025
    %v6535 = vpack.c.b16 %v6028, %v6027
    %v6536 = vpack.c.b16 %v6030, %v6029
    %v6537 = vpack.c.b16 %v6032, %v6031
    %v6538 = vpack.c.b16 %v6034, %v6033
    %v6539 = vpack.c.b16 %v6036, %v6035
    %v6540 = vpack.c.b16 %v6038, %v6037
    %v6541 = vpack.c.b16 %v6040, %v6039
    %v6542 = vpack.c.b16 %v6042, %v6041
    %v6543 = vpack.c.b16 %v6044, %v6043
    %v6544 = vpack.c.b16 %v6046, %v6045
    %v6545 = vpack.c.b16 %v6048, %v6047
    %v6546 = vpack.c.b16 %v6050, %v6049
    %v6547 = vpack.c.b16 %v6052, %v6051
    %v6548 = vpack.c.b16 %v6054, %v6053
    %v6549 = vpack.c.b16 %v6056, %v6055
    %v6550 = vpack.c.b16 %v6058, %v6057
    %v6551 = vpack.c.b16 %v6060, %v6059
    %v6552 = vpack.c.b16 %v6062, %v6061
    %v6553 = vpack.c.b16 %v6064, %v6063
    %v6554 = vpack.c.b16 %v6066, %v6065
    %v6555 = vpack.c.b16 %v6068, %v6067
    %v6556 = vpack.c.b16 %v6070, %v6069
    %v6557 = vpack.c.b16 %v6072, %v6071
    %v6558 = vpack.c.b16 %v6074, %v6073
    %v6559 = vpack.c.b16 %v6076, %v6075
    %v6560 = vpack.c.b16 %v6078, %v6077
    %v6561 = vpack.c.b16 %v6080, %v6079
    %v6562 = vpack.c.b16 %v6082, %v6081
    %v6563 = vpack.c.b16 %v6084, %v6083
    %v6564 = vpack.c.b16 %v6086, %v6085
    %v6565 = vpack.c.b16 %v6088, %v6087
    %v6566 = vpack.c.b16 %v6090, %v6089
    %v6567 = vpack.c.b16 %v6092, %v6091
    %v6568 = vpack.c.b16 %v6094, %v6093
    %v6569 = vpack.c.b16 %v6096, %v6095
    %v6570 = vpack.c.b16 %v6098, %v6097
    %v6571 = vpack.c.b16 %v6100, %v6099
    %v6572 = vpack.c.b16 %v6102, %v6101
    %v6573 = vpack.c.b16 %v6104, %v6103
    %v6574 = vpack.c.b16 %v6106, %v6105
    %v6575 = vpack.c.b16 %v6108, %v6107
    %v6576 = vpack.c.b16 %v6110, %v6109
    %v6577 = vpack.c.b16 %v6112, %v6111
    %v6578 = vpack.c.b16 %v6114, %v6113
    %v6579 = vpack.c.b16 %v6116, %v6115
    %v6580 = vpack.c.b16 %v6118, %v6117
    %v6581 = vpack.c.b16 %v6120, %v6119
    %v6582 = vpack.c.b16 %v6122, %v6121
    %v6583 = vpack.c.b16 %v6124, %v6123
    %v6584 = vpack.c.b16 %v6126, %v6125
    %v6585 = vpack.c.b16 %v6128, %v6127
    %v6586 = vpack.c.b16 %v6130, %v6129
    %v6587 = vpack.c.b16 %v6132, %v6131
    %v6588 = vpack.c.b16 %v6134, %v6133
    %v6589 = vpack.c.b16 %v6136, %v6135
    %v6590 = vpack.c.b16 %v6138, %v6137
    %v6591 = vpack.c.b16 %v6140, %v6139
    %v6592 = vpack.c.b16 %v6142, %v6141
    %v6593 = vpack.c.b16 %v6144, %v6143
    %v6594 = vpack.c.b16 %v6146, %v6145
    %v6595 = vpack.c.b16 %v6148, %v6147
    %v6596 = vpack.c.b16 %v6150, %v6149
    %v6597 = vpack.c.b16 %v6152, %v6151
    %v6598 = vpack.c.b16 %v6154, %v6153
    %v6599 = vpack.c.b16 %v6156, %v6155
    %v6600 = vpack.c.b16 %v6158, %v6157
    %v6601 = vpack.c.b16 %v6160, %v6159
    %v6602 = vpack.c.b16 %v6162, %v6161
    %v6603 = vpack.c.b16 %v6164, %v6163
    %v6604 = vpack.c.b16 %v6166, %v6165
    %v6605 = vpack.c.b16 %v6168, %v6167
    %v6606 = vpack.c.b16 %v6170, %v6169
    %v6607 = vpack.c.b16 %v6172, %v6171
    %v6608 = vpack.c.b16 %v6174, %v6173
    %v6609 = vpack.c.b16 %v6176, %v6175
    %v6610 = vpack.c.b16 %v6178, %v6177
    %v6611 = vpack.c.b16 %v6180, %v6179
    %v6612 = vpack.c.b16 %v6182, %v6181
    %v6613 = vpack.c.b16 %v6184, %v6183
    %v6614 = vpack.c.b16 %v6186, %v6185
    %v6615 = vpack.c.b16 %v6188, %v6187
    %v6616 = vpack.c.b16 %v6190, %v6189
    %v6617 = vpack.c.b16 %v6192, %v6191
    %v6618 = vpack.c.b16 %v6194, %v6193
    %v6619 = vpack.c.b16 %v6196, %v6195
    %v6620 = vpack.c.b16 %v6198, %v6197
    %v6621 = vpack.c.b16 %v6200, %v6199
    %v6622 = vpack.c.b16 %v6202, %v6201
    %v6623 = vpack.c.b16 %v6204, %v6203
    %v6624 = vpack.c.b16 %v6206, %v6205
    %v6625 = vpack.c.b16 %v6208, %v6207
    %v6626 = vpack.c.b16 %v6210, %v6209
    %v6627 = vpack.c.b16 %v6212, %v6211
    %v6628 = vpack.c.b16 %v6214, %v6213
    %v6629 = vpack.c.b16 %v6216, %v6215
    %v6630 = vpack.c.b16 %v6218, %v6217
    %v6631 = vpack.c.b16 %v6220, %v6219
    %v6632 = vpack.c.b16 %v6222, %v6221
    %v6633 = vpack.c.b16 %v6224, %v6223
    %v6634 = vpack.c.b16 %v6226, %v6225
    %v6635 = vpack.c.b16 %v6228, %v6227
    %v6636 = vpack.c.b16 %v6230, %v6229
    %v6637 = vpack.c.b16 %v6232, %v6231
    %v6638 = vpack.c.b16 %v6234, %v6233
    %v6639 = vpack.c.b16 %v6236, %v6235
    %v6640 = vpack.c.b16 %v6238, %v6237
    %v6641 = vpack.c.b16 %v6240, %v6239
    %v6642 = vpack.c.b16 %v6242, %v6241
    %v6643 = vpack.c.b16 %v6244, %v6243
    %v6644 = vpack.c.b16 %v6246, %v6245
    %v6645 = vpack.c.b16 %v6248, %v6247
    %v6646 = vpack.c.b16 %v6250, %v6249
    %v6647 = vpack.c.b16 %v6252, %v6251
    %v6648 = vpack.c.b16 %v6254, %v6253
    %v6649 = vpack.c.b16 %v6256, %v6255
    %v6650 = vpack.c.b16 %v6258, %v6257
    %v6651 = vpack.c.b16 %v6260, %v6259
    %v6652 = vpack.c.b16 %v6262, %v6261
    %v6653 = vpack.c.b16 %v6264, %v6263
    %v6654 = vpack.c.b16 %v6266, %v6265
    %v6655 = vpack.c.b16 %v6268, %v6267
    %v6656 = vpack.c.b16 %v6270, %v6269
    %v6657 = vpack.c.b16 %v6272, %v6271
    %v6658 = vpack.c.b16 %v6274, %v6273
    %v6659 = vpack.c.b16 %v6276, %v6275
    %v6660 = vpack.c.b16 %v6278, %v6277
    %v6661 = vpack.c.b16 %v6280, %v6279
    %v6662 = vpack.c.b16 %v6282, %v6281
    %v6663 = vpack.c.b16 %v6284, %v6283
    %v6664 = vpack.c.b16 %v6286, %v6285
    %v6665 = vpack.c.b16 %v6288, %v6287
    %v6666 = vpack.c.b16 %v6290, %v6289
    %v6667 = vpack.c.b16 %v6292, %v6291
    %v6668 = vpack.c.b16 %v6294, %v6293
    %v6669 = vpack.c.b16 %v6296, %v6295
    %v6670 = vpack.c.b16 %v6298, %v6297
    %v6671 = vpack.c.b16 %v6300, %v6299
    %v6672 = vpack.c.b16 %v6302, %v6301
    %v6673 = vpack.c.b16 %v6304, %v6303
    %v6674 = vpack.c.b16 %v6306, %v6305
    %v6675 = vpack.c.b16 %v6308, %v6307
    %v6676 = vpack.c.b16 %v6310, %v6309
    %v6677 = vpack.c.b16 %v6312, %v6311
    %v6678 = vpack.c.b16 %v6314, %v6313
    %v6679 = vpack.c.b16 %v6316, %v6315
    %v6680 = vpack.c.b16 %v6318, %v6317
    %v6681 = vpack.c.b16 %v6320, %v6319
    %v6682 = vpack.c.b16 %v6322, %v6321
    %v6683 = vpack.c.b16 %v6324, %v6323
    %v6684 = vpack.c.b16 %v6326, %v6325
    %v6685 = vpack.c.b16 %v6328, %v6327
    %v6686 = vpack.c.b16 %v6330, %v6329
    %v6687 = vpack.c.b16 %v6332, %v6331
    %v6688 = vpack.c.b16 %v6334, %v6333
    %v6689 = vpack.c.b16 %v6336, %v6335
    %v6690 = vpack.c.b16 %v6338, %v6337
    %v6691 = vpack.c.b16 %v6340, %v6339
    %v6692 = vpack.c.b16 %v6342, %v6341
    %v6693 = vpack.c.b16 %v6344, %v6343
    %v6694 = vpack.c.b16 %v6346, %v6345
    %v6695 = vpack.c.b16 %v6348, %v6347
    %v6696 = vpack.c.b16 %v6350, %v6349
    %v6697 = vpack.c.b16 %v6352, %v6351
    %v6698 = vpack.c.b16 %v6354, %v6353
    %v6699 = vpack.c.b16 %v6356, %v6355
    %v6700 = vpack.c.b16 %v6358, %v6357
    %v6701 = vpack.c.b16 %v6360, %v6359
    %v6702 = vpack.c.b16 %v6362, %v6361
    %v6703 = vpack.c.b16 %v6364, %v6363
    %v6704 = vpack.c.b16 %v6366, %v6365
    %v7044 = vsel %vm3051, %v4331, 0
    %7046 = vmatprep.subr.bf16.mxu0 0
    %7047 = vmatpush1.bf16.msra.mxu0 %v6367
    %7048 = vmatprep.subr.bf16.mxu0 0
    %7049 = vmatpush1.bf16.msra.mxu0 %v6368
    %7050 = vmatprep.subr.bf16.mxu0 0
    %7051 = vmatpush1.bf16.msra.mxu0 %v6369
    %7052 = vmatprep.subr.bf16.mxu0 0
    %7053 = vmatpush1.bf16.msra.mxu0 %v6370
    %7054 = vmatprep.subr.bf16.mxu0 0
    %7055 = vmatpush1.bf16.msra.mxu0 %v6371
    %7056 = vmatprep.subr.bf16.mxu0 0
    %7057 = vmatpush1.bf16.msra.mxu0 %v6372
    %7058 = vmatprep.subr.bf16.mxu0 0
    %7059 = vmatpush1.bf16.msra.mxu0 %v6373
    %7060 = vmatprep.subr.bf16.mxu0 0
    %7061 = vmatpush1.bf16.msra.mxu0 %v6374
    %7062 = vmatprep.subr.bf16.mxu0 0
    %7063 = vmatpush1.bf16.msra.mxu0 %v6375
    %7064 = vmatprep.subr.bf16.mxu0 0
    %7065 = vmatpush1.bf16.msra.mxu0 %v6376
    %7066 = vmatprep.subr.bf16.mxu0 0
    %7067 = vmatpush1.bf16.msra.mxu0 %v6377
    %7068 = vmatprep.subr.bf16.mxu0 0
    %7069 = vmatpush1.bf16.msra.mxu0 %v6378
    %7070 = vmatprep.subr.bf16.mxu0 0
    %7071 = vmatpush1.bf16.msra.mxu0 %v6379
    %7072 = vmatprep.subr.bf16.mxu0 0
    %7073 = vmatpush1.bf16.msra.mxu0 %v6380
    %7074 = vmatprep.subr.bf16.mxu0 0
    %7075 = vmatpush1.bf16.msra.mxu0 %v6381
    %7076 = vmatprep.subr.bf16.mxu0 0
    %7077 = vmatpush1.bf16.msra.mxu0 %v6382
    %7078 = vmatprep.mubr.bf16.mxu0 %v4290
    %7079 = vmatmul.mubr.bf16.gmra.mrb[0].mxu0 %v4289
    %v7080 = vpop.f32.mrb[0].mxu0
    %v7081 = vadd.f32 %v5013, %v7080
    %v7082 = vpop.f32.mrb[0].mxu0
    %v7083 = vpop.f32.mrb[0].mxu0
    %v7084 = vpop.f32.mrb[0].mxu0
    %7085 = vdwg.mxu0
    %7086 = vmatprep.subr.bf16.mxu0 0
    %7087 = vmatpush1.bf16.msra.mxu0 %v6383
    %7088 = vmatprep.subr.bf16.mxu0 0
    %7089 = vmatpush1.bf16.msra.mxu0 %v6384
    %7090 = vmatprep.subr.bf16.mxu0 0
    %7091 = vmatpush1.bf16.msra.mxu0 %v6385
    %7092 = vmatprep.subr.bf16.mxu0 0
    %7093 = vmatpush1.bf16.msra.mxu0 %v6386
    %7094 = vmatprep.subr.bf16.mxu0 0
    %7095 = vmatpush1.bf16.msra.mxu0 %v6387
    %7096 = vmatprep.subr.bf16.mxu0 0
    %7097 = vmatpush1.bf16.msra.mxu0 %v6388
    %7098 = vmatprep.subr.bf16.mxu0 0
    %7099 = vmatpush1.bf16.msra.mxu0 %v6389
    %7100 = vmatprep.subr.bf16.mxu0 0
    %7101 = vmatpush1.bf16.msra.mxu0 %v6390
    %7102 = vmatprep.subr.bf16.mxu0 0
    %7103 = vmatpush1.bf16.msra.mxu0 %v6391
    %7104 = vmatprep.subr.bf16.mxu0 0
    %7105 = vmatpush1.bf16.msra.mxu0 %v6392
    %7106 = vmatprep.subr.bf16.mxu0 0
    %7107 = vmatpush1.bf16.msra.mxu0 %v6393
    %7108 = vmatprep.subr.bf16.mxu0 0
    %7109 = vmatpush1.bf16.msra.mxu0 %v6394
    %7110 = vmatprep.subr.bf16.mxu0 0
    %7111 = vmatpush1.bf16.msra.mxu0 %v6395
    %7112 = vmatprep.subr.bf16.mxu0 0
    %7113 = vmatpush1.bf16.msra.mxu0 %v6396
    %7114 = vmatprep.subr.bf16.mxu0 0
    %7115 = vmatpush1.bf16.msra.mxu0 %v6397
    %7116 = vmatprep.subr.bf16.mxu0 0
    %7117 = vmatpush1.bf16.msra.mxu0 %v6398
    %7118 = vmatprep.mubr.bf16.mxu0 %v4292
    %7119 = vmatmul.mubr.bf16.gmra.mrb[0].mxu0 %v4291
    %v7120 = vpop.f32.mrb[0].mxu0
    %v7121 = vadd.f32 %v7081, %v7120
    %v7122 = vpop.f32.mrb[0].mxu0
    %v7123 = vpop.f32.mrb[0].mxu0
    %v7124 = vpop.f32.mrb[0].mxu0
    %7125 = vdwg.mxu0
    %7126 = vmatprep.subr.bf16.mxu0 0
    %7127 = vmatpush1.bf16.msra.mxu0 %v6399
    %7128 = vmatprep.subr.bf16.mxu0 0
    %7129 = vmatpush1.bf16.msra.mxu0 %v6400
    %7130 = vmatprep.subr.bf16.mxu0 0
    %7131 = vmatpush1.bf16.msra.mxu0 %v6401
    %7132 = vmatprep.subr.bf16.mxu0 0
    %7133 = vmatpush1.bf16.msra.mxu0 %v6402
    %7134 = vmatprep.subr.bf16.mxu0 0
    %7135 = vmatpush1.bf16.msra.mxu0 %v6403
    %7136 = vmatprep.subr.bf16.mxu0 0
    %7137 = vmatpush1.bf16.msra.mxu0 %v6404
    %7138 = vmatprep.subr.bf16.mxu0 0
    %7139 = vmatpush1.bf16.msra.mxu0 %v6405
    %7140 = vmatprep.subr.bf16.mxu0 0
    %7141 = vmatpush1.bf16.msra.mxu0 %v6406
    %7142 = vmatprep.subr.bf16.mxu0 0
    %7143 = vmatpush1.bf16.msra.mxu0 %v6407
    %7144 = vmatprep.subr.bf16.mxu0 0
    %7145 = vmatpush1.bf16.msra.mxu0 %v6408
    %7146 = vmatprep.subr.bf16.mxu0 0
    %7147 = vmatpush1.bf16.msra.mxu0 %v6409
    %7148 = vmatprep.subr.bf16.mxu0 0
    %7149 = vmatpush1.bf16.msra.mxu0 %v6410
    %7150 = vmatprep.subr.bf16.mxu0 0
    %7151 = vmatpush1.bf16.msra.mxu0 %v6411
    %7152 = vmatprep.subr.bf16.mxu0 0
    %7153 = vmatpush1.bf16.msra.mxu0 %v6412
    %7154 = vmatprep.subr.bf16.mxu0 0
    %7155 = vmatpush1.bf16.msra.mxu0 %v6413
    %7156 = vmatprep.subr.bf16.mxu0 0
    %7157 = vmatpush1.bf16.msra.mxu0 %v6414
    %7158 = vmatprep.mubr.bf16.mxu0 %v4294
    %7159 = vmatmul.mubr.bf16.gmra.mrb[0].mxu0 %v4293
    %v7160 = vpop.f32.mrb[0].mxu0
    %v7161 = vadd.f32 %v7121, %v7160
    %v7162 = vpop.f32.mrb[0].mxu0
    %v7163 = vpop.f32.mrb[0].mxu0
    %v7164 = vpop.f32.mrb[0].mxu0
    %7165 = vdwg.mxu0
    %7166 = vmatprep.subr.bf16.mxu0 0
    %7167 = vmatpush1.bf16.msra.mxu0 %v6415
    %7168 = vmatprep.subr.bf16.mxu0 0
    %7169 = vmatpush1.bf16.msra.mxu0 %v6416
    %7170 = vmatprep.subr.bf16.mxu0 0
    %7171 = vmatpush1.bf16.msra.mxu0 %v6417
    %7172 = vmatprep.subr.bf16.mxu0 0
    %7173 = vmatpush1.bf16.msra.mxu0 %v6418
    %7174 = vmatprep.subr.bf16.mxu0 0
    %7175 = vmatpush1.bf16.msra.mxu0 %v6419
    %7176 = vmatprep.subr.bf16.mxu0 0
    %7177 = vmatpush1.bf16.msra.mxu0 %v6420
    %7178 = vmatprep.subr.bf16.mxu0 0
    %7179 = vmatpush1.bf16.msra.mxu0 %v6421
    %7180 = vmatprep.subr.bf16.mxu0 0
    %7181 = vmatpush1.bf16.msra.mxu0 %v6422
    %7182 = vmatprep.subr.bf16.mxu0 0
    %7183 = vmatpush1.bf16.msra.mxu0 %v6423
    %7184 = vmatprep.subr.bf16.mxu0 0
    %7185 = vmatpush1.bf16.msra.mxu0 %v6424
    %7186 = vmatprep.subr.bf16.mxu0 0
    %7187 = vmatpush1.bf16.msra.mxu0 %v6425
    %7188 = vmatprep.subr.bf16.mxu0 0
    %7189 = vmatpush1.bf16.msra.mxu0 %v6426
    %7190 = vmatprep.subr.bf16.mxu0 0
    %7191 = vmatpush1.bf16.msra.mxu0 %v6427
    %7192 = vmatprep.subr.bf16.mxu0 0
    %7193 = vmatpush1.bf16.msra.mxu0 %v6428
    %7194 = vmatprep.subr.bf16.mxu0 0
    %7195 = vmatpush1.bf16.msra.mxu0 %v6429
    %7196 = vmatprep.subr.bf16.mxu0 0
    %7197 = vmatpush1.bf16.msra.mxu0 %v6430
    %7198 = vmatprep.mubr.bf16.mxu0 %v4296
    %7199 = vmatmul.mubr.bf16.gmra.mrb[0].mxu0 %v4295
    %v7200 = vpop.f32.mrb[0].mxu0
    %v7201 = vadd.f32 %v7161, %v7200
    %v7202 = vpop.f32.mrb[0].mxu0
    %v7203 = vpop.f32.mrb[0].mxu0
    %v7204 = vpop.f32.mrb[0].mxu0
    %7205 = vdwg.mxu0
    %7206 = vmatprep.subr.bf16.mxu0 0
    %7207 = vmatpush1.bf16.msra.mxu0 %v6431
    %7208 = vmatprep.subr.bf16.mxu0 0
    %7209 = vmatpush1.bf16.msra.mxu0 %v6432
    %7210 = vmatprep.subr.bf16.mxu0 0
    %7211 = vmatpush1.bf16.msra.mxu0 %v6433
    %7212 = vmatprep.subr.bf16.mxu0 0
    %7213 = vmatpush1.bf16.msra.mxu0 %v6434
    %7214 = vmatprep.subr.bf16.mxu0 0
    %7215 = vmatpush1.bf16.msra.mxu0 %v6435
    %7216 = vmatprep.subr.bf16.mxu0 0
    %7217 = vmatpush1.bf16.msra.mxu0 %v6436
    %7218 = vmatprep.subr.bf16.mxu0 0
    %7219 = vmatpush1.bf16.msra.mxu0 %v6437
    %7220 = vmatprep.subr.bf16.mxu0 0
    %7221 = vmatpush1.bf16.msra.mxu0 %v6438
    %7222 = vmatprep.subr.bf16.mxu0 0
    %7223 = vmatpush1.bf16.msra.mxu0 %v6439
    %7224 = vmatprep.subr.bf16.mxu0 0
    %7225 = vmatpush1.bf16.msra.mxu0 %v6440
    %7226 = vmatprep.subr.bf16.mxu0 0
    %7227 = vmatpush1.bf16.msra.mxu0 %v6441
    %7228 = vmatprep.subr.bf16.mxu0 0
    %7229 = vmatpush1.bf16.msra.mxu0 %v6442
    %7230 = vmatprep.subr.bf16.mxu0 0
    %7231 = vmatpush1.bf16.msra.mxu0 %v6443
    %7232 = vmatprep.subr.bf16.mxu0 0
    %7233 = vmatpush1.bf16.msra.mxu0 %v6444
    %7234 = vmatprep.subr.bf16.mxu0 0
    %7235 = vmatpush1.bf16.msra.mxu0 %v6445
    %7236 = vmatprep.subr.bf16.mxu0 0
    %7237 = vmatpush1.bf16.msra.mxu0 %v6446
    %7238 = vmatprep.mubr.bf16.mxu0 %v4298
    %7239 = vmatmul.mubr.bf16.gmra.mrb[0].mxu0 %v4297
    %v7240 = vpop.f32.mrb[0].mxu0
    %v7241 = vadd.f32 %v7201, %v7240
    %v7242 = vpop.f32.mrb[0].mxu0
    %v7243 = vpop.f32.mrb[0].mxu0
    %v7244 = vpop.f32.mrb[0].mxu0
    %7245 = vdwg.mxu0
    %7246 = vmatprep.subr.bf16.mxu0 0
    %7247 = vmatpush1.bf16.msra.mxu0 %v6447
    %7248 = vmatprep.subr.bf16.mxu0 0
    %7249 = vmatpush1.bf16.msra.mxu0 %v6448
    %7250 = vmatprep.subr.bf16.mxu0 0
    %7251 = vmatpush1.bf16.msra.mxu0 %v6449
    %7252 = vmatprep.subr.bf16.mxu0 0
    %7253 = vmatpush1.bf16.msra.mxu0 %v6450
    %7254 = vmatprep.subr.bf16.mxu0 0
    %7255 = vmatpush1.bf16.msra.mxu0 %v6451
    %7256 = vmatprep.subr.bf16.mxu0 0
    %7257 = vmatpush1.bf16.msra.mxu0 %v6452
    %7258 = vmatprep.subr.bf16.mxu0 0
    %7259 = vmatpush1.bf16.msra.mxu0 %v6453
    %7260 = vmatprep.subr.bf16.mxu0 0
    %7261 = vmatpush1.bf16.msra.mxu0 %v6454
    %7262 = vmatprep.subr.bf16.mxu0 0
    %7263 = vmatpush1.bf16.msra.mxu0 %v6455
    %7264 = vmatprep.subr.bf16.mxu0 0
    %7265 = vmatpush1.bf16.msra.mxu0 %v6456
    %7266 = vmatprep.subr.bf16.mxu0 0
    %7267 = vmatpush1.bf16.msra.mxu0 %v6457
    %7268 = vmatprep.subr.bf16.mxu0 0
    %7269 = vmatpush1.bf16.msra.mxu0 %v6458
    %7270 = vmatprep.subr.bf16.mxu0 0
    %7271 = vmatpush1.bf16.msra.mxu0 %v6459
    %7272 = vmatprep.subr.bf16.mxu0 0
    %7273 = vmatpush1.bf16.msra.mxu0 %v6460
    %7274 = vmatprep.subr.bf16.mxu0 0
    %7275 = vmatpush1.bf16.msra.mxu0 %v6461
    %7276 = vmatprep.subr.bf16.mxu0 0
    %7277 = vmatpush1.bf16.msra.mxu0 %v6462
    %7278 = vmatprep.mubr.bf16.mxu0 %v4300
    %7279 = vmatmul.mubr.bf16.gmra.mrb[0].mxu0 %v4299
    %v7280 = vpop.f32.mrb[0].mxu0
    %v7281 = vadd.f32 %v7241, %v7280
    %v7282 = vpop.f32.mrb[0].mxu0
    %v7283 = vpop.f32.mrb[0].mxu0
    %v7284 = vpop.f32.mrb[0].mxu0
    %7285 = vdwg.mxu0
    %7286 = vmatprep.subr.bf16.mxu0 0
    %7287 = vmatpush1.bf16.msra.mxu0 %v6463
    %7288 = vmatprep.subr.bf16.mxu0 0
    %7289 = vmatpush1.bf16.msra.mxu0 %v6464
    %7290 = vmatprep.subr.bf16.mxu0 0
    %7291 = vmatpush1.bf16.msra.mxu0 %v6465
    %7292 = vmatprep.subr.bf16.mxu0 0
    %7293 = vmatpush1.bf16.msra.mxu0 %v6466
    %7294 = vmatprep.subr.bf16.mxu0 0
    %7295 = vmatpush1.bf16.msra.mxu0 %v6467
    %7296 = vmatprep.subr.bf16.mxu0 0
    %7297 = vmatpush1.bf16.msra.mxu0 %v6468
    %7298 = vmatprep.subr.bf16.mxu0 0
    %7299 = vmatpush1.bf16.msra.mxu0 %v6469
    %7300 = vmatprep.subr.bf16.mxu0 0
    %7301 = vmatpush1.bf16.msra.mxu0 %v6470
    %7302 = vmatprep.subr.bf16.mxu0 0
    %7303 = vmatpush1.bf16.msra.mxu0 %v6471
    %7304 = vmatprep.subr.bf16.mxu0 0
    %7305 = vmatpush1.bf16.msra.mxu0 %v6472
    %7306 = vmatprep.subr.bf16.mxu0 0
    %7307 = vmatpush1.bf16.msra.mxu0 %v6473
    %7308 = vmatprep.subr.bf16.mxu0 0
    %7309 = vmatpush1.bf16.msra.mxu0 %v6474
    %7310 = vmatprep.subr.bf16.mxu0 0
    %7311 = vmatpush1.bf16.msra.mxu0 %v6475
    %7312 = vmatprep.subr.bf16.mxu0 0
    %7313 = vmatpush1.bf16.msra.mxu0 %v6476
    %7314 = vmatprep.subr.bf16.mxu0 0
    %7315 = vmatpush1.bf16.msra.mxu0 %v6477
    %7316 = vmatprep.subr.bf16.mxu0 0
    %7317 = vmatpush1.bf16.msra.mxu0 %v6478
    %7318 = vmatprep.mubr.bf16.mxu0 %v4302
    %7319 = vmatmul.mubr.bf16.gmra.mrb[0].mxu0 %v4301
    %v7320 = vpop.f32.mrb[0].mxu0
    %v7321 = vadd.f32 %v7281, %v7320
    %v7322 = vpop.f32.mrb[0].mxu0
    %v7323 = vpop.f32.mrb[0].mxu0
    %v7324 = vpop.f32.mrb[0].mxu0
    %7325 = vdwg.mxu0
    %7326 = vmatprep.subr.bf16.mxu0 0
    %7327 = vmatpush1.bf16.msra.mxu0 %v6479
    %7328 = vmatprep.subr.bf16.mxu0 0
    %7329 = vmatpush1.bf16.msra.mxu0 %v6480
    %7330 = vmatprep.subr.bf16.mxu0 0
    %7331 = vmatpush1.bf16.msra.mxu0 %v6481
    %7332 = vmatprep.subr.bf16.mxu0 0
    %7333 = vmatpush1.bf16.msra.mxu0 %v6482
    %7334 = vmatprep.subr.bf16.mxu0 0
    %7335 = vmatpush1.bf16.msra.mxu0 %v6483
    %7336 = vmatprep.subr.bf16.mxu0 0
    %7337 = vmatpush1.bf16.msra.mxu0 %v6484
    %7338 = vmatprep.subr.bf16.mxu0 0
    %7339 = vmatpush1.bf16.msra.mxu0 %v6485
    %7340 = vmatprep.subr.bf16.mxu0 0
    %7341 = vmatpush1.bf16.msra.mxu0 %v6486
    %7342 = vmatprep.subr.bf16.mxu0 0
    %7343 = vmatpush1.bf16.msra.mxu0 %v6487
    %7344 = vmatprep.subr.bf16.mxu0 0
    %7345 = vmatpush1.bf16.msra.mxu0 %v6488
    %7346 = vmatprep.subr.bf16.mxu0 0
    %7347 = vmatpush1.bf16.msra.mxu0 %v6489
    %7348 = vmatprep.subr.bf16.mxu0 0
    %7349 = vmatpush1.bf16.msra.mxu0 %v6490
    %7350 = vmatprep.subr.bf16.mxu0 0
    %7351 = vmatpush1.bf16.msra.mxu0 %v6491
    %7352 = vmatprep.subr.bf16.mxu0 0
    %7353 = vmatpush1.bf16.msra.mxu0 %v6492
    %7354 = vmatprep.subr.bf16.mxu0 0
    %7355 = vmatpush1.bf16.msra.mxu0 %v6493
    %7356 = vmatprep.subr.bf16.mxu0 0
    %7357 = vmatpush1.bf16.msra.mxu0 %v6494
    %7358 = vmatprep.mubr.bf16.mxu0 %v4304
    %7359 = vmatmul.mubr.bf16.gmra.mrb[0].mxu0 %v4303
    %v7360 = vpop.f32.mrb[0].mxu0
    %v7361 = vadd.f32 %v7321, %v7360
    %v7362 = vpop.f32.mrb[0].mxu0
    %v7363 = vpop.f32.mrb[0].mxu0
    %v7364 = vpop.f32.mrb[0].mxu0
    %7365 = vdwg.mxu0
    %7366 = vmatprep.subr.bf16.mxu0 0
    %7367 = vmatpush1.bf16.msra.mxu0 %v6495
    %7368 = vmatprep.subr.bf16.mxu0 0
    %7369 = vmatpush1.bf16.msra.mxu0 %v6496
    %7370 = vmatprep.subr.bf16.mxu0 0
    %7371 = vmatpush1.bf16.msra.mxu0 %v6497
    %7372 = vmatprep.subr.bf16.mxu0 0
    %7373 = vmatpush1.bf16.msra.mxu0 %v6498
    %7374 = vmatprep.subr.bf16.mxu0 0
    %7375 = vmatpush1.bf16.msra.mxu0 %v6499
    %7376 = vmatprep.subr.bf16.mxu0 0
    %7377 = vmatpush1.bf16.msra.mxu0 %v6500
    %7378 = vmatprep.subr.bf16.mxu0 0
    %7379 = vmatpush1.bf16.msra.mxu0 %v6501
    %7380 = vmatprep.subr.bf16.mxu0 0
    %7381 = vmatpush1.bf16.msra.mxu0 %v6502
    %7382 = vmatprep.subr.bf16.mxu0 0
    %7383 = vmatpush1.bf16.msra.mxu0 %v6503
    %7384 = vmatprep.subr.bf16.mxu0 0
    %7385 = vmatpush1.bf16.msra.mxu0 %v6504
    %7386 = vmatprep.subr.bf16.mxu0 0
    %7387 = vmatpush1.bf16.msra.mxu0 %v6505
    %7388 = vmatprep.subr.bf16.mxu0 0
    %7389 = vmatpush1.bf16.msra.mxu0 %v6506
    %7390 = vmatprep.subr.bf16.mxu0 0
    %7391 = vmatpush1.bf16.msra.mxu0 %v6507
    %7392 = vmatprep.subr.bf16.mxu0 0
    %7393 = vmatpush1.bf16.msra.mxu0 %v6508
    %7394 = vmatprep.subr.bf16.mxu0 0
    %7395 = vmatpush1.bf16.msra.mxu0 %v6509
    %7396 = vmatprep.subr.bf16.mxu0 0
    %7397 = vmatpush1.bf16.msra.mxu0 %v6510
    %7398 = vmatprep.mubr.bf16.mxu0 %v4306
    %7399 = vmatmul.mubr.bf16.gmra.mrb[0].mxu0 %v4305
    %v7400 = vpop.f32.mrb[0].mxu0
    %v7401 = vadd.f32 %v7361, %v7400
    %v7402 = vpop.f32.mrb[0].mxu0
    %v7403 = vpop.f32.mrb[0].mxu0
    %v7404 = vpop.f32.mrb[0].mxu0
    %7405 = vdwg.mxu0
    %7406 = vmatprep.subr.bf16.mxu0 0
    %7407 = vmatpush1.bf16.msra.mxu0 %v6511
    %7408 = vmatprep.subr.bf16.mxu0 0
    %7409 = vmatpush1.bf16.msra.mxu0 %v6512
    %7410 = vmatprep.subr.bf16.mxu0 0
    %7411 = vmatpush1.bf16.msra.mxu0 %v6513
    %7412 = vmatprep.subr.bf16.mxu0 0
    %7413 = vmatpush1.bf16.msra.mxu0 %v6514
    %7414 = vmatprep.subr.bf16.mxu0 0
    %7415 = vmatpush1.bf16.msra.mxu0 %v6515
    %7416 = vmatprep.subr.bf16.mxu0 0
    %7417 = vmatpush1.bf16.msra.mxu0 %v6516
    %7418 = vmatprep.subr.bf16.mxu0 0
    %7419 = vmatpush1.bf16.msra.mxu0 %v6517
    %7420 = vmatprep.subr.bf16.mxu0 0
    %7421 = vmatpush1.bf16.msra.mxu0 %v6518
    %7422 = vmatprep.subr.bf16.mxu0 0
    %7423 = vmatpush1.bf16.msra.mxu0 %v6519
    %7424 = vmatprep.subr.bf16.mxu0 0
    %7425 = vmatpush1.bf16.msra.mxu0 %v6520
    %7426 = vmatprep.subr.bf16.mxu0 0
    %7427 = vmatpush1.bf16.msra.mxu0 %v6521
    %7428 = vmatprep.subr.bf16.mxu0 0
    %7429 = vmatpush1.bf16.msra.mxu0 %v6522
    %7430 = vmatprep.subr.bf16.mxu0 0
    %7431 = vmatpush1.bf16.msra.mxu0 %v6523
    %7432 = vmatprep.subr.bf16.mxu0 0
    %7433 = vmatpush1.bf16.msra.mxu0 %v6524
    %7434 = vmatprep.subr.bf16.mxu0 0
    %7435 = vmatpush1.bf16.msra.mxu0 %v6525
    %7436 = vmatprep.subr.bf16.mxu0 0
    %7437 = vmatpush1.bf16.msra.mxu0 %v6526
    %7438 = vmatprep.mubr.bf16.mxu0 %v4308
    %7439 = vmatmul.mubr.bf16.gmra.mrb[0].mxu0 %v4307
    %v7440 = vpop.f32.mrb[0].mxu0
    %v7441 = vadd.f32 %v7401, %v7440
    %v7442 = vpop.f32.mrb[0].mxu0
    %v7443 = vpop.f32.mrb[0].mxu0
    %v7444 = vpop.f32.mrb[0].mxu0
    %7445 = vdwg.mxu0
    %7446 = vmatprep.subr.bf16.mxu0 0
    %7447 = vmatpush1.bf16.msra.mxu0 %v6527
    %7448 = vmatprep.subr.bf16.mxu0 0
    %7449 = vmatpush1.bf16.msra.mxu0 %v6528
    %7450 = vmatprep.subr.bf16.mxu0 0
    %7451 = vmatpush1.bf16.msra.mxu0 %v6529
    %7452 = vmatprep.subr.bf16.mxu0 0
    %7453 = vmatpush1.bf16.msra.mxu0 %v6530
    %7454 = vmatprep.subr.bf16.mxu0 0
    %7455 = vmatpush1.bf16.msra.mxu0 %v6531
    %7456 = vmatprep.subr.bf16.mxu0 0
    %7457 = vmatpush1.bf16.msra.mxu0 %v6532
    %7458 = vmatprep.subr.bf16.mxu0 0
    %7459 = vmatpush1.bf16.msra.mxu0 %v6533
    %7460 = vmatprep.subr.bf16.mxu0 0
    %7461 = vmatpush1.bf16.msra.mxu0 %v6534
    %7462 = vmatprep.subr.bf16.mxu0 0
    %7463 = vmatpush1.bf16.msra.mxu0 %v6535
    %7464 = vmatprep.subr.bf16.mxu0 0
    %7465 = vmatpush1.bf16.msra.mxu0 %v6536
    %7466 = vmatprep.subr.bf16.mxu0 0
    %7467 = vmatpush1.bf16.msra.mxu0 %v6537
    %7468 = vmatprep.subr.bf16.mxu0 0
    %7469 = vmatpush1.bf16.msra.mxu0 %v6538
    %7470 = vmatprep.subr.bf16.mxu0 0
    %7471 = vmatpush1.bf16.msra.mxu0 %v6539
    %7472 = vmatprep.subr.bf16.mxu0 0
    %7473 = vmatpush1.bf16.msra.mxu0 %v6540
    %7474 = vmatprep.subr.bf16.mxu0 0
    %7475 = vmatpush1.bf16.msra.mxu0 %v6541
    %7476 = vmatprep.subr.bf16.mxu0 0
    %7477 = vmatpush1.bf16.msra.mxu0 %v6542
    %7478 = vmatprep.mubr.bf16.mxu0 %v4310
    %7479 = vmatmul.mubr.bf16.gmra.mrb[0].mxu0 %v4309
    %v7480 = vpop.f32.mrb[0].mxu0
    %v7481 = vadd.f32 %v7441, %v7480
    %v7482 = vpop.f32.mrb[0].mxu0
    %v7483 = vpop.f32.mrb[0].mxu0
    %v7484 = vpop.f32.mrb[0].mxu0
    %7485 = vdwg.mxu0
    %7486 = vmatprep.subr.bf16.mxu0 0
    %7487 = vmatpush1.bf16.msra.mxu0 %v6543
    %7488 = vmatprep.subr.bf16.mxu0 0
    %7489 = vmatpush1.bf16.msra.mxu0 %v6544
    %7490 = vmatprep.subr.bf16.mxu0 0
    %7491 = vmatpush1.bf16.msra.mxu0 %v6545
    %7492 = vmatprep.subr.bf16.mxu0 0
    %7493 = vmatpush1.bf16.msra.mxu0 %v6546
    %7494 = vmatprep.subr.bf16.mxu0 0
    %7495 = vmatpush1.bf16.msra.mxu0 %v6547
    %7496 = vmatprep.subr.bf16.mxu0 0
    %7497 = vmatpush1.bf16.msra.mxu0 %v6548
    %7498 = vmatprep.subr.bf16.mxu0 0
    %7499 = vmatpush1.bf16.msra.mxu0 %v6549
    %7500 = vmatprep.subr.bf16.mxu0 0
    %7501 = vmatpush1.bf16.msra.mxu0 %v6550
    %7502 = vmatprep.subr.bf16.mxu0 0
    %7503 = vmatpush1.bf16.msra.mxu0 %v6551
    %7504 = vmatprep.subr.bf16.mxu0 0
    %7505 = vmatpush1.bf16.msra.mxu0 %v6552
    %7506 = vmatprep.subr.bf16.mxu0 0
    %7507 = vmatpush1.bf16.msra.mxu0 %v6553
    %7508 = vmatprep.subr.bf16.mxu0 0
    %7509 = vmatpush1.bf16.msra.mxu0 %v6554
    %7510 = vmatprep.subr.bf16.mxu0 0
    %7511 = vmatpush1.bf16.msra.mxu0 %v6555
    %7512 = vmatprep.subr.bf16.mxu0 0
    %7513 = vmatpush1.bf16.msra.mxu0 %v6556
    %7514 = vmatprep.subr.bf16.mxu0 0
    %7515 = vmatpush1.bf16.msra.mxu0 %v6557
    %7516 = vmatprep.subr.bf16.mxu0 0
    %7517 = vmatpush1.bf16.msra.mxu0 %v6558
    %7518 = vmatprep.mubr.bf16.mxu0 %v4312
    %7519 = vmatmul.mubr.bf16.gmra.mrb[0].mxu0 %v4311
    %v7520 = vpop.f32.mrb[0].mxu0
    %v7521 = vadd.f32 %v7481, %v7520
    %v7522 = vpop.f32.mrb[0].mxu0
    %v7523 = vpop.f32.mrb[0].mxu0
    %v7524 = vpop.f32.mrb[0].mxu0
    %7525 = vdwg.mxu0
    %7526 = vmatprep.subr.bf16.mxu0 0
    %7527 = vmatpush1.bf16.msra.mxu0 %v6559
    %7528 = vmatprep.subr.bf16.mxu0 0
    %7529 = vmatpush1.bf16.msra.mxu0 %v6560
    %7530 = vmatprep.subr.bf16.mxu0 0
    %7531 = vmatpush1.bf16.msra.mxu0 %v6561
    %7532 = vmatprep.subr.bf16.mxu0 0
    %7533 = vmatpush1.bf16.msra.mxu0 %v6562
    %7534 = vmatprep.subr.bf16.mxu0 0
    %7535 = vmatpush1.bf16.msra.mxu0 %v6563
    %7536 = vmatprep.subr.bf16.mxu0 0
    %7537 = vmatpush1.bf16.msra.mxu0 %v6564
    %7538 = vmatprep.subr.bf16.mxu0 0
    %7539 = vmatpush1.bf16.msra.mxu0 %v6565
    %7540 = vmatprep.subr.bf16.mxu0 0
    %7541 = vmatpush1.bf16.msra.mxu0 %v6566
    %7542 = vmatprep.subr.bf16.mxu0 0
    %7543 = vmatpush1.bf16.msra.mxu0 %v6567
    %7544 = vmatprep.subr.bf16.mxu0 0
    %7545 = vmatpush1.bf16.msra.mxu0 %v6568
    %7546 = vmatprep.subr.bf16.mxu0 0
    %7547 = vmatpush1.bf16.msra.mxu0 %v6569
    %7548 = vmatprep.subr.bf16.mxu0 0
    %7549 = vmatpush1.bf16.msra.mxu0 %v6570
    %7550 = vmatprep.subr.bf16.mxu0 0
    %7551 = vmatpush1.bf16.msra.mxu0 %v6571
    %7552 = vmatprep.subr.bf16.mxu0 0
    %7553 = vmatpush1.bf16.msra.mxu0 %v6572
    %7554 = vmatprep.subr.bf16.mxu0 0
    %7555 = vmatpush1.bf16.msra.mxu0 %v6573
    %7556 = vmatprep.subr.bf16.mxu0 0
    %7557 = vmatpush1.bf16.msra.mxu0 %v6574
    %7558 = vmatprep.mubr.bf16.mxu0 %v4314
    %7559 = vmatmul.mubr.bf16.gmra.mrb[0].mxu0 %v4313
    %v7560 = vpop.f32.mrb[0].mxu0
    %v7561 = vadd.f32 %v7521, %v7560
    %v7562 = vpop.f32.mrb[0].mxu0
    %v7563 = vpop.f32.mrb[0].mxu0
    %v7564 = vpop.f32.mrb[0].mxu0
    %7565 = vdwg.mxu0
    %7566 = vmatprep.subr.bf16.mxu0 0
    %7567 = vmatpush1.bf16.msra.mxu0 %v6575
    %7568 = vmatprep.subr.bf16.mxu0 0
    %7569 = vmatpush1.bf16.msra.mxu0 %v6576
    %7570 = vmatprep.subr.bf16.mxu0 0
    %7571 = vmatpush1.bf16.msra.mxu0 %v6577
    %7572 = vmatprep.subr.bf16.mxu0 0
    %7573 = vmatpush1.bf16.msra.mxu0 %v6578
    %7574 = vmatprep.subr.bf16.mxu0 0
    %7575 = vmatpush1.bf16.msra.mxu0 %v6579
    %7576 = vmatprep.subr.bf16.mxu0 0
    %7577 = vmatpush1.bf16.msra.mxu0 %v6580
    %7578 = vmatprep.subr.bf16.mxu0 0
    %7579 = vmatpush1.bf16.msra.mxu0 %v6581
    %7580 = vmatprep.subr.bf16.mxu0 0
    %7581 = vmatpush1.bf16.msra.mxu0 %v6582
    %7582 = vmatprep.subr.bf16.mxu0 0
    %7583 = vmatpush1.bf16.msra.mxu0 %v6583
    %7584 = vmatprep.subr.bf16.mxu0 0
    %7585 = vmatpush1.bf16.msra.mxu0 %v6584
    %7586 = vmatprep.subr.bf16.mxu0 0
    %7587 = vmatpush1.bf16.msra.mxu0 %v6585
    %7588 = vmatprep.subr.bf16.mxu0 0
    %7589 = vmatpush1.bf16.msra.mxu0 %v6586
    %7590 = vmatprep.subr.bf16.mxu0 0
    %7591 = vmatpush1.bf16.msra.mxu0 %v6587
    %7592 = vmatprep.subr.bf16.mxu0 0
    %7593 = vmatpush1.bf16.msra.mxu0 %v6588
    %7594 = vmatprep.subr.bf16.mxu0 0
    %7595 = vmatpush1.bf16.msra.mxu0 %v6589
    %7596 = vmatprep.subr.bf16.mxu0 0
    %7597 = vmatpush1.bf16.msra.mxu0 %v6590
    %7598 = vmatprep.mubr.bf16.mxu0 %v4316
    %7599 = vmatmul.mubr.bf16.gmra.mrb[0].mxu0 %v4315
    %v7600 = vpop.f32.mrb[0].mxu0
    %v7601 = vadd.f32 %v7561, %v7600
    %v7602 = vpop.f32.mrb[0].mxu0
    %v7603 = vpop.f32.mrb[0].mxu0
    %v7604 = vpop.f32.mrb[0].mxu0
    %7605 = vdwg.mxu0
    %7606 = vmatprep.subr.bf16.mxu0 0
    %7607 = vmatpush1.bf16.msra.mxu0 %v6591
    %7608 = vmatprep.subr.bf16.mxu0 0
    %7609 = vmatpush1.bf16.msra.mxu0 %v6592
    %7610 = vmatprep.subr.bf16.mxu0 0
    %7611 = vmatpush1.bf16.msra.mxu0 %v6593
    %7612 = vmatprep.subr.bf16.mxu0 0
    %7613 = vmatpush1.bf16.msra.mxu0 %v6594
    %7614 = vmatprep.subr.bf16.mxu0 0
    %7615 = vmatpush1.bf16.msra.mxu0 %v6595
    %7616 = vmatprep.subr.bf16.mxu0 0
    %7617 = vmatpush1.bf16.msra.mxu0 %v6596
    %7618 = vmatprep.subr.bf16.mxu0 0
    %7619 = vmatpush1.bf16.msra.mxu0 %v6597
    %7620 = vmatprep.subr.bf16.mxu0 0
    %7621 = vmatpush1.bf16.msra.mxu0 %v6598
    %7622 = vmatprep.subr.bf16.mxu0 0
    %7623 = vmatpush1.bf16.msra.mxu0 %v6599
    %7624 = vmatprep.subr.bf16.mxu0 0
    %7625 = vmatpush1.bf16.msra.mxu0 %v6600
    %7626 = vmatprep.subr.bf16.mxu0 0
    %7627 = vmatpush1.bf16.msra.mxu0 %v6601
    %7628 = vmatprep.subr.bf16.mxu0 0
    %7629 = vmatpush1.bf16.msra.mxu0 %v6602
    %7630 = vmatprep.subr.bf16.mxu0 0
    %7631 = vmatpush1.bf16.msra.mxu0 %v6603
    %7632 = vmatprep.subr.bf16.mxu0 0
    %7633 = vmatpush1.bf16.msra.mxu0 %v6604
    %7634 = vmatprep.subr.bf16.mxu0 0
    %7635 = vmatpush1.bf16.msra.mxu0 %v6605
    %7636 = vmatprep.subr.bf16.mxu0 0
    %7637 = vmatpush1.bf16.msra.mxu0 %v6606
    %7638 = vmatprep.mubr.bf16.mxu0 %v4318
    %7639 = vmatmul.mubr.bf16.gmra.mrb[0].mxu0 %v4317
    %v7640 = vpop.f32.mrb[0].mxu0
    %v7641 = vadd.f32 %v7601, %v7640
    %v7642 = vpop.f32.mrb[0].mxu0
    %v7643 = vpop.f32.mrb[0].mxu0
    %v7644 = vpop.f32.mrb[0].mxu0
    %7645 = vdwg.mxu0
    %7646 = vmatprep.subr.bf16.mxu0 0
    %7647 = vmatpush1.bf16.msra.mxu0 %v6607
    %7648 = vmatprep.subr.bf16.mxu0 0
    %7649 = vmatpush1.bf16.msra.mxu0 %v6608
    %7650 = vmatprep.subr.bf16.mxu0 0
    %7651 = vmatpush1.bf16.msra.mxu0 %v6609
    %7652 = vmatprep.subr.bf16.mxu0 0
    %7653 = vmatpush1.bf16.msra.mxu0 %v6610
    %7654 = vmatprep.subr.bf16.mxu0 0
    %7655 = vmatpush1.bf16.msra.mxu0 %v6611
    %7656 = vmatprep.subr.bf16.mxu0 0
    %7657 = vmatpush1.bf16.msra.mxu0 %v6612
    %7658 = vmatprep.subr.bf16.mxu0 0
    %7659 = vmatpush1.bf16.msra.mxu0 %v6613
    %7660 = vmatprep.subr.bf16.mxu0 0
    %7661 = vmatpush1.bf16.msra.mxu0 %v6614
    %7662 = vmatprep.subr.bf16.mxu0 0
    %7663 = vmatpush1.bf16.msra.mxu0 %v6615
    %7664 = vmatprep.subr.bf16.mxu0 0
    %7665 = vmatpush1.bf16.msra.mxu0 %v6616
    %7666 = vmatprep.subr.bf16.mxu0 0
    %7667 = vmatpush1.bf16.msra.mxu0 %v6617
    %7668 = vmatprep.subr.bf16.mxu0 0
    %7669 = vmatpush1.bf16.msra.mxu0 %v6618
    %7670 = vmatprep.subr.bf16.mxu0 0
    %7671 = vmatpush1.bf16.msra.mxu0 %v6619
    %7672 = vmatprep.subr.bf16.mxu0 0
    %7673 = vmatpush1.bf16.msra.mxu0 %v6620
    %7674 = vmatprep.subr.bf16.mxu0 0
    %7675 = vmatpush1.bf16.msra.mxu0 %v6621
    %7676 = vmatprep.subr.bf16.mxu0 0
    %7677 = vmatpush1.bf16.msra.mxu0 %v6622
    %7678 = vmatprep.mubr.bf16.mxu0 %v4320
    %7679 = vmatmul.mubr.bf16.gmra.mrb[0].mxu0 %v4319
    %v7680 = vpop.f32.mrb[0].mxu0
    %v7681 = vadd.f32 %v7641, %v7680
    %v7682 = vpop.f32.mrb[0].mxu0
    %v7683 = vpop.f32.mrb[0].mxu0
    %v7684 = vpop.f32.mrb[0].mxu0
    %7685 = vdwg.mxu0
    %7686 = vmatprep.subr.bf16.mxu0 0
    %7687 = vmatpush1.bf16.msra.mxu0 %v6623
    %7688 = vmatprep.subr.bf16.mxu0 0
    %7689 = vmatpush1.bf16.msra.mxu0 %v6624
    %7690 = vmatprep.subr.bf16.mxu0 0
    %7691 = vmatpush1.bf16.msra.mxu0 %v6625
    %7692 = vmatprep.subr.bf16.mxu0 0
    %7693 = vmatpush1.bf16.msra.mxu0 %v6626
    %7694 = vmatprep.subr.bf16.mxu0 0
    %7695 = vmatpush1.bf16.msra.mxu0 %v6627
    %7696 = vmatprep.subr.bf16.mxu0 0
    %7697 = vmatpush1.bf16.msra.mxu0 %v6628
    %7698 = vmatprep.subr.bf16.mxu0 0
    %7699 = vmatpush1.bf16.msra.mxu0 %v6629
    %7700 = vmatprep.subr.bf16.mxu0 0
    %7701 = vmatpush1.bf16.msra.mxu0 %v6630
    %7702 = vmatprep.subr.bf16.mxu0 0
    %7703 = vmatpush1.bf16.msra.mxu0 %v6631
    %7704 = vmatprep.subr.bf16.mxu0 0
    %7705 = vmatpush1.bf16.msra.mxu0 %v6632
    %7706 = vmatprep.subr.bf16.mxu0 0
    %7707 = vmatpush1.bf16.msra.mxu0 %v6633
    %7708 = vmatprep.subr.bf16.mxu0 0
    %7709 = vmatpush1.bf16.msra.mxu0 %v6634
    %7710 = vmatprep.subr.bf16.mxu0 0
    %7711 = vmatpush1.bf16.msra.mxu0 %v6635
    %7712 = vmatprep.subr.bf16.mxu0 0
    %7713 = vmatpush1.bf16.msra.mxu0 %v6636
    %7714 = vmatprep.subr.bf16.mxu0 0
    %7715 = vmatpush1.bf16.msra.mxu0 %v6637
    %7716 = vmatprep.subr.bf16.mxu0 0
    %7717 = vmatpush1.bf16.msra.mxu0 %v6638
    %7718 = vmatprep.mubr.bf16.mxu0 %v4322
    %7719 = vmatmul.mubr.bf16.gmra.mrb[0].mxu0 %v4321
    %v7720 = vpop.f32.mrb[0].mxu0
    %v7721 = vadd.f32 %v7681, %v7720
    %v7722 = vpop.f32.mrb[0].mxu0
    %v7723 = vpop.f32.mrb[0].mxu0
    %v7724 = vpop.f32.mrb[0].mxu0
    %7725 = vdwg.mxu0
    %7726 = vmatprep.subr.bf16.mxu0 0
    %7727 = vmatpush1.bf16.msra.mxu0 %v6639
    %7728 = vmatprep.subr.bf16.mxu0 0
    %7729 = vmatpush1.bf16.msra.mxu0 %v6640
    %7730 = vmatprep.subr.bf16.mxu0 0
    %7731 = vmatpush1.bf16.msra.mxu0 %v6641
    %7732 = vmatprep.subr.bf16.mxu0 0
    %7733 = vmatpush1.bf16.msra.mxu0 %v6642
    %7734 = vmatprep.subr.bf16.mxu0 0
    %7735 = vmatpush1.bf16.msra.mxu0 %v6643
    %7736 = vmatprep.subr.bf16.mxu0 0
    %7737 = vmatpush1.bf16.msra.mxu0 %v6644
    %7738 = vmatprep.subr.bf16.mxu0 0
    %7739 = vmatpush1.bf16.msra.mxu0 %v6645
    %7740 = vmatprep.subr.bf16.mxu0 0
    %7741 = vmatpush1.bf16.msra.mxu0 %v6646
    %7742 = vmatprep.subr.bf16.mxu0 0
    %7743 = vmatpush1.bf16.msra.mxu0 %v6647
    %7744 = vmatprep.subr.bf16.mxu0 0
    %7745 = vmatpush1.bf16.msra.mxu0 %v6648
    %7746 = vmatprep.subr.bf16.mxu0 0
    %7747 = vmatpush1.bf16.msra.mxu0 %v6649
    %7748 = vmatprep.subr.bf16.mxu0 0
    %7749 = vmatpush1.bf16.msra.mxu0 %v6650
    %7750 = vmatprep.subr.bf16.mxu0 0
    %7751 = vmatpush1.bf16.msra.mxu0 %v6651
    %7752 = vmatprep.subr.bf16.mxu0 0
    %7753 = vmatpush1.bf16.msra.mxu0 %v6652
    %7754 = vmatprep.subr.bf16.mxu0 0
    %7755 = vmatpush1.bf16.msra.mxu0 %v6653
    %7756 = vmatprep.subr.bf16.mxu0 0
    %7757 = vmatpush1.bf16.msra.mxu0 %v6654
    %7758 = vmatprep.mubr.bf16.mxu0 %v4324
    %7759 = vmatmul.mubr.bf16.gmra.mrb[0].mxu0 %v4323
    %v7760 = vpop.f32.mrb[0].mxu0
    %v7761 = vadd.f32 %v7721, %v7760
    %v7762 = vpop.f32.mrb[0].mxu0
    %v7763 = vpop.f32.mrb[0].mxu0
    %v7764 = vpop.f32.mrb[0].mxu0
    %7765 = vdwg.mxu0
    %7766 = vmatprep.subr.bf16.mxu0 0
    %7767 = vmatpush1.bf16.msra.mxu0 %v6655
    %7768 = vmatprep.subr.bf16.mxu0 0
    %7769 = vmatpush1.bf16.msra.mxu0 %v6656
    %7770 = vmatprep.subr.bf16.mxu0 0
    %7771 = vmatpush1.bf16.msra.mxu0 %v6657
    %7772 = vmatprep.subr.bf16.mxu0 0
    %7773 = vmatpush1.bf16.msra.mxu0 %v6658
    %7774 = vmatprep.subr.bf16.mxu0 0
    %7775 = vmatpush1.bf16.msra.mxu0 %v6659
    %7776 = vmatprep.subr.bf16.mxu0 0
    %7777 = vmatpush1.bf16.msra.mxu0 %v6660
    %7778 = vmatprep.subr.bf16.mxu0 0
    %7779 = vmatpush1.bf16.msra.mxu0 %v6661
    %7780 = vmatprep.subr.bf16.mxu0 0
    %7781 = vmatpush1.bf16.msra.mxu0 %v6662
    %7782 = vmatprep.subr.bf16.mxu0 0
    %7783 = vmatpush1.bf16.msra.mxu0 %v6663
    %7784 = vmatprep.subr.bf16.mxu0 0
    %7785 = vmatpush1.bf16.msra.mxu0 %v6664
    %7786 = vmatprep.subr.bf16.mxu0 0
    %7787 = vmatpush1.bf16.msra.mxu0 %v6665
    %7788 = vmatprep.subr.bf16.mxu0 0
    %7789 = vmatpush1.bf16.msra.mxu0 %v6666
    %7790 = vmatprep.subr.bf16.mxu0 0
    %7791 = vmatpush1.bf16.msra.mxu0 %v6667
    %7792 = vmatprep.subr.bf16.mxu0 0
    %7793 = vmatpush1.bf16.msra.mxu0 %v6668
    %7794 = vmatprep.subr.bf16.mxu0 0
    %7795 = vmatpush1.bf16.msra.mxu0 %v6669
    %7796 = vmatprep.subr.bf16.mxu0 0
    %7797 = vmatpush1.bf16.msra.mxu0 %v6670
    %7798 = vmatprep.mubr.bf16.mxu0 %v4326
    %7799 = vmatmul.mubr.bf16.gmra.mrb[0].mxu0 %v4325
    %v7800 = vpop.f32.mrb[0].mxu0
    %v7801 = vadd.f32 %v7761, %v7800
    %v7802 = vpop.f32.mrb[0].mxu0
    %v7803 = vpop.f32.mrb[0].mxu0
    %v7804 = vpop.f32.mrb[0].mxu0
    %7805 = vdwg.mxu0
    %7806 = vmatprep.subr.bf16.mxu0 0
    %7807 = vmatpush1.bf16.msra.mxu0 %v6671
    %7808 = vmatprep.subr.bf16.mxu0 0
    %7809 = vmatpush1.bf16.msra.mxu0 %v6672
    %7810 = vmatprep.subr.bf16.mxu0 0
    %7811 = vmatpush1.bf16.msra.mxu0 %v6673
    %7812 = vmatprep.subr.bf16.mxu0 0
    %7813 = vmatpush1.bf16.msra.mxu0 %v6674
    %7814 = vmatprep.subr.bf16.mxu0 0
    %7815 = vmatpush1.bf16.msra.mxu0 %v6675
    %7816 = vmatprep.subr.bf16.mxu0 0
    %7817 = vmatpush1.bf16.msra.mxu0 %v6676
    %7818 = vmatprep.subr.bf16.mxu0 0
    %7819 = vmatpush1.bf16.msra.mxu0 %v6677
    %7820 = vmatprep.subr.bf16.mxu0 0
    %7821 = vmatpush1.bf16.msra.mxu0 %v6678
    %7822 = vmatprep.subr.bf16.mxu0 0
    %7823 = vmatpush1.bf16.msra.mxu0 %v6679
    %7824 = vmatprep.subr.bf16.mxu0 0
    %7825 = vmatpush1.bf16.msra.mxu0 %v6680
    %7826 = vmatprep.subr.bf16.mxu0 0
    %7827 = vmatpush1.bf16.msra.mxu0 %v6681
    %7828 = vmatprep.subr.bf16.mxu0 0
    %7829 = vmatpush1.bf16.msra.mxu0 %v6682
    %7830 = vmatprep.subr.bf16.mxu0 0
    %7831 = vmatpush1.bf16.msra.mxu0 %v6683
    %7832 = vmatprep.subr.bf16.mxu0 0
    %7833 = vmatpush1.bf16.msra.mxu0 %v6684
    %7834 = vmatprep.subr.bf16.mxu0 0
    %7835 = vmatpush1.bf16.msra.mxu0 %v6685
    %7836 = vmatprep.subr.bf16.mxu0 0
    %7837 = vmatpush1.bf16.msra.mxu0 %v6686
    %7838 = vmatprep.mubr.bf16.mxu0 %v4328
    %7839 = vmatmul.mubr.bf16.gmra.mrb[0].mxu0 %v4327
    %v7840 = vpop.f32.mrb[0].mxu0
    %v7841 = vadd.f32 %v7801, %v7840
    %v7842 = vpop.f32.mrb[0].mxu0
    %v7843 = vpop.f32.mrb[0].mxu0
    %v7844 = vpop.f32.mrb[0].mxu0
    %7845 = vdwg.mxu0
    %7846 = vmatprep.subr.bf16.mxu0 0
    %7847 = vmatpush1.bf16.msra.mxu0 %v6687
    %7848 = vmatprep.subr.bf16.mxu0 0
    %7849 = vmatpush1.bf16.msra.mxu0 %v6688
    %7850 = vmatprep.subr.bf16.mxu0 0
    %7851 = vmatpush1.bf16.msra.mxu0 %v6689
    %7852 = vmatprep.subr.bf16.mxu0 0
    %7853 = vmatpush1.bf16.msra.mxu0 %v6690
    %7854 = vmatprep.subr.bf16.mxu0 0
    %7855 = vmatpush1.bf16.msra.mxu0 %v6691
    %7856 = vmatprep.subr.bf16.mxu0 0
    %7857 = vmatpush1.bf16.msra.mxu0 %v6692
    %7858 = vmatprep.subr.bf16.mxu0 0
    %7859 = vmatpush1.bf16.msra.mxu0 %v6693
    %7860 = vmatprep.subr.bf16.mxu0 0
    %7861 = vmatpush1.bf16.msra.mxu0 %v6694
    %7862 = vmatprep.subr.bf16.mxu0 0
    %7863 = vmatpush1.bf16.msra.mxu0 %v6695
    %7864 = vmatprep.subr.bf16.mxu0 0
    %7865 = vmatpush1.bf16.msra.mxu0 %v6696
    %7866 = vmatprep.subr.bf16.mxu0 0
    %7867 = vmatpush1.bf16.msra.mxu0 %v6697
    %7868 = vmatprep.subr.bf16.mxu0 0
    %7869 = vmatpush1.bf16.msra.mxu0 %v6698
    %7870 = vmatprep.subr.bf16.mxu0 0
    %7871 = vmatpush1.bf16.msra.mxu0 %v6699
    %7872 = vmatprep.subr.bf16.mxu0 0
    %7873 = vmatpush1.bf16.msra.mxu0 %v6700
    %7874 = vmatprep.subr.bf16.mxu0 0
    %7875 = vmatpush1.bf16.msra.mxu0 %v6701
    %7876 = vmatprep.subr.bf16.mxu0 0
    %7877 = vmatpush1.bf16.msra.mxu0 %v6702
    %7878 = vmatprep.mubr.bf16.mxu0 %v4330
    %7879 = vmatmul.mubr.bf16.gmra.mrb[0].mxu0 %v4329
    %v7880 = vpop.f32.mrb[0].mxu0
    %v7881 = vadd.f32 %v7841, %v7880
    %v7882 = vpop.f32.mrb[0].mxu0
    %v7883 = vpop.f32.mrb[0].mxu0
    %v7884 = vpop.f32.mrb[0].mxu0
    %7885 = vdwg.mxu0
    %7886 = vmatprep.subr.bf16.mxu0 0
    %7887 = vmatpush1.bf16.msra.mxu0 %v6703
    %7888 = vmatprep.subr.bf16.mxu0 0
    %7889 = vmatpush1.bf16.msra.mxu0 %v6704
    %7890 = vmatprep.subr.bf16.mxu0 0
    %7891 = vmatpush1.bf16.msra.mxu0 0
    %7892 = vmatprep.subr.bf16.mxu0 0
    %7893 = vmatpush1.bf16.msra.mxu0 0
    %7894 = vmatprep.subr.bf16.mxu0 0
    %7895 = vmatpush1.bf16.msra.mxu0 0
    %7896 = vmatprep.subr.bf16.mxu0 0
    %7897 = vmatpush1.bf16.msra.mxu0 0
    %7898 = vmatprep.subr.bf16.mxu0 0
    %7899 = vmatpush1.bf16.msra.mxu0 0
    %7900 = vmatprep.subr.bf16.mxu0 0
    %7901 = vmatpush1.bf16.msra.mxu0 0
    %7902 = vmatprep.subr.bf16.mxu0 0
    %7903 = vmatpush1.bf16.msra.mxu0 0
    %7904 = vmatprep.subr.bf16.mxu0 0
    %7905 = vmatpush1.bf16.msra.mxu0 0
    %7906 = vmatprep.subr.bf16.mxu0 0
    %7907 = vmatpush1.bf16.msra.mxu0 0
    %7908 = vmatprep.subr.bf16.mxu0 0
    %7909 = vmatpush1.bf16.msra.mxu0 0
    %7910 = vmatprep.subr.bf16.mxu0 0
    %7911 = vmatpush1.bf16.msra.mxu0 0
    %7912 = vmatprep.subr.bf16.mxu0 0
    %7913 = vmatpush1.bf16.msra.mxu0 0
    %7914 = vmatprep.subr.bf16.mxu0 0
    %7915 = vmatpush1.bf16.msra.mxu0 0
    %7916 = vmatprep.subr.bf16.mxu0 0
    %7917 = vmatpush1.bf16.msra.mxu0 0
    %7918 = vmatprep.mubr.bf16.mxu0 0
    %7919 = vmatmul.mubr.bf16.gmra.mrb[0].mxu0 %v7044
    %v7920 = vpop.f32.mrb[0].mxu0
    %v7921 = vadd.f32 %v7881, %v7920
    %v7922 = vpop.f32.mrb[0].mxu0
    %v7923 = vpop.f32.mrb[0].mxu0
    %v7924 = vpop.f32.mrb[0].mxu0
    %7925 = vdwg.mxu0
    %v7926 = vtanh.pop %v7921
    %v7927 = vld [vmem:[%s9] sm:$0xff]
    %v7928 = vld [vmem:[%s9 + $0x8] sm:$0xff]
    %v7929 = vld [vmem:[%s9 + $0x10] sm:$0xff]
    %v7930 = vld [vmem:[%s9 + $0x18] sm:$0xff]
    %v7931 = vld [vmem:[%s9 + $0x20] sm:$0xff]
    %v7932 = vld [vmem:[%s9 + $0x28] sm:$0xff]
    %v7933 = vld [vmem:[%s9 + $0x30] sm:$0xff]
    %v7934 = vld [vmem:[%s9 + $0x38] sm:$0xff]
    %v7935 = vld [vmem:[%s9 + $0x40] sm:$0xff]
    %v7936 = vld [vmem:[%s9 + $0x48] sm:$0xff]
    %v7937 = vld [vmem:[%s9 + $0x50] sm:$0xff]
    %v7938 = vld [vmem:[%s9 + $0x58] sm:$0xff]
    %v7939 = vld [vmem:[%s9 + $0x60] sm:$0xff]
    %v7940 = vld [vmem:[%s9 + $0x68] sm:$0xff]
    %v7941 = vld [vmem:[%s9 + $0x70] sm:$0xff]
    %v7942 = vld [vmem:[%s9 + $0x78] sm:$0xff]
    %v7943 = vld [vmem:[#allocation2] sm:$0x1]
    %v7945 = vlaneseq
    %v7946 = vshrl.u32 %v7945, 7
    %v7947 = vsub.s32 0, %v7946
    %v7948 = vrot.slane %v7943, %v7947
    %7950 = vmatprep.subr.mxu0 0.0
    %7951 = vmatpush1.msra.mxu0 %v7927
    %7952 = vmatprep.subr.mxu0 0.0
    %7953 = vmatpush1.msra.mxu0 %v7928
    %7954 = vmatprep.subr.mxu0 0.0
    %7955 = vmatpush1.msra.mxu0 %v7929
    %7956 = vmatprep.subr.mxu0 0.0
    %7957 = vmatpush1.msra.mxu0 %v7930
    %7958 = vmatprep.subr.mxu0 0.0
    %7959 = vmatpush1.msra.mxu0 %v7931
    %7960 = vmatprep.subr.mxu0 0.0
    %7961 = vmatpush1.msra.mxu0 %v7932
    %7962 = vmatprep.subr.mxu0 0.0
    %7963 = vmatpush1.msra.mxu0 %v7933
    %7964 = vmatprep.subr.mxu0 0.0
    %7965 = vmatpush1.msra.mxu0 %v7934
    %7966 = vmatprep.subr.mxu0 0.0
    %7967 = vmatpush1.msra.mxu0 %v7935
    %7968 = vmatprep.subr.mxu0 0.0
    %7969 = vmatpush1.msra.mxu0 %v7936
    %7970 = vmatprep.subr.mxu0 0.0
    %7971 = vmatpush1.msra.mxu0 %v7937
    %7972 = vmatprep.subr.mxu0 0.0
    %7973 = vmatpush1.msra.mxu0 %v7938
    %7974 = vmatprep.subr.mxu0 0.0
    %7975 = vmatpush1.msra.mxu0 %v7939
    %7976 = vmatprep.subr.mxu0 0.0
    %7977 = vmatpush1.msra.mxu0 %v7940
    %7978 = vmatprep.subr.mxu0 0.0
    %7979 = vmatpush1.msra.mxu0 %v7941
    %7980 = vmatprep.subr.mxu0 0.0
    %7981 = vmatpush1.msra.mxu0 %v7942
    %7982 = vmatprep.subr.mxu0 0.0
    %7983 = vmatpush1.msra.mxu0 0.0
    %7984 = vmatprep.subr.mxu0 0.0
    %7985 = vmatpush1.msra.mxu0 0.0
    %7986 = vmatprep.subr.mxu0 0.0
    %7987 = vmatpush1.msra.mxu0 0.0
    %7988 = vmatprep.subr.mxu0 0.0
    %7989 = vmatpush1.msra.mxu0 0.0
    %7990 = vmatprep.subr.mxu0 0.0
    %7991 = vmatpush1.msra.mxu0 0.0
    %7992 = vmatprep.subr.mxu0 0.0
    %7993 = vmatpush1.msra.mxu0 0.0
    %7994 = vmatprep.subr.mxu0 0.0
    %7995 = vmatpush1.msra.mxu0 0.0
    %7996 = vmatprep.subr.mxu0 0.0
    %7997 = vmatpush1.msra.mxu0 0.0
    %7998 = vmatprep.subr.mxu0 0.0
    %7999 = vmatpush1.msra.mxu0 0.0
    %8000 = vmatprep.subr.mxu0 0.0
    %8001 = vmatpush1.msra.mxu0 0.0
    %8002 = vmatprep.subr.mxu0 0.0
    %8003 = vmatpush1.msra.mxu0 0.0
    %8004 = vmatprep.subr.mxu0 0.0
    %8005 = vmatpush1.msra.mxu0 0.0
    %8006 = vmatprep.subr.mxu0 0.0
    %8007 = vmatpush1.msra.mxu0 0.0
    %8008 = vmatprep.subr.mxu0 0.0
    %8009 = vmatpush1.msra.mxu0 0.0
    %8010 = vmatprep.subr.mxu0 0.0
    %8011 = vmatpush1.msra.mxu0 0.0
    %8012 = vmatprep.subr.mxu0 0.0
    %8013 = vmatpush1.msra.mxu0 0.0
    %8014 = vmatprep.mubr.f32.mxu0 0.0
    %8015 = vmatmul.mubr.f32.gmra.mrb[0].mxu0 %v7926
    %v8016 = vpop.f32.mrb[0].mxu0
    %v8017 = vadd.f32 %v7948, %v8016
    %v8018 = vpop.f32.mrb[0].mxu0
    %8019 = vdwg.mxu0
    %vm8020 = vcmask 1024
    %8021 = vst.msk [vmem:[%s13] sm:$0x3] %vm8020, %v8017
    // Predicated region
    $region46: #{evaluate.5} parent=1 // pred_check
      _
    $region47: #{evaluate.5} parent=1 // pred_check_branch
      %8023 = sbr.rel (0) target = $region49
    $region48: #{evaluate.5} parent=1 // pred_region
      %s8025 = ssub.s32 32, 32
      %8026 = vsyncadd [#allocation4], %s8025
      %s8028 = sshll.u32 [#allocation3], 4
      %s8029 = int_to_ptr.vmem [resolvable:$true] %s8028
      %8031 = dma.vmem_to_hbm [thread:$0]  %s8029, 32, %s11, [#allocation4]
    $region49: #{evaluate.5} parent=1 // pred_fallthru
      _
    // Predicated region
    $region50: #{evaluate.5} parent=1 // pred_check
      _
    $region51: #{evaluate.5} parent=1 // pred_check_branch
      %8033 = sbr.rel (0) target = $region53
    $region52: #{evaluate.5} parent=1 // pred_region
      %s8035 = ssub.s32 32, 32
      %8036 = vsyncadd [#allocation6], %s8035
      %s8038 = sshll.u32 [#allocation5], 4
      %s8039 = int_to_ptr.vmem [resolvable:$true] %s8038
      %8041 = dma.vmem_to_hbm [thread:$0]  %s8039, 32, %s12, [#allocation6]
    $region53: #{evaluate.5} parent=1 // pred_fallthru
      _
    // Predicated region
    $region54: #{evaluate.5} parent=1 // pred_check
      _
    $region55: #{evaluate.5} parent=1 // pred_check_branch
      %8043 = sbr.rel (0) target = $region57
    $region56: #{evaluate.5} parent=1 // pred_region
      _
    $region57: #{evaluate.5} parent=1 // pred_fallthru
      _
    // Predicated region
    $region58: #{evaluate.5} parent=1 // pred_check
      _
    $region59: #{evaluate.5} parent=1 // pred_check_branch
      %8045 = sbr.rel (0) target = $region61
    $region60: #{evaluate.5} parent=1 // pred_region
      %8046 = dma.done [#allocation4], 32
    $region61: #{evaluate.5} parent=1 // pred_fallthru
      _
    // Predicated region
    $region62: #{evaluate.5} parent=1 // pred_check
      _
    $region63: #{evaluate.5} parent=1 // pred_check_branch
      %8048 = sbr.rel (0) target = $region65
    $region64: #{evaluate.5} parent=1 // pred_region
      %8049 = dma.done [#allocation6], 32
    $region65: #{evaluate.5} parent=1 // pred_fallthru
      _
    // Predicated region
    $region66: #{evaluate.5} parent=1 // pred_check
      _
    $region67: #{evaluate.5} parent=1 // pred_check_branch
      %8051 = sbr.rel (0) target = $region69
    $region68: #{evaluate.5} parent=1 // pred_region
      _
    $region69: #{evaluate.5} parent=1 // pred_fallthru
      _
    %8052 = vsyncpa [#allocation4], 1
    %8053 = vsyncpa [#allocation6], 1

</llo_original>
